<compile_context>
chip_gen: v7x
topology: tpu7x:2x2x1
jax: 0.10.0
libtpu: 0.0.40
codegen_flags: <defaults>
</compile_context>

<pallas_src>
import functools

import jax
import jax.numpy as jnp
from jax.experimental import pallas as pl
from jax.experimental.pallas import tpu as pltpu

LANE = 128  # TPU lane width; channel dims are padded to a multiple of this.


def _round_up(v, m):
    return (v + m - 1) // m * m


# ----------------------------- Pallas kernels ------------------------------

def _conv3x3_stats_kernel(x_ref, w_ref, y_ref, s_ref, ss_ref, acc_ref,
                          *, Ho, Wo, sH, sW):
    """Fused 3x3 conv (input already zero-padded) + per-sample BN partial stats.

    x_ref  : (1, Hp, Wp, Cip)  bf16  spatially + channel padded input block
    w_ref  : (3, 3, Cip, Cop)  bf16  HWIO weights (channel padded)
    y_ref  : (1, Ho, Wo, Cop)  f32   conv output
    s_ref, ss_ref : (1, 1, Cop) f32  per-sample sum / sum-of-squares over (h, w)
    acc_ref: (Ho*Wo, Cop)      f32   VMEM accumulator scratch
    """
    acc_ref[...] = jnp.zeros_like(acc_ref)
    for kh in range(3):
        for kw in range(3):
            if sH == 1 and sW == 1:
                xs = x_ref[0, kh:kh + Ho, kw:kw + Wo, :]
            else:  # strided conv (not exercised by the demo shapes)
                xs = x_ref[0, pl.ds(kh, Ho, stride=sH),
                           pl.ds(kw, Wo, stride=sW), :]
            acc_ref[...] += jnp.dot(xs.reshape(Ho * Wo, -1), w_ref[kh, kw],
                                    preferred_element_type=jnp.float32)
    acc = acc_ref[...]
    y_ref[...] = acc.reshape(1, Ho, Wo, -1)
    s_ref[...] = jnp.sum(acc, axis=0, keepdims=True).reshape(1, 1, -1)
    ss_ref[...] = jnp.sum(acc * acc, axis=0, keepdims=True).reshape(1, 1, -1)


def _bn_relu_kernel(y_ref, scale_ref, bias_ref, o_ref):
    """Apply pre-folded per-channel scale/bias, then ReLU (one batch sample)."""
    y = y_ref[...]                                   # (1, Ho, Wo, C) f32
    s = scale_ref[...].reshape(1, 1, 1, -1)
    b = bias_ref[...].reshape(1, 1, 1, -1)
    o_ref[...] = jnp.maximum(y * s + b, 0.0).astype(o_ref.dtype)


# ------------------------------ Pallas wrappers ----------------------------

def conv3x3_with_stats(x_nhwc, w_hwio, stride=(1, 1)):
    """3x3 conv, padding=1, bias=False, fused with BN partial statistics.

    x: (N, H, W, Cin_x) float (Cin_x may already be lane-padded; extra channels
       must be zero).  w: (3, 3, Cin_w, Cout) with Cin_w <= Cin_x.
    Returns y (N, Ho, Wo, Cop) f32 and per-sample sums s, ss (N, 1, Cop) f32,
    where Cop = round_up(Cout, 128) (padded output channels are exactly 0).
    """
    N, H, W, Cin_x = x_nhwc.shape
    _, _, Cin_w, Cout = w_hwio.shape
    sH, sW = stride
    Ho = (H + 2 - 3) // sH + 1
    Wo = (W + 2 - 3) // sW + 1
    Cip = _round_up(Cin_x, LANE)
    Cop = _round_up(Cout, LANE)
    Hp, Wp = H + 2, W + 2

    # bf16 MXU feeds; zero-pad: spatial halo of 1 + channels to lane multiples.
    xp = jnp.pad(x_nhwc.astype(jnp.bfloat16),
                 ((0, 0), (1, 1), (1, 1), (0, Cip - Cin_x)))
    wp = jnp.pad(w_hwio.astype(jnp.bfloat16),
                 ((0, 0), (0, 0), (0, Cip - Cin_w), (0, Cop - Cout)))

    kernel = functools.partial(_conv3x3_stats_kernel, Ho=Ho, Wo=Wo, sH=sH, sW=sW)
    flops = 2 * N * Ho * Wo * 9 * Cip * Cop
    bytes_accessed = (xp.size * 2 + wp.size * 2
                      + N * Ho * Wo * Cop * 4 + 2 * N * Cop * 4)

    # TODO(synk): at real ResNet sizes add row-tiling within a sample and a
    # K-accumulator grid axis so tiles stay inside v7x's 64 MiB VMEM.
    y, s, ss = pl.pallas_call(
        kernel,
        out_shape=(jax.ShapeDtypeStruct((N, Ho, Wo, Cop), jnp.float32),
                   jax.ShapeDtypeStruct((N, 1, Cop), jnp.float32),
                   jax.ShapeDtypeStruct((N, 1, Cop), jnp.float32)),
        grid=(N,),
        in_specs=[
            pl.BlockSpec((1, Hp, Wp, Cip), lambda n: (n, 0, 0, 0)),
            pl.BlockSpec((3, 3, Cip, Cop), lambda n: (0, 0, 0, 0)),
        ],
        out_specs=(
            pl.BlockSpec((1, Ho, Wo, Cop), lambda n: (n, 0, 0, 0)),
            pl.BlockSpec((1, 1, Cop), lambda n: (n, 0, 0)),
            pl.BlockSpec((1, 1, Cop), lambda n: (n, 0, 0)),
        ),
        scratch_shapes=[pltpu.VMEM((Ho * Wo, Cop), jnp.float32)],
        compiler_params=pltpu.CompilerParams(
            dimension_semantics=("parallel",)),        # shard batch across TCs
        cost_estimate=pl.CostEstimate(flops=flops, transcendentals=0,
                                      bytes_accessed=bytes_accessed),
    )(xp, wp)
    return y, s, ss


def bn_relu_apply(y, s, ss, gamma, beta, out_dtype):
    """Training-mode BN (batch stats, biased var, eps=1e-5) + ReLU, tiled.

    y: (N, Ho, Wo, Cop) f32 conv output.  s/ss: (N, 1, Cop) per-sample sums.
    gamma/beta: (Cout,).  Returns (N, Ho, Wo, Cop) out_dtype; padded channels
    stay exactly 0 (their gamma/beta are padded with zeros).
    """
    N, Ho, Wo, Cop = y.shape
    Cout = gamma.shape[0]
    M = N * Ho * Wo

    # Tiny per-channel math in plain JAX (combine per-sample partial sums).
    tot = jnp.sum(s, axis=(0, 1))
    tot_sq = jnp.sum(ss, axis=(0, 1))
    mean = tot / M
    var = jnp.maximum(tot_sq / M - mean * mean, 0.0)   # biased batch variance
    g = jnp.pad(gamma.astype(jnp.float32), (0, Cop - Cout))
    b = jnp.pad(beta.astype(jnp.float32), (0, Cop - Cout))
    scale = g * jax.lax.rsqrt(var + 1e-5)
    bias = b - mean * scale

    # Reuse the conv-output HBM buffer for the BN output when dtypes match.
    alias = {0: 0} if y.dtype == out_dtype else {}
    return pl.pallas_call(
        _bn_relu_kernel,
        out_shape=jax.ShapeDtypeStruct((N, Ho, Wo, Cop), out_dtype),
        grid=(N,),
        in_specs=[
            pl.BlockSpec((1, Ho, Wo, Cop), lambda n: (n, 0, 0, 0)),
            pl.BlockSpec((1, Cop), lambda n: (0, 0)),
            pl.BlockSpec((1, Cop), lambda n: (0, 0)),
        ],
        out_specs=pl.BlockSpec((1, Ho, Wo, Cop), lambda n: (n, 0, 0, 0)),
        compiler_params=pltpu.CompilerParams(dimension_semantics=("parallel",)),
        input_output_aliases=alias,
    )(y, scale.reshape(1, Cop), bias.reshape(1, Cop))


@functools.partial(jax.jit, static_argnames=("stride",))
def basic_block(x_nhwc, w1, g1, b1, w2, g2, b2, stride=(1, 1)):
    """Forward pass of BasicBlock (NHWC activations, HWIO weights)."""
    Cout = w1.shape[-1]
    # conv1 -> bn1 -> relu   (kept bf16: it is the next conv's MXU feed)
    y1, s1, ss1 = conv3x3_with_stats(x_nhwc, w1, stride)
    a1 = bn_relu_apply(y1, s1, ss1, g1, b1, out_dtype=jnp.bfloat16)
    # conv2 -> bn2 -> relu
    y2, s2, ss2 = conv3x3_with_stats(a1, w2, (1, 1))
    a2 = bn_relu_apply(y2, s2, ss2, g2, b2, out_dtype=jnp.float32)
    return a2[..., :Cout]                         # strip lane padding


# ------------------------------ reference ----------------------------------

def _ref_block(x, w1, g1, b1, w2, g2, b2, stride):
    def conv(x, w, s):
        return jax.lax.conv_general_dilated(
            x, w, window_strides=s, padding=((1, 1), (1, 1)),
            dimension_numbers=("NHWC", "HWIO", "NHWC"))

    def bnr(y, g, b):
        mean = y.mean(axis=(0, 1, 2), keepdims=True)
        var = jnp.square(y - mean).mean(axis=(0, 1, 2), keepdims=True)
        return jnp.maximum((y - mean) * jax.lax.rsqrt(var + 1e-5) * g + b, 0.0)

    y = bnr(conv(x, w1, stride), g1, b1)
    y = bnr(conv(y, w2, (1, 1)), g2, b2)
    return y


# ------------------------------ main ----------------------------------------

if __name__ == "__main__":
    key = jax.random.PRNGKey(0)
    k_x, k_w1, k_w2 = jax.random.split(key, 3)

    N, Cin, H, W = 2, 4, 16, 16
    Cout = 8
    stride = (1, 1)

    # PyTorch-style NCHW input, converted to NHWC for the kernel.
    x_nchw = jax.random.normal(k_x, (N, Cin, H, W), dtype=jnp.float32)
    x_nhwc = jnp.transpose(x_nchw, (0, 2, 3, 1))

    # Deterministic parameter init (conv weights ~ kaiming-ish scale, BN = 1/0
    # as in nn.BatchNorm2d defaults).  Conv weights built directly in HWIO.
    w1 = jax.random.normal(k_w1, (3, 3, Cin, Cout), dtype=jnp.float32) \
        * (2.0 / (9 * Cin)) ** 0.5
    w2 = jax.random.normal(k_w2, (3, 3, Cout, Cout), dtype=jnp.float32) \
        * (2.0 / (9 * Cout)) ** 0.5
    g1 = jnp.ones((Cout,), jnp.float32)
    b1 = jnp.zeros((Cout,), jnp.float32)
    g2 = jnp.ones((Cout,), jnp.float32)
    b2 = jnp.zeros((Cout,), jnp.float32)

    out = basic_block(x_nhwc, w1, g1, b1, w2, g2, b2, stride=stride)
    out = jax.block_until_ready(out)

    ref = jax.block_until_ready(
        _ref_block(x_nhwc, w1, g1, b1, w2, g2, b2, stride))
    assert out.shape == (N, H, W, Cout)
    # Tolerance reflects bf16 MXU inputs (f32 accumulation); reference is f32.
    assert jnp.allclose(out, ref, rtol=2e-2, atol=2e-2), \
        f"max abs err {jnp.max(jnp.abs(out - ref))}"

    print("KERNEL_OK")
</pallas_src>

<mosaic_0001>
module attributes {stable_mosaic.version = 11 : i64} {
  func.func @_conv3x3_stats_kernel(%arg0: i32, %arg1: memref<1x18x18x128xbf16, #tpu.memory_space<vmem>>, %arg2: memref<3x3x128x128xbf16, #tpu.memory_space<vmem>>, %arg3: memref<1x16x16x128xf32, #tpu.memory_space<vmem>>, %arg4: memref<1x1x128xf32, #tpu.memory_space<vmem>>, %arg5: memref<1x1x128xf32, #tpu.memory_space<vmem>>, %arg6: memref<256x128xf32, #tpu.memory_space<vmem>>) attributes {dimension_semantics = [#tpu.dimension_semantics<parallel>], iteration_bounds = array<i64: 2>, scalar_prefetch = 0 : i64, scratch_operands = 1 : i64, tpu.core_type = #tpu.core_type<tc>, window_params = [{transform_indices = @transform_0, window_bounds = array<i64: 1, 18, 18, 128>}, {pipeline_mode = #tpu.pipeline_mode<synchronous>, transform_indices = @transform_1, window_bounds = array<i64: 3, 3, 128, 128>}, {transform_indices = @transform_2, window_bounds = array<i64: 1, 16, 16, 128>}, {transform_indices = @transform_3, window_bounds = array<i64: 1, 1, 128>}, {transform_indices = @transform_4, window_bounds = array<i64: 1, 1, 128>}]} {
    %cst = arith.constant 0.000000e+00 : f32
    %0 = vector.broadcast %cst : f32 to vector<256x128xf32>
    %c0 = arith.constant 0 : index
    %c0_0 = arith.constant 0 : index
    %1 = vector.load %arg6[%c0, %c0_0] : memref<256x128xf32, #tpu.memory_space<vmem>>, vector<256x128xf32>
    tpu.vector_store %arg6[%c0, %c0_0], %0 {strides = array<i32>} : memref<256x128xf32, #tpu.memory_space<vmem>>, vector<256x128xf32>,
    %c0_1 = arith.constant 0 : index
    %c0_2 = arith.constant 0 : index
    %c0_3 = arith.constant 0 : index
    %c0_4 = arith.constant 0 : index
    %2 = vector.load %arg1[%c0_1, %c0_2, %c0_3, %c0_4] : memref<1x18x18x128xbf16, #tpu.memory_space<vmem>>, vector<1x16x16x128xbf16>
    %3 = vector.shape_cast %2 : vector<1x16x16x128xbf16> to vector<16x16x128xbf16>
    %c0_5 = arith.constant 0 : index
    %c0_6 = arith.constant 0 : index
    %4 = vector.load %arg6[%c0_5, %c0_6] : memref<256x128xf32, #tpu.memory_space<vmem>>, vector<256x128xf32>
    %5 = vector.shape_cast %3 : vector<16x16x128xbf16> to vector<256x128xbf16>
    %c0_7 = arith.constant 0 : index
    %c0_8 = arith.constant 0 : index
    %c0_9 = arith.constant 0 : index
    %c0_10 = arith.constant 0 : index
    %6 = vector.load %arg2[%c0_7, %c0_8, %c0_9, %c0_10] : memref<3x3x128x128xbf16, #tpu.memory_space<vmem>>, vector<1x1x128x128xbf16>
    %7 = vector.shape_cast %6 : vector<1x1x128x128xbf16> to vector<128x128xbf16>
    %cst_11 = arith.constant dense<0.000000e+00> : vector<256x128xf32>
    %8 = tpu.matmul %5, %7, %cst_11 {dimension_numbers = #tpu.dot_dimension_numbers<[1], [0], [0], [1], [0, 0, 1, 1], [], []>} : vector<256x128xbf16>, vector<128x128xbf16>, vector<256x128xf32> -> vector<256x128xf32>
    %9 = arith.addf %4, %8 : vector<256x128xf32>
    %c0_12 = arith.constant 0 : index
    %c0_13 = arith.constant 0 : index
    %10 = vector.load %arg6[%c0_12, %c0_13] : memref<256x128xf32, #tpu.memory_space<vmem>>, vector<256x128xf32>
    tpu.vector_store %arg6[%c0_12, %c0_13], %9 {strides = array<i32>} : memref<256x128xf32, #tpu.memory_space<vmem>>, vector<256x128xf32>,
    %c0_14 = arith.constant 0 : index
    %c0_15 = arith.constant 0 : index
    %c1 = arith.constant 1 : index
    %c0_16 = arith.constant 0 : index
    %11 = vector.load %arg1[%c0_14, %c0_15, %c1, %c0_16] : memref<1x18x18x128xbf16, #tpu.memory_space<vmem>>, vector<1x16x16x128xbf16>
    %12 = vector.shape_cast %11 : vector<1x16x16x128xbf16> to vector<16x16x128xbf16>
    %c0_17 = arith.constant 0 : index
    %c0_18 = arith.constant 0 : index
    %13 = vector.load %arg6[%c0_17, %c0_18] : memref<256x128xf32, #tpu.memory_space<vmem>>, vector<256x128xf32>
    %14 = vector.shape_cast %12 : vector<16x16x128xbf16> to vector<256x128xbf16>
    %c0_19 = arith.constant 0 : index
    %c1_20 = arith.constant 1 : index
    %c0_21 = arith.constant 0 : index
    %c0_22 = arith.constant 0 : index
    %15 = vector.load %arg2[%c0_19, %c1_20, %c0_21, %c0_22] : memref<3x3x128x128xbf16, #tpu.memory_space<vmem>>, vector<1x1x128x128xbf16>
    %16 = vector.shape_cast %15 : vector<1x1x128x128xbf16> to vector<128x128xbf16>
    %cst_23 = arith.constant dense<0.000000e+00> : vector<256x128xf32>
    %17 = tpu.matmul %14, %16, %cst_23 {dimension_numbers = #tpu.dot_dimension_numbers<[1], [0], [0], [1], [0, 0, 1, 1], [], []>} : vector<256x128xbf16>, vector<128x128xbf16>, vector<256x128xf32> -> vector<256x128xf32>
    %18 = arith.addf %13, %17 : vector<256x128xf32>
    %c0_24 = arith.constant 0 : index
    %c0_25 = arith.constant 0 : index
    %19 = vector.load %arg6[%c0_24, %c0_25] : memref<256x128xf32, #tpu.memory_space<vmem>>, vector<256x128xf32>
    tpu.vector_store %arg6[%c0_24, %c0_25], %18 {strides = array<i32>} : memref<256x128xf32, #tpu.memory_space<vmem>>, vector<256x128xf32>,
    %c0_26 = arith.constant 0 : index
    %c0_27 = arith.constant 0 : index
    %c2 = arith.constant 2 : index
    %c0_28 = arith.constant 0 : index
    %20 = vector.load %arg1[%c0_26, %c0_27, %c2, %c0_28] : memref<1x18x18x128xbf16, #tpu.memory_space<vmem>>, vector<1x16x16x128xbf16>
    %21 = vector.shape_cast %20 : vector<1x16x16x128xbf16> to vector<16x16x128xbf16>
    %c0_29 = arith.constant 0 : index
    %c0_30 = arith.constant 0 : index
    %22 = vector.load %arg6[%c0_29, %c0_30] : memref<256x128xf32, #tpu.memory_space<vmem>>, vector<256x128xf32>
    %23 = vector.shape_cast %21 : vector<16x16x128xbf16> to vector<256x128xbf16>
    %c0_31 = arith.constant 0 : index
    %c2_32 = arith.constant 2 : index
    %c0_33 = arith.constant 0 : index
    %c0_34 = arith.constant 0 : index
    %24 = vector.load %arg2[%c0_31, %c2_32, %c0_33, %c0_34] : memref<3x3x128x128xbf16, #tpu.memory_space<vmem>>, vector<1x1x128x128xbf16>
    %25 = vector.shape_cast %24 : vector<1x1x128x128xbf16> to vector<128x128xbf16>
    %cst_35 = arith.constant dense<0.000000e+00> : vector<256x128xf32>
    %26 = tpu.matmul %23, %25, %cst_35 {dimension_numbers = #tpu.dot_dimension_numbers<[1], [0], [0], [1], [0, 0, 1, 1], [], []>} : vector<256x128xbf16>, vector<128x128xbf16>, vector<256x128xf32> -> vector<256x128xf32>
    %27 = arith.addf %22, %26 : vector<256x128xf32>
    %c0_36 = arith.constant 0 : index
    %c0_37 = arith.constant 0 : index
    %28 = vector.load %arg6[%c0_36, %c0_37] : memref<256x128xf32, #tpu.memory_space<vmem>>, vector<256x128xf32>
    tpu.vector_store %arg6[%c0_36, %c0_37], %27 {strides = array<i32>} : memref<256x128xf32, #tpu.memory_space<vmem>>, vector<256x128xf32>,
    %c0_38 = arith.constant 0 : index
    %c1_39 = arith.constant 1 : index
    %c0_40 = arith.constant 0 : index
    %c0_41 = arith.constant 0 : index
    %29 = vector.load %arg1[%c0_38, %c1_39, %c0_40, %c0_41] : memref<1x18x18x128xbf16, #tpu.memory_space<vmem>>, vector<1x16x16x128xbf16>
    %30 = vector.shape_cast %29 : vector<1x16x16x128xbf16> to vector<16x16x128xbf16>
    %c0_42 = arith.constant 0 : index
    %c0_43 = arith.constant 0 : index
    %31 = vector.load %arg6[%c0_42, %c0_43] : memref<256x128xf32, #tpu.memory_space<vmem>>, vector<256x128xf32>
    %32 = vector.shape_cast %30 : vector<16x16x128xbf16> to vector<256x128xbf16>
    %c1_44 = arith.constant 1 : index
    %c0_45 = arith.constant 0 : index
    %c0_46 = arith.constant 0 : index
    %c0_47 = arith.constant 0 : index
    %33 = vector.load %arg2[%c1_44, %c0_45, %c0_46, %c0_47] : memref<3x3x128x128xbf16, #tpu.memory_space<vmem>>, vector<1x1x128x128xbf16>
    %34 = vector.shape_cast %33 : vector<1x1x128x128xbf16> to vector<128x128xbf16>
    %cst_48 = arith.constant dense<0.000000e+00> : vector<256x128xf32>
    %35 = tpu.matmul %32, %34, %cst_48 {dimension_numbers = #tpu.dot_dimension_numbers<[1], [0], [0], [1], [0, 0, 1, 1], [], []>} : vector<256x128xbf16>, vector<128x128xbf16>, vector<256x128xf32> -> vector<256x128xf32>
    %36 = arith.addf %31, %35 : vector<256x128xf32>
    %c0_49 = arith.constant 0 : index
    %c0_50 = arith.constant 0 : index
    %37 = vector.load %arg6[%c0_49, %c0_50] : memref<256x128xf32, #tpu.memory_space<vmem>>, vector<256x128xf32>
    tpu.vector_store %arg6[%c0_49, %c0_50], %36 {strides = array<i32>} : memref<256x128xf32, #tpu.memory_space<vmem>>, vector<256x128xf32>,
    %c0_51 = arith.constant 0 : index
    %c1_52 = arith.constant 1 : index
    %c1_53 = arith.constant 1 : index
    %c0_54 = arith.constant 0 : index
    %38 = vector.load %arg1[%c0_51, %c1_52, %c1_53, %c0_54] : memref<1x18x18x128xbf16, #tpu.memory_space<vmem>>, vector<1x16x16x128xbf16>
    %39 = vector.shape_cast %38 : vector<1x16x16x128xbf16> to vector<16x16x128xbf16>
    %c0_55 = arith.constant 0 : index
    %c0_56 = arith.constant 0 : index
    %40 = vector.load %arg6[%c0_55, %c0_56] : memref<256x128xf32, #tpu.memory_space<vmem>>, vector<256x128xf32>
    %41 = vector.shape_cast %39 : vector<16x16x128xbf16> to vector<256x128xbf16>
    %c1_57 = arith.constant 1 : index
    %c1_58 = arith.constant 1 : index
    %c0_59 = arith.constant 0 : index
    %c0_60 = arith.constant 0 : index
    %42 = vector.load %arg2[%c1_57, %c1_58, %c0_59, %c0_60] : memref<3x3x128x128xbf16, #tpu.memory_space<vmem>>, vector<1x1x128x128xbf16>
    %43 = vector.shape_cast %42 : vector<1x1x128x128xbf16> to vector<128x128xbf16>
    %cst_61 = arith.constant dense<0.000000e+00> : vector<256x128xf32>
    %44 = tpu.matmul %41, %43, %cst_61 {dimension_numbers = #tpu.dot_dimension_numbers<[1], [0], [0], [1], [0, 0, 1, 1], [], []>} : vector<256x128xbf16>, vector<128x128xbf16>, vector<256x128xf32> -> vector<256x128xf32>
    %45 = arith.addf %40, %44 : vector<256x128xf32>
    %c0_62 = arith.constant 0 : index
    %c0_63 = arith.constant 0 : index
    %46 = vector.load %arg6[%c0_62, %c0_63] : memref<256x128xf32, #tpu.memory_space<vmem>>, vector<256x128xf32>
    tpu.vector_store %arg6[%c0_62, %c0_63], %45 {strides = array<i32>} : memref<256x128xf32, #tpu.memory_space<vmem>>, vector<256x128xf32>,
    %c0_64 = arith.constant 0 : index
    %c1_65 = arith.constant 1 : index
    %c2_66 = arith.constant 2 : index
    %c0_67 = arith.constant 0 : index
    %47 = vector.load %arg1[%c0_64, %c1_65, %c2_66, %c0_67] : memref<1x18x18x128xbf16, #tpu.memory_space<vmem>>, vector<1x16x16x128xbf16>
    %48 = vector.shape_cast %47 : vector<1x16x16x128xbf16> to vector<16x16x128xbf16>
    %c0_68 = arith.constant 0 : index
    %c0_69 = arith.constant 0 : index
    %49 = vector.load %arg6[%c0_68, %c0_69] : memref<256x128xf32, #tpu.memory_space<vmem>>, vector<256x128xf32>
    %50 = vector.shape_cast %48 : vector<16x16x128xbf16> to vector<256x128xbf16>
    %c1_70 = arith.constant 1 : index
    %c2_71 = arith.constant 2 : index
    %c0_72 = arith.constant 0 : index
    %c0_73 = arith.constant 0 : index
    %51 = vector.load %arg2[%c1_70, %c2_71, %c0_72, %c0_73] : memref<3x3x128x128xbf16, #tpu.memory_space<vmem>>, vector<1x1x128x128xbf16>
    %52 = vector.shape_cast %51 : vector<1x1x128x128xbf16> to vector<128x128xbf16>
    %cst_74 = arith.constant dense<0.000000e+00> : vector<256x128xf32>
    %53 = tpu.matmul %50, %52, %cst_74 {dimension_numbers = #tpu.dot_dimension_numbers<[1], [0], [0], [1], [0, 0, 1, 1], [], []>} : vector<256x128xbf16>, vector<128x128xbf16>, vector<256x128xf32> -> vector<256x128xf32>
    %54 = arith.addf %49, %53 : vector<256x128xf32>
    %c0_75 = arith.constant 0 : index
    %c0_76 = arith.constant 0 : index
    %55 = vector.load %arg6[%c0_75, %c0_76] : memref<256x128xf32, #tpu.memory_space<vmem>>, vector<256x128xf32>
    tpu.vector_store %arg6[%c0_75, %c0_76], %54 {strides = array<i32>} : memref<256x128xf32, #tpu.memory_space<vmem>>, vector<256x128xf32>,
    %c0_77 = arith.constant 0 : index
    %c2_78 = arith.constant 2 : index
    %c0_79 = arith.constant 0 : index
    %c0_80 = arith.constant 0 : index
    %56 = vector.load %arg1[%c0_77, %c2_78, %c0_79, %c0_80] : memref<1x18x18x128xbf16, #tpu.memory_space<vmem>>, vector<1x16x16x128xbf16>
    %57 = vector.shape_cast %56 : vector<1x16x16x128xbf16> to vector<16x16x128xbf16>
    %c0_81 = arith.constant 0 : index
    %c0_82 = arith.constant 0 : index
    %58 = vector.load %arg6[%c0_81, %c0_82] : memref<256x128xf32, #tpu.memory_space<vmem>>, vector<256x128xf32>
    %59 = vector.shape_cast %57 : vector<16x16x128xbf16> to vector<256x128xbf16>
    %c2_83 = arith.constant 2 : index
    %c0_84 = arith.constant 0 : index
    %c0_85 = arith.constant 0 : index
    %c0_86 = arith.constant 0 : index
    %60 = vector.load %arg2[%c2_83, %c0_84, %c0_85, %c0_86] : memref<3x3x128x128xbf16, #tpu.memory_space<vmem>>, vector<1x1x128x128xbf16>
    %61 = vector.shape_cast %60 : vector<1x1x128x128xbf16> to vector<128x128xbf16>
    %cst_87 = arith.constant dense<0.000000e+00> : vector<256x128xf32>
    %62 = tpu.matmul %59, %61, %cst_87 {dimension_numbers = #tpu.dot_dimension_numbers<[1], [0], [0], [1], [0, 0, 1, 1], [], []>} : vector<256x128xbf16>, vector<128x128xbf16>, vector<256x128xf32> -> vector<256x128xf32>
    %63 = arith.addf %58, %62 : vector<256x128xf32>
    %c0_88 = arith.constant 0 : index
    %c0_89 = arith.constant 0 : index
    %64 = vector.load %arg6[%c0_88, %c0_89] : memref<256x128xf32, #tpu.memory_space<vmem>>, vector<256x128xf32>
    tpu.vector_store %arg6[%c0_88, %c0_89], %63 {strides = array<i32>} : memref<256x128xf32, #tpu.memory_space<vmem>>, vector<256x128xf32>,
    %c0_90 = arith.constant 0 : index
    %c2_91 = arith.constant 2 : index
    %c1_92 = arith.constant 1 : index
    %c0_93 = arith.constant 0 : index
    %65 = vector.load %arg1[%c0_90, %c2_91, %c1_92, %c0_93] : memref<1x18x18x128xbf16, #tpu.memory_space<vmem>>, vector<1x16x16x128xbf16>
    %66 = vector.shape_cast %65 : vector<1x16x16x128xbf16> to vector<16x16x128xbf16>
    %c0_94 = arith.constant 0 : index
    %c0_95 = arith.constant 0 : index
    %67 = vector.load %arg6[%c0_94, %c0_95] : memref<256x128xf32, #tpu.memory_space<vmem>>, vector<256x128xf32>
    %68 = vector.shape_cast %66 : vector<16x16x128xbf16> to vector<256x128xbf16>
    %c2_96 = arith.constant 2 : index
    %c1_97 = arith.constant 1 : index
    %c0_98 = arith.constant 0 : index
    %c0_99 = arith.constant 0 : index
    %69 = vector.load %arg2[%c2_96, %c1_97, %c0_98, %c0_99] : memref<3x3x128x128xbf16, #tpu.memory_space<vmem>>, vector<1x1x128x128xbf16>
    %70 = vector.shape_cast %69 : vector<1x1x128x128xbf16> to vector<128x128xbf16>
    %cst_100 = arith.constant dense<0.000000e+00> : vector<256x128xf32>
    %71 = tpu.matmul %68, %70, %cst_100 {dimension_numbers = #tpu.dot_dimension_numbers<[1], [0], [0], [1], [0, 0, 1, 1], [], []>} : vector<256x128xbf16>, vector<128x128xbf16>, vector<256x128xf32> -> vector<256x128xf32>
    %72 = arith.addf %67, %71 : vector<256x128xf32>
    %c0_101 = arith.constant 0 : index
    %c0_102 = arith.constant 0 : index
    %73 = vector.load %arg6[%c0_101, %c0_102] : memref<256x128xf32, #tpu.memory_space<vmem>>, vector<256x128xf32>
    tpu.vector_store %arg6[%c0_101, %c0_102], %72 {strides = array<i32>} : memref<256x128xf32, #tpu.memory_space<vmem>>, vector<256x128xf32>,
    %c0_103 = arith.constant 0 : index
    %c2_104 = arith.constant 2 : index
    %c2_105 = arith.constant 2 : index
    %c0_106 = arith.constant 0 : index
    %74 = vector.load %arg1[%c0_103, %c2_104, %c2_105, %c0_106] : memref<1x18x18x128xbf16, #tpu.memory_space<vmem>>, vector<1x16x16x128xbf16>
    %75 = vector.shape_cast %74 : vector<1x16x16x128xbf16> to vector<16x16x128xbf16>
    %c0_107 = arith.constant 0 : index
    %c0_108 = arith.constant 0 : index
    %76 = vector.load %arg6[%c0_107, %c0_108] : memref<256x128xf32, #tpu.memory_space<vmem>>, vector<256x128xf32>
    %77 = vector.shape_cast %75 : vector<16x16x128xbf16> to vector<256x128xbf16>
    %c2_109 = arith.constant 2 : index
    %c2_110 = arith.constant 2 : index
    %c0_111 = arith.constant 0 : index
    %c0_112 = arith.constant 0 : index
    %78 = vector.load %arg2[%c2_109, %c2_110, %c0_111, %c0_112] : memref<3x3x128x128xbf16, #tpu.memory_space<vmem>>, vector<1x1x128x128xbf16>
    %79 = vector.shape_cast %78 : vector<1x1x128x128xbf16> to vector<128x128xbf16>
    %cst_113 = arith.constant dense<0.000000e+00> : vector<256x128xf32>
    %80 = tpu.matmul %77, %79, %cst_113 {dimension_numbers = #tpu.dot_dimension_numbers<[1], [0], [0], [1], [0, 0, 1, 1], [], []>} : vector<256x128xbf16>, vector<128x128xbf16>, vector<256x128xf32> -> vector<256x128xf32>
    %81 = arith.addf %76, %80 : vector<256x128xf32>
    %c0_114 = arith.constant 0 : index
    %c0_115 = arith.constant 0 : index
    %82 = vector.load %arg6[%c0_114, %c0_115] : memref<256x128xf32, #tpu.memory_space<vmem>>, vector<256x128xf32>
    tpu.vector_store %arg6[%c0_114, %c0_115], %81 {strides = array<i32>} : memref<256x128xf32, #tpu.memory_space<vmem>>, vector<256x128xf32>,
    %c0_116 = arith.constant 0 : index
    %c0_117 = arith.constant 0 : index
    %83 = vector.load %arg6[%c0_116, %c0_117] : memref<256x128xf32, #tpu.memory_space<vmem>>, vector<256x128xf32>
    %84 = vector.shape_cast %83 : vector<256x128xf32> to vector<1x16x16x128xf32>
    %c0_118 = arith.constant 0 : index
    %c0_119 = arith.constant 0 : index
    %c0_120 = arith.constant 0 : index
    %c0_121 = arith.constant 0 : index
    %85 = vector.load %arg3[%c0_118, %c0_119, %c0_120, %c0_121] : memref<1x16x16x128xf32, #tpu.memory_space<vmem>>, vector<1x16x16x128xf32>
    tpu.vector_store %arg3[%c0_118, %c0_119, %c0_120, %c0_121], %84 {strides = array<i32>} : memref<1x16x16x128xf32, #tpu.memory_space<vmem>>, vector<1x16x16x128xf32>,
    %cst_122 = arith.constant dense<0.000000e+00> : vector<128xf32>
    %86 = vector.multi_reduction <add>, %83, %cst_122 [0] : vector<256x128xf32> to vector<128xf32>
    %87 = vector.shape_cast %86 : vector<128xf32> to vector<1x128xf32>
    %88 = vector.shape_cast %87 : vector<1x128xf32> to vector<1x1x128xf32>
    %c0_123 = arith.constant 0 : index
    %c0_124 = arith.constant 0 : index
    %c0_125 = arith.constant 0 : index
    %89 = vector.load %arg4[%c0_123, %c0_124, %c0_125] : memref<1x1x128xf32, #tpu.memory_space<vmem>>, vector<1x1x128xf32>
    tpu.vector_store %arg4[%c0_123, %c0_124, %c0_125], %88 {strides = array<i32>} : memref<1x1x128xf32, #tpu.memory_space<vmem>>, vector<1x1x128xf32>,
    %90 = arith.mulf %83, %83 : vector<256x128xf32>
    %cst_126 = arith.constant dense<0.000000e+00> : vector<128xf32>
    %91 = vector.multi_reduction <add>, %90, %cst_126 [0] : vector<256x128xf32> to vector<128xf32>
    %92 = vector.shape_cast %91 : vector<128xf32> to vector<1x128xf32>
    %93 = vector.shape_cast %92 : vector<1x128xf32> to vector<1x1x128xf32>
    %c0_127 = arith.constant 0 : index
    %c0_128 = arith.constant 0 : index
    %c0_129 = arith.constant 0 : index
    %94 = vector.load %arg5[%c0_127, %c0_128, %c0_129] : memref<1x1x128xf32, #tpu.memory_space<vmem>>, vector<1x1x128xf32>
    tpu.vector_store %arg5[%c0_127, %c0_128, %c0_129], %93 {strides = array<i32>} : memref<1x1x128xf32, #tpu.memory_space<vmem>>, vector<1x1x128xf32>,
    return
  }
  func.func @transform_0(%arg0: i32) -> (i32, i32, i32, i32) {
    %c0_i32 = arith.constant 0 : i32
    %c0_i32_0 = arith.constant 0 : i32
    %c0_i32_1 = arith.constant 0 : i32
    %c0_i32_2 = arith.constant 0 : i32
    return %arg0, %c0_i32, %c0_i32_0, %c0_i32_1 : i32, i32, i32, i32
  }
  func.func @transform_1(%arg0: i32) -> (i32, i32, i32, i32) {
    %c0_i32 = arith.constant 0 : i32
    %c0_i32_0 = arith.constant 0 : i32
    %c0_i32_1 = arith.constant 0 : i32
    %c0_i32_2 = arith.constant 0 : i32
    %c0_i32_3 = arith.constant 0 : i32
    return %c0_i32, %c0_i32_0, %c0_i32_1, %c0_i32_2 : i32, i32, i32, i32
  }
  func.func @transform_2(%arg0: i32) -> (i32, i32, i32, i32) {
    %c0_i32 = arith.constant 0 : i32
    %c0_i32_0 = arith.constant 0 : i32
    %c0_i32_1 = arith.constant 0 : i32
    %c0_i32_2 = arith.constant 0 : i32
    return %arg0, %c0_i32, %c0_i32_0, %c0_i32_1 : i32, i32, i32, i32
  }
  func.func @transform_3(%arg0: i32) -> (i32, i32, i32) {
    %c0_i32 = arith.constant 0 : i32
    %c0_i32_0 = arith.constant 0 : i32
    %c0_i32_1 = arith.constant 0 : i32
    return %arg0, %c0_i32, %c0_i32_0 : i32, i32, i32
  }
  func.func @transform_4(%arg0: i32) -> (i32, i32, i32) {
    %c0_i32 = arith.constant 0 : i32
    %c0_i32_0 = arith.constant 0 : i32
    %c0_i32_1 = arith.constant 0 : i32
    return %arg0, %c0_i32, %c0_i32_0 : i32, i32, i32
  }
}

module attributes {stable_mosaic.version = 11 : i64} {
  func.func @_bn_relu_kernel(%arg0: i32, %arg1: memref<1x16x16x128xf32, #tpu.memory_space<vmem>>, %arg2: memref<1x128xf32, #tpu.memory_space<vmem>>, %arg3: memref<1x128xf32, #tpu.memory_space<vmem>>, %arg4: memref<1x16x16x128xbf16, #tpu.memory_space<vmem>>) attributes {dimension_semantics = [#tpu.dimension_semantics<parallel>], iteration_bounds = array<i64: 2>, scalar_prefetch = 0 : i64, scratch_operands = 0 : i64, tpu.core_type = #tpu.core_type<tc>, window_params = [{transform_indices = @transform_0, window_bounds = array<i64: 1, 16, 16, 128>}, {pipeline_mode = #tpu.pipeline_mode<synchronous>, transform_indices = @transform_1, window_bounds = array<i64: 1, 128>}, {pipeline_mode = #tpu.pipeline_mode<synchronous>, transform_indices = @transform_2, window_bounds = array<i64: 1, 128>}, {transform_indices = @transform_3, window_bounds = array<i64: 1, 16, 16, 128>}]} {
    %c0 = arith.constant 0 : index
    %c0_0 = arith.constant 0 : index
    %c0_1 = arith.constant 0 : index
    %c0_2 = arith.constant 0 : index
    %0 = vector.load %arg1[%c0, %c0_0, %c0_1, %c0_2] : memref<1x16x16x128xf32, #tpu.memory_space<vmem>>, vector<1x16x16x128xf32>
    %c0_3 = arith.constant 0 : index
    %c0_4 = arith.constant 0 : index
    %1 = vector.load %arg2[%c0_3, %c0_4] : memref<1x128xf32, #tpu.memory_space<vmem>>, vector<1x128xf32>
    %2 = vector.shape_cast %1 : vector<1x128xf32> to vector<1x1x1x128xf32>
    %c0_5 = arith.constant 0 : index
    %c0_6 = arith.constant 0 : index
    %3 = vector.load %arg3[%c0_5, %c0_6] : memref<1x128xf32, #tpu.memory_space<vmem>>, vector<1x128xf32>
    %4 = vector.shape_cast %3 : vector<1x128xf32> to vector<1x1x1x128xf32>
    %5 = vector.broadcast %2 : vector<1x1x1x128xf32> to vector<1x16x16x128xf32>
    %6 = arith.mulf %0, %5 : vector<1x16x16x128xf32>
    %7 = vector.broadcast %4 : vector<1x1x1x128xf32> to vector<1x16x16x128xf32>
    %8 = arith.addf %6, %7 : vector<1x16x16x128xf32>
    %cst = arith.constant 0.000000e+00 : f32
    %9 = vector.broadcast %cst : f32 to vector<1x16x16x128xf32>
    %10 = arith.maximumf %8, %9 : vector<1x16x16x128xf32>
    %11 = arith.truncf %10 : vector<1x16x16x128xf32> to vector<1x16x16x128xbf16>
    %c0_7 = arith.constant 0 : index
    %c0_8 = arith.constant 0 : index
    %c0_9 = arith.constant 0 : index
    %c0_10 = arith.constant 0 : index
    %12 = vector.load %arg4[%c0_7, %c0_8, %c0_9, %c0_10] : memref<1x16x16x128xbf16, #tpu.memory_space<vmem>>, vector<1x16x16x128xbf16>
    tpu.vector_store %arg4[%c0_7, %c0_8, %c0_9, %c0_10], %11 {strides = array<i32>} : memref<1x16x16x128xbf16, #tpu.memory_space<vmem>>, vector<1x16x16x128xbf16>,
    return
  }
  func.func @transform_0(%arg0: i32) -> (i32, i32, i32, i32) {
    %c0_i32 = arith.constant 0 : i32
    %c0_i32_0 = arith.constant 0 : i32
    %c0_i32_1 = arith.constant 0 : i32
    %c0_i32_2 = arith.constant 0 : i32
    return %arg0, %c0_i32, %c0_i32_0, %c0_i32_1 : i32, i32, i32, i32
  }
  func.func @transform_1(%arg0: i32) -> (i32, i32) {
    %c0_i32 = arith.constant 0 : i32
    %c0_i32_0 = arith.constant 0 : i32
    %c0_i32_1 = arith.constant 0 : i32
    return %c0_i32, %c0_i32_0 : i32, i32
  }
  func.func @transform_2(%arg0: i32) -> (i32, i32) {
    %c0_i32 = arith.constant 0 : i32
    %c0_i32_0 = arith.constant 0 : i32
    %c0_i32_1 = arith.constant 0 : i32
    return %c0_i32, %c0_i32_0 : i32, i32
  }
  func.func @transform_3(%arg0: i32) -> (i32, i32, i32, i32) {
    %c0_i32 = arith.constant 0 : i32
    %c0_i32_0 = arith.constant 0 : i32
    %c0_i32_1 = arith.constant 0 : i32
    %c0_i32_2 = arith.constant 0 : i32
    return %arg0, %c0_i32, %c0_i32_0, %c0_i32_1 : i32, i32, i32, i32
  }
}

module attributes {stable_mosaic.version = 11 : i64} {
  func.func @_bn_relu_kernel(%arg0: i32, %arg1: memref<1x16x16x128xf32, #tpu.memory_space<vmem>>, %arg2: memref<1x128xf32, #tpu.memory_space<vmem>>, %arg3: memref<1x128xf32, #tpu.memory_space<vmem>>, %arg4: memref<1x16x16x128xf32, #tpu.memory_space<vmem>>) attributes {dimension_semantics = [#tpu.dimension_semantics<parallel>], iteration_bounds = array<i64: 2>, scalar_prefetch = 0 : i64, scratch_operands = 0 : i64, tpu.core_type = #tpu.core_type<tc>, window_params = [{transform_indices = @transform_0, window_bounds = array<i64: 1, 16, 16, 128>}, {pipeline_mode = #tpu.pipeline_mode<synchronous>, transform_indices = @transform_1, window_bounds = array<i64: 1, 128>}, {pipeline_mode = #tpu.pipeline_mode<synchronous>, transform_indices = @transform_2, window_bounds = array<i64: 1, 128>}, {transform_indices = @transform_3, window_bounds = array<i64: 1, 16, 16, 128>}]} {
    %c0 = arith.constant 0 : index
    %c0_0 = arith.constant 0 : index
    %c0_1 = arith.constant 0 : index
    %c0_2 = arith.constant 0 : index
    %0 = vector.load %arg1[%c0, %c0_0, %c0_1, %c0_2] : memref<1x16x16x128xf32, #tpu.memory_space<vmem>>, vector<1x16x16x128xf32>
    %c0_3 = arith.constant 0 : index
    %c0_4 = arith.constant 0 : index
    %1 = vector.load %arg2[%c0_3, %c0_4] : memref<1x128xf32, #tpu.memory_space<vmem>>, vector<1x128xf32>
    %2 = vector.shape_cast %1 : vector<1x128xf32> to vector<1x1x1x128xf32>
    %c0_5 = arith.constant 0 : index
    %c0_6 = arith.constant 0 : index
    %3 = vector.load %arg3[%c0_5, %c0_6] : memref<1x128xf32, #tpu.memory_space<vmem>>, vector<1x128xf32>
    %4 = vector.shape_cast %3 : vector<1x128xf32> to vector<1x1x1x128xf32>
    %5 = vector.broadcast %2 : vector<1x1x1x128xf32> to vector<1x16x16x128xf32>
    %6 = arith.mulf %0, %5 : vector<1x16x16x128xf32>
    %7 = vector.broadcast %4 : vector<1x1x1x128xf32> to vector<1x16x16x128xf32>
    %8 = arith.addf %6, %7 : vector<1x16x16x128xf32>
    %cst = arith.constant 0.000000e+00 : f32
    %9 = vector.broadcast %cst : f32 to vector<1x16x16x128xf32>
    %10 = arith.maximumf %8, %9 : vector<1x16x16x128xf32>
    %c0_7 = arith.constant 0 : index
    %c0_8 = arith.constant 0 : index
    %c0_9 = arith.constant 0 : index
    %c0_10 = arith.constant 0 : index
    %11 = vector.load %arg4[%c0_7, %c0_8, %c0_9, %c0_10] : memref<1x16x16x128xf32, #tpu.memory_space<vmem>>, vector<1x16x16x128xf32>
    tpu.vector_store %arg4[%c0_7, %c0_8, %c0_9, %c0_10], %10 {strides = array<i32>} : memref<1x16x16x128xf32, #tpu.memory_space<vmem>>, vector<1x16x16x128xf32>,
    return
  }
  func.func @transform_0(%arg0: i32) -> (i32, i32, i32, i32) {
    %c0_i32 = arith.constant 0 : i32
    %c0_i32_0 = arith.constant 0 : i32
    %c0_i32_1 = arith.constant 0 : i32
    %c0_i32_2 = arith.constant 0 : i32
    return %arg0, %c0_i32, %c0_i32_0, %c0_i32_1 : i32, i32, i32, i32
  }
  func.func @transform_1(%arg0: i32) -> (i32, i32) {
    %c0_i32 = arith.constant 0 : i32
    %c0_i32_0 = arith.constant 0 : i32
    %c0_i32_1 = arith.constant 0 : i32
    return %c0_i32, %c0_i32_0 : i32, i32
  }
  func.func @transform_2(%arg0: i32) -> (i32, i32) {
    %c0_i32 = arith.constant 0 : i32
    %c0_i32_0 = arith.constant 0 : i32
    %c0_i32_1 = arith.constant 0 : i32
    return %c0_i32, %c0_i32_0 : i32, i32
  }
  func.func @transform_3(%arg0: i32) -> (i32, i32, i32, i32) {
    %c0_i32 = arith.constant 0 : i32
    %c0_i32_0 = arith.constant 0 : i32
    %c0_i32_1 = arith.constant 0 : i32
    %c0_i32_2 = arith.constant 0 : i32
    return %arg0, %c0_i32, %c0_i32_0, %c0_i32_1 : i32, i32, i32, i32
  }
}

</mosaic_0001>

<llo_original>
// kernel: basic_block.5
$region0: #{basic_block.5}
  #allocation0 [shape = 'u32[]', space=smem, size = 0x4, offset = 0x4, fixed_abs, tag = 'smem constant byte address 0x4 - core index']
  #allocation1 [shape = 'u32[144,128]{1,0:T(1,128)}', space=vmem, size = 0x12000, scoped, tag = 'internal scratch']
  %s0 = inlined_call_operand.vmem [shape: f32[2,16,16,128], index: 0, kind: input, shape index: {}]
  %s1 = inlined_call_operand.vmem [shape: f32[1,128], index: 1, kind: input, shape index: {}]
  %s2 = inlined_call_operand.vmem [shape: f32[1,128], index: 2, kind: input, shape index: {}]
  %s3 = inlined_call_operand.vmem [shape: bf16[2,16,16,128], index: 3, kind: output, shape index: {}]
  %s4 = sld [smem:[#allocation0]]
  $region45: #{basic_block.5} parent=0
    _
  %s6 = ssub.s32 1, %s4
  %s7 = scalar_select 0, %s6, %s4
  loop: start=0, step=1, limit=4
  $region2: #{basic_block.5} parent=0 // loop_pre_header
    _
  $region3: #{basic_block.5} parent=0 // loop_header
    %s9 = sphi 0, %s13
    %p10 = scmp.ge.s32.totalorder %s9, 4
    %s19 = sphi 0, %s21
    %s22 = sphi 0, %s19
    %s23 = sphi 0, %s22
    %s39 = sphi 0, %s23
    %s43 = sphi 0, %s43
    %s45 = sphi 0, %s43
    %s46 = sphi 0, %s45
    %s60 = sphi 0, %s46
    %s64 = sphi 0, %s64
    %s66 = sphi 0, %s64
    %s67 = sphi 0, %s66
    %s81 = sphi 0, %s67
    %s87 = sphi 0, %s89
    %s90 = sphi 0, %s87
    %s91 = sphi 0, %s90
    %s107 = sphi 0, %s91
  $region4: #{basic_block.5} parent=0 // loop_header_branch
    %12 = sbr.rel (%p10) target = $region8
  $region5: #{basic_block.5} parent=0 // loop_body
    %s14 = ssub.s32 %s9, 1
    %s15 = ssub.s32 %s9, 2
    %s16 = sadd.s32 %s9, 1
    %s17 = ssub.s32 %s9, %s16
    %p18 = scmp.eq.s32.totalorder %s17, 0
    %s20 = sadd.s32 %s19, 1
    %s21 = scalar_select %p18, %s19, %s20
    %p24 = pneg %p18
    %p25 = scmp.eq.s32.totalorder %s9, 1
    %p26 = por %p24, %p25
    %p27 = scmp.ne.s32.totalorder %s19, %s22
    %p28 = scmp.eq.s32.totalorder %s9, 0
    %p29 = por %p27, %p28
    %p30 = scmp.ne.s32.totalorder %s19, %s22
    %p31 = scmp.eq.s32.totalorder %s14, 1
    %p32 = por %p30, %p31
    %p33 = scmp.ne.s32.totalorder %s22, %s23
    %p34 = scmp.eq.s32.totalorder %s14, 0
    %p35 = por %p33, %p34
    %p36 = scmp.ne.s32.totalorder %s22, %s23
    %p37 = scmp.eq.s32.totalorder %s15, 1
    %p38 = por %p36, %p37
    %p40 = scmp.ne.s32.totalorder %s23, %s39
    %p41 = scmp.eq.s32.totalorder %s15, 0
    %p42 = por %p40, %p41
    %s44 = sadd.s32 %s43, 1
    %p47 = scmp.eq.s32.totalorder %s9, 1
    %p48 = scmp.ne.s32.totalorder %s43, %s45
    %p49 = scmp.eq.s32.totalorder %s9, 0
    %p50 = por %p48, %p49
    %p51 = scmp.ne.s32.totalorder %s43, %s45
    %p52 = scmp.eq.s32.totalorder %s14, 1
    %p53 = por %p51, %p52
    %p54 = scmp.ne.s32.totalorder %s45, %s46
    %p55 = scmp.eq.s32.totalorder %s14, 0
    %p56 = por %p54, %p55
    %p57 = scmp.ne.s32.totalorder %s45, %s46
    %p58 = scmp.eq.s32.totalorder %s15, 1
    %p59 = por %p57, %p58
    %p61 = scmp.ne.s32.totalorder %s46, %s60
    %p62 = scmp.eq.s32.totalorder %s15, 0
    %p63 = por %p61, %p62
    %s65 = sadd.s32 %s64, 1
    %p68 = scmp.eq.s32.totalorder %s9, 1
    %p69 = scmp.ne.s32.totalorder %s64, %s66
    %p70 = scmp.eq.s32.totalorder %s9, 0
    %p71 = por %p69, %p70
    %p72 = scmp.ne.s32.totalorder %s64, %s66
    %p73 = scmp.eq.s32.totalorder %s14, 1
    %p74 = por %p72, %p73
    %p75 = scmp.ne.s32.totalorder %s66, %s67
    %p76 = scmp.eq.s32.totalorder %s14, 0
    %p77 = por %p75, %p76
    %p78 = scmp.ne.s32.totalorder %s66, %s67
    %p79 = scmp.eq.s32.totalorder %s15, 1
    %p80 = por %p78, %p79
    %p82 = scmp.ne.s32.totalorder %s67, %s81
    %p83 = scmp.eq.s32.totalorder %s15, 0
    %p84 = por %p82, %p83
    %s85 = ssub.s32 %s9, %s16
    %p86 = scmp.eq.s32.totalorder %s85, 0
    %s88 = sadd.s32 %s87, 1
    %s89 = scalar_select %p86, %s87, %s88
    %p92 = pneg %p86
    %p93 = scmp.eq.s32.totalorder %s9, 1
    %p94 = por %p92, %p93
    %p95 = scmp.ne.s32.totalorder %s87, %s90
    %p96 = scmp.eq.s32.totalorder %s9, 0
    %p97 = por %p95, %p96
    %p98 = scmp.ne.s32.totalorder %s87, %s90
    %p99 = scmp.eq.s32.totalorder %s14, 1
    %p100 = por %p98, %p99
    %p101 = scmp.ne.s32.totalorder %s90, %s91
    %p102 = scmp.eq.s32.totalorder %s14, 0
    %p103 = por %p101, %p102
    %p104 = scmp.ne.s32.totalorder %s90, %s91
    %p105 = scmp.eq.s32.totalorder %s15, 1
    %p106 = por %p104, %p105
    %p108 = scmp.ne.s32.totalorder %s91, %s107
    %p109 = scmp.eq.s32.totalorder %s15, 0
    %p110 = por %p108, %p109
    %p111 = scmp.le.s32.totalorder 1, %s9
    %p112 = scmp.lt.s32.totalorder %s9, 3
    %p113 = pnand %p111, %p112
    %p114 = pneg %p113
    // Predicated region
    $region9: #{basic_block.5} parent=5 // pred_check
      _
    $region10: #{basic_block.5} parent=5 // pred_check_branch
      %116 = sbr.rel (%p113) target = $region12
    $region11: #{basic_block.5} parent=5 // pred_region
      %s117 = ssub.s32 %s9, 1
      // Predicated region
      $region13: #{basic_block.5} parent=11 // pred_check
        %p118 = pneg %p56
      $region14: #{basic_block.5} parent=11 // pred_check_branch
        %120 = sbr.rel (%p118) target = $region16
      $region15: #{basic_block.5} parent=11 // pred_region
        _
      $region16: #{basic_block.5} parent=11 // pred_fallthru
        _
      // Predicated region
      $region17: #{basic_block.5} parent=11 // pred_check
        %p121 = pneg %p77
      $region18: #{basic_block.5} parent=11 // pred_check_branch
        %123 = sbr.rel (%p121) target = $region20
      $region19: #{basic_block.5} parent=11 // pred_region
        _
      $region20: #{basic_block.5} parent=11 // pred_fallthru
        _
    $region12: #{basic_block.5} parent=5 // pred_fallthru
      _
    %p124 = scmp.lt.s32.totalorder %s9, 2
    // Predicated region
    $region21: #{basic_block.5} parent=5 // pred_check
      %p125 = pneg %p124
    $region22: #{basic_block.5} parent=5 // pred_check_branch
      %127 = sbr.rel (%p125) target = $region24
    $region23: #{basic_block.5} parent=5 // pred_region
      // Predicated region
      $region25: #{basic_block.5} parent=23 // pred_check
        %p128 = pneg %p29
      $region26: #{basic_block.5} parent=23 // pred_check_branch
        %130 = sbr.rel (%p128) target = $region28
      $region27: #{basic_block.5} parent=23 // pred_region
        %p131 = scmp.lt.s32.totalorder %s9, 1
        %s132 = scalar_select %p131, %s9, 1
        %s133 = smul.addr %s132, 32
        %s134 = smul.addr %s133, 8
        %s135 = scalar_lea.vmem %s0, %s134
      $region28: #{basic_block.5} parent=23 // pred_fallthru
        _
    $region24: #{basic_block.5} parent=5 // pred_fallthru
      _
    %p136 = scmp.le.s32.totalorder 1, %s9
    %p137 = scmp.lt.s32.totalorder %s9, 3
    %p138 = pnand %p136, %p137
    %p139 = pneg %p138
    // Predicated region
    $region29: #{basic_block.5} parent=5 // pred_check
      _
    $region30: #{basic_block.5} parent=5 // pred_check_branch
      %141 = sbr.rel (%p138) target = $region32
    $region31: #{basic_block.5} parent=5 // pred_region
      %s142 = ssub.s32 %s9, 1
      %p143 = scmp.lt.s32.totalorder %s14, 1
      %s144 = scalar_select %p143, %s14, 1
      %s145 = smul.addr %s144, 32
      %s146 = smul.addr %s145, 8
      %s147 = scalar_lea.vmem %s0, %s146
      %p148 = pneg %p35
      %p149 = pneg %p32
      %p150 = pneg %p56
      %p151 = pneg %p53
      %p152 = pneg %p77
      %p153 = pneg %p74
      %p154 = pneg %p103
      %p155 = pneg %p100
      %p156 = scmp.lt.s32.totalorder %s14, 1
      %s157 = scalar_select %p156, %s14, 1
      %s158 = smul.addr %s157, 32
      %s159 = smul.addr %s158, 4
      %s160 = scalar_lea.vmem %s3, %s159
      %p161 = scmp.lt.s32.totalorder %s14, 1
      %s162 = scalar_select %p161, %s14, 1
      %s163 = smul.addr %s162, 32
      %s164 = smul.addr %s163, 8
      %s165 = scalar_lea.vmem %s0, %s164
      %p166 = scmp.lt.s32.totalorder %s14, 1
      %s167 = scalar_select %p166, %s14, 1
      %s168 = smul.addr %s167, 32
      %s169 = smul.addr %s168, 4
      %s170 = scalar_lea.vmem %s3, %s169
      %v171 = vld [vmem:[%s165] sm:$0xff]
      %v172 = vld [vmem:[%s165 + $0x8] sm:$0xff]
      %v173 = vld [vmem:[%s165 + $0x10] sm:$0xff]
      %v174 = vld [vmem:[%s165 + $0x18] sm:$0xff]
      %v175 = vld [vmem:[%s165 + $0x20] sm:$0xff]
      %v176 = vld [vmem:[%s165 + $0x28] sm:$0xff]
      %v177 = vld [vmem:[%s165 + $0x30] sm:$0xff]
      %v178 = vld [vmem:[%s165 + $0x38] sm:$0xff]
      %v179 = vld [vmem:[%s165 + $0x40] sm:$0xff]
      %v180 = vld [vmem:[%s165 + $0x48] sm:$0xff]
      %v181 = vld [vmem:[%s165 + $0x50] sm:$0xff]
      %v182 = vld [vmem:[%s165 + $0x58] sm:$0xff]
      %v183 = vld [vmem:[%s165 + $0x60] sm:$0xff]
      %v184 = vld [vmem:[%s165 + $0x68] sm:$0xff]
      %v185 = vld [vmem:[%s165 + $0x70] sm:$0xff]
      %v186 = vld [vmem:[%s165 + $0x78] sm:$0xff]
      %v187 = vld [vmem:[%s165 + $0x80] sm:$0xff]
      %v188 = vld [vmem:[%s165 + $0x88] sm:$0xff]
      %v189 = vld [vmem:[%s165 + $0x90] sm:$0xff]
      %v190 = vld [vmem:[%s165 + $0x98] sm:$0xff]
      %v191 = vld [vmem:[%s165 + $0xa0] sm:$0xff]
      %v192 = vld [vmem:[%s165 + $0xa8] sm:$0xff]
      %v193 = vld [vmem:[%s165 + $0xb0] sm:$0xff]
      %v194 = vld [vmem:[%s165 + $0xb8] sm:$0xff]
      %v195 = vld [vmem:[%s165 + $0xc0] sm:$0xff]
      %v196 = vld [vmem:[%s165 + $0xc8] sm:$0xff]
      %v197 = vld [vmem:[%s165 + $0xd0] sm:$0xff]
      %v198 = vld [vmem:[%s165 + $0xd8] sm:$0xff]
      %v199 = vld [vmem:[%s165 + $0xe0] sm:$0xff]
      %v200 = vld [vmem:[%s165 + $0xe8] sm:$0xff]
      %v201 = vld [vmem:[%s165 + $0xf0] sm:$0xff]
      %v202 = vld [vmem:[%s165 + $0xf8] sm:$0xff]
      %v203 = vld [vmem:[%s1] sm:$0x1]
      %v204 = vld [vmem:[%s2] sm:$0x1]
      %v206 = vlaneseq
      %v207 = vshrl.u32 %v206, 7
      %v208 = vsub.s32 0, %v207
      %v209 = vrot.slane %v203, %v208
      %v211 = vmul.f32 %v171, %v209
      %v212 = vmul.f32 %v172, %v209
      %v213 = vmul.f32 %v173, %v209
      %v214 = vmul.f32 %v174, %v209
      %v215 = vmul.f32 %v175, %v209
      %v216 = vmul.f32 %v176, %v209
      %v217 = vmul.f32 %v177, %v209
      %v218 = vmul.f32 %v178, %v209
      %v219 = vmul.f32 %v179, %v209
      %v220 = vmul.f32 %v180, %v209
      %v221 = vmul.f32 %v181, %v209
      %v222 = vmul.f32 %v182, %v209
      %v223 = vmul.f32 %v183, %v209
      %v224 = vmul.f32 %v184, %v209
      %v225 = vmul.f32 %v185, %v209
      %v226 = vmul.f32 %v186, %v209
      %v227 = vmul.f32 %v187, %v209
      %v228 = vmul.f32 %v188, %v209
      %v229 = vmul.f32 %v189, %v209
      %v230 = vmul.f32 %v190, %v209
      %v231 = vmul.f32 %v191, %v209
      %v232 = vmul.f32 %v192, %v209
      %v233 = vmul.f32 %v193, %v209
      %v234 = vmul.f32 %v194, %v209
      %v235 = vmul.f32 %v195, %v209
      %v236 = vmul.f32 %v196, %v209
      %v237 = vmul.f32 %v197, %v209
      %v238 = vmul.f32 %v198, %v209
      %v239 = vmul.f32 %v199, %v209
      %v240 = vmul.f32 %v200, %v209
      %v241 = vmul.f32 %v201, %v209
      %v242 = vmul.f32 %v202, %v209
      %v244 = vlaneseq
      %v245 = vshrl.u32 %v244, 7
      %v246 = vsub.s32 0, %v245
      %v247 = vrot.slane %v204, %v246
      %v249 = vadd.f32 %v211, %v247
      %v250 = vadd.f32 %v212, %v247
      %v251 = vadd.f32 %v213, %v247
      %v252 = vadd.f32 %v214, %v247
      %v253 = vadd.f32 %v215, %v247
      %v254 = vadd.f32 %v216, %v247
      %v255 = vadd.f32 %v217, %v247
      %v256 = vadd.f32 %v218, %v247
      %v257 = vadd.f32 %v219, %v247
      %v258 = vadd.f32 %v220, %v247
      %v259 = vadd.f32 %v221, %v247
      %v260 = vadd.f32 %v222, %v247
      %v261 = vadd.f32 %v223, %v247
      %v262 = vadd.f32 %v224, %v247
      %v263 = vadd.f32 %v225, %v247
      %v264 = vadd.f32 %v226, %v247
      %v265 = vadd.f32 %v227, %v247
      %v266 = vadd.f32 %v228, %v247
      %v267 = vadd.f32 %v229, %v247
      %v268 = vadd.f32 %v230, %v247
      %v269 = vadd.f32 %v231, %v247
      %v270 = vadd.f32 %v232, %v247
      %v271 = vadd.f32 %v233, %v247
      %v272 = vadd.f32 %v234, %v247
      %v273 = vadd.f32 %v235, %v247
      %v274 = vadd.f32 %v236, %v247
      %v275 = vadd.f32 %v237, %v247
      %v276 = vadd.f32 %v238, %v247
      %v277 = vadd.f32 %v239, %v247
      %v278 = vadd.f32 %v240, %v247
      %v279 = vadd.f32 %v241, %v247
      %v280 = vadd.f32 %v242, %v247
      %v281 = vmax.f32 %v249, 0.0
      %v282 = vmax.f32 %v250, 0.0
      %v283 = vmax.f32 %v251, 0.0
      %v284 = vmax.f32 %v252, 0.0
      %v285 = vmax.f32 %v253, 0.0
      %v286 = vmax.f32 %v254, 0.0
      %v287 = vmax.f32 %v255, 0.0
      %v288 = vmax.f32 %v256, 0.0
      %v289 = vmax.f32 %v257, 0.0
      %v290 = vmax.f32 %v258, 0.0
      %v291 = vmax.f32 %v259, 0.0
      %v292 = vmax.f32 %v260, 0.0
      %v293 = vmax.f32 %v261, 0.0
      %v294 = vmax.f32 %v262, 0.0
      %v295 = vmax.f32 %v263, 0.0
      %v296 = vmax.f32 %v264, 0.0
      %v297 = vmax.f32 %v265, 0.0
      %v298 = vmax.f32 %v266, 0.0
      %v299 = vmax.f32 %v267, 0.0
      %v300 = vmax.f32 %v268, 0.0
      %v301 = vmax.f32 %v269, 0.0
      %v302 = vmax.f32 %v270, 0.0
      %v303 = vmax.f32 %v271, 0.0
      %v304 = vmax.f32 %v272, 0.0
      %v305 = vmax.f32 %v273, 0.0
      %v306 = vmax.f32 %v274, 0.0
      %v307 = vmax.f32 %v275, 0.0
      %v308 = vmax.f32 %v276, 0.0
      %v309 = vmax.f32 %v277, 0.0
      %v310 = vmax.f32 %v278, 0.0
      %v311 = vmax.f32 %v279, 0.0
      %v312 = vmax.f32 %v280, 0.0
      %v313 = vpack.c.bf16 %v282, %v281
      %v314 = vpack.c.bf16 %v284, %v283
      %v315 = vpack.c.bf16 %v286, %v285
      %v316 = vpack.c.bf16 %v288, %v287
      %v317 = vpack.c.bf16 %v290, %v289
      %v318 = vpack.c.bf16 %v292, %v291
      %v319 = vpack.c.bf16 %v294, %v293
      %v320 = vpack.c.bf16 %v296, %v295
      %v321 = vpack.c.bf16 %v298, %v297
      %v322 = vpack.c.bf16 %v300, %v299
      %v323 = vpack.c.bf16 %v302, %v301
      %v324 = vpack.c.bf16 %v304, %v303
      %v325 = vpack.c.bf16 %v306, %v305
      %v326 = vpack.c.bf16 %v308, %v307
      %v327 = vpack.c.bf16 %v310, %v309
      %v328 = vpack.c.bf16 %v312, %v311
      %v345 = vunpack.c.l.b16 %v313
      %v346 = vunpack.c.h.b16 %v313
      %v347 = vunpack.c.l.b16 %v314
      %v348 = vunpack.c.h.b16 %v314
      %v349 = vunpack.c.l.b16 %v315
      %v350 = vunpack.c.h.b16 %v315
      %v351 = vunpack.c.l.b16 %v316
      %v352 = vunpack.c.h.b16 %v316
      %v353 = vunpack.c.l.b16 %v317
      %v354 = vunpack.c.h.b16 %v317
      %v355 = vunpack.c.l.b16 %v318
      %v356 = vunpack.c.h.b16 %v318
      %v357 = vunpack.c.l.b16 %v319
      %v358 = vunpack.c.h.b16 %v319
      %v359 = vunpack.c.l.b16 %v320
      %v360 = vunpack.c.h.b16 %v320
      %v361 = vunpack.c.l.b16 %v321
      %v362 = vunpack.c.h.b16 %v321
      %v363 = vunpack.c.l.b16 %v322
      %v364 = vunpack.c.h.b16 %v322
      %v365 = vunpack.c.l.b16 %v323
      %v366 = vunpack.c.h.b16 %v323
      %v367 = vunpack.c.l.b16 %v324
      %v368 = vunpack.c.h.b16 %v324
      %v369 = vunpack.c.l.b16 %v325
      %v370 = vunpack.c.h.b16 %v325
      %v371 = vunpack.c.l.b16 %v326
      %v372 = vunpack.c.h.b16 %v326
      %v373 = vunpack.c.l.b16 %v327
      %v374 = vunpack.c.h.b16 %v327
      %v375 = vunpack.c.l.b16 %v328
      %v376 = vunpack.c.h.b16 %v328
      %v377 = vpack.c.b16 %v345, %v345
      %v378 = vpack.c.b16 %v346, %v346
      %v379 = vpack.c.b16 %v347, %v347
      %v380 = vpack.c.b16 %v348, %v348
      %v381 = vpack.c.b16 %v349, %v349
      %v382 = vpack.c.b16 %v350, %v350
      %v383 = vpack.c.b16 %v351, %v351
      %v384 = vpack.c.b16 %v352, %v352
      %v385 = vpack.c.b16 %v353, %v353
      %v386 = vpack.c.b16 %v354, %v354
      %v387 = vpack.c.b16 %v355, %v355
      %v388 = vpack.c.b16 %v356, %v356
      %v389 = vpack.c.b16 %v357, %v357
      %v390 = vpack.c.b16 %v358, %v358
      %v391 = vpack.c.b16 %v359, %v359
      %v392 = vpack.c.b16 %v360, %v360
      %v393 = vpack.c.b16 %v361, %v361
      %v394 = vpack.c.b16 %v362, %v362
      %v395 = vpack.c.b16 %v363, %v363
      %v396 = vpack.c.b16 %v364, %v364
      %v397 = vpack.c.b16 %v365, %v365
      %v398 = vpack.c.b16 %v366, %v366
      %v399 = vpack.c.b16 %v367, %v367
      %v400 = vpack.c.b16 %v368, %v368
      %v401 = vpack.c.b16 %v369, %v369
      %v402 = vpack.c.b16 %v370, %v370
      %v403 = vpack.c.b16 %v371, %v371
      %v404 = vpack.c.b16 %v372, %v372
      %v405 = vpack.c.b16 %v373, %v373
      %v406 = vpack.c.b16 %v374, %v374
      %v407 = vpack.c.b16 %v375, %v375
      %v408 = vpack.c.b16 %v376, %v376
      %441 = vst [vmem:[%s170] sm:$0xf] %v377
      %442 = vst [vmem:[%s170 + $0x4] sm:$0xf] %v378
      %443 = vst [vmem:[%s170 + $0x8] sm:$0xf] %v379
      %444 = vst [vmem:[%s170 + $0xc] sm:$0xf] %v380
      %445 = vst [vmem:[%s170 + $0x10] sm:$0xf] %v381
      %446 = vst [vmem:[%s170 + $0x14] sm:$0xf] %v382
      %447 = vst [vmem:[%s170 + $0x18] sm:$0xf] %v383
      %448 = vst [vmem:[%s170 + $0x1c] sm:$0xf] %v384
      %449 = vst [vmem:[%s170 + $0x20] sm:$0xf] %v385
      %450 = vst [vmem:[%s170 + $0x24] sm:$0xf] %v386
      %451 = vst [vmem:[%s170 + $0x28] sm:$0xf] %v387
      %452 = vst [vmem:[%s170 + $0x2c] sm:$0xf] %v388
      %453 = vst [vmem:[%s170 + $0x30] sm:$0xf] %v389
      %454 = vst [vmem:[%s170 + $0x34] sm:$0xf] %v390
      %455 = vst [vmem:[%s170 + $0x38] sm:$0xf] %v391
      %456 = vst [vmem:[%s170 + $0x3c] sm:$0xf] %v392
      %457 = vst [vmem:[%s170 + $0x40] sm:$0xf] %v393
      %458 = vst [vmem:[%s170 + $0x44] sm:$0xf] %v394
      %459 = vst [vmem:[%s170 + $0x48] sm:$0xf] %v395
      %460 = vst [vmem:[%s170 + $0x4c] sm:$0xf] %v396
      %461 = vst [vmem:[%s170 + $0x50] sm:$0xf] %v397
      %462 = vst [vmem:[%s170 + $0x54] sm:$0xf] %v398
      %463 = vst [vmem:[%s170 + $0x58] sm:$0xf] %v399
      %464 = vst [vmem:[%s170 + $0x5c] sm:$0xf] %v400
      %465 = vst [vmem:[%s170 + $0x60] sm:$0xf] %v401
      %466 = vst [vmem:[%s170 + $0x64] sm:$0xf] %v402
      %467 = vst [vmem:[%s170 + $0x68] sm:$0xf] %v403
      %468 = vst [vmem:[%s170 + $0x6c] sm:$0xf] %v404
      %469 = vst [vmem:[%s170 + $0x70] sm:$0xf] %v405
      %470 = vst [vmem:[%s170 + $0x74] sm:$0xf] %v406
      %471 = vst [vmem:[%s170 + $0x78] sm:$0xf] %v407
      %472 = vst [vmem:[%s170 + $0x7c] sm:$0xf] %v408
      %p473 = scmp.lt.s32.totalorder %s14, 1
      %s474 = scalar_select %p473, %s14, 1
      %s475 = smul.addr %s474, 32
      %s476 = smul.addr %s475, 4
      %s477 = scalar_lea.vmem %s3, %s476
      // Predicated region
      $region33: #{basic_block.5} parent=31 // pred_check
        %p478 = pneg %p100
      $region34: #{basic_block.5} parent=31 // pred_check_branch
        %480 = sbr.rel (%p478) target = $region36
      $region35: #{basic_block.5} parent=31 // pred_region
        _
      $region36: #{basic_block.5} parent=31 // pred_fallthru
        _
    $region32: #{basic_block.5} parent=5 // pred_fallthru
      _
    %p481 = scmp.le.s32.totalorder 2, %s9
    // Predicated region
    $region37: #{basic_block.5} parent=5 // pred_check
      %p482 = pneg %p481
    $region38: #{basic_block.5} parent=5 // pred_check_branch
      %484 = sbr.rel (%p482) target = $region40
    $region39: #{basic_block.5} parent=5 // pred_region
      %s485 = ssub.s32 %s9, 2
      // Predicated region
      $region41: #{basic_block.5} parent=39 // pred_check
        %p486 = pneg %p106
      $region42: #{basic_block.5} parent=39 // pred_check_branch
        %488 = sbr.rel (%p486) target = $region44
      $region43: #{basic_block.5} parent=39 // pred_region
        %p489 = scmp.lt.s32.totalorder %s15, 1
        %s490 = scalar_select %p489, %s15, 1
        %s491 = smul.addr %s490, 32
        %s492 = smul.addr %s491, 4
        %s493 = scalar_lea.vmem %s3, %s492
      $region44: #{basic_block.5} parent=39 // pred_fallthru
        _
    $region40: #{basic_block.5} parent=5 // pred_fallthru
      _
  $region6: #{basic_block.5} parent=0 // loop_footer
    %s13 = sadd.s32 1, %s9
  $region7: #{basic_block.5} parent=0 // loop_footer_branch
    %8 = sbr.rel target = $region3
  $region8: #{basic_block.5} parent=0 // loop_exit
    _

// kernel: basic_block.7
$region0: #{basic_block.7}
  #allocation0 [shape = 'u32[]', space=smem, size = 0x4, offset = 0x4, fixed_abs, tag = 'smem constant byte address 0x4 - core index']
  #allocation1 [shape = 'u32[144,128]{1,0:T(1,128)}', space=vmem, size = 0x12000, scoped, tag = 'internal scratch']
  %s0 = inlined_call_operand.vmem [shape: f32[2,16,16,128], index: 0, kind: input, shape index: {}, may-alias: {0,3}]
  %s1 = inlined_call_operand.vmem [shape: f32[1,128], index: 1, kind: input, shape index: {}]
  %s2 = inlined_call_operand.vmem [shape: f32[1,128], index: 2, kind: input, shape index: {}]
  %s3 = inlined_call_operand.vmem [shape: f32[2,16,16,128], index: 3, kind: output, shape index: {}, may-alias: {0,3}]
  %s4 = sld [smem:[#allocation0]]
  $region45: #{basic_block.7} parent=0
    _
  %s6 = ssub.s32 1, %s4
  %s7 = scalar_select 0, %s6, %s4
  loop: start=0, step=1, limit=4
  $region2: #{basic_block.7} parent=0 // loop_pre_header
    _
  $region3: #{basic_block.7} parent=0 // loop_header
    %s9 = sphi 0, %s13
    %p10 = scmp.ge.s32.totalorder %s9, 4
    %s19 = sphi 0, %s21
    %s22 = sphi 0, %s19
    %s23 = sphi 0, %s22
    %s39 = sphi 0, %s23
    %s43 = sphi 0, %s43
    %s45 = sphi 0, %s43
    %s46 = sphi 0, %s45
    %s60 = sphi 0, %s46
    %s64 = sphi 0, %s64
    %s66 = sphi 0, %s64
    %s67 = sphi 0, %s66
    %s81 = sphi 0, %s67
    %s87 = sphi 0, %s89
    %s90 = sphi 0, %s87
    %s91 = sphi 0, %s90
    %s107 = sphi 0, %s91
  $region4: #{basic_block.7} parent=0 // loop_header_branch
    %12 = sbr.rel (%p10) target = $region8
  $region5: #{basic_block.7} parent=0 // loop_body
    %s14 = ssub.s32 %s9, 1
    %s15 = ssub.s32 %s9, 2
    %s16 = sadd.s32 %s9, 1
    %s17 = ssub.s32 %s9, %s16
    %p18 = scmp.eq.s32.totalorder %s17, 0
    %s20 = sadd.s32 %s19, 1
    %s21 = scalar_select %p18, %s19, %s20
    %p24 = pneg %p18
    %p25 = scmp.eq.s32.totalorder %s9, 1
    %p26 = por %p24, %p25
    %p27 = scmp.ne.s32.totalorder %s19, %s22
    %p28 = scmp.eq.s32.totalorder %s9, 0
    %p29 = por %p27, %p28
    %p30 = scmp.ne.s32.totalorder %s19, %s22
    %p31 = scmp.eq.s32.totalorder %s14, 1
    %p32 = por %p30, %p31
    %p33 = scmp.ne.s32.totalorder %s22, %s23
    %p34 = scmp.eq.s32.totalorder %s14, 0
    %p35 = por %p33, %p34
    %p36 = scmp.ne.s32.totalorder %s22, %s23
    %p37 = scmp.eq.s32.totalorder %s15, 1
    %p38 = por %p36, %p37
    %p40 = scmp.ne.s32.totalorder %s23, %s39
    %p41 = scmp.eq.s32.totalorder %s15, 0
    %p42 = por %p40, %p41
    %s44 = sadd.s32 %s43, 1
    %p47 = scmp.eq.s32.totalorder %s9, 1
    %p48 = scmp.ne.s32.totalorder %s43, %s45
    %p49 = scmp.eq.s32.totalorder %s9, 0
    %p50 = por %p48, %p49
    %p51 = scmp.ne.s32.totalorder %s43, %s45
    %p52 = scmp.eq.s32.totalorder %s14, 1
    %p53 = por %p51, %p52
    %p54 = scmp.ne.s32.totalorder %s45, %s46
    %p55 = scmp.eq.s32.totalorder %s14, 0
    %p56 = por %p54, %p55
    %p57 = scmp.ne.s32.totalorder %s45, %s46
    %p58 = scmp.eq.s32.totalorder %s15, 1
    %p59 = por %p57, %p58
    %p61 = scmp.ne.s32.totalorder %s46, %s60
    %p62 = scmp.eq.s32.totalorder %s15, 0
    %p63 = por %p61, %p62
    %s65 = sadd.s32 %s64, 1
    %p68 = scmp.eq.s32.totalorder %s9, 1
    %p69 = scmp.ne.s32.totalorder %s64, %s66
    %p70 = scmp.eq.s32.totalorder %s9, 0
    %p71 = por %p69, %p70
    %p72 = scmp.ne.s32.totalorder %s64, %s66
    %p73 = scmp.eq.s32.totalorder %s14, 1
    %p74 = por %p72, %p73
    %p75 = scmp.ne.s32.totalorder %s66, %s67
    %p76 = scmp.eq.s32.totalorder %s14, 0
    %p77 = por %p75, %p76
    %p78 = scmp.ne.s32.totalorder %s66, %s67
    %p79 = scmp.eq.s32.totalorder %s15, 1
    %p80 = por %p78, %p79
    %p82 = scmp.ne.s32.totalorder %s67, %s81
    %p83 = scmp.eq.s32.totalorder %s15, 0
    %p84 = por %p82, %p83
    %s85 = ssub.s32 %s9, %s16
    %p86 = scmp.eq.s32.totalorder %s85, 0
    %s88 = sadd.s32 %s87, 1
    %s89 = scalar_select %p86, %s87, %s88
    %p92 = pneg %p86
    %p93 = scmp.eq.s32.totalorder %s9, 1
    %p94 = por %p92, %p93
    %p95 = scmp.ne.s32.totalorder %s87, %s90
    %p96 = scmp.eq.s32.totalorder %s9, 0
    %p97 = por %p95, %p96
    %p98 = scmp.ne.s32.totalorder %s87, %s90
    %p99 = scmp.eq.s32.totalorder %s14, 1
    %p100 = por %p98, %p99
    %p101 = scmp.ne.s32.totalorder %s90, %s91
    %p102 = scmp.eq.s32.totalorder %s14, 0
    %p103 = por %p101, %p102
    %p104 = scmp.ne.s32.totalorder %s90, %s91
    %p105 = scmp.eq.s32.totalorder %s15, 1
    %p106 = por %p104, %p105
    %p108 = scmp.ne.s32.totalorder %s91, %s107
    %p109 = scmp.eq.s32.totalorder %s15, 0
    %p110 = por %p108, %p109
    %p111 = scmp.le.s32.totalorder 1, %s9
    %p112 = scmp.lt.s32.totalorder %s9, 3
    %p113 = pnand %p111, %p112
    %p114 = pneg %p113
    // Predicated region
    $region9: #{basic_block.7} parent=5 // pred_check
      _
    $region10: #{basic_block.7} parent=5 // pred_check_branch
      %116 = sbr.rel (%p113) target = $region12
    $region11: #{basic_block.7} parent=5 // pred_region
      %s117 = ssub.s32 %s9, 1
      // Predicated region
      $region13: #{basic_block.7} parent=11 // pred_check
        %p118 = pneg %p56
      $region14: #{basic_block.7} parent=11 // pred_check_branch
        %120 = sbr.rel (%p118) target = $region16
      $region15: #{basic_block.7} parent=11 // pred_region
        _
      $region16: #{basic_block.7} parent=11 // pred_fallthru
        _
      // Predicated region
      $region17: #{basic_block.7} parent=11 // pred_check
        %p121 = pneg %p77
      $region18: #{basic_block.7} parent=11 // pred_check_branch
        %123 = sbr.rel (%p121) target = $region20
      $region19: #{basic_block.7} parent=11 // pred_region
        _
      $region20: #{basic_block.7} parent=11 // pred_fallthru
        _
    $region12: #{basic_block.7} parent=5 // pred_fallthru
      _
    %p124 = scmp.lt.s32.totalorder %s9, 2
    // Predicated region
    $region21: #{basic_block.7} parent=5 // pred_check
      %p125 = pneg %p124
    $region22: #{basic_block.7} parent=5 // pred_check_branch
      %127 = sbr.rel (%p125) target = $region24
    $region23: #{basic_block.7} parent=5 // pred_region
      // Predicated region
      $region25: #{basic_block.7} parent=23 // pred_check
        %p128 = pneg %p29
      $region26: #{basic_block.7} parent=23 // pred_check_branch
        %130 = sbr.rel (%p128) target = $region28
      $region27: #{basic_block.7} parent=23 // pred_region
        %p131 = scmp.lt.s32.totalorder %s9, 1
        %s132 = scalar_select %p131, %s9, 1
        %s133 = smul.addr %s132, 32
        %s134 = smul.addr %s133, 8
        %s135 = scalar_lea.vmem %s0, %s134
      $region28: #{basic_block.7} parent=23 // pred_fallthru
        _
    $region24: #{basic_block.7} parent=5 // pred_fallthru
      _
    %p136 = scmp.le.s32.totalorder 1, %s9
    %p137 = scmp.lt.s32.totalorder %s9, 3
    %p138 = pnand %p136, %p137
    %p139 = pneg %p138
    // Predicated region
    $region29: #{basic_block.7} parent=5 // pred_check
      _
    $region30: #{basic_block.7} parent=5 // pred_check_branch
      %141 = sbr.rel (%p138) target = $region32
    $region31: #{basic_block.7} parent=5 // pred_region
      %s142 = ssub.s32 %s9, 1
      %p143 = scmp.lt.s32.totalorder %s14, 1
      %s144 = scalar_select %p143, %s14, 1
      %s145 = smul.addr %s144, 32
      %s146 = smul.addr %s145, 8
      %s147 = scalar_lea.vmem %s0, %s146
      %p148 = pneg %p35
      %p149 = pneg %p32
      %p150 = pneg %p56
      %p151 = pneg %p53
      %p152 = pneg %p77
      %p153 = pneg %p74
      %p154 = pneg %p103
      %p155 = pneg %p100
      %p156 = scmp.lt.s32.totalorder %s14, 1
      %s157 = scalar_select %p156, %s14, 1
      %s158 = smul.addr %s157, 32
      %s159 = smul.addr %s158, 8
      %s160 = scalar_lea.vmem %s3, %s159
      %p161 = scmp.lt.s32.totalorder %s14, 1
      %s162 = scalar_select %p161, %s14, 1
      %s163 = smul.addr %s162, 32
      %s164 = smul.addr %s163, 8
      %s165 = scalar_lea.vmem %s0, %s164
      %p166 = scmp.lt.s32.totalorder %s14, 1
      %s167 = scalar_select %p166, %s14, 1
      %s168 = smul.addr %s167, 32
      %s169 = smul.addr %s168, 8
      %s170 = scalar_lea.vmem %s3, %s169
      %v171 = vld [vmem:[%s165] sm:$0xff]
      %v172 = vld [vmem:[%s165 + $0x8] sm:$0xff]
      %v173 = vld [vmem:[%s165 + $0x10] sm:$0xff]
      %v174 = vld [vmem:[%s165 + $0x18] sm:$0xff]
      %v175 = vld [vmem:[%s165 + $0x20] sm:$0xff]
      %v176 = vld [vmem:[%s165 + $0x28] sm:$0xff]
      %v177 = vld [vmem:[%s165 + $0x30] sm:$0xff]
      %v178 = vld [vmem:[%s165 + $0x38] sm:$0xff]
      %v179 = vld [vmem:[%s165 + $0x40] sm:$0xff]
      %v180 = vld [vmem:[%s165 + $0x48] sm:$0xff]
      %v181 = vld [vmem:[%s165 + $0x50] sm:$0xff]
      %v182 = vld [vmem:[%s165 + $0x58] sm:$0xff]
      %v183 = vld [vmem:[%s165 + $0x60] sm:$0xff]
      %v184 = vld [vmem:[%s165 + $0x68] sm:$0xff]
      %v185 = vld [vmem:[%s165 + $0x70] sm:$0xff]
      %v186 = vld [vmem:[%s165 + $0x78] sm:$0xff]
      %v187 = vld [vmem:[%s165 + $0x80] sm:$0xff]
      %v188 = vld [vmem:[%s165 + $0x88] sm:$0xff]
      %v189 = vld [vmem:[%s165 + $0x90] sm:$0xff]
      %v190 = vld [vmem:[%s165 + $0x98] sm:$0xff]
      %v191 = vld [vmem:[%s165 + $0xa0] sm:$0xff]
      %v192 = vld [vmem:[%s165 + $0xa8] sm:$0xff]
      %v193 = vld [vmem:[%s165 + $0xb0] sm:$0xff]
      %v194 = vld [vmem:[%s165 + $0xb8] sm:$0xff]
      %v195 = vld [vmem:[%s165 + $0xc0] sm:$0xff]
      %v196 = vld [vmem:[%s165 + $0xc8] sm:$0xff]
      %v197 = vld [vmem:[%s165 + $0xd0] sm:$0xff]
      %v198 = vld [vmem:[%s165 + $0xd8] sm:$0xff]
      %v199 = vld [vmem:[%s165 + $0xe0] sm:$0xff]
      %v200 = vld [vmem:[%s165 + $0xe8] sm:$0xff]
      %v201 = vld [vmem:[%s165 + $0xf0] sm:$0xff]
      %v202 = vld [vmem:[%s165 + $0xf8] sm:$0xff]
      %v203 = vld [vmem:[%s1] sm:$0x1]
      %v204 = vld [vmem:[%s2] sm:$0x1]
      %v206 = vlaneseq
      %v207 = vshrl.u32 %v206, 7
      %v208 = vsub.s32 0, %v207
      %v209 = vrot.slane %v203, %v208
      %v211 = vmul.f32 %v171, %v209
      %v212 = vmul.f32 %v172, %v209
      %v213 = vmul.f32 %v173, %v209
      %v214 = vmul.f32 %v174, %v209
      %v215 = vmul.f32 %v175, %v209
      %v216 = vmul.f32 %v176, %v209
      %v217 = vmul.f32 %v177, %v209
      %v218 = vmul.f32 %v178, %v209
      %v219 = vmul.f32 %v179, %v209
      %v220 = vmul.f32 %v180, %v209
      %v221 = vmul.f32 %v181, %v209
      %v222 = vmul.f32 %v182, %v209
      %v223 = vmul.f32 %v183, %v209
      %v224 = vmul.f32 %v184, %v209
      %v225 = vmul.f32 %v185, %v209
      %v226 = vmul.f32 %v186, %v209
      %v227 = vmul.f32 %v187, %v209
      %v228 = vmul.f32 %v188, %v209
      %v229 = vmul.f32 %v189, %v209
      %v230 = vmul.f32 %v190, %v209
      %v231 = vmul.f32 %v191, %v209
      %v232 = vmul.f32 %v192, %v209
      %v233 = vmul.f32 %v193, %v209
      %v234 = vmul.f32 %v194, %v209
      %v235 = vmul.f32 %v195, %v209
      %v236 = vmul.f32 %v196, %v209
      %v237 = vmul.f32 %v197, %v209
      %v238 = vmul.f32 %v198, %v209
      %v239 = vmul.f32 %v199, %v209
      %v240 = vmul.f32 %v200, %v209
      %v241 = vmul.f32 %v201, %v209
      %v242 = vmul.f32 %v202, %v209
      %v244 = vlaneseq
      %v245 = vshrl.u32 %v244, 7
      %v246 = vsub.s32 0, %v245
      %v247 = vrot.slane %v204, %v246
      %v249 = vadd.f32 %v211, %v247
      %v250 = vadd.f32 %v212, %v247
      %v251 = vadd.f32 %v213, %v247
      %v252 = vadd.f32 %v214, %v247
      %v253 = vadd.f32 %v215, %v247
      %v254 = vadd.f32 %v216, %v247
      %v255 = vadd.f32 %v217, %v247
      %v256 = vadd.f32 %v218, %v247
      %v257 = vadd.f32 %v219, %v247
      %v258 = vadd.f32 %v220, %v247
      %v259 = vadd.f32 %v221, %v247
      %v260 = vadd.f32 %v222, %v247
      %v261 = vadd.f32 %v223, %v247
      %v262 = vadd.f32 %v224, %v247
      %v263 = vadd.f32 %v225, %v247
      %v264 = vadd.f32 %v226, %v247
      %v265 = vadd.f32 %v227, %v247
      %v266 = vadd.f32 %v228, %v247
      %v267 = vadd.f32 %v229, %v247
      %v268 = vadd.f32 %v230, %v247
      %v269 = vadd.f32 %v231, %v247
      %v270 = vadd.f32 %v232, %v247
      %v271 = vadd.f32 %v233, %v247
      %v272 = vadd.f32 %v234, %v247
      %v273 = vadd.f32 %v235, %v247
      %v274 = vadd.f32 %v236, %v247
      %v275 = vadd.f32 %v237, %v247
      %v276 = vadd.f32 %v238, %v247
      %v277 = vadd.f32 %v239, %v247
      %v278 = vadd.f32 %v240, %v247
      %v279 = vadd.f32 %v241, %v247
      %v280 = vadd.f32 %v242, %v247
      %v281 = vmax.f32 %v249, 0.0
      %v282 = vmax.f32 %v250, 0.0
      %v283 = vmax.f32 %v251, 0.0
      %v284 = vmax.f32 %v252, 0.0
      %v285 = vmax.f32 %v253, 0.0
      %v286 = vmax.f32 %v254, 0.0
      %v287 = vmax.f32 %v255, 0.0
      %v288 = vmax.f32 %v256, 0.0
      %v289 = vmax.f32 %v257, 0.0
      %v290 = vmax.f32 %v258, 0.0
      %v291 = vmax.f32 %v259, 0.0
      %v292 = vmax.f32 %v260, 0.0
      %v293 = vmax.f32 %v261, 0.0
      %v294 = vmax.f32 %v262, 0.0
      %v295 = vmax.f32 %v263, 0.0
      %v296 = vmax.f32 %v264, 0.0
      %v297 = vmax.f32 %v265, 0.0
      %v298 = vmax.f32 %v266, 0.0
      %v299 = vmax.f32 %v267, 0.0
      %v300 = vmax.f32 %v268, 0.0
      %v301 = vmax.f32 %v269, 0.0
      %v302 = vmax.f32 %v270, 0.0
      %v303 = vmax.f32 %v271, 0.0
      %v304 = vmax.f32 %v272, 0.0
      %v305 = vmax.f32 %v273, 0.0
      %v306 = vmax.f32 %v274, 0.0
      %v307 = vmax.f32 %v275, 0.0
      %v308 = vmax.f32 %v276, 0.0
      %v309 = vmax.f32 %v277, 0.0
      %v310 = vmax.f32 %v278, 0.0
      %v311 = vmax.f32 %v279, 0.0
      %v312 = vmax.f32 %v280, 0.0
      %313 = vst [vmem:[%s170] sm:$0xff] %v281
      %314 = vst [vmem:[%s170 + $0x8] sm:$0xff] %v282
      %315 = vst [vmem:[%s170 + $0x10] sm:$0xff] %v283
      %316 = vst [vmem:[%s170 + $0x18] sm:$0xff] %v284
      %317 = vst [vmem:[%s170 + $0x20] sm:$0xff] %v285
      %318 = vst [vmem:[%s170 + $0x28] sm:$0xff] %v286
      %319 = vst [vmem:[%s170 + $0x30] sm:$0xff] %v287
      %320 = vst [vmem:[%s170 + $0x38] sm:$0xff] %v288
      %321 = vst [vmem:[%s170 + $0x40] sm:$0xff] %v289
      %322 = vst [vmem:[%s170 + $0x48] sm:$0xff] %v290
      %323 = vst [vmem:[%s170 + $0x50] sm:$0xff] %v291
      %324 = vst [vmem:[%s170 + $0x58] sm:$0xff] %v292
      %325 = vst [vmem:[%s170 + $0x60] sm:$0xff] %v293
      %326 = vst [vmem:[%s170 + $0x68] sm:$0xff] %v294
      %327 = vst [vmem:[%s170 + $0x70] sm:$0xff] %v295
      %328 = vst [vmem:[%s170 + $0x78] sm:$0xff] %v296
      %329 = vst [vmem:[%s170 + $0x80] sm:$0xff] %v297
      %330 = vst [vmem:[%s170 + $0x88] sm:$0xff] %v298
      %331 = vst [vmem:[%s170 + $0x90] sm:$0xff] %v299
      %332 = vst [vmem:[%s170 + $0x98] sm:$0xff] %v300
      %333 = vst [vmem:[%s170 + $0xa0] sm:$0xff] %v301
      %334 = vst [vmem:[%s170 + $0xa8] sm:$0xff] %v302
      %335 = vst [vmem:[%s170 + $0xb0] sm:$0xff] %v303
      %336 = vst [vmem:[%s170 + $0xb8] sm:$0xff] %v304
      %337 = vst [vmem:[%s170 + $0xc0] sm:$0xff] %v305
      %338 = vst [vmem:[%s170 + $0xc8] sm:$0xff] %v306
      %339 = vst [vmem:[%s170 + $0xd0] sm:$0xff] %v307
      %340 = vst [vmem:[%s170 + $0xd8] sm:$0xff] %v308
      %341 = vst [vmem:[%s170 + $0xe0] sm:$0xff] %v309
      %342 = vst [vmem:[%s170 + $0xe8] sm:$0xff] %v310
      %343 = vst [vmem:[%s170 + $0xf0] sm:$0xff] %v311
      %344 = vst [vmem:[%s170 + $0xf8] sm:$0xff] %v312
      %p345 = scmp.lt.s32.totalorder %s14, 1
      %s346 = scalar_select %p345, %s14, 1
      %s347 = smul.addr %s346, 32
      %s348 = smul.addr %s347, 8
      %s349 = scalar_lea.vmem %s3, %s348
      // Predicated region
      $region33: #{basic_block.7} parent=31 // pred_check
        %p350 = pneg %p100
      $region34: #{basic_block.7} parent=31 // pred_check_branch
        %352 = sbr.rel (%p350) target = $region36
      $region35: #{basic_block.7} parent=31 // pred_region
        _
      $region36: #{basic_block.7} parent=31 // pred_fallthru
        _
    $region32: #{basic_block.7} parent=5 // pred_fallthru
      _
    %p353 = scmp.le.s32.totalorder 2, %s9
    // Predicated region
    $region37: #{basic_block.7} parent=5 // pred_check
      %p354 = pneg %p353
    $region38: #{basic_block.7} parent=5 // pred_check_branch
      %356 = sbr.rel (%p354) target = $region40
    $region39: #{basic_block.7} parent=5 // pred_region
      %s357 = ssub.s32 %s9, 2
      // Predicated region
      $region41: #{basic_block.7} parent=39 // pred_check
        %p358 = pneg %p106
      $region42: #{basic_block.7} parent=39 // pred_check_branch
        %360 = sbr.rel (%p358) target = $region44
      $region43: #{basic_block.7} parent=39 // pred_region
        %p361 = scmp.lt.s32.totalorder %s15, 1
        %s362 = scalar_select %p361, %s15, 1
        %s363 = smul.addr %s362, 32
        %s364 = smul.addr %s363, 8
        %s365 = scalar_lea.vmem %s3, %s364
      $region44: #{basic_block.7} parent=39 // pred_fallthru
        _
    $region40: #{basic_block.7} parent=5 // pred_fallthru
      _
  $region6: #{basic_block.7} parent=0 // loop_footer
    %s13 = sadd.s32 1, %s9
  $region7: #{basic_block.7} parent=0 // loop_footer_branch
    %8 = sbr.rel target = $region3
  $region8: #{basic_block.7} parent=0 // loop_exit
    _

// kernel: basic_block.4
$region0: #{basic_block.4}
  #allocation0 [shape = 'u32[]', space=smem, size = 0x4, offset = 0x4, fixed_abs, tag = 'smem constant byte address 0x4 - core index']
  #allocation1 [shape = 'u32[144,128]{1,0:T(1,128)}', space=vmem, size = 0x12000, scoped, tag = 'internal scratch']
  #allocation2 [shape = 'f32[256,128]{1,0:T(8,128)}', space=vmem, size = 0x20000, scoped, tag = 'scratch operand']
  %s0 = inlined_call_operand.vmem [shape: bf16[2,18,18,128], index: 0, kind: input, shape index: {}]
  %s1 = inlined_call_operand.vmem [shape: bf16[3,3,128,128], index: 1, kind: input, shape index: {}]
  %s2 = inlined_call_operand.vmem [shape: f32[2,16,16,128], index: 2, kind: output, shape index: {0}]
  %s3 = inlined_call_operand.vmem [shape: f32[2,1,128], index: 3, kind: output, shape index: {1}]
  %s4 = inlined_call_operand.vmem [shape: f32[2,1,128], index: 4, kind: output, shape index: {2}]
  %5 = xla_tuple %s2, %s3, %s4
  %s6 = sld [smem:[#allocation0]]
  $region57: #{basic_block.4} parent=0
    _
  %s8 = ssub.s32 1, %s6
  %s9 = scalar_select 0, %s8, %s6
  loop: start=0, step=1, limit=4
  $region2: #{basic_block.4} parent=0 // loop_pre_header
    _
  $region3: #{basic_block.4} parent=0 // loop_header
    %s11 = sphi 0, %s15
    %p12 = scmp.ge.s32.totalorder %s11, 4
    %s21 = sphi 0, %s23
    %s24 = sphi 0, %s21
    %s25 = sphi 0, %s24
    %s41 = sphi 0, %s25
    %s45 = sphi 0, %s45
    %s47 = sphi 0, %s45
    %s48 = sphi 0, %s47
    %s62 = sphi 0, %s48
    %s68 = sphi 0, %s70
    %s71 = sphi 0, %s68
    %s72 = sphi 0, %s71
    %s88 = sphi 0, %s72
    %s94 = sphi 0, %s96
    %s97 = sphi 0, %s94
    %s98 = sphi 0, %s97
    %s114 = sphi 0, %s98
    %s120 = sphi 0, %s122
    %s123 = sphi 0, %s120
    %s124 = sphi 0, %s123
    %s140 = sphi 0, %s124
  $region4: #{basic_block.4} parent=0 // loop_header_branch
    %14 = sbr.rel (%p12) target = $region8
  $region5: #{basic_block.4} parent=0 // loop_body
    %s16 = ssub.s32 %s11, 1
    %s17 = ssub.s32 %s11, 2
    %s18 = sadd.s32 %s11, 1
    %s19 = ssub.s32 %s11, %s18
    %p20 = scmp.eq.s32.totalorder %s19, 0
    %s22 = sadd.s32 %s21, 1
    %s23 = scalar_select %p20, %s21, %s22
    %p26 = pneg %p20
    %p27 = scmp.eq.s32.totalorder %s11, 1
    %p28 = por %p26, %p27
    %p29 = scmp.ne.s32.totalorder %s21, %s24
    %p30 = scmp.eq.s32.totalorder %s11, 0
    %p31 = por %p29, %p30
    %p32 = scmp.ne.s32.totalorder %s21, %s24
    %p33 = scmp.eq.s32.totalorder %s16, 1
    %p34 = por %p32, %p33
    %p35 = scmp.ne.s32.totalorder %s24, %s25
    %p36 = scmp.eq.s32.totalorder %s16, 0
    %p37 = por %p35, %p36
    %p38 = scmp.ne.s32.totalorder %s24, %s25
    %p39 = scmp.eq.s32.totalorder %s17, 1
    %p40 = por %p38, %p39
    %p42 = scmp.ne.s32.totalorder %s25, %s41
    %p43 = scmp.eq.s32.totalorder %s17, 0
    %p44 = por %p42, %p43
    %s46 = sadd.s32 %s45, 1
    %p49 = scmp.eq.s32.totalorder %s11, 1
    %p50 = scmp.ne.s32.totalorder %s45, %s47
    %p51 = scmp.eq.s32.totalorder %s11, 0
    %p52 = por %p50, %p51
    %p53 = scmp.ne.s32.totalorder %s45, %s47
    %p54 = scmp.eq.s32.totalorder %s16, 1
    %p55 = por %p53, %p54
    %p56 = scmp.ne.s32.totalorder %s47, %s48
    %p57 = scmp.eq.s32.totalorder %s16, 0
    %p58 = por %p56, %p57
    %p59 = scmp.ne.s32.totalorder %s47, %s48
    %p60 = scmp.eq.s32.totalorder %s17, 1
    %p61 = por %p59, %p60
    %p63 = scmp.ne.s32.totalorder %s48, %s62
    %p64 = scmp.eq.s32.totalorder %s17, 0
    %p65 = por %p63, %p64
    %s66 = ssub.s32 %s11, %s18
    %p67 = scmp.eq.s32.totalorder %s66, 0
    %s69 = sadd.s32 %s68, 1
    %s70 = scalar_select %p67, %s68, %s69
    %p73 = pneg %p67
    %p74 = scmp.eq.s32.totalorder %s11, 1
    %p75 = por %p73, %p74
    %p76 = scmp.ne.s32.totalorder %s68, %s71
    %p77 = scmp.eq.s32.totalorder %s11, 0
    %p78 = por %p76, %p77
    %p79 = scmp.ne.s32.totalorder %s68, %s71
    %p80 = scmp.eq.s32.totalorder %s16, 1
    %p81 = por %p79, %p80
    %p82 = scmp.ne.s32.totalorder %s71, %s72
    %p83 = scmp.eq.s32.totalorder %s16, 0
    %p84 = por %p82, %p83
    %p85 = scmp.ne.s32.totalorder %s71, %s72
    %p86 = scmp.eq.s32.totalorder %s17, 1
    %p87 = por %p85, %p86
    %p89 = scmp.ne.s32.totalorder %s72, %s88
    %p90 = scmp.eq.s32.totalorder %s17, 0
    %p91 = por %p89, %p90
    %s92 = ssub.s32 %s11, %s18
    %p93 = scmp.eq.s32.totalorder %s92, 0
    %s95 = sadd.s32 %s94, 1
    %s96 = scalar_select %p93, %s94, %s95
    %p99 = pneg %p93
    %p100 = scmp.eq.s32.totalorder %s11, 1
    %p101 = por %p99, %p100
    %p102 = scmp.ne.s32.totalorder %s94, %s97
    %p103 = scmp.eq.s32.totalorder %s11, 0
    %p104 = por %p102, %p103
    %p105 = scmp.ne.s32.totalorder %s94, %s97
    %p106 = scmp.eq.s32.totalorder %s16, 1
    %p107 = por %p105, %p106
    %p108 = scmp.ne.s32.totalorder %s97, %s98
    %p109 = scmp.eq.s32.totalorder %s16, 0
    %p110 = por %p108, %p109
    %p111 = scmp.ne.s32.totalorder %s97, %s98
    %p112 = scmp.eq.s32.totalorder %s17, 1
    %p113 = por %p111, %p112
    %p115 = scmp.ne.s32.totalorder %s98, %s114
    %p116 = scmp.eq.s32.totalorder %s17, 0
    %p117 = por %p115, %p116
    %s118 = ssub.s32 %s11, %s18
    %p119 = scmp.eq.s32.totalorder %s118, 0
    %s121 = sadd.s32 %s120, 1
    %s122 = scalar_select %p119, %s120, %s121
    %p125 = pneg %p119
    %p126 = scmp.eq.s32.totalorder %s11, 1
    %p127 = por %p125, %p126
    %p128 = scmp.ne.s32.totalorder %s120, %s123
    %p129 = scmp.eq.s32.totalorder %s11, 0
    %p130 = por %p128, %p129
    %p131 = scmp.ne.s32.totalorder %s120, %s123
    %p132 = scmp.eq.s32.totalorder %s16, 1
    %p133 = por %p131, %p132
    %p134 = scmp.ne.s32.totalorder %s123, %s124
    %p135 = scmp.eq.s32.totalorder %s16, 0
    %p136 = por %p134, %p135
    %p137 = scmp.ne.s32.totalorder %s123, %s124
    %p138 = scmp.eq.s32.totalorder %s17, 1
    %p139 = por %p137, %p138
    %p141 = scmp.ne.s32.totalorder %s124, %s140
    %p142 = scmp.eq.s32.totalorder %s17, 0
    %p143 = por %p141, %p142
    %p144 = scmp.le.s32.totalorder 1, %s11
    %p145 = scmp.lt.s32.totalorder %s11, 3
    %p146 = pnand %p144, %p145
    %p147 = pneg %p146
    // Predicated region
    $region9: #{basic_block.4} parent=5 // pred_check
      _
    $region10: #{basic_block.4} parent=5 // pred_check_branch
      %149 = sbr.rel (%p146) target = $region12
    $region11: #{basic_block.4} parent=5 // pred_region
      %s150 = ssub.s32 %s11, 1
      // Predicated region
      $region13: #{basic_block.4} parent=11 // pred_check
        %p151 = pneg %p58
      $region14: #{basic_block.4} parent=11 // pred_check_branch
        %153 = sbr.rel (%p151) target = $region16
      $region15: #{basic_block.4} parent=11 // pred_region
        _
      $region16: #{basic_block.4} parent=11 // pred_fallthru
        _
    $region12: #{basic_block.4} parent=5 // pred_fallthru
      _
    %p154 = scmp.lt.s32.totalorder %s11, 2
    // Predicated region
    $region17: #{basic_block.4} parent=5 // pred_check
      %p155 = pneg %p154
    $region18: #{basic_block.4} parent=5 // pred_check_branch
      %157 = sbr.rel (%p155) target = $region20
    $region19: #{basic_block.4} parent=5 // pred_region
      // Predicated region
      $region21: #{basic_block.4} parent=19 // pred_check
        %p158 = pneg %p31
      $region22: #{basic_block.4} parent=19 // pred_check_branch
        %160 = sbr.rel (%p158) target = $region24
      $region23: #{basic_block.4} parent=19 // pred_region
        %p161 = scmp.lt.s32.totalorder %s11, 1
        %s162 = scalar_select %p161, %s11, 1
        %s163 = smul.addr %s162, 54
        %s164 = smul.addr %s163, 4
        %s165 = scalar_lea.vmem %s0, %s164
      $region24: #{basic_block.4} parent=19 // pred_fallthru
        _
    $region20: #{basic_block.4} parent=5 // pred_fallthru
      _
    %p166 = scmp.le.s32.totalorder 1, %s11
    %p167 = scmp.lt.s32.totalorder %s11, 3
    %p168 = pnand %p166, %p167
    %p169 = pneg %p168
    // Predicated region
    $region25: #{basic_block.4} parent=5 // pred_check
      _
    $region26: #{basic_block.4} parent=5 // pred_check_branch
      %171 = sbr.rel (%p168) target = $region28
    $region27: #{basic_block.4} parent=5 // pred_region
      %s172 = ssub.s32 %s11, 1
      %p173 = scmp.lt.s32.totalorder %s16, 1
      %s174 = scalar_select %p173, %s16, 1
      %s175 = smul.addr %s174, 54
      %s176 = smul.addr %s175, 4
      %s177 = scalar_lea.vmem %s0, %s176
      %p178 = pneg %p37
      %p179 = pneg %p34
      %p180 = pneg %p58
      %p181 = pneg %p55
      %p182 = pneg %p84
      %p183 = pneg %p81
      %p184 = scmp.lt.s32.totalorder %s16, 1
      %s185 = scalar_select %p184, %s16, 1
      %s186 = smul.addr %s185, 32
      %s187 = smul.addr %s186, 8
      %s188 = scalar_lea.vmem %s2, %s187
      %p189 = pneg %p110
      %p190 = pneg %p107
      %p191 = scmp.lt.s32.totalorder %s16, 1
      %s192 = scalar_select %p191, %s16, 1
      %s193 = scalar_lea.vmem %s3, %s192
      %p194 = pneg %p136
      %p195 = pneg %p133
      %p196 = scmp.lt.s32.totalorder %s16, 1
      %s197 = scalar_select %p196, %s16, 1
      %s198 = scalar_lea.vmem %s4, %s197
      %p199 = scmp.lt.s32.totalorder %s16, 1
      %s200 = scalar_select %p199, %s16, 1
      %s201 = smul.addr %s200, 54
      %s202 = smul.addr %s201, 4
      %s203 = scalar_lea.vmem %s0, %s202
      %p204 = scmp.lt.s32.totalorder %s16, 1
      %s205 = scalar_select %p204, %s16, 1
      %s206 = smul.addr %s205, 32
      %s207 = smul.addr %s206, 8
      %s208 = scalar_lea.vmem %s2, %s207
      %p209 = scmp.lt.s32.totalorder %s16, 1
      %s210 = scalar_select %p209, %s16, 1
      %s211 = scalar_lea.vmem %s3, %s210
      %p212 = scmp.lt.s32.totalorder %s16, 1
      %s213 = scalar_select %p212, %s16, 1
      %s214 = scalar_lea.vmem %s4, %s213
      %216 = vst [vmem:[#allocation2] sm:$0xff] 0.0
      %217 = vst [vmem:[#allocation2 + $0x8] sm:$0xff] 0.0
      %218 = vst [vmem:[#allocation2 + $0x10] sm:$0xff] 0.0
      %219 = vst [vmem:[#allocation2 + $0x18] sm:$0xff] 0.0
      %220 = vst [vmem:[#allocation2 + $0x20] sm:$0xff] 0.0
      %221 = vst [vmem:[#allocation2 + $0x28] sm:$0xff] 0.0
      %222 = vst [vmem:[#allocation2 + $0x30] sm:$0xff] 0.0
      %223 = vst [vmem:[#allocation2 + $0x38] sm:$0xff] 0.0
      %224 = vst [vmem:[#allocation2 + $0x40] sm:$0xff] 0.0
      %225 = vst [vmem:[#allocation2 + $0x48] sm:$0xff] 0.0
      %226 = vst [vmem:[#allocation2 + $0x50] sm:$0xff] 0.0
      %227 = vst [vmem:[#allocation2 + $0x58] sm:$0xff] 0.0
      %228 = vst [vmem:[#allocation2 + $0x60] sm:$0xff] 0.0
      %229 = vst [vmem:[#allocation2 + $0x68] sm:$0xff] 0.0
      %230 = vst [vmem:[#allocation2 + $0x70] sm:$0xff] 0.0
      %231 = vst [vmem:[#allocation2 + $0x78] sm:$0xff] 0.0
      %232 = vst [vmem:[#allocation2 + $0x80] sm:$0xff] 0.0
      %233 = vst [vmem:[#allocation2 + $0x88] sm:$0xff] 0.0
      %234 = vst [vmem:[#allocation2 + $0x90] sm:$0xff] 0.0
      %235 = vst [vmem:[#allocation2 + $0x98] sm:$0xff] 0.0
      %236 = vst [vmem:[#allocation2 + $0xa0] sm:$0xff] 0.0
      %237 = vst [vmem:[#allocation2 + $0xa8] sm:$0xff] 0.0
      %238 = vst [vmem:[#allocation2 + $0xb0] sm:$0xff] 0.0
      %239 = vst [vmem:[#allocation2 + $0xb8] sm:$0xff] 0.0
      %240 = vst [vmem:[#allocation2 + $0xc0] sm:$0xff] 0.0
      %241 = vst [vmem:[#allocation2 + $0xc8] sm:$0xff] 0.0
      %242 = vst [vmem:[#allocation2 + $0xd0] sm:$0xff] 0.0
      %243 = vst [vmem:[#allocation2 + $0xd8] sm:$0xff] 0.0
      %244 = vst [vmem:[#allocation2 + $0xe0] sm:$0xff] 0.0
      %245 = vst [vmem:[#allocation2 + $0xe8] sm:$0xff] 0.0
      %246 = vst [vmem:[#allocation2 + $0xf0] sm:$0xff] 0.0
      %247 = vst [vmem:[#allocation2 + $0xf8] sm:$0xff] 0.0
      %v248 = vld [vmem:[%s203] sm:$0xf]
      %v249 = vld [vmem:[%s203 + $0x4] sm:$0xf]
      %v250 = vld [vmem:[%s203 + $0xc] sm:$0xf]
      %v251 = vld [vmem:[%s203 + $0x10] sm:$0xf]
      %v252 = vld [vmem:[%s203 + $0x18] sm:$0xf]
      %v253 = vld [vmem:[%s203 + $0x1c] sm:$0xf]
      %v254 = vld [vmem:[%s203 + $0x24] sm:$0xf]
      %v255 = vld [vmem:[%s203 + $0x28] sm:$0xf]
      %v256 = vld [vmem:[%s203 + $0x30] sm:$0xf]
      %v257 = vld [vmem:[%s203 + $0x34] sm:$0xf]
      %v258 = vld [vmem:[%s203 + $0x3c] sm:$0xf]
      %v259 = vld [vmem:[%s203 + $0x40] sm:$0xf]
      %v260 = vld [vmem:[%s203 + $0x48] sm:$0xf]
      %v261 = vld [vmem:[%s203 + $0x4c] sm:$0xf]
      %v262 = vld [vmem:[%s203 + $0x54] sm:$0xf]
      %v263 = vld [vmem:[%s203 + $0x58] sm:$0xf]
      %v264 = vld [vmem:[%s203 + $0x60] sm:$0xf]
      %v265 = vld [vmem:[%s203 + $0x64] sm:$0xf]
      %v266 = vld [vmem:[%s203 + $0x6c] sm:$0xf]
      %v267 = vld [vmem:[%s203 + $0x70] sm:$0xf]
      %v268 = vld [vmem:[%s203 + $0x78] sm:$0xf]
      %v269 = vld [vmem:[%s203 + $0x7c] sm:$0xf]
      %v270 = vld [vmem:[%s203 + $0x84] sm:$0xf]
      %v271 = vld [vmem:[%s203 + $0x88] sm:$0xf]
      %v272 = vld [vmem:[%s203 + $0x90] sm:$0xf]
      %v273 = vld [vmem:[%s203 + $0x94] sm:$0xf]
      %v274 = vld [vmem:[%s203 + $0x9c] sm:$0xf]
      %v275 = vld [vmem:[%s203 + $0xa0] sm:$0xf]
      %v276 = vld [vmem:[%s203 + $0xa8] sm:$0xf]
      %v277 = vld [vmem:[%s203 + $0xac] sm:$0xf]
      %v278 = vld [vmem:[%s203 + $0xb4] sm:$0xf]
      %v279 = vld [vmem:[%s203 + $0xb8] sm:$0xf]
      %v280 = vld [vmem:[#allocation2] sm:$0xff]
      %v281 = vld [vmem:[#allocation2 + $0x8] sm:$0xff]
      %v282 = vld [vmem:[#allocation2 + $0x10] sm:$0xff]
      %v283 = vld [vmem:[#allocation2 + $0x18] sm:$0xff]
      %v284 = vld [vmem:[#allocation2 + $0x20] sm:$0xff]
      %v285 = vld [vmem:[#allocation2 + $0x28] sm:$0xff]
      %v286 = vld [vmem:[#allocation2 + $0x30] sm:$0xff]
      %v287 = vld [vmem:[#allocation2 + $0x38] sm:$0xff]
      %v288 = vld [vmem:[#allocation2 + $0x40] sm:$0xff]
      %v289 = vld [vmem:[#allocation2 + $0x48] sm:$0xff]
      %v290 = vld [vmem:[#allocation2 + $0x50] sm:$0xff]
      %v291 = vld [vmem:[#allocation2 + $0x58] sm:$0xff]
      %v292 = vld [vmem:[#allocation2 + $0x60] sm:$0xff]
      %v293 = vld [vmem:[#allocation2 + $0x68] sm:$0xff]
      %v294 = vld [vmem:[#allocation2 + $0x70] sm:$0xff]
      %v295 = vld [vmem:[#allocation2 + $0x78] sm:$0xff]
      %v296 = vld [vmem:[#allocation2 + $0x80] sm:$0xff]
      %v297 = vld [vmem:[#allocation2 + $0x88] sm:$0xff]
      %v298 = vld [vmem:[#allocation2 + $0x90] sm:$0xff]
      %v299 = vld [vmem:[#allocation2 + $0x98] sm:$0xff]
      %v300 = vld [vmem:[#allocation2 + $0xa0] sm:$0xff]
      %v301 = vld [vmem:[#allocation2 + $0xa8] sm:$0xff]
      %v302 = vld [vmem:[#allocation2 + $0xb0] sm:$0xff]
      %v303 = vld [vmem:[#allocation2 + $0xb8] sm:$0xff]
      %v304 = vld [vmem:[#allocation2 + $0xc0] sm:$0xff]
      %v305 = vld [vmem:[#allocation2 + $0xc8] sm:$0xff]
      %v306 = vld [vmem:[#allocation2 + $0xd0] sm:$0xff]
      %v307 = vld [vmem:[#allocation2 + $0xd8] sm:$0xff]
      %v308 = vld [vmem:[#allocation2 + $0xe0] sm:$0xff]
      %v309 = vld [vmem:[#allocation2 + $0xe8] sm:$0xff]
      %v310 = vld [vmem:[#allocation2 + $0xf0] sm:$0xff]
      %v311 = vld [vmem:[#allocation2 + $0xf8] sm:$0xff]
      %v312 = vld [vmem:[%s1] sm:$0xf]
      %v313 = vld [vmem:[%s1 + $0x4] sm:$0xf]
      %v314 = vld [vmem:[%s1 + $0x8] sm:$0xf]
      %v315 = vld [vmem:[%s1 + $0xc] sm:$0xf]
      %v316 = vld [vmem:[%s1 + $0x10] sm:$0xf]
      %v317 = vld [vmem:[%s1 + $0x14] sm:$0xf]
      %v318 = vld [vmem:[%s1 + $0x18] sm:$0xf]
      %v319 = vld [vmem:[%s1 + $0x1c] sm:$0xf]
      %v320 = vld [vmem:[%s1 + $0x20] sm:$0xf]
      %v321 = vld [vmem:[%s1 + $0x24] sm:$0xf]
      %v322 = vld [vmem:[%s1 + $0x28] sm:$0xf]
      %v323 = vld [vmem:[%s1 + $0x2c] sm:$0xf]
      %v324 = vld [vmem:[%s1 + $0x30] sm:$0xf]
      %v325 = vld [vmem:[%s1 + $0x34] sm:$0xf]
      %v326 = vld [vmem:[%s1 + $0x38] sm:$0xf]
      %v327 = vld [vmem:[%s1 + $0x3c] sm:$0xf]
      %v360 = vunpack.c.l.b16 %v248
      %v361 = vunpack.c.l.b16 %v249
      %v362 = vunpack.c.l.b16 %v250
      %v363 = vunpack.c.l.b16 %v251
      %v364 = vunpack.c.l.b16 %v252
      %v365 = vunpack.c.l.b16 %v253
      %v366 = vunpack.c.l.b16 %v254
      %v367 = vunpack.c.l.b16 %v255
      %v368 = vunpack.c.l.b16 %v256
      %v369 = vunpack.c.l.b16 %v257
      %v370 = vunpack.c.l.b16 %v258
      %v371 = vunpack.c.l.b16 %v259
      %v372 = vunpack.c.l.b16 %v260
      %v373 = vunpack.c.l.b16 %v261
      %v374 = vunpack.c.l.b16 %v262
      %v375 = vunpack.c.l.b16 %v263
      %v376 = vunpack.c.l.b16 %v264
      %v377 = vunpack.c.l.b16 %v265
      %v378 = vunpack.c.l.b16 %v266
      %v379 = vunpack.c.l.b16 %v267
      %v380 = vunpack.c.l.b16 %v268
      %v381 = vunpack.c.l.b16 %v269
      %v382 = vunpack.c.l.b16 %v270
      %v383 = vunpack.c.l.b16 %v271
      %v384 = vunpack.c.l.b16 %v272
      %v385 = vunpack.c.l.b16 %v273
      %v386 = vunpack.c.l.b16 %v274
      %v387 = vunpack.c.l.b16 %v275
      %v388 = vunpack.c.l.b16 %v276
      %v389 = vunpack.c.l.b16 %v277
      %v390 = vunpack.c.l.b16 %v278
      %v391 = vunpack.c.l.b16 %v279
      %v392 = vpack.c.b16 %v361, %v360
      %v393 = vpack.c.b16 %v363, %v362
      %v394 = vpack.c.b16 %v365, %v364
      %v395 = vpack.c.b16 %v367, %v366
      %v396 = vpack.c.b16 %v369, %v368
      %v397 = vpack.c.b16 %v371, %v370
      %v398 = vpack.c.b16 %v373, %v372
      %v399 = vpack.c.b16 %v375, %v374
      %v400 = vpack.c.b16 %v377, %v376
      %v401 = vpack.c.b16 %v379, %v378
      %v402 = vpack.c.b16 %v381, %v380
      %v403 = vpack.c.b16 %v383, %v382
      %v404 = vpack.c.b16 %v385, %v384
      %v405 = vpack.c.b16 %v387, %v386
      %v406 = vpack.c.b16 %v389, %v388
      %v407 = vpack.c.b16 %v391, %v390
      %v440 = vunpack.c.l.b16 %v312
      %v441 = vunpack.c.l.b16 %v313
      %v442 = vunpack.c.l.b16 %v314
      %v443 = vunpack.c.l.b16 %v315
      %v444 = vunpack.c.l.b16 %v316
      %v445 = vunpack.c.l.b16 %v317
      %v446 = vunpack.c.l.b16 %v318
      %v447 = vunpack.c.l.b16 %v319
      %v448 = vunpack.c.l.b16 %v320
      %v449 = vunpack.c.l.b16 %v321
      %v450 = vunpack.c.l.b16 %v322
      %v451 = vunpack.c.l.b16 %v323
      %v452 = vunpack.c.l.b16 %v324
      %v453 = vunpack.c.l.b16 %v325
      %v454 = vunpack.c.l.b16 %v326
      %v455 = vunpack.c.l.b16 %v327
      %v456 = vpack.c.b16 %v441, %v440
      %v457 = vpack.c.b16 %v443, %v442
      %v458 = vpack.c.b16 %v445, %v444
      %v459 = vpack.c.b16 %v447, %v446
      %v460 = vpack.c.b16 %v449, %v448
      %v461 = vpack.c.b16 %v451, %v450
      %v462 = vpack.c.b16 %v453, %v452
      %v463 = vpack.c.b16 %v455, %v454
      %472 = vmatprep.subr.bf16.mxu0 0
      %473 = vmatpush1.bf16.msra.mxu0 %v456
      %474 = vmatprep.subr.bf16.mxu0 0
      %475 = vmatpush1.bf16.msra.mxu0 %v457
      %476 = vmatprep.subr.bf16.mxu0 0
      %477 = vmatpush1.bf16.msra.mxu0 %v458
      %478 = vmatprep.subr.bf16.mxu0 0
      %479 = vmatpush1.bf16.msra.mxu0 %v459
      %480 = vmatprep.subr.bf16.mxu0 0
      %481 = vmatpush1.bf16.msra.mxu0 %v460
      %482 = vmatprep.subr.bf16.mxu0 0
      %483 = vmatpush1.bf16.msra.mxu0 %v461
      %484 = vmatprep.subr.bf16.mxu0 0
      %485 = vmatpush1.bf16.msra.mxu0 %v462
      %486 = vmatprep.subr.bf16.mxu0 0
      %487 = vmatpush1.bf16.msra.mxu0 %v463
      %488 = vmatprep.subr.bf16.mxu0 0
      %489 = vmatpush1.bf16.msra.mxu0 0
      %490 = vmatprep.subr.bf16.mxu0 0
      %491 = vmatpush1.bf16.msra.mxu0 0
      %492 = vmatprep.subr.bf16.mxu0 0
      %493 = vmatpush1.bf16.msra.mxu0 0
      %494 = vmatprep.subr.bf16.mxu0 0
      %495 = vmatpush1.bf16.msra.mxu0 0
      %496 = vmatprep.subr.bf16.mxu0 0
      %497 = vmatpush1.bf16.msra.mxu0 0
      %498 = vmatprep.subr.bf16.mxu0 0
      %499 = vmatpush1.bf16.msra.mxu0 0
      %500 = vmatprep.subr.bf16.mxu0 0
      %501 = vmatpush1.bf16.msra.mxu0 0
      %502 = vmatprep.subr.bf16.mxu0 0
      %503 = vmatpush1.bf16.msra.mxu0 0
      %504 = vmatprep.mubr.bf16.mxu0 0
      %505 = vmatmul.mubr.bf16.gmra.mrb[0].mxu0 %v392
      %v506 = vpop.f32.mrb[0].mxu0
      %v507 = vadd.f32 0.0, %v506
      %v508 = vpop.f32.mrb[0].mxu0
      %v509 = vpop.f32.mrb[0].mxu0
      %v510 = vadd.f32 0.0, %v509
      %v511 = vpop.f32.mrb[0].mxu0
      %512 = vmatprep.mubr.bf16.mxu0 0
      %513 = vmatmul.mubr.bf16.gmra.mrb[0].mxu0 %v393
      %v514 = vpop.f32.mrb[0].mxu0
      %v515 = vadd.f32 0.0, %v514
      %v516 = vpop.f32.mrb[0].mxu0
      %v517 = vpop.f32.mrb[0].mxu0
      %v518 = vadd.f32 0.0, %v517
      %v519 = vpop.f32.mrb[0].mxu0
      %520 = vmatprep.mubr.bf16.mxu0 0
      %521 = vmatmul.mubr.bf16.gmra.mrb[0].mxu0 %v394
      %v522 = vpop.f32.mrb[0].mxu0
      %v523 = vadd.f32 0.0, %v522
      %v524 = vpop.f32.mrb[0].mxu0
      %v525 = vpop.f32.mrb[0].mxu0
      %v526 = vadd.f32 0.0, %v525
      %v527 = vpop.f32.mrb[0].mxu0
      %528 = vmatprep.mubr.bf16.mxu0 0
      %529 = vmatmul.mubr.bf16.gmra.mrb[0].mxu0 %v395
      %v530 = vpop.f32.mrb[0].mxu0
      %v531 = vadd.f32 0.0, %v530
      %v532 = vpop.f32.mrb[0].mxu0
      %v533 = vpop.f32.mrb[0].mxu0
      %v534 = vadd.f32 0.0, %v533
      %v535 = vpop.f32.mrb[0].mxu0
      %536 = vmatprep.mubr.bf16.mxu0 0
      %537 = vmatmul.mubr.bf16.gmra.mrb[0].mxu0 %v396
      %v538 = vpop.f32.mrb[0].mxu0
      %v539 = vadd.f32 0.0, %v538
      %v540 = vpop.f32.mrb[0].mxu0
      %v541 = vpop.f32.mrb[0].mxu0
      %v542 = vadd.f32 0.0, %v541
      %v543 = vpop.f32.mrb[0].mxu0
      %544 = vmatprep.mubr.bf16.mxu0 0
      %545 = vmatmul.mubr.bf16.gmra.mrb[0].mxu0 %v397
      %v546 = vpop.f32.mrb[0].mxu0
      %v547 = vadd.f32 0.0, %v546
      %v548 = vpop.f32.mrb[0].mxu0
      %v549 = vpop.f32.mrb[0].mxu0
      %v550 = vadd.f32 0.0, %v549
      %v551 = vpop.f32.mrb[0].mxu0
      %552 = vmatprep.mubr.bf16.mxu0 0
      %553 = vmatmul.mubr.bf16.gmra.mrb[0].mxu0 %v398
      %v554 = vpop.f32.mrb[0].mxu0
      %v555 = vadd.f32 0.0, %v554
      %v556 = vpop.f32.mrb[0].mxu0
      %v557 = vpop.f32.mrb[0].mxu0
      %v558 = vadd.f32 0.0, %v557
      %v559 = vpop.f32.mrb[0].mxu0
      %560 = vmatprep.mubr.bf16.mxu0 0
      %561 = vmatmul.mubr.bf16.gmra.mrb[0].mxu0 %v399
      %v562 = vpop.f32.mrb[0].mxu0
      %v563 = vadd.f32 0.0, %v562
      %v564 = vpop.f32.mrb[0].mxu0
      %v565 = vpop.f32.mrb[0].mxu0
      %v566 = vadd.f32 0.0, %v565
      %v567 = vpop.f32.mrb[0].mxu0
      %568 = vmatprep.mubr.bf16.mxu0 0
      %569 = vmatmul.mubr.bf16.gmra.mrb[0].mxu0 %v400
      %v570 = vpop.f32.mrb[0].mxu0
      %v571 = vadd.f32 0.0, %v570
      %v572 = vpop.f32.mrb[0].mxu0
      %v573 = vpop.f32.mrb[0].mxu0
      %v574 = vadd.f32 0.0, %v573
      %v575 = vpop.f32.mrb[0].mxu0
      %576 = vmatprep.mubr.bf16.mxu0 0
      %577 = vmatmul.mubr.bf16.gmra.mrb[0].mxu0 %v401
      %v578 = vpop.f32.mrb[0].mxu0
      %v579 = vadd.f32 0.0, %v578
      %v580 = vpop.f32.mrb[0].mxu0
      %v581 = vpop.f32.mrb[0].mxu0
      %v582 = vadd.f32 0.0, %v581
      %v583 = vpop.f32.mrb[0].mxu0
      %584 = vmatprep.mubr.bf16.mxu0 0
      %585 = vmatmul.mubr.bf16.gmra.mrb[0].mxu0 %v402
      %v586 = vpop.f32.mrb[0].mxu0
      %v587 = vadd.f32 0.0, %v586
      %v588 = vpop.f32.mrb[0].mxu0
      %v589 = vpop.f32.mrb[0].mxu0
      %v590 = vadd.f32 0.0, %v589
      %v591 = vpop.f32.mrb[0].mxu0
      %592 = vmatprep.mubr.bf16.mxu0 0
      %593 = vmatmul.mubr.bf16.gmra.mrb[0].mxu0 %v403
      %v594 = vpop.f32.mrb[0].mxu0
      %v595 = vadd.f32 0.0, %v594
      %v596 = vpop.f32.mrb[0].mxu0
      %v597 = vpop.f32.mrb[0].mxu0
      %v598 = vadd.f32 0.0, %v597
      %v599 = vpop.f32.mrb[0].mxu0
      %600 = vmatprep.mubr.bf16.mxu0 0
      %601 = vmatmul.mubr.bf16.gmra.mrb[0].mxu0 %v404
      %v602 = vpop.f32.mrb[0].mxu0
      %v603 = vadd.f32 0.0, %v602
      %v604 = vpop.f32.mrb[0].mxu0
      %v605 = vpop.f32.mrb[0].mxu0
      %v606 = vadd.f32 0.0, %v605
      %v607 = vpop.f32.mrb[0].mxu0
      %608 = vmatprep.mubr.bf16.mxu0 0
      %609 = vmatmul.mubr.bf16.gmra.mrb[0].mxu0 %v405
      %v610 = vpop.f32.mrb[0].mxu0
      %v611 = vadd.f32 0.0, %v610
      %v612 = vpop.f32.mrb[0].mxu0
      %v613 = vpop.f32.mrb[0].mxu0
      %v614 = vadd.f32 0.0, %v613
      %v615 = vpop.f32.mrb[0].mxu0
      %616 = vmatprep.mubr.bf16.mxu0 0
      %617 = vmatmul.mubr.bf16.gmra.mrb[0].mxu0 %v406
      %v618 = vpop.f32.mrb[0].mxu0
      %v619 = vadd.f32 0.0, %v618
      %v620 = vpop.f32.mrb[0].mxu0
      %v621 = vpop.f32.mrb[0].mxu0
      %v622 = vadd.f32 0.0, %v621
      %v623 = vpop.f32.mrb[0].mxu0
      %624 = vmatprep.mubr.bf16.mxu0 0
      %625 = vmatmul.mubr.bf16.gmra.mrb[0].mxu0 %v407
      %v626 = vpop.f32.mrb[0].mxu0
      %v627 = vadd.f32 0.0, %v626
      %v628 = vpop.f32.mrb[0].mxu0
      %v629 = vpop.f32.mrb[0].mxu0
      %v630 = vadd.f32 0.0, %v629
      %v631 = vpop.f32.mrb[0].mxu0
      %632 = vdwg.mxu0
      %v633 = vadd.f32 %v280, %v507
      %v634 = vadd.f32 %v281, %v510
      %v635 = vadd.f32 %v282, %v515
      %v636 = vadd.f32 %v283, %v518
      %v637 = vadd.f32 %v284, %v523
      %v638 = vadd.f32 %v285, %v526
      %v639 = vadd.f32 %v286, %v531
      %v640 = vadd.f32 %v287, %v534
      %v641 = vadd.f32 %v288, %v539
      %v642 = vadd.f32 %v289, %v542
      %v643 = vadd.f32 %v290, %v547
      %v644 = vadd.f32 %v291, %v550
      %v645 = vadd.f32 %v292, %v555
      %v646 = vadd.f32 %v293, %v558
      %v647 = vadd.f32 %v294, %v563
      %v648 = vadd.f32 %v295, %v566
      %v649 = vadd.f32 %v296, %v571
      %v650 = vadd.f32 %v297, %v574
      %v651 = vadd.f32 %v298, %v579
      %v652 = vadd.f32 %v299, %v582
      %v653 = vadd.f32 %v300, %v587
      %v654 = vadd.f32 %v301, %v590
      %v655 = vadd.f32 %v302, %v595
      %v656 = vadd.f32 %v303, %v598
      %v657 = vadd.f32 %v304, %v603
      %v658 = vadd.f32 %v305, %v606
      %v659 = vadd.f32 %v306, %v611
      %v660 = vadd.f32 %v307, %v614
      %v661 = vadd.f32 %v308, %v619
      %v662 = vadd.f32 %v309, %v622
      %v663 = vadd.f32 %v310, %v627
      %v664 = vadd.f32 %v311, %v630
      %665 = vst [vmem:[#allocation2] sm:$0xff] %v633
      %666 = vst [vmem:[#allocation2 + $0x8] sm:$0xff] %v634
      %667 = vst [vmem:[#allocation2 + $0x10] sm:$0xff] %v635
      %668 = vst [vmem:[#allocation2 + $0x18] sm:$0xff] %v636
      %669 = vst [vmem:[#allocation2 + $0x20] sm:$0xff] %v637
      %670 = vst [vmem:[#allocation2 + $0x28] sm:$0xff] %v638
      %671 = vst [vmem:[#allocation2 + $0x30] sm:$0xff] %v639
      %672 = vst [vmem:[#allocation2 + $0x38] sm:$0xff] %v640
      %673 = vst [vmem:[#allocation2 + $0x40] sm:$0xff] %v641
      %674 = vst [vmem:[#allocation2 + $0x48] sm:$0xff] %v642
      %675 = vst [vmem:[#allocation2 + $0x50] sm:$0xff] %v643
      %676 = vst [vmem:[#allocation2 + $0x58] sm:$0xff] %v644
      %677 = vst [vmem:[#allocation2 + $0x60] sm:$0xff] %v645
      %678 = vst [vmem:[#allocation2 + $0x68] sm:$0xff] %v646
      %679 = vst [vmem:[#allocation2 + $0x70] sm:$0xff] %v647
      %680 = vst [vmem:[#allocation2 + $0x78] sm:$0xff] %v648
      %681 = vst [vmem:[#allocation2 + $0x80] sm:$0xff] %v649
      %682 = vst [vmem:[#allocation2 + $0x88] sm:$0xff] %v650
      %683 = vst [vmem:[#allocation2 + $0x90] sm:$0xff] %v651
      %684 = vst [vmem:[#allocation2 + $0x98] sm:$0xff] %v652
      %685 = vst [vmem:[#allocation2 + $0xa0] sm:$0xff] %v653
      %686 = vst [vmem:[#allocation2 + $0xa8] sm:$0xff] %v654
      %687 = vst [vmem:[#allocation2 + $0xb0] sm:$0xff] %v655
      %688 = vst [vmem:[#allocation2 + $0xb8] sm:$0xff] %v656
      %689 = vst [vmem:[#allocation2 + $0xc0] sm:$0xff] %v657
      %690 = vst [vmem:[#allocation2 + $0xc8] sm:$0xff] %v658
      %691 = vst [vmem:[#allocation2 + $0xd0] sm:$0xff] %v659
      %692 = vst [vmem:[#allocation2 + $0xd8] sm:$0xff] %v660
      %693 = vst [vmem:[#allocation2 + $0xe0] sm:$0xff] %v661
      %694 = vst [vmem:[#allocation2 + $0xe8] sm:$0xff] %v662
      %695 = vst [vmem:[#allocation2 + $0xf0] sm:$0xff] %v663
      %696 = vst [vmem:[#allocation2 + $0xf8] sm:$0xff] %v664
      %v697 = vld [vmem:[%s203] sm:$0xf]
      %v698 = vld [vmem:[%s203 + $0x4] sm:$0xf]
      %v699 = vld [vmem:[%s203 + $0x8] sm:$0x1]
      %v700 = vld [vmem:[%s203 + $0xc] sm:$0xf]
      %v701 = vld [vmem:[%s203 + $0x10] sm:$0xf]
      %v702 = vld [vmem:[%s203 + $0x14] sm:$0x1]
      %v703 = vld [vmem:[%s203 + $0x18] sm:$0xf]
      %v704 = vld [vmem:[%s203 + $0x1c] sm:$0xf]
      %v705 = vld [vmem:[%s203 + $0x20] sm:$0x1]
      %v706 = vld [vmem:[%s203 + $0x24] sm:$0xf]
      %v707 = vld [vmem:[%s203 + $0x28] sm:$0xf]
      %v708 = vld [vmem:[%s203 + $0x2c] sm:$0x1]
      %v709 = vld [vmem:[%s203 + $0x30] sm:$0xf]
      %v710 = vld [vmem:[%s203 + $0x34] sm:$0xf]
      %v711 = vld [vmem:[%s203 + $0x38] sm:$0x1]
      %v712 = vld [vmem:[%s203 + $0x3c] sm:$0xf]
      %v713 = vld [vmem:[%s203 + $0x40] sm:$0xf]
      %v714 = vld [vmem:[%s203 + $0x44] sm:$0x1]
      %v715 = vld [vmem:[%s203 + $0x48] sm:$0xf]
      %v716 = vld [vmem:[%s203 + $0x4c] sm:$0xf]
      %v717 = vld [vmem:[%s203 + $0x50] sm:$0x1]
      %v718 = vld [vmem:[%s203 + $0x54] sm:$0xf]
      %v719 = vld [vmem:[%s203 + $0x58] sm:$0xf]
      %v720 = vld [vmem:[%s203 + $0x5c] sm:$0x1]
      %v721 = vld [vmem:[%s203 + $0x60] sm:$0xf]
      %v722 = vld [vmem:[%s203 + $0x64] sm:$0xf]
      %v723 = vld [vmem:[%s203 + $0x68] sm:$0x1]
      %v724 = vld [vmem:[%s203 + $0x6c] sm:$0xf]
      %v725 = vld [vmem:[%s203 + $0x70] sm:$0xf]
      %v726 = vld [vmem:[%s203 + $0x74] sm:$0x1]
      %v727 = vld [vmem:[%s203 + $0x78] sm:$0xf]
      %v728 = vld [vmem:[%s203 + $0x7c] sm:$0xf]
      %v729 = vld [vmem:[%s203 + $0x80] sm:$0x1]
      %v730 = vld [vmem:[%s203 + $0x84] sm:$0xf]
      %v731 = vld [vmem:[%s203 + $0x88] sm:$0xf]
      %v732 = vld [vmem:[%s203 + $0x8c] sm:$0x1]
      %v733 = vld [vmem:[%s203 + $0x90] sm:$0xf]
      %v734 = vld [vmem:[%s203 + $0x94] sm:$0xf]
      %v735 = vld [vmem:[%s203 + $0x98] sm:$0x1]
      %v736 = vld [vmem:[%s203 + $0x9c] sm:$0xf]
      %v737 = vld [vmem:[%s203 + $0xa0] sm:$0xf]
      %v738 = vld [vmem:[%s203 + $0xa4] sm:$0x1]
      %v739 = vld [vmem:[%s203 + $0xa8] sm:$0xf]
      %v740 = vld [vmem:[%s203 + $0xac] sm:$0xf]
      %v741 = vld [vmem:[%s203 + $0xb0] sm:$0x1]
      %v742 = vld [vmem:[%s203 + $0xb4] sm:$0xf]
      %v743 = vld [vmem:[%s203 + $0xb8] sm:$0xf]
      %v744 = vld [vmem:[%s203 + $0xbc] sm:$0x1]
      %v745 = vld [vmem:[#allocation2] sm:$0xff]
      %v746 = vld [vmem:[#allocation2 + $0x8] sm:$0xff]
      %v747 = vld [vmem:[#allocation2 + $0x10] sm:$0xff]
      %v748 = vld [vmem:[#allocation2 + $0x18] sm:$0xff]
      %v749 = vld [vmem:[#allocation2 + $0x20] sm:$0xff]
      %v750 = vld [vmem:[#allocation2 + $0x28] sm:$0xff]
      %v751 = vld [vmem:[#allocation2 + $0x30] sm:$0xff]
      %v752 = vld [vmem:[#allocation2 + $0x38] sm:$0xff]
      %v753 = vld [vmem:[#allocation2 + $0x40] sm:$0xff]
      %v754 = vld [vmem:[#allocation2 + $0x48] sm:$0xff]
      %v755 = vld [vmem:[#allocation2 + $0x50] sm:$0xff]
      %v756 = vld [vmem:[#allocation2 + $0x58] sm:$0xff]
      %v757 = vld [vmem:[#allocation2 + $0x60] sm:$0xff]
      %v758 = vld [vmem:[#allocation2 + $0x68] sm:$0xff]
      %v759 = vld [vmem:[#allocation2 + $0x70] sm:$0xff]
      %v760 = vld [vmem:[#allocation2 + $0x78] sm:$0xff]
      %v761 = vld [vmem:[#allocation2 + $0x80] sm:$0xff]
      %v762 = vld [vmem:[#allocation2 + $0x88] sm:$0xff]
      %v763 = vld [vmem:[#allocation2 + $0x90] sm:$0xff]
      %v764 = vld [vmem:[#allocation2 + $0x98] sm:$0xff]
      %v765 = vld [vmem:[#allocation2 + $0xa0] sm:$0xff]
      %v766 = vld [vmem:[#allocation2 + $0xa8] sm:$0xff]
      %v767 = vld [vmem:[#allocation2 + $0xb0] sm:$0xff]
      %v768 = vld [vmem:[#allocation2 + $0xb8] sm:$0xff]
      %v769 = vld [vmem:[#allocation2 + $0xc0] sm:$0xff]
      %v770 = vld [vmem:[#allocation2 + $0xc8] sm:$0xff]
      %v771 = vld [vmem:[#allocation2 + $0xd0] sm:$0xff]
      %v772 = vld [vmem:[#allocation2 + $0xd8] sm:$0xff]
      %v773 = vld [vmem:[#allocation2 + $0xe0] sm:$0xff]
      %v774 = vld [vmem:[#allocation2 + $0xe8] sm:$0xff]
      %v775 = vld [vmem:[#allocation2 + $0xf0] sm:$0xff]
      %v776 = vld [vmem:[#allocation2 + $0xf8] sm:$0xff]
      %vm777 = vsmask.f32 3328
      %vm778 = vsmask.f32 7440
      %vm779 = vmor %vm777, %vm778
      %v781 = vshrl.u32 %v697, 16
      %v783 = vrot.slane %v781, 4
      %v784 = vshll.u32 %v697, 16
      %v786 = vrot.slane %v784, 5
      %v787 = vor.u32 %v783, %v786
      %v788 = vrot.slane %v787, 4
      %v790 = vshll.u32 %v698, 16
      %v792 = vrot.slane %v790, 5
      %v793 = vsel %vm779, %v788, %v792
      %v794 = vshrl.u32 %v698, 16
      %v796 = vrot.slane %v794, 4
      %v797 = vor.u32 %v796, %v792
      %v798 = vrot.slane %v797, 4
      %v800 = vshll.u32 %v699, 16
      %v802 = vrot.slane %v800, 5
      %v803 = vsel %vm779, %v798, %v802
      %v805 = vshrl.u32 %v700, 16
      %v807 = vrot.slane %v805, 4
      %v808 = vshll.u32 %v700, 16
      %v810 = vrot.slane %v808, 5
      %v811 = vor.u32 %v807, %v810
      %v812 = vrot.slane %v811, 4
      %v814 = vshll.u32 %v701, 16
      %v816 = vrot.slane %v814, 5
      %v817 = vsel %vm779, %v812, %v816
      %v818 = vshrl.u32 %v701, 16
      %v820 = vrot.slane %v818, 4
      %v821 = vor.u32 %v820, %v816
      %v822 = vrot.slane %v821, 4
      %v824 = vshll.u32 %v702, 16
      %v826 = vrot.slane %v824, 5
      %v827 = vsel %vm779, %v822, %v826
      %v829 = vshrl.u32 %v703, 16
      %v831 = vrot.slane %v829, 4
      %v832 = vshll.u32 %v703, 16
      %v834 = vrot.slane %v832, 5
      %v835 = vor.u32 %v831, %v834
      %v836 = vrot.slane %v835, 4
      %v838 = vshll.u32 %v704, 16
      %v840 = vrot.slane %v838, 5
      %v841 = vsel %vm779, %v836, %v840
      %v842 = vshrl.u32 %v704, 16
      %v844 = vrot.slane %v842, 4
      %v845 = vor.u32 %v844, %v840
      %v846 = vrot.slane %v845, 4
      %v848 = vshll.u32 %v705, 16
      %v850 = vrot.slane %v848, 5
      %v851 = vsel %vm779, %v846, %v850
      %v853 = vshrl.u32 %v706, 16
      %v855 = vrot.slane %v853, 4
      %v856 = vshll.u32 %v706, 16
      %v858 = vrot.slane %v856, 5
      %v859 = vor.u32 %v855, %v858
      %v860 = vrot.slane %v859, 4
      %v862 = vshll.u32 %v707, 16
      %v864 = vrot.slane %v862, 5
      %v865 = vsel %vm779, %v860, %v864
      %v866 = vshrl.u32 %v707, 16
      %v868 = vrot.slane %v866, 4
      %v869 = vor.u32 %v868, %v864
      %v870 = vrot.slane %v869, 4
      %v872 = vshll.u32 %v708, 16
      %v874 = vrot.slane %v872, 5
      %v875 = vsel %vm779, %v870, %v874
      %v877 = vshrl.u32 %v709, 16
      %v879 = vrot.slane %v877, 4
      %v880 = vshll.u32 %v709, 16
      %v882 = vrot.slane %v880, 5
      %v883 = vor.u32 %v879, %v882
      %v884 = vrot.slane %v883, 4
      %v886 = vshll.u32 %v710, 16
      %v888 = vrot.slane %v886, 5
      %v889 = vsel %vm779, %v884, %v888
      %v890 = vshrl.u32 %v710, 16
      %v892 = vrot.slane %v890, 4
      %v893 = vor.u32 %v892, %v888
      %v894 = vrot.slane %v893, 4
      %v896 = vshll.u32 %v711, 16
      %v898 = vrot.slane %v896, 5
      %v899 = vsel %vm779, %v894, %v898
      %v901 = vshrl.u32 %v712, 16
      %v903 = vrot.slane %v901, 4
      %v904 = vshll.u32 %v712, 16
      %v906 = vrot.slane %v904, 5
      %v907 = vor.u32 %v903, %v906
      %v908 = vrot.slane %v907, 4
      %v910 = vshll.u32 %v713, 16
      %v912 = vrot.slane %v910, 5
      %v913 = vsel %vm779, %v908, %v912
      %v914 = vshrl.u32 %v713, 16
      %v916 = vrot.slane %v914, 4
      %v917 = vor.u32 %v916, %v912
      %v918 = vrot.slane %v917, 4
      %v920 = vshll.u32 %v714, 16
      %v922 = vrot.slane %v920, 5
      %v923 = vsel %vm779, %v918, %v922
      %v925 = vshrl.u32 %v715, 16
      %v927 = vrot.slane %v925, 4
      %v928 = vshll.u32 %v715, 16
      %v930 = vrot.slane %v928, 5
      %v931 = vor.u32 %v927, %v930
      %v932 = vrot.slane %v931, 4
      %v934 = vshll.u32 %v716, 16
      %v936 = vrot.slane %v934, 5
      %v937 = vsel %vm779, %v932, %v936
      %v938 = vshrl.u32 %v716, 16
      %v940 = vrot.slane %v938, 4
      %v941 = vor.u32 %v940, %v936
      %v942 = vrot.slane %v941, 4
      %v944 = vshll.u32 %v717, 16
      %v946 = vrot.slane %v944, 5
      %v947 = vsel %vm779, %v942, %v946
      %v949 = vshrl.u32 %v718, 16
      %v951 = vrot.slane %v949, 4
      %v952 = vshll.u32 %v718, 16
      %v954 = vrot.slane %v952, 5
      %v955 = vor.u32 %v951, %v954
      %v956 = vrot.slane %v955, 4
      %v958 = vshll.u32 %v719, 16
      %v960 = vrot.slane %v958, 5
      %v961 = vsel %vm779, %v956, %v960
      %v962 = vshrl.u32 %v719, 16
      %v964 = vrot.slane %v962, 4
      %v965 = vor.u32 %v964, %v960
      %v966 = vrot.slane %v965, 4
      %v968 = vshll.u32 %v720, 16
      %v970 = vrot.slane %v968, 5
      %v971 = vsel %vm779, %v966, %v970
      %v973 = vshrl.u32 %v721, 16
      %v975 = vrot.slane %v973, 4
      %v976 = vshll.u32 %v721, 16
      %v978 = vrot.slane %v976, 5
      %v979 = vor.u32 %v975, %v978
      %v980 = vrot.slane %v979, 4
      %v982 = vshll.u32 %v722, 16
      %v984 = vrot.slane %v982, 5
      %v985 = vsel %vm779, %v980, %v984
      %v986 = vshrl.u32 %v722, 16
      %v988 = vrot.slane %v986, 4
      %v989 = vor.u32 %v988, %v984
      %v990 = vrot.slane %v989, 4
      %v992 = vshll.u32 %v723, 16
      %v994 = vrot.slane %v992, 5
      %v995 = vsel %vm779, %v990, %v994
      %v997 = vshrl.u32 %v724, 16
      %v999 = vrot.slane %v997, 4
      %v1000 = vshll.u32 %v724, 16
      %v1002 = vrot.slane %v1000, 5
      %v1003 = vor.u32 %v999, %v1002
      %v1004 = vrot.slane %v1003, 4
      %v1006 = vshll.u32 %v725, 16
      %v1008 = vrot.slane %v1006, 5
      %v1009 = vsel %vm779, %v1004, %v1008
      %v1010 = vshrl.u32 %v725, 16
      %v1012 = vrot.slane %v1010, 4
      %v1013 = vor.u32 %v1012, %v1008
      %v1014 = vrot.slane %v1013, 4
      %v1016 = vshll.u32 %v726, 16
      %v1018 = vrot.slane %v1016, 5
      %v1019 = vsel %vm779, %v1014, %v1018
      %v1021 = vshrl.u32 %v727, 16
      %v1023 = vrot.slane %v1021, 4
      %v1024 = vshll.u32 %v727, 16
      %v1026 = vrot.slane %v1024, 5
      %v1027 = vor.u32 %v1023, %v1026
      %v1028 = vrot.slane %v1027, 4
      %v1030 = vshll.u32 %v728, 16
      %v1032 = vrot.slane %v1030, 5
      %v1033 = vsel %vm779, %v1028, %v1032
      %v1034 = vshrl.u32 %v728, 16
      %v1036 = vrot.slane %v1034, 4
      %v1037 = vor.u32 %v1036, %v1032
      %v1038 = vrot.slane %v1037, 4
      %v1040 = vshll.u32 %v729, 16
      %v1042 = vrot.slane %v1040, 5
      %v1043 = vsel %vm779, %v1038, %v1042
      %v1045 = vshrl.u32 %v730, 16
      %v1047 = vrot.slane %v1045, 4
      %v1048 = vshll.u32 %v730, 16
      %v1050 = vrot.slane %v1048, 5
      %v1051 = vor.u32 %v1047, %v1050
      %v1052 = vrot.slane %v1051, 4
      %v1054 = vshll.u32 %v731, 16
      %v1056 = vrot.slane %v1054, 5
      %v1057 = vsel %vm779, %v1052, %v1056
      %v1058 = vshrl.u32 %v731, 16
      %v1060 = vrot.slane %v1058, 4
      %v1061 = vor.u32 %v1060, %v1056
      %v1062 = vrot.slane %v1061, 4
      %v1064 = vshll.u32 %v732, 16
      %v1066 = vrot.slane %v1064, 5
      %v1067 = vsel %vm779, %v1062, %v1066
      %v1069 = vshrl.u32 %v733, 16
      %v1071 = vrot.slane %v1069, 4
      %v1072 = vshll.u32 %v733, 16
      %v1074 = vrot.slane %v1072, 5
      %v1075 = vor.u32 %v1071, %v1074
      %v1076 = vrot.slane %v1075, 4
      %v1078 = vshll.u32 %v734, 16
      %v1080 = vrot.slane %v1078, 5
      %v1081 = vsel %vm779, %v1076, %v1080
      %v1082 = vshrl.u32 %v734, 16
      %v1084 = vrot.slane %v1082, 4
      %v1085 = vor.u32 %v1084, %v1080
      %v1086 = vrot.slane %v1085, 4
      %v1088 = vshll.u32 %v735, 16
      %v1090 = vrot.slane %v1088, 5
      %v1091 = vsel %vm779, %v1086, %v1090
      %v1093 = vshrl.u32 %v736, 16
      %v1095 = vrot.slane %v1093, 4
      %v1096 = vshll.u32 %v736, 16
      %v1098 = vrot.slane %v1096, 5
      %v1099 = vor.u32 %v1095, %v1098
      %v1100 = vrot.slane %v1099, 4
      %v1102 = vshll.u32 %v737, 16
      %v1104 = vrot.slane %v1102, 5
      %v1105 = vsel %vm779, %v1100, %v1104
      %v1106 = vshrl.u32 %v737, 16
      %v1108 = vrot.slane %v1106, 4
      %v1109 = vor.u32 %v1108, %v1104
      %v1110 = vrot.slane %v1109, 4
      %v1112 = vshll.u32 %v738, 16
      %v1114 = vrot.slane %v1112, 5
      %v1115 = vsel %vm779, %v1110, %v1114
      %v1117 = vshrl.u32 %v739, 16
      %v1119 = vrot.slane %v1117, 4
      %v1120 = vshll.u32 %v739, 16
      %v1122 = vrot.slane %v1120, 5
      %v1123 = vor.u32 %v1119, %v1122
      %v1124 = vrot.slane %v1123, 4
      %v1126 = vshll.u32 %v740, 16
      %v1128 = vrot.slane %v1126, 5
      %v1129 = vsel %vm779, %v1124, %v1128
      %v1130 = vshrl.u32 %v740, 16
      %v1132 = vrot.slane %v1130, 4
      %v1133 = vor.u32 %v1132, %v1128
      %v1134 = vrot.slane %v1133, 4
      %v1136 = vshll.u32 %v741, 16
      %v1138 = vrot.slane %v1136, 5
      %v1139 = vsel %vm779, %v1134, %v1138
      %v1141 = vshrl.u32 %v742, 16
      %v1143 = vrot.slane %v1141, 4
      %v1144 = vshll.u32 %v742, 16
      %v1146 = vrot.slane %v1144, 5
      %v1147 = vor.u32 %v1143, %v1146
      %v1148 = vrot.slane %v1147, 4
      %v1150 = vshll.u32 %v743, 16
      %v1152 = vrot.slane %v1150, 5
      %v1153 = vsel %vm779, %v1148, %v1152
      %v1154 = vshrl.u32 %v743, 16
      %v1156 = vrot.slane %v1154, 4
      %v1157 = vor.u32 %v1156, %v1152
      %v1158 = vrot.slane %v1157, 4
      %v1160 = vshll.u32 %v744, 16
      %v1162 = vrot.slane %v1160, 5
      %v1163 = vsel %vm779, %v1158, %v1162
      %s1164 = scalar_lea.vmem %s1, 64
      %v1165 = vld [vmem:[%s1164] sm:$0xf]
      %v1166 = vld [vmem:[%s1164 + $0x4] sm:$0xf]
      %v1167 = vld [vmem:[%s1164 + $0x8] sm:$0xf]
      %v1168 = vld [vmem:[%s1164 + $0xc] sm:$0xf]
      %v1169 = vld [vmem:[%s1164 + $0x10] sm:$0xf]
      %v1170 = vld [vmem:[%s1164 + $0x14] sm:$0xf]
      %v1171 = vld [vmem:[%s1164 + $0x18] sm:$0xf]
      %v1172 = vld [vmem:[%s1164 + $0x1c] sm:$0xf]
      %v1173 = vld [vmem:[%s1164 + $0x20] sm:$0xf]
      %v1174 = vld [vmem:[%s1164 + $0x24] sm:$0xf]
      %v1175 = vld [vmem:[%s1164 + $0x28] sm:$0xf]
      %v1176 = vld [vmem:[%s1164 + $0x2c] sm:$0xf]
      %v1177 = vld [vmem:[%s1164 + $0x30] sm:$0xf]
      %v1178 = vld [vmem:[%s1164 + $0x34] sm:$0xf]
      %v1179 = vld [vmem:[%s1164 + $0x38] sm:$0xf]
      %v1180 = vld [vmem:[%s1164 + $0x3c] sm:$0xf]
      %v1181 = vunpack.c.l.b16 %v793
      %v1182 = vunpack.c.l.b16 %v803
      %v1183 = vunpack.c.l.b16 %v817
      %v1184 = vunpack.c.l.b16 %v827
      %v1185 = vunpack.c.l.b16 %v841
      %v1186 = vunpack.c.l.b16 %v851
      %v1187 = vunpack.c.l.b16 %v865
      %v1188 = vunpack.c.l.b16 %v875
      %v1189 = vunpack.c.l.b16 %v889
      %v1190 = vunpack.c.l.b16 %v899
      %v1191 = vunpack.c.l.b16 %v913
      %v1192 = vunpack.c.l.b16 %v923
      %v1193 = vunpack.c.l.b16 %v937
      %v1194 = vunpack.c.l.b16 %v947
      %v1195 = vunpack.c.l.b16 %v961
      %v1196 = vunpack.c.l.b16 %v971
      %v1197 = vunpack.c.l.b16 %v985
      %v1198 = vunpack.c.l.b16 %v995
      %v1199 = vunpack.c.l.b16 %v1009
      %v1200 = vunpack.c.l.b16 %v1019
      %v1201 = vunpack.c.l.b16 %v1033
      %v1202 = vunpack.c.l.b16 %v1043
      %v1203 = vunpack.c.l.b16 %v1057
      %v1204 = vunpack.c.l.b16 %v1067
      %v1205 = vunpack.c.l.b16 %v1081
      %v1206 = vunpack.c.l.b16 %v1091
      %v1207 = vunpack.c.l.b16 %v1105
      %v1208 = vunpack.c.l.b16 %v1115
      %v1209 = vunpack.c.l.b16 %v1129
      %v1210 = vunpack.c.l.b16 %v1139
      %v1211 = vunpack.c.l.b16 %v1153
      %v1212 = vunpack.c.l.b16 %v1163
      %v1213 = vpack.c.b16 %v1182, %v1181
      %v1214 = vpack.c.b16 %v1184, %v1183
      %v1215 = vpack.c.b16 %v1186, %v1185
      %v1216 = vpack.c.b16 %v1188, %v1187
      %v1217 = vpack.c.b16 %v1190, %v1189
      %v1218 = vpack.c.b16 %v1192, %v1191
      %v1219 = vpack.c.b16 %v1194, %v1193
      %v1220 = vpack.c.b16 %v1196, %v1195
      %v1221 = vpack.c.b16 %v1198, %v1197
      %v1222 = vpack.c.b16 %v1200, %v1199
      %v1223 = vpack.c.b16 %v1202, %v1201
      %v1224 = vpack.c.b16 %v1204, %v1203
      %v1225 = vpack.c.b16 %v1206, %v1205
      %v1226 = vpack.c.b16 %v1208, %v1207
      %v1227 = vpack.c.b16 %v1210, %v1209
      %v1228 = vpack.c.b16 %v1212, %v1211
      %v1261 = vunpack.c.l.b16 %v1165
      %v1262 = vunpack.c.l.b16 %v1166
      %v1263 = vunpack.c.l.b16 %v1167
      %v1264 = vunpack.c.l.b16 %v1168
      %v1265 = vunpack.c.l.b16 %v1169
      %v1266 = vunpack.c.l.b16 %v1170
      %v1267 = vunpack.c.l.b16 %v1171
      %v1268 = vunpack.c.l.b16 %v1172
      %v1269 = vunpack.c.l.b16 %v1173
      %v1270 = vunpack.c.l.b16 %v1174
      %v1271 = vunpack.c.l.b16 %v1175
      %v1272 = vunpack.c.l.b16 %v1176
      %v1273 = vunpack.c.l.b16 %v1177
      %v1274 = vunpack.c.l.b16 %v1178
      %v1275 = vunpack.c.l.b16 %v1179
      %v1276 = vunpack.c.l.b16 %v1180
      %v1277 = vpack.c.b16 %v1262, %v1261
      %v1278 = vpack.c.b16 %v1264, %v1263
      %v1279 = vpack.c.b16 %v1266, %v1265
      %v1280 = vpack.c.b16 %v1268, %v1267
      %v1281 = vpack.c.b16 %v1270, %v1269
      %v1282 = vpack.c.b16 %v1272, %v1271
      %v1283 = vpack.c.b16 %v1274, %v1273
      %v1284 = vpack.c.b16 %v1276, %v1275
      %1293 = vmatprep.subr.bf16.mxu0 0
      %1294 = vmatpush1.bf16.msra.mxu0 %v1277
      %1295 = vmatprep.subr.bf16.mxu0 0
      %1296 = vmatpush1.bf16.msra.mxu0 %v1278
      %1297 = vmatprep.subr.bf16.mxu0 0
      %1298 = vmatpush1.bf16.msra.mxu0 %v1279
      %1299 = vmatprep.subr.bf16.mxu0 0
      %1300 = vmatpush1.bf16.msra.mxu0 %v1280
      %1301 = vmatprep.subr.bf16.mxu0 0
      %1302 = vmatpush1.bf16.msra.mxu0 %v1281
      %1303 = vmatprep.subr.bf16.mxu0 0
      %1304 = vmatpush1.bf16.msra.mxu0 %v1282
      %1305 = vmatprep.subr.bf16.mxu0 0
      %1306 = vmatpush1.bf16.msra.mxu0 %v1283
      %1307 = vmatprep.subr.bf16.mxu0 0
      %1308 = vmatpush1.bf16.msra.mxu0 %v1284
      %1309 = vmatprep.subr.bf16.mxu0 0
      %1310 = vmatpush1.bf16.msra.mxu0 0
      %1311 = vmatprep.subr.bf16.mxu0 0
      %1312 = vmatpush1.bf16.msra.mxu0 0
      %1313 = vmatprep.subr.bf16.mxu0 0
      %1314 = vmatpush1.bf16.msra.mxu0 0
      %1315 = vmatprep.subr.bf16.mxu0 0
      %1316 = vmatpush1.bf16.msra.mxu0 0
      %1317 = vmatprep.subr.bf16.mxu0 0
      %1318 = vmatpush1.bf16.msra.mxu0 0
      %1319 = vmatprep.subr.bf16.mxu0 0
      %1320 = vmatpush1.bf16.msra.mxu0 0
      %1321 = vmatprep.subr.bf16.mxu0 0
      %1322 = vmatpush1.bf16.msra.mxu0 0
      %1323 = vmatprep.subr.bf16.mxu0 0
      %1324 = vmatpush1.bf16.msra.mxu0 0
      %1325 = vmatprep.mubr.bf16.mxu0 0
      %1326 = vmatmul.mubr.bf16.gmra.mrb[0].mxu0 %v1213
      %v1327 = vpop.f32.mrb[0].mxu0
      %v1328 = vadd.f32 0.0, %v1327
      %v1329 = vpop.f32.mrb[0].mxu0
      %v1330 = vpop.f32.mrb[0].mxu0
      %v1331 = vadd.f32 0.0, %v1330
      %v1332 = vpop.f32.mrb[0].mxu0
      %1333 = vmatprep.mubr.bf16.mxu0 0
      %1334 = vmatmul.mubr.bf16.gmra.mrb[0].mxu0 %v1214
      %v1335 = vpop.f32.mrb[0].mxu0
      %v1336 = vadd.f32 0.0, %v1335
      %v1337 = vpop.f32.mrb[0].mxu0
      %v1338 = vpop.f32.mrb[0].mxu0
      %v1339 = vadd.f32 0.0, %v1338
      %v1340 = vpop.f32.mrb[0].mxu0
      %1341 = vmatprep.mubr.bf16.mxu0 0
      %1342 = vmatmul.mubr.bf16.gmra.mrb[0].mxu0 %v1215
      %v1343 = vpop.f32.mrb[0].mxu0
      %v1344 = vadd.f32 0.0, %v1343
      %v1345 = vpop.f32.mrb[0].mxu0
      %v1346 = vpop.f32.mrb[0].mxu0
      %v1347 = vadd.f32 0.0, %v1346
      %v1348 = vpop.f32.mrb[0].mxu0
      %1349 = vmatprep.mubr.bf16.mxu0 0
      %1350 = vmatmul.mubr.bf16.gmra.mrb[0].mxu0 %v1216
      %v1351 = vpop.f32.mrb[0].mxu0
      %v1352 = vadd.f32 0.0, %v1351
      %v1353 = vpop.f32.mrb[0].mxu0
      %v1354 = vpop.f32.mrb[0].mxu0
      %v1355 = vadd.f32 0.0, %v1354
      %v1356 = vpop.f32.mrb[0].mxu0
      %1357 = vmatprep.mubr.bf16.mxu0 0
      %1358 = vmatmul.mubr.bf16.gmra.mrb[0].mxu0 %v1217
      %v1359 = vpop.f32.mrb[0].mxu0
      %v1360 = vadd.f32 0.0, %v1359
      %v1361 = vpop.f32.mrb[0].mxu0
      %v1362 = vpop.f32.mrb[0].mxu0
      %v1363 = vadd.f32 0.0, %v1362
      %v1364 = vpop.f32.mrb[0].mxu0
      %1365 = vmatprep.mubr.bf16.mxu0 0
      %1366 = vmatmul.mubr.bf16.gmra.mrb[0].mxu0 %v1218
      %v1367 = vpop.f32.mrb[0].mxu0
      %v1368 = vadd.f32 0.0, %v1367
      %v1369 = vpop.f32.mrb[0].mxu0
      %v1370 = vpop.f32.mrb[0].mxu0
      %v1371 = vadd.f32 0.0, %v1370
      %v1372 = vpop.f32.mrb[0].mxu0
      %1373 = vmatprep.mubr.bf16.mxu0 0
      %1374 = vmatmul.mubr.bf16.gmra.mrb[0].mxu0 %v1219
      %v1375 = vpop.f32.mrb[0].mxu0
      %v1376 = vadd.f32 0.0, %v1375
      %v1377 = vpop.f32.mrb[0].mxu0
      %v1378 = vpop.f32.mrb[0].mxu0
      %v1379 = vadd.f32 0.0, %v1378
      %v1380 = vpop.f32.mrb[0].mxu0
      %1381 = vmatprep.mubr.bf16.mxu0 0
      %1382 = vmatmul.mubr.bf16.gmra.mrb[0].mxu0 %v1220
      %v1383 = vpop.f32.mrb[0].mxu0
      %v1384 = vadd.f32 0.0, %v1383
      %v1385 = vpop.f32.mrb[0].mxu0
      %v1386 = vpop.f32.mrb[0].mxu0
      %v1387 = vadd.f32 0.0, %v1386
      %v1388 = vpop.f32.mrb[0].mxu0
      %1389 = vmatprep.mubr.bf16.mxu0 0
      %1390 = vmatmul.mubr.bf16.gmra.mrb[0].mxu0 %v1221
      %v1391 = vpop.f32.mrb[0].mxu0
      %v1392 = vadd.f32 0.0, %v1391
      %v1393 = vpop.f32.mrb[0].mxu0
      %v1394 = vpop.f32.mrb[0].mxu0
      %v1395 = vadd.f32 0.0, %v1394
      %v1396 = vpop.f32.mrb[0].mxu0
      %1397 = vmatprep.mubr.bf16.mxu0 0
      %1398 = vmatmul.mubr.bf16.gmra.mrb[0].mxu0 %v1222
      %v1399 = vpop.f32.mrb[0].mxu0
      %v1400 = vadd.f32 0.0, %v1399
      %v1401 = vpop.f32.mrb[0].mxu0
      %v1402 = vpop.f32.mrb[0].mxu0
      %v1403 = vadd.f32 0.0, %v1402
      %v1404 = vpop.f32.mrb[0].mxu0
      %1405 = vmatprep.mubr.bf16.mxu0 0
      %1406 = vmatmul.mubr.bf16.gmra.mrb[0].mxu0 %v1223
      %v1407 = vpop.f32.mrb[0].mxu0
      %v1408 = vadd.f32 0.0, %v1407
      %v1409 = vpop.f32.mrb[0].mxu0
      %v1410 = vpop.f32.mrb[0].mxu0
      %v1411 = vadd.f32 0.0, %v1410
      %v1412 = vpop.f32.mrb[0].mxu0
      %1413 = vmatprep.mubr.bf16.mxu0 0
      %1414 = vmatmul.mubr.bf16.gmra.mrb[0].mxu0 %v1224
      %v1415 = vpop.f32.mrb[0].mxu0
      %v1416 = vadd.f32 0.0, %v1415
      %v1417 = vpop.f32.mrb[0].mxu0
      %v1418 = vpop.f32.mrb[0].mxu0
      %v1419 = vadd.f32 0.0, %v1418
      %v1420 = vpop.f32.mrb[0].mxu0
      %1421 = vmatprep.mubr.bf16.mxu0 0
      %1422 = vmatmul.mubr.bf16.gmra.mrb[0].mxu0 %v1225
      %v1423 = vpop.f32.mrb[0].mxu0
      %v1424 = vadd.f32 0.0, %v1423
      %v1425 = vpop.f32.mrb[0].mxu0
      %v1426 = vpop.f32.mrb[0].mxu0
      %v1427 = vadd.f32 0.0, %v1426
      %v1428 = vpop.f32.mrb[0].mxu0
      %1429 = vmatprep.mubr.bf16.mxu0 0
      %1430 = vmatmul.mubr.bf16.gmra.mrb[0].mxu0 %v1226
      %v1431 = vpop.f32.mrb[0].mxu0
      %v1432 = vadd.f32 0.0, %v1431
      %v1433 = vpop.f32.mrb[0].mxu0
      %v1434 = vpop.f32.mrb[0].mxu0
      %v1435 = vadd.f32 0.0, %v1434
      %v1436 = vpop.f32.mrb[0].mxu0
      %1437 = vmatprep.mubr.bf16.mxu0 0
      %1438 = vmatmul.mubr.bf16.gmra.mrb[0].mxu0 %v1227
      %v1439 = vpop.f32.mrb[0].mxu0
      %v1440 = vadd.f32 0.0, %v1439
      %v1441 = vpop.f32.mrb[0].mxu0
      %v1442 = vpop.f32.mrb[0].mxu0
      %v1443 = vadd.f32 0.0, %v1442
      %v1444 = vpop.f32.mrb[0].mxu0
      %1445 = vmatprep.mubr.bf16.mxu0 0
      %1446 = vmatmul.mubr.bf16.gmra.mrb[0].mxu0 %v1228
      %v1447 = vpop.f32.mrb[0].mxu0
      %v1448 = vadd.f32 0.0, %v1447
      %v1449 = vpop.f32.mrb[0].mxu0
      %v1450 = vpop.f32.mrb[0].mxu0
      %v1451 = vadd.f32 0.0, %v1450
      %v1452 = vpop.f32.mrb[0].mxu0
      %1453 = vdwg.mxu0
      %v1454 = vadd.f32 %v745, %v1328
      %v1455 = vadd.f32 %v746, %v1331
      %v1456 = vadd.f32 %v747, %v1336
      %v1457 = vadd.f32 %v748, %v1339
      %v1458 = vadd.f32 %v749, %v1344
      %v1459 = vadd.f32 %v750, %v1347
      %v1460 = vadd.f32 %v751, %v1352
      %v1461 = vadd.f32 %v752, %v1355
      %v1462 = vadd.f32 %v753, %v1360
      %v1463 = vadd.f32 %v754, %v1363
      %v1464 = vadd.f32 %v755, %v1368
      %v1465 = vadd.f32 %v756, %v1371
      %v1466 = vadd.f32 %v757, %v1376
      %v1467 = vadd.f32 %v758, %v1379
      %v1468 = vadd.f32 %v759, %v1384
      %v1469 = vadd.f32 %v760, %v1387
      %v1470 = vadd.f32 %v761, %v1392
      %v1471 = vadd.f32 %v762, %v1395
      %v1472 = vadd.f32 %v763, %v1400
      %v1473 = vadd.f32 %v764, %v1403
      %v1474 = vadd.f32 %v765, %v1408
      %v1475 = vadd.f32 %v766, %v1411
      %v1476 = vadd.f32 %v767, %v1416
      %v1477 = vadd.f32 %v768, %v1419
      %v1478 = vadd.f32 %v769, %v1424
      %v1479 = vadd.f32 %v770, %v1427
      %v1480 = vadd.f32 %v771, %v1432
      %v1481 = vadd.f32 %v772, %v1435
      %v1482 = vadd.f32 %v773, %v1440
      %v1483 = vadd.f32 %v774, %v1443
      %v1484 = vadd.f32 %v775, %v1448
      %v1485 = vadd.f32 %v776, %v1451
      %1486 = vst [vmem:[#allocation2] sm:$0xff] %v1454
      %1487 = vst [vmem:[#allocation2 + $0x8] sm:$0xff] %v1455
      %1488 = vst [vmem:[#allocation2 + $0x10] sm:$0xff] %v1456
      %1489 = vst [vmem:[#allocation2 + $0x18] sm:$0xff] %v1457
      %1490 = vst [vmem:[#allocation2 + $0x20] sm:$0xff] %v1458
      %1491 = vst [vmem:[#allocation2 + $0x28] sm:$0xff] %v1459
      %1492 = vst [vmem:[#allocation2 + $0x30] sm:$0xff] %v1460
      %1493 = vst [vmem:[#allocation2 + $0x38] sm:$0xff] %v1461
      %1494 = vst [vmem:[#allocation2 + $0x40] sm:$0xff] %v1462
      %1495 = vst [vmem:[#allocation2 + $0x48] sm:$0xff] %v1463
      %1496 = vst [vmem:[#allocation2 + $0x50] sm:$0xff] %v1464
      %1497 = vst [vmem:[#allocation2 + $0x58] sm:$0xff] %v1465
      %1498 = vst [vmem:[#allocation2 + $0x60] sm:$0xff] %v1466
      %1499 = vst [vmem:[#allocation2 + $0x68] sm:$0xff] %v1467
      %1500 = vst [vmem:[#allocation2 + $0x70] sm:$0xff] %v1468
      %1501 = vst [vmem:[#allocation2 + $0x78] sm:$0xff] %v1469
      %1502 = vst [vmem:[#allocation2 + $0x80] sm:$0xff] %v1470
      %1503 = vst [vmem:[#allocation2 + $0x88] sm:$0xff] %v1471
      %1504 = vst [vmem:[#allocation2 + $0x90] sm:$0xff] %v1472
      %1505 = vst [vmem:[#allocation2 + $0x98] sm:$0xff] %v1473
      %1506 = vst [vmem:[#allocation2 + $0xa0] sm:$0xff] %v1474
      %1507 = vst [vmem:[#allocation2 + $0xa8] sm:$0xff] %v1475
      %1508 = vst [vmem:[#allocation2 + $0xb0] sm:$0xff] %v1476
      %1509 = vst [vmem:[#allocation2 + $0xb8] sm:$0xff] %v1477
      %1510 = vst [vmem:[#allocation2 + $0xc0] sm:$0xff] %v1478
      %1511 = vst [vmem:[#allocation2 + $0xc8] sm:$0xff] %v1479
      %1512 = vst [vmem:[#allocation2 + $0xd0] sm:$0xff] %v1480
      %1513 = vst [vmem:[#allocation2 + $0xd8] sm:$0xff] %v1481
      %1514 = vst [vmem:[#allocation2 + $0xe0] sm:$0xff] %v1482
      %1515 = vst [vmem:[#allocation2 + $0xe8] sm:$0xff] %v1483
      %1516 = vst [vmem:[#allocation2 + $0xf0] sm:$0xff] %v1484
      %1517 = vst [vmem:[#allocation2 + $0xf8] sm:$0xff] %v1485
      %v1518 = vld [vmem:[%s203] sm:$0xe]
      %v1519 = vld [vmem:[%s203 + $0x4] sm:$0xf]
      %v1520 = vld [vmem:[%s203 + $0x8] sm:$0x1]
      %v1521 = vld [vmem:[%s203 + $0xc] sm:$0xe]
      %v1522 = vld [vmem:[%s203 + $0x10] sm:$0xf]
      %v1523 = vld [vmem:[%s203 + $0x14] sm:$0x1]
      %v1524 = vld [vmem:[%s203 + $0x18] sm:$0xe]
      %v1525 = vld [vmem:[%s203 + $0x1c] sm:$0xf]
      %v1526 = vld [vmem:[%s203 + $0x20] sm:$0x1]
      %v1527 = vld [vmem:[%s203 + $0x24] sm:$0xe]
      %v1528 = vld [vmem:[%s203 + $0x28] sm:$0xf]
      %v1529 = vld [vmem:[%s203 + $0x2c] sm:$0x1]
      %v1530 = vld [vmem:[%s203 + $0x30] sm:$0xe]
      %v1531 = vld [vmem:[%s203 + $0x34] sm:$0xf]
      %v1532 = vld [vmem:[%s203 + $0x38] sm:$0x1]
      %v1533 = vld [vmem:[%s203 + $0x3c] sm:$0xe]
      %v1534 = vld [vmem:[%s203 + $0x40] sm:$0xf]
      %v1535 = vld [vmem:[%s203 + $0x44] sm:$0x1]
      %v1536 = vld [vmem:[%s203 + $0x48] sm:$0xe]
      %v1537 = vld [vmem:[%s203 + $0x4c] sm:$0xf]
      %v1538 = vld [vmem:[%s203 + $0x50] sm:$0x1]
      %v1539 = vld [vmem:[%s203 + $0x54] sm:$0xe]
      %v1540 = vld [vmem:[%s203 + $0x58] sm:$0xf]
      %v1541 = vld [vmem:[%s203 + $0x5c] sm:$0x1]
      %v1542 = vld [vmem:[%s203 + $0x60] sm:$0xe]
      %v1543 = vld [vmem:[%s203 + $0x64] sm:$0xf]
      %v1544 = vld [vmem:[%s203 + $0x68] sm:$0x1]
      %v1545 = vld [vmem:[%s203 + $0x6c] sm:$0xe]
      %v1546 = vld [vmem:[%s203 + $0x70] sm:$0xf]
      %v1547 = vld [vmem:[%s203 + $0x74] sm:$0x1]
      %v1548 = vld [vmem:[%s203 + $0x78] sm:$0xe]
      %v1549 = vld [vmem:[%s203 + $0x7c] sm:$0xf]
      %v1550 = vld [vmem:[%s203 + $0x80] sm:$0x1]
      %v1551 = vld [vmem:[%s203 + $0x84] sm:$0xe]
      %v1552 = vld [vmem:[%s203 + $0x88] sm:$0xf]
      %v1553 = vld [vmem:[%s203 + $0x8c] sm:$0x1]
      %v1554 = vld [vmem:[%s203 + $0x90] sm:$0xe]
      %v1555 = vld [vmem:[%s203 + $0x94] sm:$0xf]
      %v1556 = vld [vmem:[%s203 + $0x98] sm:$0x1]
      %v1557 = vld [vmem:[%s203 + $0x9c] sm:$0xe]
      %v1558 = vld [vmem:[%s203 + $0xa0] sm:$0xf]
      %v1559 = vld [vmem:[%s203 + $0xa4] sm:$0x1]
      %v1560 = vld [vmem:[%s203 + $0xa8] sm:$0xe]
      %v1561 = vld [vmem:[%s203 + $0xac] sm:$0xf]
      %v1562 = vld [vmem:[%s203 + $0xb0] sm:$0x1]
      %v1563 = vld [vmem:[%s203 + $0xb4] sm:$0xe]
      %v1564 = vld [vmem:[%s203 + $0xb8] sm:$0xf]
      %v1565 = vld [vmem:[%s203 + $0xbc] sm:$0x1]
      %v1566 = vld [vmem:[#allocation2] sm:$0xff]
      %v1567 = vld [vmem:[#allocation2 + $0x8] sm:$0xff]
      %v1568 = vld [vmem:[#allocation2 + $0x10] sm:$0xff]
      %v1569 = vld [vmem:[#allocation2 + $0x18] sm:$0xff]
      %v1570 = vld [vmem:[#allocation2 + $0x20] sm:$0xff]
      %v1571 = vld [vmem:[#allocation2 + $0x28] sm:$0xff]
      %v1572 = vld [vmem:[#allocation2 + $0x30] sm:$0xff]
      %v1573 = vld [vmem:[#allocation2 + $0x38] sm:$0xff]
      %v1574 = vld [vmem:[#allocation2 + $0x40] sm:$0xff]
      %v1575 = vld [vmem:[#allocation2 + $0x48] sm:$0xff]
      %v1576 = vld [vmem:[#allocation2 + $0x50] sm:$0xff]
      %v1577 = vld [vmem:[#allocation2 + $0x58] sm:$0xff]
      %v1578 = vld [vmem:[#allocation2 + $0x60] sm:$0xff]
      %v1579 = vld [vmem:[#allocation2 + $0x68] sm:$0xff]
      %v1580 = vld [vmem:[#allocation2 + $0x70] sm:$0xff]
      %v1581 = vld [vmem:[#allocation2 + $0x78] sm:$0xff]
      %v1582 = vld [vmem:[#allocation2 + $0x80] sm:$0xff]
      %v1583 = vld [vmem:[#allocation2 + $0x88] sm:$0xff]
      %v1584 = vld [vmem:[#allocation2 + $0x90] sm:$0xff]
      %v1585 = vld [vmem:[#allocation2 + $0x98] sm:$0xff]
      %v1586 = vld [vmem:[#allocation2 + $0xa0] sm:$0xff]
      %v1587 = vld [vmem:[#allocation2 + $0xa8] sm:$0xff]
      %v1588 = vld [vmem:[#allocation2 + $0xb0] sm:$0xff]
      %v1589 = vld [vmem:[#allocation2 + $0xb8] sm:$0xff]
      %v1590 = vld [vmem:[#allocation2 + $0xc0] sm:$0xff]
      %v1591 = vld [vmem:[#allocation2 + $0xc8] sm:$0xff]
      %v1592 = vld [vmem:[#allocation2 + $0xd0] sm:$0xff]
      %v1593 = vld [vmem:[#allocation2 + $0xd8] sm:$0xff]
      %v1594 = vld [vmem:[#allocation2 + $0xe0] sm:$0xff]
      %v1595 = vld [vmem:[#allocation2 + $0xe8] sm:$0xff]
      %v1596 = vld [vmem:[#allocation2 + $0xf0] sm:$0xff]
      %v1597 = vld [vmem:[#allocation2 + $0xf8] sm:$0xff]
      %vm1646 = vcmask 1042432
      %vm1647 = vcmask 1046532
      %vm1648 = vmor %vm1646, %vm1647
      %v1649 = vrot.slane %v1518, 5
      %v1650 = vrot.slane %v1649, 4
      %v1651 = vrot.slane %v1519, 5
      %v1652 = vsel %vm1648, %v1650, %v1651
      %v1653 = vrot.slane %v1651, 4
      %v1654 = vrot.slane %v1520, 5
      %v1655 = vsel %vm1648, %v1653, %v1654
      %v1656 = vrot.slane %v1521, 5
      %v1657 = vrot.slane %v1656, 4
      %v1658 = vrot.slane %v1522, 5
      %v1659 = vsel %vm1648, %v1657, %v1658
      %v1660 = vrot.slane %v1658, 4
      %v1661 = vrot.slane %v1523, 5
      %v1662 = vsel %vm1648, %v1660, %v1661
      %v1663 = vrot.slane %v1524, 5
      %v1664 = vrot.slane %v1663, 4
      %v1665 = vrot.slane %v1525, 5
      %v1666 = vsel %vm1648, %v1664, %v1665
      %v1667 = vrot.slane %v1665, 4
      %v1668 = vrot.slane %v1526, 5
      %v1669 = vsel %vm1648, %v1667, %v1668
      %v1670 = vrot.slane %v1527, 5
      %v1671 = vrot.slane %v1670, 4
      %v1672 = vrot.slane %v1528, 5
      %v1673 = vsel %vm1648, %v1671, %v1672
      %v1674 = vrot.slane %v1672, 4
      %v1675 = vrot.slane %v1529, 5
      %v1676 = vsel %vm1648, %v1674, %v1675
      %v1677 = vrot.slane %v1530, 5
      %v1678 = vrot.slane %v1677, 4
      %v1679 = vrot.slane %v1531, 5
      %v1680 = vsel %vm1648, %v1678, %v1679
      %v1681 = vrot.slane %v1679, 4
      %v1682 = vrot.slane %v1532, 5
      %v1683 = vsel %vm1648, %v1681, %v1682
      %v1684 = vrot.slane %v1533, 5
      %v1685 = vrot.slane %v1684, 4
      %v1686 = vrot.slane %v1534, 5
      %v1687 = vsel %vm1648, %v1685, %v1686
      %v1688 = vrot.slane %v1686, 4
      %v1689 = vrot.slane %v1535, 5
      %v1690 = vsel %vm1648, %v1688, %v1689
      %v1691 = vrot.slane %v1536, 5
      %v1692 = vrot.slane %v1691, 4
      %v1693 = vrot.slane %v1537, 5
      %v1694 = vsel %vm1648, %v1692, %v1693
      %v1695 = vrot.slane %v1693, 4
      %v1696 = vrot.slane %v1538, 5
      %v1697 = vsel %vm1648, %v1695, %v1696
      %v1698 = vrot.slane %v1539, 5
      %v1699 = vrot.slane %v1698, 4
      %v1700 = vrot.slane %v1540, 5
      %v1701 = vsel %vm1648, %v1699, %v1700
      %v1702 = vrot.slane %v1700, 4
      %v1703 = vrot.slane %v1541, 5
      %v1704 = vsel %vm1648, %v1702, %v1703
      %v1705 = vrot.slane %v1542, 5
      %v1706 = vrot.slane %v1705, 4
      %v1707 = vrot.slane %v1543, 5
      %v1708 = vsel %vm1648, %v1706, %v1707
      %v1709 = vrot.slane %v1707, 4
      %v1710 = vrot.slane %v1544, 5
      %v1711 = vsel %vm1648, %v1709, %v1710
      %v1712 = vrot.slane %v1545, 5
      %v1713 = vrot.slane %v1712, 4
      %v1714 = vrot.slane %v1546, 5
      %v1715 = vsel %vm1648, %v1713, %v1714
      %v1716 = vrot.slane %v1714, 4
      %v1717 = vrot.slane %v1547, 5
      %v1718 = vsel %vm1648, %v1716, %v1717
      %v1719 = vrot.slane %v1548, 5
      %v1720 = vrot.slane %v1719, 4
      %v1721 = vrot.slane %v1549, 5
      %v1722 = vsel %vm1648, %v1720, %v1721
      %v1723 = vrot.slane %v1721, 4
      %v1724 = vrot.slane %v1550, 5
      %v1725 = vsel %vm1648, %v1723, %v1724
      %v1726 = vrot.slane %v1551, 5
      %v1727 = vrot.slane %v1726, 4
      %v1728 = vrot.slane %v1552, 5
      %v1729 = vsel %vm1648, %v1727, %v1728
      %v1730 = vrot.slane %v1728, 4
      %v1731 = vrot.slane %v1553, 5
      %v1732 = vsel %vm1648, %v1730, %v1731
      %v1733 = vrot.slane %v1554, 5
      %v1734 = vrot.slane %v1733, 4
      %v1735 = vrot.slane %v1555, 5
      %v1736 = vsel %vm1648, %v1734, %v1735
      %v1737 = vrot.slane %v1735, 4
      %v1738 = vrot.slane %v1556, 5
      %v1739 = vsel %vm1648, %v1737, %v1738
      %v1740 = vrot.slane %v1557, 5
      %v1741 = vrot.slane %v1740, 4
      %v1742 = vrot.slane %v1558, 5
      %v1743 = vsel %vm1648, %v1741, %v1742
      %v1744 = vrot.slane %v1742, 4
      %v1745 = vrot.slane %v1559, 5
      %v1746 = vsel %vm1648, %v1744, %v1745
      %v1747 = vrot.slane %v1560, 5
      %v1748 = vrot.slane %v1747, 4
      %v1749 = vrot.slane %v1561, 5
      %v1750 = vsel %vm1648, %v1748, %v1749
      %v1751 = vrot.slane %v1749, 4
      %v1752 = vrot.slane %v1562, 5
      %v1753 = vsel %vm1648, %v1751, %v1752
      %v1754 = vrot.slane %v1563, 5
      %v1755 = vrot.slane %v1754, 4
      %v1756 = vrot.slane %v1564, 5
      %v1757 = vsel %vm1648, %v1755, %v1756
      %v1758 = vrot.slane %v1756, 4
      %v1759 = vrot.slane %v1565, 5
      %v1760 = vsel %vm1648, %v1758, %v1759
      %s1761 = scalar_lea.vmem %s1, 128
      %v1762 = vld [vmem:[%s1761] sm:$0xf]
      %v1763 = vld [vmem:[%s1761 + $0x4] sm:$0xf]
      %v1764 = vld [vmem:[%s1761 + $0x8] sm:$0xf]
      %v1765 = vld [vmem:[%s1761 + $0xc] sm:$0xf]
      %v1766 = vld [vmem:[%s1761 + $0x10] sm:$0xf]
      %v1767 = vld [vmem:[%s1761 + $0x14] sm:$0xf]
      %v1768 = vld [vmem:[%s1761 + $0x18] sm:$0xf]
      %v1769 = vld [vmem:[%s1761 + $0x1c] sm:$0xf]
      %v1770 = vld [vmem:[%s1761 + $0x20] sm:$0xf]
      %v1771 = vld [vmem:[%s1761 + $0x24] sm:$0xf]
      %v1772 = vld [vmem:[%s1761 + $0x28] sm:$0xf]
      %v1773 = vld [vmem:[%s1761 + $0x2c] sm:$0xf]
      %v1774 = vld [vmem:[%s1761 + $0x30] sm:$0xf]
      %v1775 = vld [vmem:[%s1761 + $0x34] sm:$0xf]
      %v1776 = vld [vmem:[%s1761 + $0x38] sm:$0xf]
      %v1777 = vld [vmem:[%s1761 + $0x3c] sm:$0xf]
      %v1778 = vunpack.c.l.b16 %v1652
      %v1779 = vunpack.c.l.b16 %v1655
      %v1780 = vunpack.c.l.b16 %v1659
      %v1781 = vunpack.c.l.b16 %v1662
      %v1782 = vunpack.c.l.b16 %v1666
      %v1783 = vunpack.c.l.b16 %v1669
      %v1784 = vunpack.c.l.b16 %v1673
      %v1785 = vunpack.c.l.b16 %v1676
      %v1786 = vunpack.c.l.b16 %v1680
      %v1787 = vunpack.c.l.b16 %v1683
      %v1788 = vunpack.c.l.b16 %v1687
      %v1789 = vunpack.c.l.b16 %v1690
      %v1790 = vunpack.c.l.b16 %v1694
      %v1791 = vunpack.c.l.b16 %v1697
      %v1792 = vunpack.c.l.b16 %v1701
      %v1793 = vunpack.c.l.b16 %v1704
      %v1794 = vunpack.c.l.b16 %v1708
      %v1795 = vunpack.c.l.b16 %v1711
      %v1796 = vunpack.c.l.b16 %v1715
      %v1797 = vunpack.c.l.b16 %v1718
      %v1798 = vunpack.c.l.b16 %v1722
      %v1799 = vunpack.c.l.b16 %v1725
      %v1800 = vunpack.c.l.b16 %v1729
      %v1801 = vunpack.c.l.b16 %v1732
      %v1802 = vunpack.c.l.b16 %v1736
      %v1803 = vunpack.c.l.b16 %v1739
      %v1804 = vunpack.c.l.b16 %v1743
      %v1805 = vunpack.c.l.b16 %v1746
      %v1806 = vunpack.c.l.b16 %v1750
      %v1807 = vunpack.c.l.b16 %v1753
      %v1808 = vunpack.c.l.b16 %v1757
      %v1809 = vunpack.c.l.b16 %v1760
      %v1810 = vpack.c.b16 %v1779, %v1778
      %v1811 = vpack.c.b16 %v1781, %v1780
      %v1812 = vpack.c.b16 %v1783, %v1782
      %v1813 = vpack.c.b16 %v1785, %v1784
      %v1814 = vpack.c.b16 %v1787, %v1786
      %v1815 = vpack.c.b16 %v1789, %v1788
      %v1816 = vpack.c.b16 %v1791, %v1790
      %v1817 = vpack.c.b16 %v1793, %v1792
      %v1818 = vpack.c.b16 %v1795, %v1794
      %v1819 = vpack.c.b16 %v1797, %v1796
      %v1820 = vpack.c.b16 %v1799, %v1798
      %v1821 = vpack.c.b16 %v1801, %v1800
      %v1822 = vpack.c.b16 %v1803, %v1802
      %v1823 = vpack.c.b16 %v1805, %v1804
      %v1824 = vpack.c.b16 %v1807, %v1806
      %v1825 = vpack.c.b16 %v1809, %v1808
      %v1858 = vunpack.c.l.b16 %v1762
      %v1859 = vunpack.c.l.b16 %v1763
      %v1860 = vunpack.c.l.b16 %v1764
      %v1861 = vunpack.c.l.b16 %v1765
      %v1862 = vunpack.c.l.b16 %v1766
      %v1863 = vunpack.c.l.b16 %v1767
      %v1864 = vunpack.c.l.b16 %v1768
      %v1865 = vunpack.c.l.b16 %v1769
      %v1866 = vunpack.c.l.b16 %v1770
      %v1867 = vunpack.c.l.b16 %v1771
      %v1868 = vunpack.c.l.b16 %v1772
      %v1869 = vunpack.c.l.b16 %v1773
      %v1870 = vunpack.c.l.b16 %v1774
      %v1871 = vunpack.c.l.b16 %v1775
      %v1872 = vunpack.c.l.b16 %v1776
      %v1873 = vunpack.c.l.b16 %v1777
      %v1874 = vpack.c.b16 %v1859, %v1858
      %v1875 = vpack.c.b16 %v1861, %v1860
      %v1876 = vpack.c.b16 %v1863, %v1862
      %v1877 = vpack.c.b16 %v1865, %v1864
      %v1878 = vpack.c.b16 %v1867, %v1866
      %v1879 = vpack.c.b16 %v1869, %v1868
      %v1880 = vpack.c.b16 %v1871, %v1870
      %v1881 = vpack.c.b16 %v1873, %v1872
      %1890 = vmatprep.subr.bf16.mxu0 0
      %1891 = vmatpush1.bf16.msra.mxu0 %v1874
      %1892 = vmatprep.subr.bf16.mxu0 0
      %1893 = vmatpush1.bf16.msra.mxu0 %v1875
      %1894 = vmatprep.subr.bf16.mxu0 0
      %1895 = vmatpush1.bf16.msra.mxu0 %v1876
      %1896 = vmatprep.subr.bf16.mxu0 0
      %1897 = vmatpush1.bf16.msra.mxu0 %v1877
      %1898 = vmatprep.subr.bf16.mxu0 0
      %1899 = vmatpush1.bf16.msra.mxu0 %v1878
      %1900 = vmatprep.subr.bf16.mxu0 0
      %1901 = vmatpush1.bf16.msra.mxu0 %v1879
      %1902 = vmatprep.subr.bf16.mxu0 0
      %1903 = vmatpush1.bf16.msra.mxu0 %v1880
      %1904 = vmatprep.subr.bf16.mxu0 0
      %1905 = vmatpush1.bf16.msra.mxu0 %v1881
      %1906 = vmatprep.subr.bf16.mxu0 0
      %1907 = vmatpush1.bf16.msra.mxu0 0
      %1908 = vmatprep.subr.bf16.mxu0 0
      %1909 = vmatpush1.bf16.msra.mxu0 0
      %1910 = vmatprep.subr.bf16.mxu0 0
      %1911 = vmatpush1.bf16.msra.mxu0 0
      %1912 = vmatprep.subr.bf16.mxu0 0
      %1913 = vmatpush1.bf16.msra.mxu0 0
      %1914 = vmatprep.subr.bf16.mxu0 0
      %1915 = vmatpush1.bf16.msra.mxu0 0
      %1916 = vmatprep.subr.bf16.mxu0 0
      %1917 = vmatpush1.bf16.msra.mxu0 0
      %1918 = vmatprep.subr.bf16.mxu0 0
      %1919 = vmatpush1.bf16.msra.mxu0 0
      %1920 = vmatprep.subr.bf16.mxu0 0
      %1921 = vmatpush1.bf16.msra.mxu0 0
      %1922 = vmatprep.mubr.bf16.mxu0 0
      %1923 = vmatmul.mubr.bf16.gmra.mrb[0].mxu0 %v1810
      %v1924 = vpop.f32.mrb[0].mxu0
      %v1925 = vadd.f32 0.0, %v1924
      %v1926 = vpop.f32.mrb[0].mxu0
      %v1927 = vpop.f32.mrb[0].mxu0
      %v1928 = vadd.f32 0.0, %v1927
      %v1929 = vpop.f32.mrb[0].mxu0
      %1930 = vmatprep.mubr.bf16.mxu0 0
      %1931 = vmatmul.mubr.bf16.gmra.mrb[0].mxu0 %v1811
      %v1932 = vpop.f32.mrb[0].mxu0
      %v1933 = vadd.f32 0.0, %v1932
      %v1934 = vpop.f32.mrb[0].mxu0
      %v1935 = vpop.f32.mrb[0].mxu0
      %v1936 = vadd.f32 0.0, %v1935
      %v1937 = vpop.f32.mrb[0].mxu0
      %1938 = vmatprep.mubr.bf16.mxu0 0
      %1939 = vmatmul.mubr.bf16.gmra.mrb[0].mxu0 %v1812
      %v1940 = vpop.f32.mrb[0].mxu0
      %v1941 = vadd.f32 0.0, %v1940
      %v1942 = vpop.f32.mrb[0].mxu0
      %v1943 = vpop.f32.mrb[0].mxu0
      %v1944 = vadd.f32 0.0, %v1943
      %v1945 = vpop.f32.mrb[0].mxu0
      %1946 = vmatprep.mubr.bf16.mxu0 0
      %1947 = vmatmul.mubr.bf16.gmra.mrb[0].mxu0 %v1813
      %v1948 = vpop.f32.mrb[0].mxu0
      %v1949 = vadd.f32 0.0, %v1948
      %v1950 = vpop.f32.mrb[0].mxu0
      %v1951 = vpop.f32.mrb[0].mxu0
      %v1952 = vadd.f32 0.0, %v1951
      %v1953 = vpop.f32.mrb[0].mxu0
      %1954 = vmatprep.mubr.bf16.mxu0 0
      %1955 = vmatmul.mubr.bf16.gmra.mrb[0].mxu0 %v1814
      %v1956 = vpop.f32.mrb[0].mxu0
      %v1957 = vadd.f32 0.0, %v1956
      %v1958 = vpop.f32.mrb[0].mxu0
      %v1959 = vpop.f32.mrb[0].mxu0
      %v1960 = vadd.f32 0.0, %v1959
      %v1961 = vpop.f32.mrb[0].mxu0
      %1962 = vmatprep.mubr.bf16.mxu0 0
      %1963 = vmatmul.mubr.bf16.gmra.mrb[0].mxu0 %v1815
      %v1964 = vpop.f32.mrb[0].mxu0
      %v1965 = vadd.f32 0.0, %v1964
      %v1966 = vpop.f32.mrb[0].mxu0
      %v1967 = vpop.f32.mrb[0].mxu0
      %v1968 = vadd.f32 0.0, %v1967
      %v1969 = vpop.f32.mrb[0].mxu0
      %1970 = vmatprep.mubr.bf16.mxu0 0
      %1971 = vmatmul.mubr.bf16.gmra.mrb[0].mxu0 %v1816
      %v1972 = vpop.f32.mrb[0].mxu0
      %v1973 = vadd.f32 0.0, %v1972
      %v1974 = vpop.f32.mrb[0].mxu0
      %v1975 = vpop.f32.mrb[0].mxu0
      %v1976 = vadd.f32 0.0, %v1975
      %v1977 = vpop.f32.mrb[0].mxu0
      %1978 = vmatprep.mubr.bf16.mxu0 0
      %1979 = vmatmul.mubr.bf16.gmra.mrb[0].mxu0 %v1817
      %v1980 = vpop.f32.mrb[0].mxu0
      %v1981 = vadd.f32 0.0, %v1980
      %v1982 = vpop.f32.mrb[0].mxu0
      %v1983 = vpop.f32.mrb[0].mxu0
      %v1984 = vadd.f32 0.0, %v1983
      %v1985 = vpop.f32.mrb[0].mxu0
      %1986 = vmatprep.mubr.bf16.mxu0 0
      %1987 = vmatmul.mubr.bf16.gmra.mrb[0].mxu0 %v1818
      %v1988 = vpop.f32.mrb[0].mxu0
      %v1989 = vadd.f32 0.0, %v1988
      %v1990 = vpop.f32.mrb[0].mxu0
      %v1991 = vpop.f32.mrb[0].mxu0
      %v1992 = vadd.f32 0.0, %v1991
      %v1993 = vpop.f32.mrb[0].mxu0
      %1994 = vmatprep.mubr.bf16.mxu0 0
      %1995 = vmatmul.mubr.bf16.gmra.mrb[0].mxu0 %v1819
      %v1996 = vpop.f32.mrb[0].mxu0
      %v1997 = vadd.f32 0.0, %v1996
      %v1998 = vpop.f32.mrb[0].mxu0
      %v1999 = vpop.f32.mrb[0].mxu0
      %v2000 = vadd.f32 0.0, %v1999
      %v2001 = vpop.f32.mrb[0].mxu0
      %2002 = vmatprep.mubr.bf16.mxu0 0
      %2003 = vmatmul.mubr.bf16.gmra.mrb[0].mxu0 %v1820
      %v2004 = vpop.f32.mrb[0].mxu0
      %v2005 = vadd.f32 0.0, %v2004
      %v2006 = vpop.f32.mrb[0].mxu0
      %v2007 = vpop.f32.mrb[0].mxu0
      %v2008 = vadd.f32 0.0, %v2007
      %v2009 = vpop.f32.mrb[0].mxu0
      %2010 = vmatprep.mubr.bf16.mxu0 0
      %2011 = vmatmul.mubr.bf16.gmra.mrb[0].mxu0 %v1821
      %v2012 = vpop.f32.mrb[0].mxu0
      %v2013 = vadd.f32 0.0, %v2012
      %v2014 = vpop.f32.mrb[0].mxu0
      %v2015 = vpop.f32.mrb[0].mxu0
      %v2016 = vadd.f32 0.0, %v2015
      %v2017 = vpop.f32.mrb[0].mxu0
      %2018 = vmatprep.mubr.bf16.mxu0 0
      %2019 = vmatmul.mubr.bf16.gmra.mrb[0].mxu0 %v1822
      %v2020 = vpop.f32.mrb[0].mxu0
      %v2021 = vadd.f32 0.0, %v2020
      %v2022 = vpop.f32.mrb[0].mxu0
      %v2023 = vpop.f32.mrb[0].mxu0
      %v2024 = vadd.f32 0.0, %v2023
      %v2025 = vpop.f32.mrb[0].mxu0
      %2026 = vmatprep.mubr.bf16.mxu0 0
      %2027 = vmatmul.mubr.bf16.gmra.mrb[0].mxu0 %v1823
      %v2028 = vpop.f32.mrb[0].mxu0
      %v2029 = vadd.f32 0.0, %v2028
      %v2030 = vpop.f32.mrb[0].mxu0
      %v2031 = vpop.f32.mrb[0].mxu0
      %v2032 = vadd.f32 0.0, %v2031
      %v2033 = vpop.f32.mrb[0].mxu0
      %2034 = vmatprep.mubr.bf16.mxu0 0
      %2035 = vmatmul.mubr.bf16.gmra.mrb[0].mxu0 %v1824
      %v2036 = vpop.f32.mrb[0].mxu0
      %v2037 = vadd.f32 0.0, %v2036
      %v2038 = vpop.f32.mrb[0].mxu0
      %v2039 = vpop.f32.mrb[0].mxu0
      %v2040 = vadd.f32 0.0, %v2039
      %v2041 = vpop.f32.mrb[0].mxu0
      %2042 = vmatprep.mubr.bf16.mxu0 0
      %2043 = vmatmul.mubr.bf16.gmra.mrb[0].mxu0 %v1825
      %v2044 = vpop.f32.mrb[0].mxu0
      %v2045 = vadd.f32 0.0, %v2044
      %v2046 = vpop.f32.mrb[0].mxu0
      %v2047 = vpop.f32.mrb[0].mxu0
      %v2048 = vadd.f32 0.0, %v2047
      %v2049 = vpop.f32.mrb[0].mxu0
      %2050 = vdwg.mxu0
      %v2051 = vadd.f32 %v1566, %v1925
      %v2052 = vadd.f32 %v1567, %v1928
      %v2053 = vadd.f32 %v1568, %v1933
      %v2054 = vadd.f32 %v1569, %v1936
      %v2055 = vadd.f32 %v1570, %v1941
      %v2056 = vadd.f32 %v1571, %v1944
      %v2057 = vadd.f32 %v1572, %v1949
      %v2058 = vadd.f32 %v1573, %v1952
      %v2059 = vadd.f32 %v1574, %v1957
      %v2060 = vadd.f32 %v1575, %v1960
      %v2061 = vadd.f32 %v1576, %v1965
      %v2062 = vadd.f32 %v1577, %v1968
      %v2063 = vadd.f32 %v1578, %v1973
      %v2064 = vadd.f32 %v1579, %v1976
      %v2065 = vadd.f32 %v1580, %v1981
      %v2066 = vadd.f32 %v1581, %v1984
      %v2067 = vadd.f32 %v1582, %v1989
      %v2068 = vadd.f32 %v1583, %v1992
      %v2069 = vadd.f32 %v1584, %v1997
      %v2070 = vadd.f32 %v1585, %v2000
      %v2071 = vadd.f32 %v1586, %v2005
      %v2072 = vadd.f32 %v1587, %v2008
      %v2073 = vadd.f32 %v1588, %v2013
      %v2074 = vadd.f32 %v1589, %v2016
      %v2075 = vadd.f32 %v1590, %v2021
      %v2076 = vadd.f32 %v1591, %v2024
      %v2077 = vadd.f32 %v1592, %v2029
      %v2078 = vadd.f32 %v1593, %v2032
      %v2079 = vadd.f32 %v1594, %v2037
      %v2080 = vadd.f32 %v1595, %v2040
      %v2081 = vadd.f32 %v1596, %v2045
      %v2082 = vadd.f32 %v1597, %v2048
      %2083 = vst [vmem:[#allocation2] sm:$0xff] %v2051
      %2084 = vst [vmem:[#allocation2 + $0x8] sm:$0xff] %v2052
      %2085 = vst [vmem:[#allocation2 + $0x10] sm:$0xff] %v2053
      %2086 = vst [vmem:[#allocation2 + $0x18] sm:$0xff] %v2054
      %2087 = vst [vmem:[#allocation2 + $0x20] sm:$0xff] %v2055
      %2088 = vst [vmem:[#allocation2 + $0x28] sm:$0xff] %v2056
      %2089 = vst [vmem:[#allocation2 + $0x30] sm:$0xff] %v2057
      %2090 = vst [vmem:[#allocation2 + $0x38] sm:$0xff] %v2058
      %2091 = vst [vmem:[#allocation2 + $0x40] sm:$0xff] %v2059
      %2092 = vst [vmem:[#allocation2 + $0x48] sm:$0xff] %v2060
      %2093 = vst [vmem:[#allocation2 + $0x50] sm:$0xff] %v2061
      %2094 = vst [vmem:[#allocation2 + $0x58] sm:$0xff] %v2062
      %2095 = vst [vmem:[#allocation2 + $0x60] sm:$0xff] %v2063
      %2096 = vst [vmem:[#allocation2 + $0x68] sm:$0xff] %v2064
      %2097 = vst [vmem:[#allocation2 + $0x70] sm:$0xff] %v2065
      %2098 = vst [vmem:[#allocation2 + $0x78] sm:$0xff] %v2066
      %2099 = vst [vmem:[#allocation2 + $0x80] sm:$0xff] %v2067
      %2100 = vst [vmem:[#allocation2 + $0x88] sm:$0xff] %v2068
      %2101 = vst [vmem:[#allocation2 + $0x90] sm:$0xff] %v2069
      %2102 = vst [vmem:[#allocation2 + $0x98] sm:$0xff] %v2070
      %2103 = vst [vmem:[#allocation2 + $0xa0] sm:$0xff] %v2071
      %2104 = vst [vmem:[#allocation2 + $0xa8] sm:$0xff] %v2072
      %2105 = vst [vmem:[#allocation2 + $0xb0] sm:$0xff] %v2073
      %2106 = vst [vmem:[#allocation2 + $0xb8] sm:$0xff] %v2074
      %2107 = vst [vmem:[#allocation2 + $0xc0] sm:$0xff] %v2075
      %2108 = vst [vmem:[#allocation2 + $0xc8] sm:$0xff] %v2076
      %2109 = vst [vmem:[#allocation2 + $0xd0] sm:$0xff] %v2077
      %2110 = vst [vmem:[#allocation2 + $0xd8] sm:$0xff] %v2078
      %2111 = vst [vmem:[#allocation2 + $0xe0] sm:$0xff] %v2079
      %2112 = vst [vmem:[#allocation2 + $0xe8] sm:$0xff] %v2080
      %2113 = vst [vmem:[#allocation2 + $0xf0] sm:$0xff] %v2081
      %2114 = vst [vmem:[#allocation2 + $0xf8] sm:$0xff] %v2082
      %s2115 = scalar_lea.vmem %s203, 12
      %v2116 = vld [vmem:[%s2115] sm:$0xf]
      %v2117 = vld [vmem:[%s2115 + $0x4] sm:$0xf]
      %v2118 = vld [vmem:[%s2115 + $0xc] sm:$0xf]
      %v2119 = vld [vmem:[%s2115 + $0x10] sm:$0xf]
      %v2120 = vld [vmem:[%s2115 + $0x18] sm:$0xf]
      %v2121 = vld [vmem:[%s2115 + $0x1c] sm:$0xf]
      %v2122 = vld [vmem:[%s2115 + $0x24] sm:$0xf]
      %v2123 = vld [vmem:[%s2115 + $0x28] sm:$0xf]
      %v2124 = vld [vmem:[%s2115 + $0x30] sm:$0xf]
      %v2125 = vld [vmem:[%s2115 + $0x34] sm:$0xf]
      %v2126 = vld [vmem:[%s2115 + $0x3c] sm:$0xf]
      %v2127 = vld [vmem:[%s2115 + $0x40] sm:$0xf]
      %v2128 = vld [vmem:[%s2115 + $0x48] sm:$0xf]
      %v2129 = vld [vmem:[%s2115 + $0x4c] sm:$0xf]
      %v2130 = vld [vmem:[%s2115 + $0x54] sm:$0xf]
      %v2131 = vld [vmem:[%s2115 + $0x58] sm:$0xf]
      %v2132 = vld [vmem:[%s2115 + $0x60] sm:$0xf]
      %v2133 = vld [vmem:[%s2115 + $0x64] sm:$0xf]
      %v2134 = vld [vmem:[%s2115 + $0x6c] sm:$0xf]
      %v2135 = vld [vmem:[%s2115 + $0x70] sm:$0xf]
      %v2136 = vld [vmem:[%s2115 + $0x78] sm:$0xf]
      %v2137 = vld [vmem:[%s2115 + $0x7c] sm:$0xf]
      %v2138 = vld [vmem:[%s2115 + $0x84] sm:$0xf]
      %v2139 = vld [vmem:[%s2115 + $0x88] sm:$0xf]
      %v2140 = vld [vmem:[%s2115 + $0x90] sm:$0xf]
      %v2141 = vld [vmem:[%s2115 + $0x94] sm:$0xf]
      %v2142 = vld [vmem:[%s2115 + $0x9c] sm:$0xf]
      %v2143 = vld [vmem:[%s2115 + $0xa0] sm:$0xf]
      %v2144 = vld [vmem:[%s2115 + $0xa8] sm:$0xf]
      %v2145 = vld [vmem:[%s2115 + $0xac] sm:$0xf]
      %v2146 = vld [vmem:[%s2115 + $0xb4] sm:$0xf]
      %v2147 = vld [vmem:[%s2115 + $0xb8] sm:$0xf]
      %v2148 = vld [vmem:[#allocation2] sm:$0xff]
      %v2149 = vld [vmem:[#allocation2 + $0x8] sm:$0xff]
      %v2150 = vld [vmem:[#allocation2 + $0x10] sm:$0xff]
      %v2151 = vld [vmem:[#allocation2 + $0x18] sm:$0xff]
      %v2152 = vld [vmem:[#allocation2 + $0x20] sm:$0xff]
      %v2153 = vld [vmem:[#allocation2 + $0x28] sm:$0xff]
      %v2154 = vld [vmem:[#allocation2 + $0x30] sm:$0xff]
      %v2155 = vld [vmem:[#allocation2 + $0x38] sm:$0xff]
      %v2156 = vld [vmem:[#allocation2 + $0x40] sm:$0xff]
      %v2157 = vld [vmem:[#allocation2 + $0x48] sm:$0xff]
      %v2158 = vld [vmem:[#allocation2 + $0x50] sm:$0xff]
      %v2159 = vld [vmem:[#allocation2 + $0x58] sm:$0xff]
      %v2160 = vld [vmem:[#allocation2 + $0x60] sm:$0xff]
      %v2161 = vld [vmem:[#allocation2 + $0x68] sm:$0xff]
      %v2162 = vld [vmem:[#allocation2 + $0x70] sm:$0xff]
      %v2163 = vld [vmem:[#allocation2 + $0x78] sm:$0xff]
      %v2164 = vld [vmem:[#allocation2 + $0x80] sm:$0xff]
      %v2165 = vld [vmem:[#allocation2 + $0x88] sm:$0xff]
      %v2166 = vld [vmem:[#allocation2 + $0x90] sm:$0xff]
      %v2167 = vld [vmem:[#allocation2 + $0x98] sm:$0xff]
      %v2168 = vld [vmem:[#allocation2 + $0xa0] sm:$0xff]
      %v2169 = vld [vmem:[#allocation2 + $0xa8] sm:$0xff]
      %v2170 = vld [vmem:[#allocation2 + $0xb0] sm:$0xff]
      %v2171 = vld [vmem:[#allocation2 + $0xb8] sm:$0xff]
      %v2172 = vld [vmem:[#allocation2 + $0xc0] sm:$0xff]
      %v2173 = vld [vmem:[#allocation2 + $0xc8] sm:$0xff]
      %v2174 = vld [vmem:[#allocation2 + $0xd0] sm:$0xff]
      %v2175 = vld [vmem:[#allocation2 + $0xd8] sm:$0xff]
      %v2176 = vld [vmem:[#allocation2 + $0xe0] sm:$0xff]
      %v2177 = vld [vmem:[#allocation2 + $0xe8] sm:$0xff]
      %v2178 = vld [vmem:[#allocation2 + $0xf0] sm:$0xff]
      %v2179 = vld [vmem:[#allocation2 + $0xf8] sm:$0xff]
      %s2180 = scalar_lea.vmem %s1, 192
      %v2181 = vld [vmem:[%s2180] sm:$0xf]
      %v2182 = vld [vmem:[%s2180 + $0x4] sm:$0xf]
      %v2183 = vld [vmem:[%s2180 + $0x8] sm:$0xf]
      %v2184 = vld [vmem:[%s2180 + $0xc] sm:$0xf]
      %v2185 = vld [vmem:[%s2180 + $0x10] sm:$0xf]
      %v2186 = vld [vmem:[%s2180 + $0x14] sm:$0xf]
      %v2187 = vld [vmem:[%s2180 + $0x18] sm:$0xf]
      %v2188 = vld [vmem:[%s2180 + $0x1c] sm:$0xf]
      %v2189 = vld [vmem:[%s2180 + $0x20] sm:$0xf]
      %v2190 = vld [vmem:[%s2180 + $0x24] sm:$0xf]
      %v2191 = vld [vmem:[%s2180 + $0x28] sm:$0xf]
      %v2192 = vld [vmem:[%s2180 + $0x2c] sm:$0xf]
      %v2193 = vld [vmem:[%s2180 + $0x30] sm:$0xf]
      %v2194 = vld [vmem:[%s2180 + $0x34] sm:$0xf]
      %v2195 = vld [vmem:[%s2180 + $0x38] sm:$0xf]
      %v2196 = vld [vmem:[%s2180 + $0x3c] sm:$0xf]
      %v2229 = vunpack.c.l.b16 %v2116
      %v2230 = vunpack.c.l.b16 %v2117
      %v2231 = vunpack.c.l.b16 %v2118
      %v2232 = vunpack.c.l.b16 %v2119
      %v2233 = vunpack.c.l.b16 %v2120
      %v2234 = vunpack.c.l.b16 %v2121
      %v2235 = vunpack.c.l.b16 %v2122
      %v2236 = vunpack.c.l.b16 %v2123
      %v2237 = vunpack.c.l.b16 %v2124
      %v2238 = vunpack.c.l.b16 %v2125
      %v2239 = vunpack.c.l.b16 %v2126
      %v2240 = vunpack.c.l.b16 %v2127
      %v2241 = vunpack.c.l.b16 %v2128
      %v2242 = vunpack.c.l.b16 %v2129
      %v2243 = vunpack.c.l.b16 %v2130
      %v2244 = vunpack.c.l.b16 %v2131
      %v2245 = vunpack.c.l.b16 %v2132
      %v2246 = vunpack.c.l.b16 %v2133
      %v2247 = vunpack.c.l.b16 %v2134
      %v2248 = vunpack.c.l.b16 %v2135
      %v2249 = vunpack.c.l.b16 %v2136
      %v2250 = vunpack.c.l.b16 %v2137
      %v2251 = vunpack.c.l.b16 %v2138
      %v2252 = vunpack.c.l.b16 %v2139
      %v2253 = vunpack.c.l.b16 %v2140
      %v2254 = vunpack.c.l.b16 %v2141
      %v2255 = vunpack.c.l.b16 %v2142
      %v2256 = vunpack.c.l.b16 %v2143
      %v2257 = vunpack.c.l.b16 %v2144
      %v2258 = vunpack.c.l.b16 %v2145
      %v2259 = vunpack.c.l.b16 %v2146
      %v2260 = vunpack.c.l.b16 %v2147
      %v2261 = vpack.c.b16 %v2230, %v2229
      %v2262 = vpack.c.b16 %v2232, %v2231
      %v2263 = vpack.c.b16 %v2234, %v2233
      %v2264 = vpack.c.b16 %v2236, %v2235
      %v2265 = vpack.c.b16 %v2238, %v2237
      %v2266 = vpack.c.b16 %v2240, %v2239
      %v2267 = vpack.c.b16 %v2242, %v2241
      %v2268 = vpack.c.b16 %v2244, %v2243
      %v2269 = vpack.c.b16 %v2246, %v2245
      %v2270 = vpack.c.b16 %v2248, %v2247
      %v2271 = vpack.c.b16 %v2250, %v2249
      %v2272 = vpack.c.b16 %v2252, %v2251
      %v2273 = vpack.c.b16 %v2254, %v2253
      %v2274 = vpack.c.b16 %v2256, %v2255
      %v2275 = vpack.c.b16 %v2258, %v2257
      %v2276 = vpack.c.b16 %v2260, %v2259
      %v2309 = vunpack.c.l.b16 %v2181
      %v2310 = vunpack.c.l.b16 %v2182
      %v2311 = vunpack.c.l.b16 %v2183
      %v2312 = vunpack.c.l.b16 %v2184
      %v2313 = vunpack.c.l.b16 %v2185
      %v2314 = vunpack.c.l.b16 %v2186
      %v2315 = vunpack.c.l.b16 %v2187
      %v2316 = vunpack.c.l.b16 %v2188
      %v2317 = vunpack.c.l.b16 %v2189
      %v2318 = vunpack.c.l.b16 %v2190
      %v2319 = vunpack.c.l.b16 %v2191
      %v2320 = vunpack.c.l.b16 %v2192
      %v2321 = vunpack.c.l.b16 %v2193
      %v2322 = vunpack.c.l.b16 %v2194
      %v2323 = vunpack.c.l.b16 %v2195
      %v2324 = vunpack.c.l.b16 %v2196
      %v2325 = vpack.c.b16 %v2310, %v2309
      %v2326 = vpack.c.b16 %v2312, %v2311
      %v2327 = vpack.c.b16 %v2314, %v2313
      %v2328 = vpack.c.b16 %v2316, %v2315
      %v2329 = vpack.c.b16 %v2318, %v2317
      %v2330 = vpack.c.b16 %v2320, %v2319
      %v2331 = vpack.c.b16 %v2322, %v2321
      %v2332 = vpack.c.b16 %v2324, %v2323
      %2341 = vmatprep.subr.bf16.mxu0 0
      %2342 = vmatpush1.bf16.msra.mxu0 %v2325
      %2343 = vmatprep.subr.bf16.mxu0 0
      %2344 = vmatpush1.bf16.msra.mxu0 %v2326
      %2345 = vmatprep.subr.bf16.mxu0 0
      %2346 = vmatpush1.bf16.msra.mxu0 %v2327
      %2347 = vmatprep.subr.bf16.mxu0 0
      %2348 = vmatpush1.bf16.msra.mxu0 %v2328
      %2349 = vmatprep.subr.bf16.mxu0 0
      %2350 = vmatpush1.bf16.msra.mxu0 %v2329
      %2351 = vmatprep.subr.bf16.mxu0 0
      %2352 = vmatpush1.bf16.msra.mxu0 %v2330
      %2353 = vmatprep.subr.bf16.mxu0 0
      %2354 = vmatpush1.bf16.msra.mxu0 %v2331
      %2355 = vmatprep.subr.bf16.mxu0 0
      %2356 = vmatpush1.bf16.msra.mxu0 %v2332
      %2357 = vmatprep.subr.bf16.mxu0 0
      %2358 = vmatpush1.bf16.msra.mxu0 0
      %2359 = vmatprep.subr.bf16.mxu0 0
      %2360 = vmatpush1.bf16.msra.mxu0 0
      %2361 = vmatprep.subr.bf16.mxu0 0
      %2362 = vmatpush1.bf16.msra.mxu0 0
      %2363 = vmatprep.subr.bf16.mxu0 0
      %2364 = vmatpush1.bf16.msra.mxu0 0
      %2365 = vmatprep.subr.bf16.mxu0 0
      %2366 = vmatpush1.bf16.msra.mxu0 0
      %2367 = vmatprep.subr.bf16.mxu0 0
      %2368 = vmatpush1.bf16.msra.mxu0 0
      %2369 = vmatprep.subr.bf16.mxu0 0
      %2370 = vmatpush1.bf16.msra.mxu0 0
      %2371 = vmatprep.subr.bf16.mxu0 0
      %2372 = vmatpush1.bf16.msra.mxu0 0
      %2373 = vmatprep.mubr.bf16.mxu0 0
      %2374 = vmatmul.mubr.bf16.gmra.mrb[0].mxu0 %v2261
      %v2375 = vpop.f32.mrb[0].mxu0
      %v2376 = vadd.f32 0.0, %v2375
      %v2377 = vpop.f32.mrb[0].mxu0
      %v2378 = vpop.f32.mrb[0].mxu0
      %v2379 = vadd.f32 0.0, %v2378
      %v2380 = vpop.f32.mrb[0].mxu0
      %2381 = vmatprep.mubr.bf16.mxu0 0
      %2382 = vmatmul.mubr.bf16.gmra.mrb[0].mxu0 %v2262
      %v2383 = vpop.f32.mrb[0].mxu0
      %v2384 = vadd.f32 0.0, %v2383
      %v2385 = vpop.f32.mrb[0].mxu0
      %v2386 = vpop.f32.mrb[0].mxu0
      %v2387 = vadd.f32 0.0, %v2386
      %v2388 = vpop.f32.mrb[0].mxu0
      %2389 = vmatprep.mubr.bf16.mxu0 0
      %2390 = vmatmul.mubr.bf16.gmra.mrb[0].mxu0 %v2263
      %v2391 = vpop.f32.mrb[0].mxu0
      %v2392 = vadd.f32 0.0, %v2391
      %v2393 = vpop.f32.mrb[0].mxu0
      %v2394 = vpop.f32.mrb[0].mxu0
      %v2395 = vadd.f32 0.0, %v2394
      %v2396 = vpop.f32.mrb[0].mxu0
      %2397 = vmatprep.mubr.bf16.mxu0 0
      %2398 = vmatmul.mubr.bf16.gmra.mrb[0].mxu0 %v2264
      %v2399 = vpop.f32.mrb[0].mxu0
      %v2400 = vadd.f32 0.0, %v2399
      %v2401 = vpop.f32.mrb[0].mxu0
      %v2402 = vpop.f32.mrb[0].mxu0
      %v2403 = vadd.f32 0.0, %v2402
      %v2404 = vpop.f32.mrb[0].mxu0
      %2405 = vmatprep.mubr.bf16.mxu0 0
      %2406 = vmatmul.mubr.bf16.gmra.mrb[0].mxu0 %v2265
      %v2407 = vpop.f32.mrb[0].mxu0
      %v2408 = vadd.f32 0.0, %v2407
      %v2409 = vpop.f32.mrb[0].mxu0
      %v2410 = vpop.f32.mrb[0].mxu0
      %v2411 = vadd.f32 0.0, %v2410
      %v2412 = vpop.f32.mrb[0].mxu0
      %2413 = vmatprep.mubr.bf16.mxu0 0
      %2414 = vmatmul.mubr.bf16.gmra.mrb[0].mxu0 %v2266
      %v2415 = vpop.f32.mrb[0].mxu0
      %v2416 = vadd.f32 0.0, %v2415
      %v2417 = vpop.f32.mrb[0].mxu0
      %v2418 = vpop.f32.mrb[0].mxu0
      %v2419 = vadd.f32 0.0, %v2418
      %v2420 = vpop.f32.mrb[0].mxu0
      %2421 = vmatprep.mubr.bf16.mxu0 0
      %2422 = vmatmul.mubr.bf16.gmra.mrb[0].mxu0 %v2267
      %v2423 = vpop.f32.mrb[0].mxu0
      %v2424 = vadd.f32 0.0, %v2423
      %v2425 = vpop.f32.mrb[0].mxu0
      %v2426 = vpop.f32.mrb[0].mxu0
      %v2427 = vadd.f32 0.0, %v2426
      %v2428 = vpop.f32.mrb[0].mxu0
      %2429 = vmatprep.mubr.bf16.mxu0 0
      %2430 = vmatmul.mubr.bf16.gmra.mrb[0].mxu0 %v2268
      %v2431 = vpop.f32.mrb[0].mxu0
      %v2432 = vadd.f32 0.0, %v2431
      %v2433 = vpop.f32.mrb[0].mxu0
      %v2434 = vpop.f32.mrb[0].mxu0
      %v2435 = vadd.f32 0.0, %v2434
      %v2436 = vpop.f32.mrb[0].mxu0
      %2437 = vmatprep.mubr.bf16.mxu0 0
      %2438 = vmatmul.mubr.bf16.gmra.mrb[0].mxu0 %v2269
      %v2439 = vpop.f32.mrb[0].mxu0
      %v2440 = vadd.f32 0.0, %v2439
      %v2441 = vpop.f32.mrb[0].mxu0
      %v2442 = vpop.f32.mrb[0].mxu0
      %v2443 = vadd.f32 0.0, %v2442
      %v2444 = vpop.f32.mrb[0].mxu0
      %2445 = vmatprep.mubr.bf16.mxu0 0
      %2446 = vmatmul.mubr.bf16.gmra.mrb[0].mxu0 %v2270
      %v2447 = vpop.f32.mrb[0].mxu0
      %v2448 = vadd.f32 0.0, %v2447
      %v2449 = vpop.f32.mrb[0].mxu0
      %v2450 = vpop.f32.mrb[0].mxu0
      %v2451 = vadd.f32 0.0, %v2450
      %v2452 = vpop.f32.mrb[0].mxu0
      %2453 = vmatprep.mubr.bf16.mxu0 0
      %2454 = vmatmul.mubr.bf16.gmra.mrb[0].mxu0 %v2271
      %v2455 = vpop.f32.mrb[0].mxu0
      %v2456 = vadd.f32 0.0, %v2455
      %v2457 = vpop.f32.mrb[0].mxu0
      %v2458 = vpop.f32.mrb[0].mxu0
      %v2459 = vadd.f32 0.0, %v2458
      %v2460 = vpop.f32.mrb[0].mxu0
      %2461 = vmatprep.mubr.bf16.mxu0 0
      %2462 = vmatmul.mubr.bf16.gmra.mrb[0].mxu0 %v2272
      %v2463 = vpop.f32.mrb[0].mxu0
      %v2464 = vadd.f32 0.0, %v2463
      %v2465 = vpop.f32.mrb[0].mxu0
      %v2466 = vpop.f32.mrb[0].mxu0
      %v2467 = vadd.f32 0.0, %v2466
      %v2468 = vpop.f32.mrb[0].mxu0
      %2469 = vmatprep.mubr.bf16.mxu0 0
      %2470 = vmatmul.mubr.bf16.gmra.mrb[0].mxu0 %v2273
      %v2471 = vpop.f32.mrb[0].mxu0
      %v2472 = vadd.f32 0.0, %v2471
      %v2473 = vpop.f32.mrb[0].mxu0
      %v2474 = vpop.f32.mrb[0].mxu0
      %v2475 = vadd.f32 0.0, %v2474
      %v2476 = vpop.f32.mrb[0].mxu0
      %2477 = vmatprep.mubr.bf16.mxu0 0
      %2478 = vmatmul.mubr.bf16.gmra.mrb[0].mxu0 %v2274
      %v2479 = vpop.f32.mrb[0].mxu0
      %v2480 = vadd.f32 0.0, %v2479
      %v2481 = vpop.f32.mrb[0].mxu0
      %v2482 = vpop.f32.mrb[0].mxu0
      %v2483 = vadd.f32 0.0, %v2482
      %v2484 = vpop.f32.mrb[0].mxu0
      %2485 = vmatprep.mubr.bf16.mxu0 0
      %2486 = vmatmul.mubr.bf16.gmra.mrb[0].mxu0 %v2275
      %v2487 = vpop.f32.mrb[0].mxu0
      %v2488 = vadd.f32 0.0, %v2487
      %v2489 = vpop.f32.mrb[0].mxu0
      %v2490 = vpop.f32.mrb[0].mxu0
      %v2491 = vadd.f32 0.0, %v2490
      %v2492 = vpop.f32.mrb[0].mxu0
      %2493 = vmatprep.mubr.bf16.mxu0 0
      %2494 = vmatmul.mubr.bf16.gmra.mrb[0].mxu0 %v2276
      %v2495 = vpop.f32.mrb[0].mxu0
      %v2496 = vadd.f32 0.0, %v2495
      %v2497 = vpop.f32.mrb[0].mxu0
      %v2498 = vpop.f32.mrb[0].mxu0
      %v2499 = vadd.f32 0.0, %v2498
      %v2500 = vpop.f32.mrb[0].mxu0
      %2501 = vdwg.mxu0
      %v2502 = vadd.f32 %v2148, %v2376
      %v2503 = vadd.f32 %v2149, %v2379
      %v2504 = vadd.f32 %v2150, %v2384
      %v2505 = vadd.f32 %v2151, %v2387
      %v2506 = vadd.f32 %v2152, %v2392
      %v2507 = vadd.f32 %v2153, %v2395
      %v2508 = vadd.f32 %v2154, %v2400
      %v2509 = vadd.f32 %v2155, %v2403
      %v2510 = vadd.f32 %v2156, %v2408
      %v2511 = vadd.f32 %v2157, %v2411
      %v2512 = vadd.f32 %v2158, %v2416
      %v2513 = vadd.f32 %v2159, %v2419
      %v2514 = vadd.f32 %v2160, %v2424
      %v2515 = vadd.f32 %v2161, %v2427
      %v2516 = vadd.f32 %v2162, %v2432
      %v2517 = vadd.f32 %v2163, %v2435
      %v2518 = vadd.f32 %v2164, %v2440
      %v2519 = vadd.f32 %v2165, %v2443
      %v2520 = vadd.f32 %v2166, %v2448
      %v2521 = vadd.f32 %v2167, %v2451
      %v2522 = vadd.f32 %v2168, %v2456
      %v2523 = vadd.f32 %v2169, %v2459
      %v2524 = vadd.f32 %v2170, %v2464
      %v2525 = vadd.f32 %v2171, %v2467
      %v2526 = vadd.f32 %v2172, %v2472
      %v2527 = vadd.f32 %v2173, %v2475
      %v2528 = vadd.f32 %v2174, %v2480
      %v2529 = vadd.f32 %v2175, %v2483
      %v2530 = vadd.f32 %v2176, %v2488
      %v2531 = vadd.f32 %v2177, %v2491
      %v2532 = vadd.f32 %v2178, %v2496
      %v2533 = vadd.f32 %v2179, %v2499
      %2534 = vst [vmem:[#allocation2] sm:$0xff] %v2502
      %2535 = vst [vmem:[#allocation2 + $0x8] sm:$0xff] %v2503
      %2536 = vst [vmem:[#allocation2 + $0x10] sm:$0xff] %v2504
      %2537 = vst [vmem:[#allocation2 + $0x18] sm:$0xff] %v2505
      %2538 = vst [vmem:[#allocation2 + $0x20] sm:$0xff] %v2506
      %2539 = vst [vmem:[#allocation2 + $0x28] sm:$0xff] %v2507
      %2540 = vst [vmem:[#allocation2 + $0x30] sm:$0xff] %v2508
      %2541 = vst [vmem:[#allocation2 + $0x38] sm:$0xff] %v2509
      %2542 = vst [vmem:[#allocation2 + $0x40] sm:$0xff] %v2510
      %2543 = vst [vmem:[#allocation2 + $0x48] sm:$0xff] %v2511
      %2544 = vst [vmem:[#allocation2 + $0x50] sm:$0xff] %v2512
      %2545 = vst [vmem:[#allocation2 + $0x58] sm:$0xff] %v2513
      %2546 = vst [vmem:[#allocation2 + $0x60] sm:$0xff] %v2514
      %2547 = vst [vmem:[#allocation2 + $0x68] sm:$0xff] %v2515
      %2548 = vst [vmem:[#allocation2 + $0x70] sm:$0xff] %v2516
      %2549 = vst [vmem:[#allocation2 + $0x78] sm:$0xff] %v2517
      %2550 = vst [vmem:[#allocation2 + $0x80] sm:$0xff] %v2518
      %2551 = vst [vmem:[#allocation2 + $0x88] sm:$0xff] %v2519
      %2552 = vst [vmem:[#allocation2 + $0x90] sm:$0xff] %v2520
      %2553 = vst [vmem:[#allocation2 + $0x98] sm:$0xff] %v2521
      %2554 = vst [vmem:[#allocation2 + $0xa0] sm:$0xff] %v2522
      %2555 = vst [vmem:[#allocation2 + $0xa8] sm:$0xff] %v2523
      %2556 = vst [vmem:[#allocation2 + $0xb0] sm:$0xff] %v2524
      %2557 = vst [vmem:[#allocation2 + $0xb8] sm:$0xff] %v2525
      %2558 = vst [vmem:[#allocation2 + $0xc0] sm:$0xff] %v2526
      %2559 = vst [vmem:[#allocation2 + $0xc8] sm:$0xff] %v2527
      %2560 = vst [vmem:[#allocation2 + $0xd0] sm:$0xff] %v2528
      %2561 = vst [vmem:[#allocation2 + $0xd8] sm:$0xff] %v2529
      %2562 = vst [vmem:[#allocation2 + $0xe0] sm:$0xff] %v2530
      %2563 = vst [vmem:[#allocation2 + $0xe8] sm:$0xff] %v2531
      %2564 = vst [vmem:[#allocation2 + $0xf0] sm:$0xff] %v2532
      %2565 = vst [vmem:[#allocation2 + $0xf8] sm:$0xff] %v2533
      %v2566 = vld [vmem:[%s2115] sm:$0xf]
      %v2567 = vld [vmem:[%s2115 + $0x4] sm:$0xf]
      %v2568 = vld [vmem:[%s2115 + $0x8] sm:$0x1]
      %v2569 = vld [vmem:[%s2115 + $0xc] sm:$0xf]
      %v2570 = vld [vmem:[%s2115 + $0x10] sm:$0xf]
      %v2571 = vld [vmem:[%s2115 + $0x14] sm:$0x1]
      %v2572 = vld [vmem:[%s2115 + $0x18] sm:$0xf]
      %v2573 = vld [vmem:[%s2115 + $0x1c] sm:$0xf]
      %v2574 = vld [vmem:[%s2115 + $0x20] sm:$0x1]
      %v2575 = vld [vmem:[%s2115 + $0x24] sm:$0xf]
      %v2576 = vld [vmem:[%s2115 + $0x28] sm:$0xf]
      %v2577 = vld [vmem:[%s2115 + $0x2c] sm:$0x1]
      %v2578 = vld [vmem:[%s2115 + $0x30] sm:$0xf]
      %v2579 = vld [vmem:[%s2115 + $0x34] sm:$0xf]
      %v2580 = vld [vmem:[%s2115 + $0x38] sm:$0x1]
      %v2581 = vld [vmem:[%s2115 + $0x3c] sm:$0xf]
      %v2582 = vld [vmem:[%s2115 + $0x40] sm:$0xf]
      %v2583 = vld [vmem:[%s2115 + $0x44] sm:$0x1]
      %v2584 = vld [vmem:[%s2115 + $0x48] sm:$0xf]
      %v2585 = vld [vmem:[%s2115 + $0x4c] sm:$0xf]
      %v2586 = vld [vmem:[%s2115 + $0x50] sm:$0x1]
      %v2587 = vld [vmem:[%s2115 + $0x54] sm:$0xf]
      %v2588 = vld [vmem:[%s2115 + $0x58] sm:$0xf]
      %v2589 = vld [vmem:[%s2115 + $0x5c] sm:$0x1]
      %v2590 = vld [vmem:[%s2115 + $0x60] sm:$0xf]
      %v2591 = vld [vmem:[%s2115 + $0x64] sm:$0xf]
      %v2592 = vld [vmem:[%s2115 + $0x68] sm:$0x1]
      %v2593 = vld [vmem:[%s2115 + $0x6c] sm:$0xf]
      %v2594 = vld [vmem:[%s2115 + $0x70] sm:$0xf]
      %v2595 = vld [vmem:[%s2115 + $0x74] sm:$0x1]
      %v2596 = vld [vmem:[%s2115 + $0x78] sm:$0xf]
      %v2597 = vld [vmem:[%s2115 + $0x7c] sm:$0xf]
      %v2598 = vld [vmem:[%s2115 + $0x80] sm:$0x1]
      %v2599 = vld [vmem:[%s2115 + $0x84] sm:$0xf]
      %v2600 = vld [vmem:[%s2115 + $0x88] sm:$0xf]
      %v2601 = vld [vmem:[%s2115 + $0x8c] sm:$0x1]
      %v2602 = vld [vmem:[%s2115 + $0x90] sm:$0xf]
      %v2603 = vld [vmem:[%s2115 + $0x94] sm:$0xf]
      %v2604 = vld [vmem:[%s2115 + $0x98] sm:$0x1]
      %v2605 = vld [vmem:[%s2115 + $0x9c] sm:$0xf]
      %v2606 = vld [vmem:[%s2115 + $0xa0] sm:$0xf]
      %v2607 = vld [vmem:[%s2115 + $0xa4] sm:$0x1]
      %v2608 = vld [vmem:[%s2115 + $0xa8] sm:$0xf]
      %v2609 = vld [vmem:[%s2115 + $0xac] sm:$0xf]
      %v2610 = vld [vmem:[%s2115 + $0xb0] sm:$0x1]
      %v2611 = vld [vmem:[%s2115 + $0xb4] sm:$0xf]
      %v2612 = vld [vmem:[%s2115 + $0xb8] sm:$0xf]
      %v2613 = vld [vmem:[%s2115 + $0xbc] sm:$0x1]
      %v2614 = vld [vmem:[#allocation2] sm:$0xff]
      %v2615 = vld [vmem:[#allocation2 + $0x8] sm:$0xff]
      %v2616 = vld [vmem:[#allocation2 + $0x10] sm:$0xff]
      %v2617 = vld [vmem:[#allocation2 + $0x18] sm:$0xff]
      %v2618 = vld [vmem:[#allocation2 + $0x20] sm:$0xff]
      %v2619 = vld [vmem:[#allocation2 + $0x28] sm:$0xff]
      %v2620 = vld [vmem:[#allocation2 + $0x30] sm:$0xff]
      %v2621 = vld [vmem:[#allocation2 + $0x38] sm:$0xff]
      %v2622 = vld [vmem:[#allocation2 + $0x40] sm:$0xff]
      %v2623 = vld [vmem:[#allocation2 + $0x48] sm:$0xff]
      %v2624 = vld [vmem:[#allocation2 + $0x50] sm:$0xff]
      %v2625 = vld [vmem:[#allocation2 + $0x58] sm:$0xff]
      %v2626 = vld [vmem:[#allocation2 + $0x60] sm:$0xff]
      %v2627 = vld [vmem:[#allocation2 + $0x68] sm:$0xff]
      %v2628 = vld [vmem:[#allocation2 + $0x70] sm:$0xff]
      %v2629 = vld [vmem:[#allocation2 + $0x78] sm:$0xff]
      %v2630 = vld [vmem:[#allocation2 + $0x80] sm:$0xff]
      %v2631 = vld [vmem:[#allocation2 + $0x88] sm:$0xff]
      %v2632 = vld [vmem:[#allocation2 + $0x90] sm:$0xff]
      %v2633 = vld [vmem:[#allocation2 + $0x98] sm:$0xff]
      %v2634 = vld [vmem:[#allocation2 + $0xa0] sm:$0xff]
      %v2635 = vld [vmem:[#allocation2 + $0xa8] sm:$0xff]
      %v2636 = vld [vmem:[#allocation2 + $0xb0] sm:$0xff]
      %v2637 = vld [vmem:[#allocation2 + $0xb8] sm:$0xff]
      %v2638 = vld [vmem:[#allocation2 + $0xc0] sm:$0xff]
      %v2639 = vld [vmem:[#allocation2 + $0xc8] sm:$0xff]
      %v2640 = vld [vmem:[#allocation2 + $0xd0] sm:$0xff]
      %v2641 = vld [vmem:[#allocation2 + $0xd8] sm:$0xff]
      %v2642 = vld [vmem:[#allocation2 + $0xe0] sm:$0xff]
      %v2643 = vld [vmem:[#allocation2 + $0xe8] sm:$0xff]
      %v2644 = vld [vmem:[#allocation2 + $0xf0] sm:$0xff]
      %v2645 = vld [vmem:[#allocation2 + $0xf8] sm:$0xff]
      %v2647 = vshrl.u32 %v2566, 16
      %v2649 = vrot.slane %v2647, 4
      %v2650 = vshll.u32 %v2566, 16
      %v2652 = vrot.slane %v2650, 5
      %v2653 = vor.u32 %v2649, %v2652
      %v2654 = vrot.slane %v2653, 4
      %v2656 = vshll.u32 %v2567, 16
      %v2658 = vrot.slane %v2656, 5
      %v2659 = vsel %vm779, %v2654, %v2658
      %v2660 = vshrl.u32 %v2567, 16
      %v2662 = vrot.slane %v2660, 4
      %v2663 = vor.u32 %v2662, %v2658
      %v2664 = vrot.slane %v2663, 4
      %v2666 = vshll.u32 %v2568, 16
      %v2668 = vrot.slane %v2666, 5
      %v2669 = vsel %vm779, %v2664, %v2668
      %v2671 = vshrl.u32 %v2569, 16
      %v2673 = vrot.slane %v2671, 4
      %v2674 = vshll.u32 %v2569, 16
      %v2676 = vrot.slane %v2674, 5
      %v2677 = vor.u32 %v2673, %v2676
      %v2678 = vrot.slane %v2677, 4
      %v2680 = vshll.u32 %v2570, 16
      %v2682 = vrot.slane %v2680, 5
      %v2683 = vsel %vm779, %v2678, %v2682
      %v2684 = vshrl.u32 %v2570, 16
      %v2686 = vrot.slane %v2684, 4
      %v2687 = vor.u32 %v2686, %v2682
      %v2688 = vrot.slane %v2687, 4
      %v2690 = vshll.u32 %v2571, 16
      %v2692 = vrot.slane %v2690, 5
      %v2693 = vsel %vm779, %v2688, %v2692
      %v2695 = vshrl.u32 %v2572, 16
      %v2697 = vrot.slane %v2695, 4
      %v2698 = vshll.u32 %v2572, 16
      %v2700 = vrot.slane %v2698, 5
      %v2701 = vor.u32 %v2697, %v2700
      %v2702 = vrot.slane %v2701, 4
      %v2704 = vshll.u32 %v2573, 16
      %v2706 = vrot.slane %v2704, 5
      %v2707 = vsel %vm779, %v2702, %v2706
      %v2708 = vshrl.u32 %v2573, 16
      %v2710 = vrot.slane %v2708, 4
      %v2711 = vor.u32 %v2710, %v2706
      %v2712 = vrot.slane %v2711, 4
      %v2714 = vshll.u32 %v2574, 16
      %v2716 = vrot.slane %v2714, 5
      %v2717 = vsel %vm779, %v2712, %v2716
      %v2719 = vshrl.u32 %v2575, 16
      %v2721 = vrot.slane %v2719, 4
      %v2722 = vshll.u32 %v2575, 16
      %v2724 = vrot.slane %v2722, 5
      %v2725 = vor.u32 %v2721, %v2724
      %v2726 = vrot.slane %v2725, 4
      %v2728 = vshll.u32 %v2576, 16
      %v2730 = vrot.slane %v2728, 5
      %v2731 = vsel %vm779, %v2726, %v2730
      %v2732 = vshrl.u32 %v2576, 16
      %v2734 = vrot.slane %v2732, 4
      %v2735 = vor.u32 %v2734, %v2730
      %v2736 = vrot.slane %v2735, 4
      %v2738 = vshll.u32 %v2577, 16
      %v2740 = vrot.slane %v2738, 5
      %v2741 = vsel %vm779, %v2736, %v2740
      %v2743 = vshrl.u32 %v2578, 16
      %v2745 = vrot.slane %v2743, 4
      %v2746 = vshll.u32 %v2578, 16
      %v2748 = vrot.slane %v2746, 5
      %v2749 = vor.u32 %v2745, %v2748
      %v2750 = vrot.slane %v2749, 4
      %v2752 = vshll.u32 %v2579, 16
      %v2754 = vrot.slane %v2752, 5
      %v2755 = vsel %vm779, %v2750, %v2754
      %v2756 = vshrl.u32 %v2579, 16
      %v2758 = vrot.slane %v2756, 4
      %v2759 = vor.u32 %v2758, %v2754
      %v2760 = vrot.slane %v2759, 4
      %v2762 = vshll.u32 %v2580, 16
      %v2764 = vrot.slane %v2762, 5
      %v2765 = vsel %vm779, %v2760, %v2764
      %v2767 = vshrl.u32 %v2581, 16
      %v2769 = vrot.slane %v2767, 4
      %v2770 = vshll.u32 %v2581, 16
      %v2772 = vrot.slane %v2770, 5
      %v2773 = vor.u32 %v2769, %v2772
      %v2774 = vrot.slane %v2773, 4
      %v2776 = vshll.u32 %v2582, 16
      %v2778 = vrot.slane %v2776, 5
      %v2779 = vsel %vm779, %v2774, %v2778
      %v2780 = vshrl.u32 %v2582, 16
      %v2782 = vrot.slane %v2780, 4
      %v2783 = vor.u32 %v2782, %v2778
      %v2784 = vrot.slane %v2783, 4
      %v2786 = vshll.u32 %v2583, 16
      %v2788 = vrot.slane %v2786, 5
      %v2789 = vsel %vm779, %v2784, %v2788
      %v2791 = vshrl.u32 %v2584, 16
      %v2793 = vrot.slane %v2791, 4
      %v2794 = vshll.u32 %v2584, 16
      %v2796 = vrot.slane %v2794, 5
      %v2797 = vor.u32 %v2793, %v2796
      %v2798 = vrot.slane %v2797, 4
      %v2800 = vshll.u32 %v2585, 16
      %v2802 = vrot.slane %v2800, 5
      %v2803 = vsel %vm779, %v2798, %v2802
      %v2804 = vshrl.u32 %v2585, 16
      %v2806 = vrot.slane %v2804, 4
      %v2807 = vor.u32 %v2806, %v2802
      %v2808 = vrot.slane %v2807, 4
      %v2810 = vshll.u32 %v2586, 16
      %v2812 = vrot.slane %v2810, 5
      %v2813 = vsel %vm779, %v2808, %v2812
      %v2815 = vshrl.u32 %v2587, 16
      %v2817 = vrot.slane %v2815, 4
      %v2818 = vshll.u32 %v2587, 16
      %v2820 = vrot.slane %v2818, 5
      %v2821 = vor.u32 %v2817, %v2820
      %v2822 = vrot.slane %v2821, 4
      %v2824 = vshll.u32 %v2588, 16
      %v2826 = vrot.slane %v2824, 5
      %v2827 = vsel %vm779, %v2822, %v2826
      %v2828 = vshrl.u32 %v2588, 16
      %v2830 = vrot.slane %v2828, 4
      %v2831 = vor.u32 %v2830, %v2826
      %v2832 = vrot.slane %v2831, 4
      %v2834 = vshll.u32 %v2589, 16
      %v2836 = vrot.slane %v2834, 5
      %v2837 = vsel %vm779, %v2832, %v2836
      %v2839 = vshrl.u32 %v2590, 16
      %v2841 = vrot.slane %v2839, 4
      %v2842 = vshll.u32 %v2590, 16
      %v2844 = vrot.slane %v2842, 5
      %v2845 = vor.u32 %v2841, %v2844
      %v2846 = vrot.slane %v2845, 4
      %v2848 = vshll.u32 %v2591, 16
      %v2850 = vrot.slane %v2848, 5
      %v2851 = vsel %vm779, %v2846, %v2850
      %v2852 = vshrl.u32 %v2591, 16
      %v2854 = vrot.slane %v2852, 4
      %v2855 = vor.u32 %v2854, %v2850
      %v2856 = vrot.slane %v2855, 4
      %v2858 = vshll.u32 %v2592, 16
      %v2860 = vrot.slane %v2858, 5
      %v2861 = vsel %vm779, %v2856, %v2860
      %v2863 = vshrl.u32 %v2593, 16
      %v2865 = vrot.slane %v2863, 4
      %v2866 = vshll.u32 %v2593, 16
      %v2868 = vrot.slane %v2866, 5
      %v2869 = vor.u32 %v2865, %v2868
      %v2870 = vrot.slane %v2869, 4
      %v2872 = vshll.u32 %v2594, 16
      %v2874 = vrot.slane %v2872, 5
      %v2875 = vsel %vm779, %v2870, %v2874
      %v2876 = vshrl.u32 %v2594, 16
      %v2878 = vrot.slane %v2876, 4
      %v2879 = vor.u32 %v2878, %v2874
      %v2880 = vrot.slane %v2879, 4
      %v2882 = vshll.u32 %v2595, 16
      %v2884 = vrot.slane %v2882, 5
      %v2885 = vsel %vm779, %v2880, %v2884
      %v2887 = vshrl.u32 %v2596, 16
      %v2889 = vrot.slane %v2887, 4
      %v2890 = vshll.u32 %v2596, 16
      %v2892 = vrot.slane %v2890, 5
      %v2893 = vor.u32 %v2889, %v2892
      %v2894 = vrot.slane %v2893, 4
      %v2896 = vshll.u32 %v2597, 16
      %v2898 = vrot.slane %v2896, 5
      %v2899 = vsel %vm779, %v2894, %v2898
      %v2900 = vshrl.u32 %v2597, 16
      %v2902 = vrot.slane %v2900, 4
      %v2903 = vor.u32 %v2902, %v2898
      %v2904 = vrot.slane %v2903, 4
      %v2906 = vshll.u32 %v2598, 16
      %v2908 = vrot.slane %v2906, 5
      %v2909 = vsel %vm779, %v2904, %v2908
      %v2911 = vshrl.u32 %v2599, 16
      %v2913 = vrot.slane %v2911, 4
      %v2914 = vshll.u32 %v2599, 16
      %v2916 = vrot.slane %v2914, 5
      %v2917 = vor.u32 %v2913, %v2916
      %v2918 = vrot.slane %v2917, 4
      %v2920 = vshll.u32 %v2600, 16
      %v2922 = vrot.slane %v2920, 5
      %v2923 = vsel %vm779, %v2918, %v2922
      %v2924 = vshrl.u32 %v2600, 16
      %v2926 = vrot.slane %v2924, 4
      %v2927 = vor.u32 %v2926, %v2922
      %v2928 = vrot.slane %v2927, 4
      %v2930 = vshll.u32 %v2601, 16
      %v2932 = vrot.slane %v2930, 5
      %v2933 = vsel %vm779, %v2928, %v2932
      %v2935 = vshrl.u32 %v2602, 16
      %v2937 = vrot.slane %v2935, 4
      %v2938 = vshll.u32 %v2602, 16
      %v2940 = vrot.slane %v2938, 5
      %v2941 = vor.u32 %v2937, %v2940
      %v2942 = vrot.slane %v2941, 4
      %v2944 = vshll.u32 %v2603, 16
      %v2946 = vrot.slane %v2944, 5
      %v2947 = vsel %vm779, %v2942, %v2946
      %v2948 = vshrl.u32 %v2603, 16
      %v2950 = vrot.slane %v2948, 4
      %v2951 = vor.u32 %v2950, %v2946
      %v2952 = vrot.slane %v2951, 4
      %v2954 = vshll.u32 %v2604, 16
      %v2956 = vrot.slane %v2954, 5
      %v2957 = vsel %vm779, %v2952, %v2956
      %v2959 = vshrl.u32 %v2605, 16
      %v2961 = vrot.slane %v2959, 4
      %v2962 = vshll.u32 %v2605, 16
      %v2964 = vrot.slane %v2962, 5
      %v2965 = vor.u32 %v2961, %v2964
      %v2966 = vrot.slane %v2965, 4
      %v2968 = vshll.u32 %v2606, 16
      %v2970 = vrot.slane %v2968, 5
      %v2971 = vsel %vm779, %v2966, %v2970
      %v2972 = vshrl.u32 %v2606, 16
      %v2974 = vrot.slane %v2972, 4
      %v2975 = vor.u32 %v2974, %v2970
      %v2976 = vrot.slane %v2975, 4
      %v2978 = vshll.u32 %v2607, 16
      %v2980 = vrot.slane %v2978, 5
      %v2981 = vsel %vm779, %v2976, %v2980
      %v2983 = vshrl.u32 %v2608, 16
      %v2985 = vrot.slane %v2983, 4
      %v2986 = vshll.u32 %v2608, 16
      %v2988 = vrot.slane %v2986, 5
      %v2989 = vor.u32 %v2985, %v2988
      %v2990 = vrot.slane %v2989, 4
      %v2992 = vshll.u32 %v2609, 16
      %v2994 = vrot.slane %v2992, 5
      %v2995 = vsel %vm779, %v2990, %v2994
      %v2996 = vshrl.u32 %v2609, 16
      %v2998 = vrot.slane %v2996, 4
      %v2999 = vor.u32 %v2998, %v2994
      %v3000 = vrot.slane %v2999, 4
      %v3002 = vshll.u32 %v2610, 16
      %v3004 = vrot.slane %v3002, 5
      %v3005 = vsel %vm779, %v3000, %v3004
      %v3007 = vshrl.u32 %v2611, 16
      %v3009 = vrot.slane %v3007, 4
      %v3010 = vshll.u32 %v2611, 16
      %v3012 = vrot.slane %v3010, 5
      %v3013 = vor.u32 %v3009, %v3012
      %v3014 = vrot.slane %v3013, 4
      %v3016 = vshll.u32 %v2612, 16
      %v3018 = vrot.slane %v3016, 5
      %v3019 = vsel %vm779, %v3014, %v3018
      %v3020 = vshrl.u32 %v2612, 16
      %v3022 = vrot.slane %v3020, 4
      %v3023 = vor.u32 %v3022, %v3018
      %v3024 = vrot.slane %v3023, 4
      %v3026 = vshll.u32 %v2613, 16
      %v3028 = vrot.slane %v3026, 5
      %v3029 = vsel %vm779, %v3024, %v3028
      %s3030 = scalar_lea.vmem %s1, 256
      %v3031 = vld [vmem:[%s3030] sm:$0xf]
      %v3032 = vld [vmem:[%s3030 + $0x4] sm:$0xf]
      %v3033 = vld [vmem:[%s3030 + $0x8] sm:$0xf]
      %v3034 = vld [vmem:[%s3030 + $0xc] sm:$0xf]
      %v3035 = vld [vmem:[%s3030 + $0x10] sm:$0xf]
      %v3036 = vld [vmem:[%s3030 + $0x14] sm:$0xf]
      %v3037 = vld [vmem:[%s3030 + $0x18] sm:$0xf]
      %v3038 = vld [vmem:[%s3030 + $0x1c] sm:$0xf]
      %v3039 = vld [vmem:[%s3030 + $0x20] sm:$0xf]
      %v3040 = vld [vmem:[%s3030 + $0x24] sm:$0xf]
      %v3041 = vld [vmem:[%s3030 + $0x28] sm:$0xf]
      %v3042 = vld [vmem:[%s3030 + $0x2c] sm:$0xf]
      %v3043 = vld [vmem:[%s3030 + $0x30] sm:$0xf]
      %v3044 = vld [vmem:[%s3030 + $0x34] sm:$0xf]
      %v3045 = vld [vmem:[%s3030 + $0x38] sm:$0xf]
      %v3046 = vld [vmem:[%s3030 + $0x3c] sm:$0xf]
      %v3047 = vunpack.c.l.b16 %v2659
      %v3048 = vunpack.c.l.b16 %v2669
      %v3049 = vunpack.c.l.b16 %v2683
      %v3050 = vunpack.c.l.b16 %v2693
      %v3051 = vunpack.c.l.b16 %v2707
      %v3052 = vunpack.c.l.b16 %v2717
      %v3053 = vunpack.c.l.b16 %v2731
      %v3054 = vunpack.c.l.b16 %v2741
      %v3055 = vunpack.c.l.b16 %v2755
      %v3056 = vunpack.c.l.b16 %v2765
      %v3057 = vunpack.c.l.b16 %v2779
      %v3058 = vunpack.c.l.b16 %v2789
      %v3059 = vunpack.c.l.b16 %v2803
      %v3060 = vunpack.c.l.b16 %v2813
      %v3061 = vunpack.c.l.b16 %v2827
      %v3062 = vunpack.c.l.b16 %v2837
      %v3063 = vunpack.c.l.b16 %v2851
      %v3064 = vunpack.c.l.b16 %v2861
      %v3065 = vunpack.c.l.b16 %v2875
      %v3066 = vunpack.c.l.b16 %v2885
      %v3067 = vunpack.c.l.b16 %v2899
      %v3068 = vunpack.c.l.b16 %v2909
      %v3069 = vunpack.c.l.b16 %v2923
      %v3070 = vunpack.c.l.b16 %v2933
      %v3071 = vunpack.c.l.b16 %v2947
      %v3072 = vunpack.c.l.b16 %v2957
      %v3073 = vunpack.c.l.b16 %v2971
      %v3074 = vunpack.c.l.b16 %v2981
      %v3075 = vunpack.c.l.b16 %v2995
      %v3076 = vunpack.c.l.b16 %v3005
      %v3077 = vunpack.c.l.b16 %v3019
      %v3078 = vunpack.c.l.b16 %v3029
      %v3079 = vpack.c.b16 %v3048, %v3047
      %v3080 = vpack.c.b16 %v3050, %v3049
      %v3081 = vpack.c.b16 %v3052, %v3051
      %v3082 = vpack.c.b16 %v3054, %v3053
      %v3083 = vpack.c.b16 %v3056, %v3055
      %v3084 = vpack.c.b16 %v3058, %v3057
      %v3085 = vpack.c.b16 %v3060, %v3059
      %v3086 = vpack.c.b16 %v3062, %v3061
      %v3087 = vpack.c.b16 %v3064, %v3063
      %v3088 = vpack.c.b16 %v3066, %v3065
      %v3089 = vpack.c.b16 %v3068, %v3067
      %v3090 = vpack.c.b16 %v3070, %v3069
      %v3091 = vpack.c.b16 %v3072, %v3071
      %v3092 = vpack.c.b16 %v3074, %v3073
      %v3093 = vpack.c.b16 %v3076, %v3075
      %v3094 = vpack.c.b16 %v3078, %v3077
      %v3127 = vunpack.c.l.b16 %v3031
      %v3128 = vunpack.c.l.b16 %v3032
      %v3129 = vunpack.c.l.b16 %v3033
      %v3130 = vunpack.c.l.b16 %v3034
      %v3131 = vunpack.c.l.b16 %v3035
      %v3132 = vunpack.c.l.b16 %v3036
      %v3133 = vunpack.c.l.b16 %v3037
      %v3134 = vunpack.c.l.b16 %v3038
      %v3135 = vunpack.c.l.b16 %v3039
      %v3136 = vunpack.c.l.b16 %v3040
      %v3137 = vunpack.c.l.b16 %v3041
      %v3138 = vunpack.c.l.b16 %v3042
      %v3139 = vunpack.c.l.b16 %v3043
      %v3140 = vunpack.c.l.b16 %v3044
      %v3141 = vunpack.c.l.b16 %v3045
      %v3142 = vunpack.c.l.b16 %v3046
      %v3143 = vpack.c.b16 %v3128, %v3127
      %v3144 = vpack.c.b16 %v3130, %v3129
      %v3145 = vpack.c.b16 %v3132, %v3131
      %v3146 = vpack.c.b16 %v3134, %v3133
      %v3147 = vpack.c.b16 %v3136, %v3135
      %v3148 = vpack.c.b16 %v3138, %v3137
      %v3149 = vpack.c.b16 %v3140, %v3139
      %v3150 = vpack.c.b16 %v3142, %v3141
      %3159 = vmatprep.subr.bf16.mxu0 0
      %3160 = vmatpush1.bf16.msra.mxu0 %v3143
      %3161 = vmatprep.subr.bf16.mxu0 0
      %3162 = vmatpush1.bf16.msra.mxu0 %v3144
      %3163 = vmatprep.subr.bf16.mxu0 0
      %3164 = vmatpush1.bf16.msra.mxu0 %v3145
      %3165 = vmatprep.subr.bf16.mxu0 0
      %3166 = vmatpush1.bf16.msra.mxu0 %v3146
      %3167 = vmatprep.subr.bf16.mxu0 0
      %3168 = vmatpush1.bf16.msra.mxu0 %v3147
      %3169 = vmatprep.subr.bf16.mxu0 0
      %3170 = vmatpush1.bf16.msra.mxu0 %v3148
      %3171 = vmatprep.subr.bf16.mxu0 0
      %3172 = vmatpush1.bf16.msra.mxu0 %v3149
      %3173 = vmatprep.subr.bf16.mxu0 0
      %3174 = vmatpush1.bf16.msra.mxu0 %v3150
      %3175 = vmatprep.subr.bf16.mxu0 0
      %3176 = vmatpush1.bf16.msra.mxu0 0
      %3177 = vmatprep.subr.bf16.mxu0 0
      %3178 = vmatpush1.bf16.msra.mxu0 0
      %3179 = vmatprep.subr.bf16.mxu0 0
      %3180 = vmatpush1.bf16.msra.mxu0 0
      %3181 = vmatprep.subr.bf16.mxu0 0
      %3182 = vmatpush1.bf16.msra.mxu0 0
      %3183 = vmatprep.subr.bf16.mxu0 0
      %3184 = vmatpush1.bf16.msra.mxu0 0
      %3185 = vmatprep.subr.bf16.mxu0 0
      %3186 = vmatpush1.bf16.msra.mxu0 0
      %3187 = vmatprep.subr.bf16.mxu0 0
      %3188 = vmatpush1.bf16.msra.mxu0 0
      %3189 = vmatprep.subr.bf16.mxu0 0
      %3190 = vmatpush1.bf16.msra.mxu0 0
      %3191 = vmatprep.mubr.bf16.mxu0 0
      %3192 = vmatmul.mubr.bf16.gmra.mrb[0].mxu0 %v3079
      %v3193 = vpop.f32.mrb[0].mxu0
      %v3194 = vadd.f32 0.0, %v3193
      %v3195 = vpop.f32.mrb[0].mxu0
      %v3196 = vpop.f32.mrb[0].mxu0
      %v3197 = vadd.f32 0.0, %v3196
      %v3198 = vpop.f32.mrb[0].mxu0
      %3199 = vmatprep.mubr.bf16.mxu0 0
      %3200 = vmatmul.mubr.bf16.gmra.mrb[0].mxu0 %v3080
      %v3201 = vpop.f32.mrb[0].mxu0
      %v3202 = vadd.f32 0.0, %v3201
      %v3203 = vpop.f32.mrb[0].mxu0
      %v3204 = vpop.f32.mrb[0].mxu0
      %v3205 = vadd.f32 0.0, %v3204
      %v3206 = vpop.f32.mrb[0].mxu0
      %3207 = vmatprep.mubr.bf16.mxu0 0
      %3208 = vmatmul.mubr.bf16.gmra.mrb[0].mxu0 %v3081
      %v3209 = vpop.f32.mrb[0].mxu0
      %v3210 = vadd.f32 0.0, %v3209
      %v3211 = vpop.f32.mrb[0].mxu0
      %v3212 = vpop.f32.mrb[0].mxu0
      %v3213 = vadd.f32 0.0, %v3212
      %v3214 = vpop.f32.mrb[0].mxu0
      %3215 = vmatprep.mubr.bf16.mxu0 0
      %3216 = vmatmul.mubr.bf16.gmra.mrb[0].mxu0 %v3082
      %v3217 = vpop.f32.mrb[0].mxu0
      %v3218 = vadd.f32 0.0, %v3217
      %v3219 = vpop.f32.mrb[0].mxu0
      %v3220 = vpop.f32.mrb[0].mxu0
      %v3221 = vadd.f32 0.0, %v3220
      %v3222 = vpop.f32.mrb[0].mxu0
      %3223 = vmatprep.mubr.bf16.mxu0 0
      %3224 = vmatmul.mubr.bf16.gmra.mrb[0].mxu0 %v3083
      %v3225 = vpop.f32.mrb[0].mxu0
      %v3226 = vadd.f32 0.0, %v3225
      %v3227 = vpop.f32.mrb[0].mxu0
      %v3228 = vpop.f32.mrb[0].mxu0
      %v3229 = vadd.f32 0.0, %v3228
      %v3230 = vpop.f32.mrb[0].mxu0
      %3231 = vmatprep.mubr.bf16.mxu0 0
      %3232 = vmatmul.mubr.bf16.gmra.mrb[0].mxu0 %v3084
      %v3233 = vpop.f32.mrb[0].mxu0
      %v3234 = vadd.f32 0.0, %v3233
      %v3235 = vpop.f32.mrb[0].mxu0
      %v3236 = vpop.f32.mrb[0].mxu0
      %v3237 = vadd.f32 0.0, %v3236
      %v3238 = vpop.f32.mrb[0].mxu0
      %3239 = vmatprep.mubr.bf16.mxu0 0
      %3240 = vmatmul.mubr.bf16.gmra.mrb[0].mxu0 %v3085
      %v3241 = vpop.f32.mrb[0].mxu0
      %v3242 = vadd.f32 0.0, %v3241
      %v3243 = vpop.f32.mrb[0].mxu0
      %v3244 = vpop.f32.mrb[0].mxu0
      %v3245 = vadd.f32 0.0, %v3244
      %v3246 = vpop.f32.mrb[0].mxu0
      %3247 = vmatprep.mubr.bf16.mxu0 0
      %3248 = vmatmul.mubr.bf16.gmra.mrb[0].mxu0 %v3086
      %v3249 = vpop.f32.mrb[0].mxu0
      %v3250 = vadd.f32 0.0, %v3249
      %v3251 = vpop.f32.mrb[0].mxu0
      %v3252 = vpop.f32.mrb[0].mxu0
      %v3253 = vadd.f32 0.0, %v3252
      %v3254 = vpop.f32.mrb[0].mxu0
      %3255 = vmatprep.mubr.bf16.mxu0 0
      %3256 = vmatmul.mubr.bf16.gmra.mrb[0].mxu0 %v3087
      %v3257 = vpop.f32.mrb[0].mxu0
      %v3258 = vadd.f32 0.0, %v3257
      %v3259 = vpop.f32.mrb[0].mxu0
      %v3260 = vpop.f32.mrb[0].mxu0
      %v3261 = vadd.f32 0.0, %v3260
      %v3262 = vpop.f32.mrb[0].mxu0
      %3263 = vmatprep.mubr.bf16.mxu0 0
      %3264 = vmatmul.mubr.bf16.gmra.mrb[0].mxu0 %v3088
      %v3265 = vpop.f32.mrb[0].mxu0
      %v3266 = vadd.f32 0.0, %v3265
      %v3267 = vpop.f32.mrb[0].mxu0
      %v3268 = vpop.f32.mrb[0].mxu0
      %v3269 = vadd.f32 0.0, %v3268
      %v3270 = vpop.f32.mrb[0].mxu0
      %3271 = vmatprep.mubr.bf16.mxu0 0
      %3272 = vmatmul.mubr.bf16.gmra.mrb[0].mxu0 %v3089
      %v3273 = vpop.f32.mrb[0].mxu0
      %v3274 = vadd.f32 0.0, %v3273
      %v3275 = vpop.f32.mrb[0].mxu0
      %v3276 = vpop.f32.mrb[0].mxu0
      %v3277 = vadd.f32 0.0, %v3276
      %v3278 = vpop.f32.mrb[0].mxu0
      %3279 = vmatprep.mubr.bf16.mxu0 0
      %3280 = vmatmul.mubr.bf16.gmra.mrb[0].mxu0 %v3090
      %v3281 = vpop.f32.mrb[0].mxu0
      %v3282 = vadd.f32 0.0, %v3281
      %v3283 = vpop.f32.mrb[0].mxu0
      %v3284 = vpop.f32.mrb[0].mxu0
      %v3285 = vadd.f32 0.0, %v3284
      %v3286 = vpop.f32.mrb[0].mxu0
      %3287 = vmatprep.mubr.bf16.mxu0 0
      %3288 = vmatmul.mubr.bf16.gmra.mrb[0].mxu0 %v3091
      %v3289 = vpop.f32.mrb[0].mxu0
      %v3290 = vadd.f32 0.0, %v3289
      %v3291 = vpop.f32.mrb[0].mxu0
      %v3292 = vpop.f32.mrb[0].mxu0
      %v3293 = vadd.f32 0.0, %v3292
      %v3294 = vpop.f32.mrb[0].mxu0
      %3295 = vmatprep.mubr.bf16.mxu0 0
      %3296 = vmatmul.mubr.bf16.gmra.mrb[0].mxu0 %v3092
      %v3297 = vpop.f32.mrb[0].mxu0
      %v3298 = vadd.f32 0.0, %v3297
      %v3299 = vpop.f32.mrb[0].mxu0
      %v3300 = vpop.f32.mrb[0].mxu0
      %v3301 = vadd.f32 0.0, %v3300
      %v3302 = vpop.f32.mrb[0].mxu0
      %3303 = vmatprep.mubr.bf16.mxu0 0
      %3304 = vmatmul.mubr.bf16.gmra.mrb[0].mxu0 %v3093
      %v3305 = vpop.f32.mrb[0].mxu0
      %v3306 = vadd.f32 0.0, %v3305
      %v3307 = vpop.f32.mrb[0].mxu0
      %v3308 = vpop.f32.mrb[0].mxu0
      %v3309 = vadd.f32 0.0, %v3308
      %v3310 = vpop.f32.mrb[0].mxu0
      %3311 = vmatprep.mubr.bf16.mxu0 0
      %3312 = vmatmul.mubr.bf16.gmra.mrb[0].mxu0 %v3094
      %v3313 = vpop.f32.mrb[0].mxu0
      %v3314 = vadd.f32 0.0, %v3313
      %v3315 = vpop.f32.mrb[0].mxu0
      %v3316 = vpop.f32.mrb[0].mxu0
      %v3317 = vadd.f32 0.0, %v3316
      %v3318 = vpop.f32.mrb[0].mxu0
      %3319 = vdwg.mxu0
      %v3320 = vadd.f32 %v2614, %v3194
      %v3321 = vadd.f32 %v2615, %v3197
      %v3322 = vadd.f32 %v2616, %v3202
      %v3323 = vadd.f32 %v2617, %v3205
      %v3324 = vadd.f32 %v2618, %v3210
      %v3325 = vadd.f32 %v2619, %v3213
      %v3326 = vadd.f32 %v2620, %v3218
      %v3327 = vadd.f32 %v2621, %v3221
      %v3328 = vadd.f32 %v2622, %v3226
      %v3329 = vadd.f32 %v2623, %v3229
      %v3330 = vadd.f32 %v2624, %v3234
      %v3331 = vadd.f32 %v2625, %v3237
      %v3332 = vadd.f32 %v2626, %v3242
      %v3333 = vadd.f32 %v2627, %v3245
      %v3334 = vadd.f32 %v2628, %v3250
      %v3335 = vadd.f32 %v2629, %v3253
      %v3336 = vadd.f32 %v2630, %v3258
      %v3337 = vadd.f32 %v2631, %v3261
      %v3338 = vadd.f32 %v2632, %v3266
      %v3339 = vadd.f32 %v2633, %v3269
      %v3340 = vadd.f32 %v2634, %v3274
      %v3341 = vadd.f32 %v2635, %v3277
      %v3342 = vadd.f32 %v2636, %v3282
      %v3343 = vadd.f32 %v2637, %v3285
      %v3344 = vadd.f32 %v2638, %v3290
      %v3345 = vadd.f32 %v2639, %v3293
      %v3346 = vadd.f32 %v2640, %v3298
      %v3347 = vadd.f32 %v2641, %v3301
      %v3348 = vadd.f32 %v2642, %v3306
      %v3349 = vadd.f32 %v2643, %v3309
      %v3350 = vadd.f32 %v2644, %v3314
      %v3351 = vadd.f32 %v2645, %v3317
      %3352 = vst [vmem:[#allocation2] sm:$0xff] %v3320
      %3353 = vst [vmem:[#allocation2 + $0x8] sm:$0xff] %v3321
      %3354 = vst [vmem:[#allocation2 + $0x10] sm:$0xff] %v3322
      %3355 = vst [vmem:[#allocation2 + $0x18] sm:$0xff] %v3323
      %3356 = vst [vmem:[#allocation2 + $0x20] sm:$0xff] %v3324
      %3357 = vst [vmem:[#allocation2 + $0x28] sm:$0xff] %v3325
      %3358 = vst [vmem:[#allocation2 + $0x30] sm:$0xff] %v3326
      %3359 = vst [vmem:[#allocation2 + $0x38] sm:$0xff] %v3327
      %3360 = vst [vmem:[#allocation2 + $0x40] sm:$0xff] %v3328
      %3361 = vst [vmem:[#allocation2 + $0x48] sm:$0xff] %v3329
      %3362 = vst [vmem:[#allocation2 + $0x50] sm:$0xff] %v3330
      %3363 = vst [vmem:[#allocation2 + $0x58] sm:$0xff] %v3331
      %3364 = vst [vmem:[#allocation2 + $0x60] sm:$0xff] %v3332
      %3365 = vst [vmem:[#allocation2 + $0x68] sm:$0xff] %v3333
      %3366 = vst [vmem:[#allocation2 + $0x70] sm:$0xff] %v3334
      %3367 = vst [vmem:[#allocation2 + $0x78] sm:$0xff] %v3335
      %3368 = vst [vmem:[#allocation2 + $0x80] sm:$0xff] %v3336
      %3369 = vst [vmem:[#allocation2 + $0x88] sm:$0xff] %v3337
      %3370 = vst [vmem:[#allocation2 + $0x90] sm:$0xff] %v3338
      %3371 = vst [vmem:[#allocation2 + $0x98] sm:$0xff] %v3339
      %3372 = vst [vmem:[#allocation2 + $0xa0] sm:$0xff] %v3340
      %3373 = vst [vmem:[#allocation2 + $0xa8] sm:$0xff] %v3341
      %3374 = vst [vmem:[#allocation2 + $0xb0] sm:$0xff] %v3342
      %3375 = vst [vmem:[#allocation2 + $0xb8] sm:$0xff] %v3343
      %3376 = vst [vmem:[#allocation2 + $0xc0] sm:$0xff] %v3344
      %3377 = vst [vmem:[#allocation2 + $0xc8] sm:$0xff] %v3345
      %3378 = vst [vmem:[#allocation2 + $0xd0] sm:$0xff] %v3346
      %3379 = vst [vmem:[#allocation2 + $0xd8] sm:$0xff] %v3347
      %3380 = vst [vmem:[#allocation2 + $0xe0] sm:$0xff] %v3348
      %3381 = vst [vmem:[#allocation2 + $0xe8] sm:$0xff] %v3349
      %3382 = vst [vmem:[#allocation2 + $0xf0] sm:$0xff] %v3350
      %3383 = vst [vmem:[#allocation2 + $0xf8] sm:$0xff] %v3351
      %v3384 = vld [vmem:[%s2115] sm:$0xe]
      %v3385 = vld [vmem:[%s2115 + $0x4] sm:$0xf]
      %v3386 = vld [vmem:[%s2115 + $0x8] sm:$0x1]
      %v3387 = vld [vmem:[%s2115 + $0xc] sm:$0xe]
      %v3388 = vld [vmem:[%s2115 + $0x10] sm:$0xf]
      %v3389 = vld [vmem:[%s2115 + $0x14] sm:$0x1]
      %v3390 = vld [vmem:[%s2115 + $0x18] sm:$0xe]
      %v3391 = vld [vmem:[%s2115 + $0x1c] sm:$0xf]
      %v3392 = vld [vmem:[%s2115 + $0x20] sm:$0x1]
      %v3393 = vld [vmem:[%s2115 + $0x24] sm:$0xe]
      %v3394 = vld [vmem:[%s2115 + $0x28] sm:$0xf]
      %v3395 = vld [vmem:[%s2115 + $0x2c] sm:$0x1]
      %v3396 = vld [vmem:[%s2115 + $0x30] sm:$0xe]
      %v3397 = vld [vmem:[%s2115 + $0x34] sm:$0xf]
      %v3398 = vld [vmem:[%s2115 + $0x38] sm:$0x1]
      %v3399 = vld [vmem:[%s2115 + $0x3c] sm:$0xe]
      %v3400 = vld [vmem:[%s2115 + $0x40] sm:$0xf]
      %v3401 = vld [vmem:[%s2115 + $0x44] sm:$0x1]
      %v3402 = vld [vmem:[%s2115 + $0x48] sm:$0xe]
      %v3403 = vld [vmem:[%s2115 + $0x4c] sm:$0xf]
      %v3404 = vld [vmem:[%s2115 + $0x50] sm:$0x1]
      %v3405 = vld [vmem:[%s2115 + $0x54] sm:$0xe]
      %v3406 = vld [vmem:[%s2115 + $0x58] sm:$0xf]
      %v3407 = vld [vmem:[%s2115 + $0x5c] sm:$0x1]
      %v3408 = vld [vmem:[%s2115 + $0x60] sm:$0xe]
      %v3409 = vld [vmem:[%s2115 + $0x64] sm:$0xf]
      %v3410 = vld [vmem:[%s2115 + $0x68] sm:$0x1]
      %v3411 = vld [vmem:[%s2115 + $0x6c] sm:$0xe]
      %v3412 = vld [vmem:[%s2115 + $0x70] sm:$0xf]
      %v3413 = vld [vmem:[%s2115 + $0x74] sm:$0x1]
      %v3414 = vld [vmem:[%s2115 + $0x78] sm:$0xe]
      %v3415 = vld [vmem:[%s2115 + $0x7c] sm:$0xf]
      %v3416 = vld [vmem:[%s2115 + $0x80] sm:$0x1]
      %v3417 = vld [vmem:[%s2115 + $0x84] sm:$0xe]
      %v3418 = vld [vmem:[%s2115 + $0x88] sm:$0xf]
      %v3419 = vld [vmem:[%s2115 + $0x8c] sm:$0x1]
      %v3420 = vld [vmem:[%s2115 + $0x90] sm:$0xe]
      %v3421 = vld [vmem:[%s2115 + $0x94] sm:$0xf]
      %v3422 = vld [vmem:[%s2115 + $0x98] sm:$0x1]
      %v3423 = vld [vmem:[%s2115 + $0x9c] sm:$0xe]
      %v3424 = vld [vmem:[%s2115 + $0xa0] sm:$0xf]
      %v3425 = vld [vmem:[%s2115 + $0xa4] sm:$0x1]
      %v3426 = vld [vmem:[%s2115 + $0xa8] sm:$0xe]
      %v3427 = vld [vmem:[%s2115 + $0xac] sm:$0xf]
      %v3428 = vld [vmem:[%s2115 + $0xb0] sm:$0x1]
      %v3429 = vld [vmem:[%s2115 + $0xb4] sm:$0xe]
      %v3430 = vld [vmem:[%s2115 + $0xb8] sm:$0xf]
      %v3431 = vld [vmem:[%s2115 + $0xbc] sm:$0x1]
      %v3432 = vld [vmem:[#allocation2] sm:$0xff]
      %v3433 = vld [vmem:[#allocation2 + $0x8] sm:$0xff]
      %v3434 = vld [vmem:[#allocation2 + $0x10] sm:$0xff]
      %v3435 = vld [vmem:[#allocation2 + $0x18] sm:$0xff]
      %v3436 = vld [vmem:[#allocation2 + $0x20] sm:$0xff]
      %v3437 = vld [vmem:[#allocation2 + $0x28] sm:$0xff]
      %v3438 = vld [vmem:[#allocation2 + $0x30] sm:$0xff]
      %v3439 = vld [vmem:[#allocation2 + $0x38] sm:$0xff]
      %v3440 = vld [vmem:[#allocation2 + $0x40] sm:$0xff]
      %v3441 = vld [vmem:[#allocation2 + $0x48] sm:$0xff]
      %v3442 = vld [vmem:[#allocation2 + $0x50] sm:$0xff]
      %v3443 = vld [vmem:[#allocation2 + $0x58] sm:$0xff]
      %v3444 = vld [vmem:[#allocation2 + $0x60] sm:$0xff]
      %v3445 = vld [vmem:[#allocation2 + $0x68] sm:$0xff]
      %v3446 = vld [vmem:[#allocation2 + $0x70] sm:$0xff]
      %v3447 = vld [vmem:[#allocation2 + $0x78] sm:$0xff]
      %v3448 = vld [vmem:[#allocation2 + $0x80] sm:$0xff]
      %v3449 = vld [vmem:[#allocation2 + $0x88] sm:$0xff]
      %v3450 = vld [vmem:[#allocation2 + $0x90] sm:$0xff]
      %v3451 = vld [vmem:[#allocation2 + $0x98] sm:$0xff]
      %v3452 = vld [vmem:[#allocation2 + $0xa0] sm:$0xff]
      %v3453 = vld [vmem:[#allocation2 + $0xa8] sm:$0xff]
      %v3454 = vld [vmem:[#allocation2 + $0xb0] sm:$0xff]
      %v3455 = vld [vmem:[#allocation2 + $0xb8] sm:$0xff]
      %v3456 = vld [vmem:[#allocation2 + $0xc0] sm:$0xff]
      %v3457 = vld [vmem:[#allocation2 + $0xc8] sm:$0xff]
      %v3458 = vld [vmem:[#allocation2 + $0xd0] sm:$0xff]
      %v3459 = vld [vmem:[#allocation2 + $0xd8] sm:$0xff]
      %v3460 = vld [vmem:[#allocation2 + $0xe0] sm:$0xff]
      %v3461 = vld [vmem:[#allocation2 + $0xe8] sm:$0xff]
      %v3462 = vld [vmem:[#allocation2 + $0xf0] sm:$0xff]
      %v3463 = vld [vmem:[#allocation2 + $0xf8] sm:$0xff]
      %v3512 = vrot.slane %v3384, 5
      %v3513 = vrot.slane %v3512, 4
      %v3514 = vrot.slane %v3385, 5
      %v3515 = vsel %vm1648, %v3513, %v3514
      %v3516 = vrot.slane %v3514, 4
      %v3517 = vrot.slane %v3386, 5
      %v3518 = vsel %vm1648, %v3516, %v3517
      %v3519 = vrot.slane %v3387, 5
      %v3520 = vrot.slane %v3519, 4
      %v3521 = vrot.slane %v3388, 5
      %v3522 = vsel %vm1648, %v3520, %v3521
      %v3523 = vrot.slane %v3521, 4
      %v3524 = vrot.slane %v3389, 5
      %v3525 = vsel %vm1648, %v3523, %v3524
      %v3526 = vrot.slane %v3390, 5
      %v3527 = vrot.slane %v3526, 4
      %v3528 = vrot.slane %v3391, 5
      %v3529 = vsel %vm1648, %v3527, %v3528
      %v3530 = vrot.slane %v3528, 4
      %v3531 = vrot.slane %v3392, 5
      %v3532 = vsel %vm1648, %v3530, %v3531
      %v3533 = vrot.slane %v3393, 5
      %v3534 = vrot.slane %v3533, 4
      %v3535 = vrot.slane %v3394, 5
      %v3536 = vsel %vm1648, %v3534, %v3535
      %v3537 = vrot.slane %v3535, 4
      %v3538 = vrot.slane %v3395, 5
      %v3539 = vsel %vm1648, %v3537, %v3538
      %v3540 = vrot.slane %v3396, 5
      %v3541 = vrot.slane %v3540, 4
      %v3542 = vrot.slane %v3397, 5
      %v3543 = vsel %vm1648, %v3541, %v3542
      %v3544 = vrot.slane %v3542, 4
      %v3545 = vrot.slane %v3398, 5
      %v3546 = vsel %vm1648, %v3544, %v3545
      %v3547 = vrot.slane %v3399, 5
      %v3548 = vrot.slane %v3547, 4
      %v3549 = vrot.slane %v3400, 5
      %v3550 = vsel %vm1648, %v3548, %v3549
      %v3551 = vrot.slane %v3549, 4
      %v3552 = vrot.slane %v3401, 5
      %v3553 = vsel %vm1648, %v3551, %v3552
      %v3554 = vrot.slane %v3402, 5
      %v3555 = vrot.slane %v3554, 4
      %v3556 = vrot.slane %v3403, 5
      %v3557 = vsel %vm1648, %v3555, %v3556
      %v3558 = vrot.slane %v3556, 4
      %v3559 = vrot.slane %v3404, 5
      %v3560 = vsel %vm1648, %v3558, %v3559
      %v3561 = vrot.slane %v3405, 5
      %v3562 = vrot.slane %v3561, 4
      %v3563 = vrot.slane %v3406, 5
      %v3564 = vsel %vm1648, %v3562, %v3563
      %v3565 = vrot.slane %v3563, 4
      %v3566 = vrot.slane %v3407, 5
      %v3567 = vsel %vm1648, %v3565, %v3566
      %v3568 = vrot.slane %v3408, 5
      %v3569 = vrot.slane %v3568, 4
      %v3570 = vrot.slane %v3409, 5
      %v3571 = vsel %vm1648, %v3569, %v3570
      %v3572 = vrot.slane %v3570, 4
      %v3573 = vrot.slane %v3410, 5
      %v3574 = vsel %vm1648, %v3572, %v3573
      %v3575 = vrot.slane %v3411, 5
      %v3576 = vrot.slane %v3575, 4
      %v3577 = vrot.slane %v3412, 5
      %v3578 = vsel %vm1648, %v3576, %v3577
      %v3579 = vrot.slane %v3577, 4
      %v3580 = vrot.slane %v3413, 5
      %v3581 = vsel %vm1648, %v3579, %v3580
      %v3582 = vrot.slane %v3414, 5
      %v3583 = vrot.slane %v3582, 4
      %v3584 = vrot.slane %v3415, 5
      %v3585 = vsel %vm1648, %v3583, %v3584
      %v3586 = vrot.slane %v3584, 4
      %v3587 = vrot.slane %v3416, 5
      %v3588 = vsel %vm1648, %v3586, %v3587
      %v3589 = vrot.slane %v3417, 5
      %v3590 = vrot.slane %v3589, 4
      %v3591 = vrot.slane %v3418, 5
      %v3592 = vsel %vm1648, %v3590, %v3591
      %v3593 = vrot.slane %v3591, 4
      %v3594 = vrot.slane %v3419, 5
      %v3595 = vsel %vm1648, %v3593, %v3594
      %v3596 = vrot.slane %v3420, 5
      %v3597 = vrot.slane %v3596, 4
      %v3598 = vrot.slane %v3421, 5
      %v3599 = vsel %vm1648, %v3597, %v3598
      %v3600 = vrot.slane %v3598, 4
      %v3601 = vrot.slane %v3422, 5
      %v3602 = vsel %vm1648, %v3600, %v3601
      %v3603 = vrot.slane %v3423, 5
      %v3604 = vrot.slane %v3603, 4
      %v3605 = vrot.slane %v3424, 5
      %v3606 = vsel %vm1648, %v3604, %v3605
      %v3607 = vrot.slane %v3605, 4
      %v3608 = vrot.slane %v3425, 5
      %v3609 = vsel %vm1648, %v3607, %v3608
      %v3610 = vrot.slane %v3426, 5
      %v3611 = vrot.slane %v3610, 4
      %v3612 = vrot.slane %v3427, 5
      %v3613 = vsel %vm1648, %v3611, %v3612
      %v3614 = vrot.slane %v3612, 4
      %v3615 = vrot.slane %v3428, 5
      %v3616 = vsel %vm1648, %v3614, %v3615
      %v3617 = vrot.slane %v3429, 5
      %v3618 = vrot.slane %v3617, 4
      %v3619 = vrot.slane %v3430, 5
      %v3620 = vsel %vm1648, %v3618, %v3619
      %v3621 = vrot.slane %v3619, 4
      %v3622 = vrot.slane %v3431, 5
      %v3623 = vsel %vm1648, %v3621, %v3622
      %s3624 = scalar_lea.vmem %s1, 320
      %v3625 = vld [vmem:[%s3624] sm:$0xf]
      %v3626 = vld [vmem:[%s3624 + $0x4] sm:$0xf]
      %v3627 = vld [vmem:[%s3624 + $0x8] sm:$0xf]
      %v3628 = vld [vmem:[%s3624 + $0xc] sm:$0xf]
      %v3629 = vld [vmem:[%s3624 + $0x10] sm:$0xf]
      %v3630 = vld [vmem:[%s3624 + $0x14] sm:$0xf]
      %v3631 = vld [vmem:[%s3624 + $0x18] sm:$0xf]
      %v3632 = vld [vmem:[%s3624 + $0x1c] sm:$0xf]
      %v3633 = vld [vmem:[%s3624 + $0x20] sm:$0xf]
      %v3634 = vld [vmem:[%s3624 + $0x24] sm:$0xf]
      %v3635 = vld [vmem:[%s3624 + $0x28] sm:$0xf]
      %v3636 = vld [vmem:[%s3624 + $0x2c] sm:$0xf]
      %v3637 = vld [vmem:[%s3624 + $0x30] sm:$0xf]
      %v3638 = vld [vmem:[%s3624 + $0x34] sm:$0xf]
      %v3639 = vld [vmem:[%s3624 + $0x38] sm:$0xf]
      %v3640 = vld [vmem:[%s3624 + $0x3c] sm:$0xf]
      %v3641 = vunpack.c.l.b16 %v3515
      %v3642 = vunpack.c.l.b16 %v3518
      %v3643 = vunpack.c.l.b16 %v3522
      %v3644 = vunpack.c.l.b16 %v3525
      %v3645 = vunpack.c.l.b16 %v3529
      %v3646 = vunpack.c.l.b16 %v3532
      %v3647 = vunpack.c.l.b16 %v3536
      %v3648 = vunpack.c.l.b16 %v3539
      %v3649 = vunpack.c.l.b16 %v3543
      %v3650 = vunpack.c.l.b16 %v3546
      %v3651 = vunpack.c.l.b16 %v3550
      %v3652 = vunpack.c.l.b16 %v3553
      %v3653 = vunpack.c.l.b16 %v3557
      %v3654 = vunpack.c.l.b16 %v3560
      %v3655 = vunpack.c.l.b16 %v3564
      %v3656 = vunpack.c.l.b16 %v3567
      %v3657 = vunpack.c.l.b16 %v3571
      %v3658 = vunpack.c.l.b16 %v3574
      %v3659 = vunpack.c.l.b16 %v3578
      %v3660 = vunpack.c.l.b16 %v3581
      %v3661 = vunpack.c.l.b16 %v3585
      %v3662 = vunpack.c.l.b16 %v3588
      %v3663 = vunpack.c.l.b16 %v3592
      %v3664 = vunpack.c.l.b16 %v3595
      %v3665 = vunpack.c.l.b16 %v3599
      %v3666 = vunpack.c.l.b16 %v3602
      %v3667 = vunpack.c.l.b16 %v3606
      %v3668 = vunpack.c.l.b16 %v3609
      %v3669 = vunpack.c.l.b16 %v3613
      %v3670 = vunpack.c.l.b16 %v3616
      %v3671 = vunpack.c.l.b16 %v3620
      %v3672 = vunpack.c.l.b16 %v3623
      %v3673 = vpack.c.b16 %v3642, %v3641
      %v3674 = vpack.c.b16 %v3644, %v3643
      %v3675 = vpack.c.b16 %v3646, %v3645
      %v3676 = vpack.c.b16 %v3648, %v3647
      %v3677 = vpack.c.b16 %v3650, %v3649
      %v3678 = vpack.c.b16 %v3652, %v3651
      %v3679 = vpack.c.b16 %v3654, %v3653
      %v3680 = vpack.c.b16 %v3656, %v3655
      %v3681 = vpack.c.b16 %v3658, %v3657
      %v3682 = vpack.c.b16 %v3660, %v3659
      %v3683 = vpack.c.b16 %v3662, %v3661
      %v3684 = vpack.c.b16 %v3664, %v3663
      %v3685 = vpack.c.b16 %v3666, %v3665
      %v3686 = vpack.c.b16 %v3668, %v3667
      %v3687 = vpack.c.b16 %v3670, %v3669
      %v3688 = vpack.c.b16 %v3672, %v3671
      %v3721 = vunpack.c.l.b16 %v3625
      %v3722 = vunpack.c.l.b16 %v3626
      %v3723 = vunpack.c.l.b16 %v3627
      %v3724 = vunpack.c.l.b16 %v3628
      %v3725 = vunpack.c.l.b16 %v3629
      %v3726 = vunpack.c.l.b16 %v3630
      %v3727 = vunpack.c.l.b16 %v3631
      %v3728 = vunpack.c.l.b16 %v3632
      %v3729 = vunpack.c.l.b16 %v3633
      %v3730 = vunpack.c.l.b16 %v3634
      %v3731 = vunpack.c.l.b16 %v3635
      %v3732 = vunpack.c.l.b16 %v3636
      %v3733 = vunpack.c.l.b16 %v3637
      %v3734 = vunpack.c.l.b16 %v3638
      %v3735 = vunpack.c.l.b16 %v3639
      %v3736 = vunpack.c.l.b16 %v3640
      %v3737 = vpack.c.b16 %v3722, %v3721
      %v3738 = vpack.c.b16 %v3724, %v3723
      %v3739 = vpack.c.b16 %v3726, %v3725
      %v3740 = vpack.c.b16 %v3728, %v3727
      %v3741 = vpack.c.b16 %v3730, %v3729
      %v3742 = vpack.c.b16 %v3732, %v3731
      %v3743 = vpack.c.b16 %v3734, %v3733
      %v3744 = vpack.c.b16 %v3736, %v3735
      %3753 = vmatprep.subr.bf16.mxu0 0
      %3754 = vmatpush1.bf16.msra.mxu0 %v3737
      %3755 = vmatprep.subr.bf16.mxu0 0
      %3756 = vmatpush1.bf16.msra.mxu0 %v3738
      %3757 = vmatprep.subr.bf16.mxu0 0
      %3758 = vmatpush1.bf16.msra.mxu0 %v3739
      %3759 = vmatprep.subr.bf16.mxu0 0
      %3760 = vmatpush1.bf16.msra.mxu0 %v3740
      %3761 = vmatprep.subr.bf16.mxu0 0
      %3762 = vmatpush1.bf16.msra.mxu0 %v3741
      %3763 = vmatprep.subr.bf16.mxu0 0
      %3764 = vmatpush1.bf16.msra.mxu0 %v3742
      %3765 = vmatprep.subr.bf16.mxu0 0
      %3766 = vmatpush1.bf16.msra.mxu0 %v3743
      %3767 = vmatprep.subr.bf16.mxu0 0
      %3768 = vmatpush1.bf16.msra.mxu0 %v3744
      %3769 = vmatprep.subr.bf16.mxu0 0
      %3770 = vmatpush1.bf16.msra.mxu0 0
      %3771 = vmatprep.subr.bf16.mxu0 0
      %3772 = vmatpush1.bf16.msra.mxu0 0
      %3773 = vmatprep.subr.bf16.mxu0 0
      %3774 = vmatpush1.bf16.msra.mxu0 0
      %3775 = vmatprep.subr.bf16.mxu0 0
      %3776 = vmatpush1.bf16.msra.mxu0 0
      %3777 = vmatprep.subr.bf16.mxu0 0
      %3778 = vmatpush1.bf16.msra.mxu0 0
      %3779 = vmatprep.subr.bf16.mxu0 0
      %3780 = vmatpush1.bf16.msra.mxu0 0
      %3781 = vmatprep.subr.bf16.mxu0 0
      %3782 = vmatpush1.bf16.msra.mxu0 0
      %3783 = vmatprep.subr.bf16.mxu0 0
      %3784 = vmatpush1.bf16.msra.mxu0 0
      %3785 = vmatprep.mubr.bf16.mxu0 0
      %3786 = vmatmul.mubr.bf16.gmra.mrb[0].mxu0 %v3673
      %v3787 = vpop.f32.mrb[0].mxu0
      %v3788 = vadd.f32 0.0, %v3787
      %v3789 = vpop.f32.mrb[0].mxu0
      %v3790 = vpop.f32.mrb[0].mxu0
      %v3791 = vadd.f32 0.0, %v3790
      %v3792 = vpop.f32.mrb[0].mxu0
      %3793 = vmatprep.mubr.bf16.mxu0 0
      %3794 = vmatmul.mubr.bf16.gmra.mrb[0].mxu0 %v3674
      %v3795 = vpop.f32.mrb[0].mxu0
      %v3796 = vadd.f32 0.0, %v3795
      %v3797 = vpop.f32.mrb[0].mxu0
      %v3798 = vpop.f32.mrb[0].mxu0
      %v3799 = vadd.f32 0.0, %v3798
      %v3800 = vpop.f32.mrb[0].mxu0
      %3801 = vmatprep.mubr.bf16.mxu0 0
      %3802 = vmatmul.mubr.bf16.gmra.mrb[0].mxu0 %v3675
      %v3803 = vpop.f32.mrb[0].mxu0
      %v3804 = vadd.f32 0.0, %v3803
      %v3805 = vpop.f32.mrb[0].mxu0
      %v3806 = vpop.f32.mrb[0].mxu0
      %v3807 = vadd.f32 0.0, %v3806
      %v3808 = vpop.f32.mrb[0].mxu0
      %3809 = vmatprep.mubr.bf16.mxu0 0
      %3810 = vmatmul.mubr.bf16.gmra.mrb[0].mxu0 %v3676
      %v3811 = vpop.f32.mrb[0].mxu0
      %v3812 = vadd.f32 0.0, %v3811
      %v3813 = vpop.f32.mrb[0].mxu0
      %v3814 = vpop.f32.mrb[0].mxu0
      %v3815 = vadd.f32 0.0, %v3814
      %v3816 = vpop.f32.mrb[0].mxu0
      %3817 = vmatprep.mubr.bf16.mxu0 0
      %3818 = vmatmul.mubr.bf16.gmra.mrb[0].mxu0 %v3677
      %v3819 = vpop.f32.mrb[0].mxu0
      %v3820 = vadd.f32 0.0, %v3819
      %v3821 = vpop.f32.mrb[0].mxu0
      %v3822 = vpop.f32.mrb[0].mxu0
      %v3823 = vadd.f32 0.0, %v3822
      %v3824 = vpop.f32.mrb[0].mxu0
      %3825 = vmatprep.mubr.bf16.mxu0 0
      %3826 = vmatmul.mubr.bf16.gmra.mrb[0].mxu0 %v3678
      %v3827 = vpop.f32.mrb[0].mxu0
      %v3828 = vadd.f32 0.0, %v3827
      %v3829 = vpop.f32.mrb[0].mxu0
      %v3830 = vpop.f32.mrb[0].mxu0
      %v3831 = vadd.f32 0.0, %v3830
      %v3832 = vpop.f32.mrb[0].mxu0
      %3833 = vmatprep.mubr.bf16.mxu0 0
      %3834 = vmatmul.mubr.bf16.gmra.mrb[0].mxu0 %v3679
      %v3835 = vpop.f32.mrb[0].mxu0
      %v3836 = vadd.f32 0.0, %v3835
      %v3837 = vpop.f32.mrb[0].mxu0
      %v3838 = vpop.f32.mrb[0].mxu0
      %v3839 = vadd.f32 0.0, %v3838
      %v3840 = vpop.f32.mrb[0].mxu0
      %3841 = vmatprep.mubr.bf16.mxu0 0
      %3842 = vmatmul.mubr.bf16.gmra.mrb[0].mxu0 %v3680
      %v3843 = vpop.f32.mrb[0].mxu0
      %v3844 = vadd.f32 0.0, %v3843
      %v3845 = vpop.f32.mrb[0].mxu0
      %v3846 = vpop.f32.mrb[0].mxu0
      %v3847 = vadd.f32 0.0, %v3846
      %v3848 = vpop.f32.mrb[0].mxu0
      %3849 = vmatprep.mubr.bf16.mxu0 0
      %3850 = vmatmul.mubr.bf16.gmra.mrb[0].mxu0 %v3681
      %v3851 = vpop.f32.mrb[0].mxu0
      %v3852 = vadd.f32 0.0, %v3851
      %v3853 = vpop.f32.mrb[0].mxu0
      %v3854 = vpop.f32.mrb[0].mxu0
      %v3855 = vadd.f32 0.0, %v3854
      %v3856 = vpop.f32.mrb[0].mxu0
      %3857 = vmatprep.mubr.bf16.mxu0 0
      %3858 = vmatmul.mubr.bf16.gmra.mrb[0].mxu0 %v3682
      %v3859 = vpop.f32.mrb[0].mxu0
      %v3860 = vadd.f32 0.0, %v3859
      %v3861 = vpop.f32.mrb[0].mxu0
      %v3862 = vpop.f32.mrb[0].mxu0
      %v3863 = vadd.f32 0.0, %v3862
      %v3864 = vpop.f32.mrb[0].mxu0
      %3865 = vmatprep.mubr.bf16.mxu0 0
      %3866 = vmatmul.mubr.bf16.gmra.mrb[0].mxu0 %v3683
      %v3867 = vpop.f32.mrb[0].mxu0
      %v3868 = vadd.f32 0.0, %v3867
      %v3869 = vpop.f32.mrb[0].mxu0
      %v3870 = vpop.f32.mrb[0].mxu0
      %v3871 = vadd.f32 0.0, %v3870
      %v3872 = vpop.f32.mrb[0].mxu0
      %3873 = vmatprep.mubr.bf16.mxu0 0
      %3874 = vmatmul.mubr.bf16.gmra.mrb[0].mxu0 %v3684
      %v3875 = vpop.f32.mrb[0].mxu0
      %v3876 = vadd.f32 0.0, %v3875
      %v3877 = vpop.f32.mrb[0].mxu0
      %v3878 = vpop.f32.mrb[0].mxu0
      %v3879 = vadd.f32 0.0, %v3878
      %v3880 = vpop.f32.mrb[0].mxu0
      %3881 = vmatprep.mubr.bf16.mxu0 0
      %3882 = vmatmul.mubr.bf16.gmra.mrb[0].mxu0 %v3685
      %v3883 = vpop.f32.mrb[0].mxu0
      %v3884 = vadd.f32 0.0, %v3883
      %v3885 = vpop.f32.mrb[0].mxu0
      %v3886 = vpop.f32.mrb[0].mxu0
      %v3887 = vadd.f32 0.0, %v3886
      %v3888 = vpop.f32.mrb[0].mxu0
      %3889 = vmatprep.mubr.bf16.mxu0 0
      %3890 = vmatmul.mubr.bf16.gmra.mrb[0].mxu0 %v3686
      %v3891 = vpop.f32.mrb[0].mxu0
      %v3892 = vadd.f32 0.0, %v3891
      %v3893 = vpop.f32.mrb[0].mxu0
      %v3894 = vpop.f32.mrb[0].mxu0
      %v3895 = vadd.f32 0.0, %v3894
      %v3896 = vpop.f32.mrb[0].mxu0
      %3897 = vmatprep.mubr.bf16.mxu0 0
      %3898 = vmatmul.mubr.bf16.gmra.mrb[0].mxu0 %v3687
      %v3899 = vpop.f32.mrb[0].mxu0
      %v3900 = vadd.f32 0.0, %v3899
      %v3901 = vpop.f32.mrb[0].mxu0
      %v3902 = vpop.f32.mrb[0].mxu0
      %v3903 = vadd.f32 0.0, %v3902
      %v3904 = vpop.f32.mrb[0].mxu0
      %3905 = vmatprep.mubr.bf16.mxu0 0
      %3906 = vmatmul.mubr.bf16.gmra.mrb[0].mxu0 %v3688
      %v3907 = vpop.f32.mrb[0].mxu0
      %v3908 = vadd.f32 0.0, %v3907
      %v3909 = vpop.f32.mrb[0].mxu0
      %v3910 = vpop.f32.mrb[0].mxu0
      %v3911 = vadd.f32 0.0, %v3910
      %v3912 = vpop.f32.mrb[0].mxu0
      %3913 = vdwg.mxu0
      %v3914 = vadd.f32 %v3432, %v3788
      %v3915 = vadd.f32 %v3433, %v3791
      %v3916 = vadd.f32 %v3434, %v3796
      %v3917 = vadd.f32 %v3435, %v3799
      %v3918 = vadd.f32 %v3436, %v3804
      %v3919 = vadd.f32 %v3437, %v3807
      %v3920 = vadd.f32 %v3438, %v3812
      %v3921 = vadd.f32 %v3439, %v3815
      %v3922 = vadd.f32 %v3440, %v3820
      %v3923 = vadd.f32 %v3441, %v3823
      %v3924 = vadd.f32 %v3442, %v3828
      %v3925 = vadd.f32 %v3443, %v3831
      %v3926 = vadd.f32 %v3444, %v3836
      %v3927 = vadd.f32 %v3445, %v3839
      %v3928 = vadd.f32 %v3446, %v3844
      %v3929 = vadd.f32 %v3447, %v3847
      %v3930 = vadd.f32 %v3448, %v3852
      %v3931 = vadd.f32 %v3449, %v3855
      %v3932 = vadd.f32 %v3450, %v3860
      %v3933 = vadd.f32 %v3451, %v3863
      %v3934 = vadd.f32 %v3452, %v3868
      %v3935 = vadd.f32 %v3453, %v3871
      %v3936 = vadd.f32 %v3454, %v3876
      %v3937 = vadd.f32 %v3455, %v3879
      %v3938 = vadd.f32 %v3456, %v3884
      %v3939 = vadd.f32 %v3457, %v3887
      %v3940 = vadd.f32 %v3458, %v3892
      %v3941 = vadd.f32 %v3459, %v3895
      %v3942 = vadd.f32 %v3460, %v3900
      %v3943 = vadd.f32 %v3461, %v3903
      %v3944 = vadd.f32 %v3462, %v3908
      %v3945 = vadd.f32 %v3463, %v3911
      %3946 = vst [vmem:[#allocation2] sm:$0xff] %v3914
      %3947 = vst [vmem:[#allocation2 + $0x8] sm:$0xff] %v3915
      %3948 = vst [vmem:[#allocation2 + $0x10] sm:$0xff] %v3916
      %3949 = vst [vmem:[#allocation2 + $0x18] sm:$0xff] %v3917
      %3950 = vst [vmem:[#allocation2 + $0x20] sm:$0xff] %v3918
      %3951 = vst [vmem:[#allocation2 + $0x28] sm:$0xff] %v3919
      %3952 = vst [vmem:[#allocation2 + $0x30] sm:$0xff] %v3920
      %3953 = vst [vmem:[#allocation2 + $0x38] sm:$0xff] %v3921
      %3954 = vst [vmem:[#allocation2 + $0x40] sm:$0xff] %v3922
      %3955 = vst [vmem:[#allocation2 + $0x48] sm:$0xff] %v3923
      %3956 = vst [vmem:[#allocation2 + $0x50] sm:$0xff] %v3924
      %3957 = vst [vmem:[#allocation2 + $0x58] sm:$0xff] %v3925
      %3958 = vst [vmem:[#allocation2 + $0x60] sm:$0xff] %v3926
      %3959 = vst [vmem:[#allocation2 + $0x68] sm:$0xff] %v3927
      %3960 = vst [vmem:[#allocation2 + $0x70] sm:$0xff] %v3928
      %3961 = vst [vmem:[#allocation2 + $0x78] sm:$0xff] %v3929
      %3962 = vst [vmem:[#allocation2 + $0x80] sm:$0xff] %v3930
      %3963 = vst [vmem:[#allocation2 + $0x88] sm:$0xff] %v3931
      %3964 = vst [vmem:[#allocation2 + $0x90] sm:$0xff] %v3932
      %3965 = vst [vmem:[#allocation2 + $0x98] sm:$0xff] %v3933
      %3966 = vst [vmem:[#allocation2 + $0xa0] sm:$0xff] %v3934
      %3967 = vst [vmem:[#allocation2 + $0xa8] sm:$0xff] %v3935
      %3968 = vst [vmem:[#allocation2 + $0xb0] sm:$0xff] %v3936
      %3969 = vst [vmem:[#allocation2 + $0xb8] sm:$0xff] %v3937
      %3970 = vst [vmem:[#allocation2 + $0xc0] sm:$0xff] %v3938
      %3971 = vst [vmem:[#allocation2 + $0xc8] sm:$0xff] %v3939
      %3972 = vst [vmem:[#allocation2 + $0xd0] sm:$0xff] %v3940
      %3973 = vst [vmem:[#allocation2 + $0xd8] sm:$0xff] %v3941
      %3974 = vst [vmem:[#allocation2 + $0xe0] sm:$0xff] %v3942
      %3975 = vst [vmem:[#allocation2 + $0xe8] sm:$0xff] %v3943
      %3976 = vst [vmem:[#allocation2 + $0xf0] sm:$0xff] %v3944
      %3977 = vst [vmem:[#allocation2 + $0xf8] sm:$0xff] %v3945
      %s3978 = scalar_lea.vmem %s203, 24
      %v3979 = vld [vmem:[%s3978] sm:$0xf]
      %v3980 = vld [vmem:[%s3978 + $0x4] sm:$0xf]
      %v3981 = vld [vmem:[%s3978 + $0xc] sm:$0xf]
      %v3982 = vld [vmem:[%s3978 + $0x10] sm:$0xf]
      %v3983 = vld [vmem:[%s3978 + $0x18] sm:$0xf]
      %v3984 = vld [vmem:[%s3978 + $0x1c] sm:$0xf]
      %v3985 = vld [vmem:[%s3978 + $0x24] sm:$0xf]
      %v3986 = vld [vmem:[%s3978 + $0x28] sm:$0xf]
      %v3987 = vld [vmem:[%s3978 + $0x30] sm:$0xf]
      %v3988 = vld [vmem:[%s3978 + $0x34] sm:$0xf]
      %v3989 = vld [vmem:[%s3978 + $0x3c] sm:$0xf]
      %v3990 = vld [vmem:[%s3978 + $0x40] sm:$0xf]
      %v3991 = vld [vmem:[%s3978 + $0x48] sm:$0xf]
      %v3992 = vld [vmem:[%s3978 + $0x4c] sm:$0xf]
      %v3993 = vld [vmem:[%s3978 + $0x54] sm:$0xf]
      %v3994 = vld [vmem:[%s3978 + $0x58] sm:$0xf]
      %v3995 = vld [vmem:[%s3978 + $0x60] sm:$0xf]
      %v3996 = vld [vmem:[%s3978 + $0x64] sm:$0xf]
      %v3997 = vld [vmem:[%s3978 + $0x6c] sm:$0xf]
      %v3998 = vld [vmem:[%s3978 + $0x70] sm:$0xf]
      %v3999 = vld [vmem:[%s3978 + $0x78] sm:$0xf]
      %v4000 = vld [vmem:[%s3978 + $0x7c] sm:$0xf]
      %v4001 = vld [vmem:[%s3978 + $0x84] sm:$0xf]
      %v4002 = vld [vmem:[%s3978 + $0x88] sm:$0xf]
      %v4003 = vld [vmem:[%s3978 + $0x90] sm:$0xf]
      %v4004 = vld [vmem:[%s3978 + $0x94] sm:$0xf]
      %v4005 = vld [vmem:[%s3978 + $0x9c] sm:$0xf]
      %v4006 = vld [vmem:[%s3978 + $0xa0] sm:$0xf]
      %v4007 = vld [vmem:[%s3978 + $0xa8] sm:$0xf]
      %v4008 = vld [vmem:[%s3978 + $0xac] sm:$0xf]
      %v4009 = vld [vmem:[%s3978 + $0xb4] sm:$0xf]
      %v4010 = vld [vmem:[%s3978 + $0xb8] sm:$0xf]
      %v4011 = vld [vmem:[#allocation2] sm:$0xff]
      %v4012 = vld [vmem:[#allocation2 + $0x8] sm:$0xff]
      %v4013 = vld [vmem:[#allocation2 + $0x10] sm:$0xff]
      %v4014 = vld [vmem:[#allocation2 + $0x18] sm:$0xff]
      %v4015 = vld [vmem:[#allocation2 + $0x20] sm:$0xff]
      %v4016 = vld [vmem:[#allocation2 + $0x28] sm:$0xff]
      %v4017 = vld [vmem:[#allocation2 + $0x30] sm:$0xff]
      %v4018 = vld [vmem:[#allocation2 + $0x38] sm:$0xff]
      %v4019 = vld [vmem:[#allocation2 + $0x40] sm:$0xff]
      %v4020 = vld [vmem:[#allocation2 + $0x48] sm:$0xff]
      %v4021 = vld [vmem:[#allocation2 + $0x50] sm:$0xff]
      %v4022 = vld [vmem:[#allocation2 + $0x58] sm:$0xff]
      %v4023 = vld [vmem:[#allocation2 + $0x60] sm:$0xff]
      %v4024 = vld [vmem:[#allocation2 + $0x68] sm:$0xff]
      %v4025 = vld [vmem:[#allocation2 + $0x70] sm:$0xff]
      %v4026 = vld [vmem:[#allocation2 + $0x78] sm:$0xff]
      %v4027 = vld [vmem:[#allocation2 + $0x80] sm:$0xff]
      %v4028 = vld [vmem:[#allocation2 + $0x88] sm:$0xff]
      %v4029 = vld [vmem:[#allocation2 + $0x90] sm:$0xff]
      %v4030 = vld [vmem:[#allocation2 + $0x98] sm:$0xff]
      %v4031 = vld [vmem:[#allocation2 + $0xa0] sm:$0xff]
      %v4032 = vld [vmem:[#allocation2 + $0xa8] sm:$0xff]
      %v4033 = vld [vmem:[#allocation2 + $0xb0] sm:$0xff]
      %v4034 = vld [vmem:[#allocation2 + $0xb8] sm:$0xff]
      %v4035 = vld [vmem:[#allocation2 + $0xc0] sm:$0xff]
      %v4036 = vld [vmem:[#allocation2 + $0xc8] sm:$0xff]
      %v4037 = vld [vmem:[#allocation2 + $0xd0] sm:$0xff]
      %v4038 = vld [vmem:[#allocation2 + $0xd8] sm:$0xff]
      %v4039 = vld [vmem:[#allocation2 + $0xe0] sm:$0xff]
      %v4040 = vld [vmem:[#allocation2 + $0xe8] sm:$0xff]
      %v4041 = vld [vmem:[#allocation2 + $0xf0] sm:$0xff]
      %v4042 = vld [vmem:[#allocation2 + $0xf8] sm:$0xff]
      %s4043 = scalar_lea.vmem %s1, 384
      %v4044 = vld [vmem:[%s4043] sm:$0xf]
      %v4045 = vld [vmem:[%s4043 + $0x4] sm:$0xf]
      %v4046 = vld [vmem:[%s4043 + $0x8] sm:$0xf]
      %v4047 = vld [vmem:[%s4043 + $0xc] sm:$0xf]
      %v4048 = vld [vmem:[%s4043 + $0x10] sm:$0xf]
      %v4049 = vld [vmem:[%s4043 + $0x14] sm:$0xf]
      %v4050 = vld [vmem:[%s4043 + $0x18] sm:$0xf]
      %v4051 = vld [vmem:[%s4043 + $0x1c] sm:$0xf]
      %v4052 = vld [vmem:[%s4043 + $0x20] sm:$0xf]
      %v4053 = vld [vmem:[%s4043 + $0x24] sm:$0xf]
      %v4054 = vld [vmem:[%s4043 + $0x28] sm:$0xf]
      %v4055 = vld [vmem:[%s4043 + $0x2c] sm:$0xf]
      %v4056 = vld [vmem:[%s4043 + $0x30] sm:$0xf]
      %v4057 = vld [vmem:[%s4043 + $0x34] sm:$0xf]
      %v4058 = vld [vmem:[%s4043 + $0x38] sm:$0xf]
      %v4059 = vld [vmem:[%s4043 + $0x3c] sm:$0xf]
      %v4092 = vunpack.c.l.b16 %v3979
      %v4093 = vunpack.c.l.b16 %v3980
      %v4094 = vunpack.c.l.b16 %v3981
      %v4095 = vunpack.c.l.b16 %v3982
      %v4096 = vunpack.c.l.b16 %v3983
      %v4097 = vunpack.c.l.b16 %v3984
      %v4098 = vunpack.c.l.b16 %v3985
      %v4099 = vunpack.c.l.b16 %v3986
      %v4100 = vunpack.c.l.b16 %v3987
      %v4101 = vunpack.c.l.b16 %v3988
      %v4102 = vunpack.c.l.b16 %v3989
      %v4103 = vunpack.c.l.b16 %v3990
      %v4104 = vunpack.c.l.b16 %v3991
      %v4105 = vunpack.c.l.b16 %v3992
      %v4106 = vunpack.c.l.b16 %v3993
      %v4107 = vunpack.c.l.b16 %v3994
      %v4108 = vunpack.c.l.b16 %v3995
      %v4109 = vunpack.c.l.b16 %v3996
      %v4110 = vunpack.c.l.b16 %v3997
      %v4111 = vunpack.c.l.b16 %v3998
      %v4112 = vunpack.c.l.b16 %v3999
      %v4113 = vunpack.c.l.b16 %v4000
      %v4114 = vunpack.c.l.b16 %v4001
      %v4115 = vunpack.c.l.b16 %v4002
      %v4116 = vunpack.c.l.b16 %v4003
      %v4117 = vunpack.c.l.b16 %v4004
      %v4118 = vunpack.c.l.b16 %v4005
      %v4119 = vunpack.c.l.b16 %v4006
      %v4120 = vunpack.c.l.b16 %v4007
      %v4121 = vunpack.c.l.b16 %v4008
      %v4122 = vunpack.c.l.b16 %v4009
      %v4123 = vunpack.c.l.b16 %v4010
      %v4124 = vpack.c.b16 %v4093, %v4092
      %v4125 = vpack.c.b16 %v4095, %v4094
      %v4126 = vpack.c.b16 %v4097, %v4096
      %v4127 = vpack.c.b16 %v4099, %v4098
      %v4128 = vpack.c.b16 %v4101, %v4100
      %v4129 = vpack.c.b16 %v4103, %v4102
      %v4130 = vpack.c.b16 %v4105, %v4104
      %v4131 = vpack.c.b16 %v4107, %v4106
      %v4132 = vpack.c.b16 %v4109, %v4108
      %v4133 = vpack.c.b16 %v4111, %v4110
      %v4134 = vpack.c.b16 %v4113, %v4112
      %v4135 = vpack.c.b16 %v4115, %v4114
      %v4136 = vpack.c.b16 %v4117, %v4116
      %v4137 = vpack.c.b16 %v4119, %v4118
      %v4138 = vpack.c.b16 %v4121, %v4120
      %v4139 = vpack.c.b16 %v4123, %v4122
      %v4172 = vunpack.c.l.b16 %v4044
      %v4173 = vunpack.c.l.b16 %v4045
      %v4174 = vunpack.c.l.b16 %v4046
      %v4175 = vunpack.c.l.b16 %v4047
      %v4176 = vunpack.c.l.b16 %v4048
      %v4177 = vunpack.c.l.b16 %v4049
      %v4178 = vunpack.c.l.b16 %v4050
      %v4179 = vunpack.c.l.b16 %v4051
      %v4180 = vunpack.c.l.b16 %v4052
      %v4181 = vunpack.c.l.b16 %v4053
      %v4182 = vunpack.c.l.b16 %v4054
      %v4183 = vunpack.c.l.b16 %v4055
      %v4184 = vunpack.c.l.b16 %v4056
      %v4185 = vunpack.c.l.b16 %v4057
      %v4186 = vunpack.c.l.b16 %v4058
      %v4187 = vunpack.c.l.b16 %v4059
      %v4188 = vpack.c.b16 %v4173, %v4172
      %v4189 = vpack.c.b16 %v4175, %v4174
      %v4190 = vpack.c.b16 %v4177, %v4176
      %v4191 = vpack.c.b16 %v4179, %v4178
      %v4192 = vpack.c.b16 %v4181, %v4180
      %v4193 = vpack.c.b16 %v4183, %v4182
      %v4194 = vpack.c.b16 %v4185, %v4184
      %v4195 = vpack.c.b16 %v4187, %v4186
      %4204 = vmatprep.subr.bf16.mxu0 0
      %4205 = vmatpush1.bf16.msra.mxu0 %v4188
      %4206 = vmatprep.subr.bf16.mxu0 0
      %4207 = vmatpush1.bf16.msra.mxu0 %v4189
      %4208 = vmatprep.subr.bf16.mxu0 0
      %4209 = vmatpush1.bf16.msra.mxu0 %v4190
      %4210 = vmatprep.subr.bf16.mxu0 0
      %4211 = vmatpush1.bf16.msra.mxu0 %v4191
      %4212 = vmatprep.subr.bf16.mxu0 0
      %4213 = vmatpush1.bf16.msra.mxu0 %v4192
      %4214 = vmatprep.subr.bf16.mxu0 0
      %4215 = vmatpush1.bf16.msra.mxu0 %v4193
      %4216 = vmatprep.subr.bf16.mxu0 0
      %4217 = vmatpush1.bf16.msra.mxu0 %v4194
      %4218 = vmatprep.subr.bf16.mxu0 0
      %4219 = vmatpush1.bf16.msra.mxu0 %v4195
      %4220 = vmatprep.subr.bf16.mxu0 0
      %4221 = vmatpush1.bf16.msra.mxu0 0
      %4222 = vmatprep.subr.bf16.mxu0 0
      %4223 = vmatpush1.bf16.msra.mxu0 0
      %4224 = vmatprep.subr.bf16.mxu0 0
      %4225 = vmatpush1.bf16.msra.mxu0 0
      %4226 = vmatprep.subr.bf16.mxu0 0
      %4227 = vmatpush1.bf16.msra.mxu0 0
      %4228 = vmatprep.subr.bf16.mxu0 0
      %4229 = vmatpush1.bf16.msra.mxu0 0
      %4230 = vmatprep.subr.bf16.mxu0 0
      %4231 = vmatpush1.bf16.msra.mxu0 0
      %4232 = vmatprep.subr.bf16.mxu0 0
      %4233 = vmatpush1.bf16.msra.mxu0 0
      %4234 = vmatprep.subr.bf16.mxu0 0
      %4235 = vmatpush1.bf16.msra.mxu0 0
      %4236 = vmatprep.mubr.bf16.mxu0 0
      %4237 = vmatmul.mubr.bf16.gmra.mrb[0].mxu0 %v4124
      %v4238 = vpop.f32.mrb[0].mxu0
      %v4239 = vadd.f32 0.0, %v4238
      %v4240 = vpop.f32.mrb[0].mxu0
      %v4241 = vpop.f32.mrb[0].mxu0
      %v4242 = vadd.f32 0.0, %v4241
      %v4243 = vpop.f32.mrb[0].mxu0
      %4244 = vmatprep.mubr.bf16.mxu0 0
      %4245 = vmatmul.mubr.bf16.gmra.mrb[0].mxu0 %v4125
      %v4246 = vpop.f32.mrb[0].mxu0
      %v4247 = vadd.f32 0.0, %v4246
      %v4248 = vpop.f32.mrb[0].mxu0
      %v4249 = vpop.f32.mrb[0].mxu0
      %v4250 = vadd.f32 0.0, %v4249
      %v4251 = vpop.f32.mrb[0].mxu0
      %4252 = vmatprep.mubr.bf16.mxu0 0
      %4253 = vmatmul.mubr.bf16.gmra.mrb[0].mxu0 %v4126
      %v4254 = vpop.f32.mrb[0].mxu0
      %v4255 = vadd.f32 0.0, %v4254
      %v4256 = vpop.f32.mrb[0].mxu0
      %v4257 = vpop.f32.mrb[0].mxu0
      %v4258 = vadd.f32 0.0, %v4257
      %v4259 = vpop.f32.mrb[0].mxu0
      %4260 = vmatprep.mubr.bf16.mxu0 0
      %4261 = vmatmul.mubr.bf16.gmra.mrb[0].mxu0 %v4127
      %v4262 = vpop.f32.mrb[0].mxu0
      %v4263 = vadd.f32 0.0, %v4262
      %v4264 = vpop.f32.mrb[0].mxu0
      %v4265 = vpop.f32.mrb[0].mxu0
      %v4266 = vadd.f32 0.0, %v4265
      %v4267 = vpop.f32.mrb[0].mxu0
      %4268 = vmatprep.mubr.bf16.mxu0 0
      %4269 = vmatmul.mubr.bf16.gmra.mrb[0].mxu0 %v4128
      %v4270 = vpop.f32.mrb[0].mxu0
      %v4271 = vadd.f32 0.0, %v4270
      %v4272 = vpop.f32.mrb[0].mxu0
      %v4273 = vpop.f32.mrb[0].mxu0
      %v4274 = vadd.f32 0.0, %v4273
      %v4275 = vpop.f32.mrb[0].mxu0
      %4276 = vmatprep.mubr.bf16.mxu0 0
      %4277 = vmatmul.mubr.bf16.gmra.mrb[0].mxu0 %v4129
      %v4278 = vpop.f32.mrb[0].mxu0
      %v4279 = vadd.f32 0.0, %v4278
      %v4280 = vpop.f32.mrb[0].mxu0
      %v4281 = vpop.f32.mrb[0].mxu0
      %v4282 = vadd.f32 0.0, %v4281
      %v4283 = vpop.f32.mrb[0].mxu0
      %4284 = vmatprep.mubr.bf16.mxu0 0
      %4285 = vmatmul.mubr.bf16.gmra.mrb[0].mxu0 %v4130
      %v4286 = vpop.f32.mrb[0].mxu0
      %v4287 = vadd.f32 0.0, %v4286
      %v4288 = vpop.f32.mrb[0].mxu0
      %v4289 = vpop.f32.mrb[0].mxu0
      %v4290 = vadd.f32 0.0, %v4289
      %v4291 = vpop.f32.mrb[0].mxu0
      %4292 = vmatprep.mubr.bf16.mxu0 0
      %4293 = vmatmul.mubr.bf16.gmra.mrb[0].mxu0 %v4131
      %v4294 = vpop.f32.mrb[0].mxu0
      %v4295 = vadd.f32 0.0, %v4294
      %v4296 = vpop.f32.mrb[0].mxu0
      %v4297 = vpop.f32.mrb[0].mxu0
      %v4298 = vadd.f32 0.0, %v4297
      %v4299 = vpop.f32.mrb[0].mxu0
      %4300 = vmatprep.mubr.bf16.mxu0 0
      %4301 = vmatmul.mubr.bf16.gmra.mrb[0].mxu0 %v4132
      %v4302 = vpop.f32.mrb[0].mxu0
      %v4303 = vadd.f32 0.0, %v4302
      %v4304 = vpop.f32.mrb[0].mxu0
      %v4305 = vpop.f32.mrb[0].mxu0
      %v4306 = vadd.f32 0.0, %v4305
      %v4307 = vpop.f32.mrb[0].mxu0
      %4308 = vmatprep.mubr.bf16.mxu0 0
      %4309 = vmatmul.mubr.bf16.gmra.mrb[0].mxu0 %v4133
      %v4310 = vpop.f32.mrb[0].mxu0
      %v4311 = vadd.f32 0.0, %v4310
      %v4312 = vpop.f32.mrb[0].mxu0
      %v4313 = vpop.f32.mrb[0].mxu0
      %v4314 = vadd.f32 0.0, %v4313
      %v4315 = vpop.f32.mrb[0].mxu0
      %4316 = vmatprep.mubr.bf16.mxu0 0
      %4317 = vmatmul.mubr.bf16.gmra.mrb[0].mxu0 %v4134
      %v4318 = vpop.f32.mrb[0].mxu0
      %v4319 = vadd.f32 0.0, %v4318
      %v4320 = vpop.f32.mrb[0].mxu0
      %v4321 = vpop.f32.mrb[0].mxu0
      %v4322 = vadd.f32 0.0, %v4321
      %v4323 = vpop.f32.mrb[0].mxu0
      %4324 = vmatprep.mubr.bf16.mxu0 0
      %4325 = vmatmul.mubr.bf16.gmra.mrb[0].mxu0 %v4135
      %v4326 = vpop.f32.mrb[0].mxu0
      %v4327 = vadd.f32 0.0, %v4326
      %v4328 = vpop.f32.mrb[0].mxu0
      %v4329 = vpop.f32.mrb[0].mxu0
      %v4330 = vadd.f32 0.0, %v4329
      %v4331 = vpop.f32.mrb[0].mxu0
      %4332 = vmatprep.mubr.bf16.mxu0 0
      %4333 = vmatmul.mubr.bf16.gmra.mrb[0].mxu0 %v4136
      %v4334 = vpop.f32.mrb[0].mxu0
      %v4335 = vadd.f32 0.0, %v4334
      %v4336 = vpop.f32.mrb[0].mxu0
      %v4337 = vpop.f32.mrb[0].mxu0
      %v4338 = vadd.f32 0.0, %v4337
      %v4339 = vpop.f32.mrb[0].mxu0
      %4340 = vmatprep.mubr.bf16.mxu0 0
      %4341 = vmatmul.mubr.bf16.gmra.mrb[0].mxu0 %v4137
      %v4342 = vpop.f32.mrb[0].mxu0
      %v4343 = vadd.f32 0.0, %v4342
      %v4344 = vpop.f32.mrb[0].mxu0
      %v4345 = vpop.f32.mrb[0].mxu0
      %v4346 = vadd.f32 0.0, %v4345
      %v4347 = vpop.f32.mrb[0].mxu0
      %4348 = vmatprep.mubr.bf16.mxu0 0
      %4349 = vmatmul.mubr.bf16.gmra.mrb[0].mxu0 %v4138
      %v4350 = vpop.f32.mrb[0].mxu0
      %v4351 = vadd.f32 0.0, %v4350
      %v4352 = vpop.f32.mrb[0].mxu0
      %v4353 = vpop.f32.mrb[0].mxu0
      %v4354 = vadd.f32 0.0, %v4353
      %v4355 = vpop.f32.mrb[0].mxu0
      %4356 = vmatprep.mubr.bf16.mxu0 0
      %4357 = vmatmul.mubr.bf16.gmra.mrb[0].mxu0 %v4139
      %v4358 = vpop.f32.mrb[0].mxu0
      %v4359 = vadd.f32 0.0, %v4358
      %v4360 = vpop.f32.mrb[0].mxu0
      %v4361 = vpop.f32.mrb[0].mxu0
      %v4362 = vadd.f32 0.0, %v4361
      %v4363 = vpop.f32.mrb[0].mxu0
      %4364 = vdwg.mxu0
      %v4365 = vadd.f32 %v4011, %v4239
      %v4366 = vadd.f32 %v4012, %v4242
      %v4367 = vadd.f32 %v4013, %v4247
      %v4368 = vadd.f32 %v4014, %v4250
      %v4369 = vadd.f32 %v4015, %v4255
      %v4370 = vadd.f32 %v4016, %v4258
      %v4371 = vadd.f32 %v4017, %v4263
      %v4372 = vadd.f32 %v4018, %v4266
      %v4373 = vadd.f32 %v4019, %v4271
      %v4374 = vadd.f32 %v4020, %v4274
      %v4375 = vadd.f32 %v4021, %v4279
      %v4376 = vadd.f32 %v4022, %v4282
      %v4377 = vadd.f32 %v4023, %v4287
      %v4378 = vadd.f32 %v4024, %v4290
      %v4379 = vadd.f32 %v4025, %v4295
      %v4380 = vadd.f32 %v4026, %v4298
      %v4381 = vadd.f32 %v4027, %v4303
      %v4382 = vadd.f32 %v4028, %v4306
      %v4383 = vadd.f32 %v4029, %v4311
      %v4384 = vadd.f32 %v4030, %v4314
      %v4385 = vadd.f32 %v4031, %v4319
      %v4386 = vadd.f32 %v4032, %v4322
      %v4387 = vadd.f32 %v4033, %v4327
      %v4388 = vadd.f32 %v4034, %v4330
      %v4389 = vadd.f32 %v4035, %v4335
      %v4390 = vadd.f32 %v4036, %v4338
      %v4391 = vadd.f32 %v4037, %v4343
      %v4392 = vadd.f32 %v4038, %v4346
      %v4393 = vadd.f32 %v4039, %v4351
      %v4394 = vadd.f32 %v4040, %v4354
      %v4395 = vadd.f32 %v4041, %v4359
      %v4396 = vadd.f32 %v4042, %v4362
      %4397 = vst [vmem:[#allocation2] sm:$0xff] %v4365
      %4398 = vst [vmem:[#allocation2 + $0x8] sm:$0xff] %v4366
      %4399 = vst [vmem:[#allocation2 + $0x10] sm:$0xff] %v4367
      %4400 = vst [vmem:[#allocation2 + $0x18] sm:$0xff] %v4368
      %4401 = vst [vmem:[#allocation2 + $0x20] sm:$0xff] %v4369
      %4402 = vst [vmem:[#allocation2 + $0x28] sm:$0xff] %v4370
      %4403 = vst [vmem:[#allocation2 + $0x30] sm:$0xff] %v4371
      %4404 = vst [vmem:[#allocation2 + $0x38] sm:$0xff] %v4372
      %4405 = vst [vmem:[#allocation2 + $0x40] sm:$0xff] %v4373
      %4406 = vst [vmem:[#allocation2 + $0x48] sm:$0xff] %v4374
      %4407 = vst [vmem:[#allocation2 + $0x50] sm:$0xff] %v4375
      %4408 = vst [vmem:[#allocation2 + $0x58] sm:$0xff] %v4376
      %4409 = vst [vmem:[#allocation2 + $0x60] sm:$0xff] %v4377
      %4410 = vst [vmem:[#allocation2 + $0x68] sm:$0xff] %v4378
      %4411 = vst [vmem:[#allocation2 + $0x70] sm:$0xff] %v4379
      %4412 = vst [vmem:[#allocation2 + $0x78] sm:$0xff] %v4380
      %4413 = vst [vmem:[#allocation2 + $0x80] sm:$0xff] %v4381
      %4414 = vst [vmem:[#allocation2 + $0x88] sm:$0xff] %v4382
      %4415 = vst [vmem:[#allocation2 + $0x90] sm:$0xff] %v4383
      %4416 = vst [vmem:[#allocation2 + $0x98] sm:$0xff] %v4384
      %4417 = vst [vmem:[#allocation2 + $0xa0] sm:$0xff] %v4385
      %4418 = vst [vmem:[#allocation2 + $0xa8] sm:$0xff] %v4386
      %4419 = vst [vmem:[#allocation2 + $0xb0] sm:$0xff] %v4387
      %4420 = vst [vmem:[#allocation2 + $0xb8] sm:$0xff] %v4388
      %4421 = vst [vmem:[#allocation2 + $0xc0] sm:$0xff] %v4389
      %4422 = vst [vmem:[#allocation2 + $0xc8] sm:$0xff] %v4390
      %4423 = vst [vmem:[#allocation2 + $0xd0] sm:$0xff] %v4391
      %4424 = vst [vmem:[#allocation2 + $0xd8] sm:$0xff] %v4392
      %4425 = vst [vmem:[#allocation2 + $0xe0] sm:$0xff] %v4393
      %4426 = vst [vmem:[#allocation2 + $0xe8] sm:$0xff] %v4394
      %4427 = vst [vmem:[#allocation2 + $0xf0] sm:$0xff] %v4395
      %4428 = vst [vmem:[#allocation2 + $0xf8] sm:$0xff] %v4396
      %v4429 = vld [vmem:[%s3978] sm:$0xf]
      %v4430 = vld [vmem:[%s3978 + $0x4] sm:$0xf]
      %v4431 = vld [vmem:[%s3978 + $0x8] sm:$0x1]
      %v4432 = vld [vmem:[%s3978 + $0xc] sm:$0xf]
      %v4433 = vld [vmem:[%s3978 + $0x10] sm:$0xf]
      %v4434 = vld [vmem:[%s3978 + $0x14] sm:$0x1]
      %v4435 = vld [vmem:[%s3978 + $0x18] sm:$0xf]
      %v4436 = vld [vmem:[%s3978 + $0x1c] sm:$0xf]
      %v4437 = vld [vmem:[%s3978 + $0x20] sm:$0x1]
      %v4438 = vld [vmem:[%s3978 + $0x24] sm:$0xf]
      %v4439 = vld [vmem:[%s3978 + $0x28] sm:$0xf]
      %v4440 = vld [vmem:[%s3978 + $0x2c] sm:$0x1]
      %v4441 = vld [vmem:[%s3978 + $0x30] sm:$0xf]
      %v4442 = vld [vmem:[%s3978 + $0x34] sm:$0xf]
      %v4443 = vld [vmem:[%s3978 + $0x38] sm:$0x1]
      %v4444 = vld [vmem:[%s3978 + $0x3c] sm:$0xf]
      %v4445 = vld [vmem:[%s3978 + $0x40] sm:$0xf]
      %v4446 = vld [vmem:[%s3978 + $0x44] sm:$0x1]
      %v4447 = vld [vmem:[%s3978 + $0x48] sm:$0xf]
      %v4448 = vld [vmem:[%s3978 + $0x4c] sm:$0xf]
      %v4449 = vld [vmem:[%s3978 + $0x50] sm:$0x1]
      %v4450 = vld [vmem:[%s3978 + $0x54] sm:$0xf]
      %v4451 = vld [vmem:[%s3978 + $0x58] sm:$0xf]
      %v4452 = vld [vmem:[%s3978 + $0x5c] sm:$0x1]
      %v4453 = vld [vmem:[%s3978 + $0x60] sm:$0xf]
      %v4454 = vld [vmem:[%s3978 + $0x64] sm:$0xf]
      %v4455 = vld [vmem:[%s3978 + $0x68] sm:$0x1]
      %v4456 = vld [vmem:[%s3978 + $0x6c] sm:$0xf]
      %v4457 = vld [vmem:[%s3978 + $0x70] sm:$0xf]
      %v4458 = vld [vmem:[%s3978 + $0x74] sm:$0x1]
      %v4459 = vld [vmem:[%s3978 + $0x78] sm:$0xf]
      %v4460 = vld [vmem:[%s3978 + $0x7c] sm:$0xf]
      %v4461 = vld [vmem:[%s3978 + $0x80] sm:$0x1]
      %v4462 = vld [vmem:[%s3978 + $0x84] sm:$0xf]
      %v4463 = vld [vmem:[%s3978 + $0x88] sm:$0xf]
      %v4464 = vld [vmem:[%s3978 + $0x8c] sm:$0x1]
      %v4465 = vld [vmem:[%s3978 + $0x90] sm:$0xf]
      %v4466 = vld [vmem:[%s3978 + $0x94] sm:$0xf]
      %v4467 = vld [vmem:[%s3978 + $0x98] sm:$0x1]
      %v4468 = vld [vmem:[%s3978 + $0x9c] sm:$0xf]
      %v4469 = vld [vmem:[%s3978 + $0xa0] sm:$0xf]
      %v4470 = vld [vmem:[%s3978 + $0xa4] sm:$0x1]
      %v4471 = vld [vmem:[%s3978 + $0xa8] sm:$0xf]
      %v4472 = vld [vmem:[%s3978 + $0xac] sm:$0xf]
      %v4473 = vld [vmem:[%s3978 + $0xb0] sm:$0x1]
      %v4474 = vld [vmem:[%s3978 + $0xb4] sm:$0xf]
      %v4475 = vld [vmem:[%s3978 + $0xb8] sm:$0xf]
      %v4476 = vld [vmem:[%s3978 + $0xbc] sm:$0x1]
      %v4477 = vld [vmem:[#allocation2] sm:$0xff]
      %v4478 = vld [vmem:[#allocation2 + $0x8] sm:$0xff]
      %v4479 = vld [vmem:[#allocation2 + $0x10] sm:$0xff]
      %v4480 = vld [vmem:[#allocation2 + $0x18] sm:$0xff]
      %v4481 = vld [vmem:[#allocation2 + $0x20] sm:$0xff]
      %v4482 = vld [vmem:[#allocation2 + $0x28] sm:$0xff]
      %v4483 = vld [vmem:[#allocation2 + $0x30] sm:$0xff]
      %v4484 = vld [vmem:[#allocation2 + $0x38] sm:$0xff]
      %v4485 = vld [vmem:[#allocation2 + $0x40] sm:$0xff]
      %v4486 = vld [vmem:[#allocation2 + $0x48] sm:$0xff]
      %v4487 = vld [vmem:[#allocation2 + $0x50] sm:$0xff]
      %v4488 = vld [vmem:[#allocation2 + $0x58] sm:$0xff]
      %v4489 = vld [vmem:[#allocation2 + $0x60] sm:$0xff]
      %v4490 = vld [vmem:[#allocation2 + $0x68] sm:$0xff]
      %v4491 = vld [vmem:[#allocation2 + $0x70] sm:$0xff]
      %v4492 = vld [vmem:[#allocation2 + $0x78] sm:$0xff]
      %v4493 = vld [vmem:[#allocation2 + $0x80] sm:$0xff]
      %v4494 = vld [vmem:[#allocation2 + $0x88] sm:$0xff]
      %v4495 = vld [vmem:[#allocation2 + $0x90] sm:$0xff]
      %v4496 = vld [vmem:[#allocation2 + $0x98] sm:$0xff]
      %v4497 = vld [vmem:[#allocation2 + $0xa0] sm:$0xff]
      %v4498 = vld [vmem:[#allocation2 + $0xa8] sm:$0xff]
      %v4499 = vld [vmem:[#allocation2 + $0xb0] sm:$0xff]
      %v4500 = vld [vmem:[#allocation2 + $0xb8] sm:$0xff]
      %v4501 = vld [vmem:[#allocation2 + $0xc0] sm:$0xff]
      %v4502 = vld [vmem:[#allocation2 + $0xc8] sm:$0xff]
      %v4503 = vld [vmem:[#allocation2 + $0xd0] sm:$0xff]
      %v4504 = vld [vmem:[#allocation2 + $0xd8] sm:$0xff]
      %v4505 = vld [vmem:[#allocation2 + $0xe0] sm:$0xff]
      %v4506 = vld [vmem:[#allocation2 + $0xe8] sm:$0xff]
      %v4507 = vld [vmem:[#allocation2 + $0xf0] sm:$0xff]
      %v4508 = vld [vmem:[#allocation2 + $0xf8] sm:$0xff]
      %v4510 = vshrl.u32 %v4429, 16
      %v4512 = vrot.slane %v4510, 4
      %v4513 = vshll.u32 %v4429, 16
      %v4515 = vrot.slane %v4513, 5
      %v4516 = vor.u32 %v4512, %v4515
      %v4517 = vrot.slane %v4516, 4
      %v4519 = vshll.u32 %v4430, 16
      %v4521 = vrot.slane %v4519, 5
      %v4522 = vsel %vm779, %v4517, %v4521
      %v4523 = vshrl.u32 %v4430, 16
      %v4525 = vrot.slane %v4523, 4
      %v4526 = vor.u32 %v4525, %v4521
      %v4527 = vrot.slane %v4526, 4
      %v4529 = vshll.u32 %v4431, 16
      %v4531 = vrot.slane %v4529, 5
      %v4532 = vsel %vm779, %v4527, %v4531
      %v4534 = vshrl.u32 %v4432, 16
      %v4536 = vrot.slane %v4534, 4
      %v4537 = vshll.u32 %v4432, 16
      %v4539 = vrot.slane %v4537, 5
      %v4540 = vor.u32 %v4536, %v4539
      %v4541 = vrot.slane %v4540, 4
      %v4543 = vshll.u32 %v4433, 16
      %v4545 = vrot.slane %v4543, 5
      %v4546 = vsel %vm779, %v4541, %v4545
      %v4547 = vshrl.u32 %v4433, 16
      %v4549 = vrot.slane %v4547, 4
      %v4550 = vor.u32 %v4549, %v4545
      %v4551 = vrot.slane %v4550, 4
      %v4553 = vshll.u32 %v4434, 16
      %v4555 = vrot.slane %v4553, 5
      %v4556 = vsel %vm779, %v4551, %v4555
      %v4558 = vshrl.u32 %v4435, 16
      %v4560 = vrot.slane %v4558, 4
      %v4561 = vshll.u32 %v4435, 16
      %v4563 = vrot.slane %v4561, 5
      %v4564 = vor.u32 %v4560, %v4563
      %v4565 = vrot.slane %v4564, 4
      %v4567 = vshll.u32 %v4436, 16
      %v4569 = vrot.slane %v4567, 5
      %v4570 = vsel %vm779, %v4565, %v4569
      %v4571 = vshrl.u32 %v4436, 16
      %v4573 = vrot.slane %v4571, 4
      %v4574 = vor.u32 %v4573, %v4569
      %v4575 = vrot.slane %v4574, 4
      %v4577 = vshll.u32 %v4437, 16
      %v4579 = vrot.slane %v4577, 5
      %v4580 = vsel %vm779, %v4575, %v4579
      %v4582 = vshrl.u32 %v4438, 16
      %v4584 = vrot.slane %v4582, 4
      %v4585 = vshll.u32 %v4438, 16
      %v4587 = vrot.slane %v4585, 5
      %v4588 = vor.u32 %v4584, %v4587
      %v4589 = vrot.slane %v4588, 4
      %v4591 = vshll.u32 %v4439, 16
      %v4593 = vrot.slane %v4591, 5
      %v4594 = vsel %vm779, %v4589, %v4593
      %v4595 = vshrl.u32 %v4439, 16
      %v4597 = vrot.slane %v4595, 4
      %v4598 = vor.u32 %v4597, %v4593
      %v4599 = vrot.slane %v4598, 4
      %v4601 = vshll.u32 %v4440, 16
      %v4603 = vrot.slane %v4601, 5
      %v4604 = vsel %vm779, %v4599, %v4603
      %v4606 = vshrl.u32 %v4441, 16
      %v4608 = vrot.slane %v4606, 4
      %v4609 = vshll.u32 %v4441, 16
      %v4611 = vrot.slane %v4609, 5
      %v4612 = vor.u32 %v4608, %v4611
      %v4613 = vrot.slane %v4612, 4
      %v4615 = vshll.u32 %v4442, 16
      %v4617 = vrot.slane %v4615, 5
      %v4618 = vsel %vm779, %v4613, %v4617
      %v4619 = vshrl.u32 %v4442, 16
      %v4621 = vrot.slane %v4619, 4
      %v4622 = vor.u32 %v4621, %v4617
      %v4623 = vrot.slane %v4622, 4
      %v4625 = vshll.u32 %v4443, 16
      %v4627 = vrot.slane %v4625, 5
      %v4628 = vsel %vm779, %v4623, %v4627
      %v4630 = vshrl.u32 %v4444, 16
      %v4632 = vrot.slane %v4630, 4
      %v4633 = vshll.u32 %v4444, 16
      %v4635 = vrot.slane %v4633, 5
      %v4636 = vor.u32 %v4632, %v4635
      %v4637 = vrot.slane %v4636, 4
      %v4639 = vshll.u32 %v4445, 16
      %v4641 = vrot.slane %v4639, 5
      %v4642 = vsel %vm779, %v4637, %v4641
      %v4643 = vshrl.u32 %v4445, 16
      %v4645 = vrot.slane %v4643, 4
      %v4646 = vor.u32 %v4645, %v4641
      %v4647 = vrot.slane %v4646, 4
      %v4649 = vshll.u32 %v4446, 16
      %v4651 = vrot.slane %v4649, 5
      %v4652 = vsel %vm779, %v4647, %v4651
      %v4654 = vshrl.u32 %v4447, 16
      %v4656 = vrot.slane %v4654, 4
      %v4657 = vshll.u32 %v4447, 16
      %v4659 = vrot.slane %v4657, 5
      %v4660 = vor.u32 %v4656, %v4659
      %v4661 = vrot.slane %v4660, 4
      %v4663 = vshll.u32 %v4448, 16
      %v4665 = vrot.slane %v4663, 5
      %v4666 = vsel %vm779, %v4661, %v4665
      %v4667 = vshrl.u32 %v4448, 16
      %v4669 = vrot.slane %v4667, 4
      %v4670 = vor.u32 %v4669, %v4665
      %v4671 = vrot.slane %v4670, 4
      %v4673 = vshll.u32 %v4449, 16
      %v4675 = vrot.slane %v4673, 5
      %v4676 = vsel %vm779, %v4671, %v4675
      %v4678 = vshrl.u32 %v4450, 16
      %v4680 = vrot.slane %v4678, 4
      %v4681 = vshll.u32 %v4450, 16
      %v4683 = vrot.slane %v4681, 5
      %v4684 = vor.u32 %v4680, %v4683
      %v4685 = vrot.slane %v4684, 4
      %v4687 = vshll.u32 %v4451, 16
      %v4689 = vrot.slane %v4687, 5
      %v4690 = vsel %vm779, %v4685, %v4689
      %v4691 = vshrl.u32 %v4451, 16
      %v4693 = vrot.slane %v4691, 4
      %v4694 = vor.u32 %v4693, %v4689
      %v4695 = vrot.slane %v4694, 4
      %v4697 = vshll.u32 %v4452, 16
      %v4699 = vrot.slane %v4697, 5
      %v4700 = vsel %vm779, %v4695, %v4699
      %v4702 = vshrl.u32 %v4453, 16
      %v4704 = vrot.slane %v4702, 4
      %v4705 = vshll.u32 %v4453, 16
      %v4707 = vrot.slane %v4705, 5
      %v4708 = vor.u32 %v4704, %v4707
      %v4709 = vrot.slane %v4708, 4
      %v4711 = vshll.u32 %v4454, 16
      %v4713 = vrot.slane %v4711, 5
      %v4714 = vsel %vm779, %v4709, %v4713
      %v4715 = vshrl.u32 %v4454, 16
      %v4717 = vrot.slane %v4715, 4
      %v4718 = vor.u32 %v4717, %v4713
      %v4719 = vrot.slane %v4718, 4
      %v4721 = vshll.u32 %v4455, 16
      %v4723 = vrot.slane %v4721, 5
      %v4724 = vsel %vm779, %v4719, %v4723
      %v4726 = vshrl.u32 %v4456, 16
      %v4728 = vrot.slane %v4726, 4
      %v4729 = vshll.u32 %v4456, 16
      %v4731 = vrot.slane %v4729, 5
      %v4732 = vor.u32 %v4728, %v4731
      %v4733 = vrot.slane %v4732, 4
      %v4735 = vshll.u32 %v4457, 16
      %v4737 = vrot.slane %v4735, 5
      %v4738 = vsel %vm779, %v4733, %v4737
      %v4739 = vshrl.u32 %v4457, 16
      %v4741 = vrot.slane %v4739, 4
      %v4742 = vor.u32 %v4741, %v4737
      %v4743 = vrot.slane %v4742, 4
      %v4745 = vshll.u32 %v4458, 16
      %v4747 = vrot.slane %v4745, 5
      %v4748 = vsel %vm779, %v4743, %v4747
      %v4750 = vshrl.u32 %v4459, 16
      %v4752 = vrot.slane %v4750, 4
      %v4753 = vshll.u32 %v4459, 16
      %v4755 = vrot.slane %v4753, 5
      %v4756 = vor.u32 %v4752, %v4755
      %v4757 = vrot.slane %v4756, 4
      %v4759 = vshll.u32 %v4460, 16
      %v4761 = vrot.slane %v4759, 5
      %v4762 = vsel %vm779, %v4757, %v4761
      %v4763 = vshrl.u32 %v4460, 16
      %v4765 = vrot.slane %v4763, 4
      %v4766 = vor.u32 %v4765, %v4761
      %v4767 = vrot.slane %v4766, 4
      %v4769 = vshll.u32 %v4461, 16
      %v4771 = vrot.slane %v4769, 5
      %v4772 = vsel %vm779, %v4767, %v4771
      %v4774 = vshrl.u32 %v4462, 16
      %v4776 = vrot.slane %v4774, 4
      %v4777 = vshll.u32 %v4462, 16
      %v4779 = vrot.slane %v4777, 5
      %v4780 = vor.u32 %v4776, %v4779
      %v4781 = vrot.slane %v4780, 4
      %v4783 = vshll.u32 %v4463, 16
      %v4785 = vrot.slane %v4783, 5
      %v4786 = vsel %vm779, %v4781, %v4785
      %v4787 = vshrl.u32 %v4463, 16
      %v4789 = vrot.slane %v4787, 4
      %v4790 = vor.u32 %v4789, %v4785
      %v4791 = vrot.slane %v4790, 4
      %v4793 = vshll.u32 %v4464, 16
      %v4795 = vrot.slane %v4793, 5
      %v4796 = vsel %vm779, %v4791, %v4795
      %v4798 = vshrl.u32 %v4465, 16
      %v4800 = vrot.slane %v4798, 4
      %v4801 = vshll.u32 %v4465, 16
      %v4803 = vrot.slane %v4801, 5
      %v4804 = vor.u32 %v4800, %v4803
      %v4805 = vrot.slane %v4804, 4
      %v4807 = vshll.u32 %v4466, 16
      %v4809 = vrot.slane %v4807, 5
      %v4810 = vsel %vm779, %v4805, %v4809
      %v4811 = vshrl.u32 %v4466, 16
      %v4813 = vrot.slane %v4811, 4
      %v4814 = vor.u32 %v4813, %v4809
      %v4815 = vrot.slane %v4814, 4
      %v4817 = vshll.u32 %v4467, 16
      %v4819 = vrot.slane %v4817, 5
      %v4820 = vsel %vm779, %v4815, %v4819
      %v4822 = vshrl.u32 %v4468, 16
      %v4824 = vrot.slane %v4822, 4
      %v4825 = vshll.u32 %v4468, 16
      %v4827 = vrot.slane %v4825, 5
      %v4828 = vor.u32 %v4824, %v4827
      %v4829 = vrot.slane %v4828, 4
      %v4831 = vshll.u32 %v4469, 16
      %v4833 = vrot.slane %v4831, 5
      %v4834 = vsel %vm779, %v4829, %v4833
      %v4835 = vshrl.u32 %v4469, 16
      %v4837 = vrot.slane %v4835, 4
      %v4838 = vor.u32 %v4837, %v4833
      %v4839 = vrot.slane %v4838, 4
      %v4841 = vshll.u32 %v4470, 16
      %v4843 = vrot.slane %v4841, 5
      %v4844 = vsel %vm779, %v4839, %v4843
      %v4846 = vshrl.u32 %v4471, 16
      %v4848 = vrot.slane %v4846, 4
      %v4849 = vshll.u32 %v4471, 16
      %v4851 = vrot.slane %v4849, 5
      %v4852 = vor.u32 %v4848, %v4851
      %v4853 = vrot.slane %v4852, 4
      %v4855 = vshll.u32 %v4472, 16
      %v4857 = vrot.slane %v4855, 5
      %v4858 = vsel %vm779, %v4853, %v4857
      %v4859 = vshrl.u32 %v4472, 16
      %v4861 = vrot.slane %v4859, 4
      %v4862 = vor.u32 %v4861, %v4857
      %v4863 = vrot.slane %v4862, 4
      %v4865 = vshll.u32 %v4473, 16
      %v4867 = vrot.slane %v4865, 5
      %v4868 = vsel %vm779, %v4863, %v4867
      %v4870 = vshrl.u32 %v4474, 16
      %v4872 = vrot.slane %v4870, 4
      %v4873 = vshll.u32 %v4474, 16
      %v4875 = vrot.slane %v4873, 5
      %v4876 = vor.u32 %v4872, %v4875
      %v4877 = vrot.slane %v4876, 4
      %v4879 = vshll.u32 %v4475, 16
      %v4881 = vrot.slane %v4879, 5
      %v4882 = vsel %vm779, %v4877, %v4881
      %v4883 = vshrl.u32 %v4475, 16
      %v4885 = vrot.slane %v4883, 4
      %v4886 = vor.u32 %v4885, %v4881
      %v4887 = vrot.slane %v4886, 4
      %v4889 = vshll.u32 %v4476, 16
      %v4891 = vrot.slane %v4889, 5
      %v4892 = vsel %vm779, %v4887, %v4891
      %s4893 = scalar_lea.vmem %s1, 448
      %v4894 = vld [vmem:[%s4893] sm:$0xf]
      %v4895 = vld [vmem:[%s4893 + $0x4] sm:$0xf]
      %v4896 = vld [vmem:[%s4893 + $0x8] sm:$0xf]
      %v4897 = vld [vmem:[%s4893 + $0xc] sm:$0xf]
      %v4898 = vld [vmem:[%s4893 + $0x10] sm:$0xf]
      %v4899 = vld [vmem:[%s4893 + $0x14] sm:$0xf]
      %v4900 = vld [vmem:[%s4893 + $0x18] sm:$0xf]
      %v4901 = vld [vmem:[%s4893 + $0x1c] sm:$0xf]
      %v4902 = vld [vmem:[%s4893 + $0x20] sm:$0xf]
      %v4903 = vld [vmem:[%s4893 + $0x24] sm:$0xf]
      %v4904 = vld [vmem:[%s4893 + $0x28] sm:$0xf]
      %v4905 = vld [vmem:[%s4893 + $0x2c] sm:$0xf]
      %v4906 = vld [vmem:[%s4893 + $0x30] sm:$0xf]
      %v4907 = vld [vmem:[%s4893 + $0x34] sm:$0xf]
      %v4908 = vld [vmem:[%s4893 + $0x38] sm:$0xf]
      %v4909 = vld [vmem:[%s4893 + $0x3c] sm:$0xf]
      %v4910 = vunpack.c.l.b16 %v4522
      %v4911 = vunpack.c.l.b16 %v4532
      %v4912 = vunpack.c.l.b16 %v4546
      %v4913 = vunpack.c.l.b16 %v4556
      %v4914 = vunpack.c.l.b16 %v4570
      %v4915 = vunpack.c.l.b16 %v4580
      %v4916 = vunpack.c.l.b16 %v4594
      %v4917 = vunpack.c.l.b16 %v4604
      %v4918 = vunpack.c.l.b16 %v4618
      %v4919 = vunpack.c.l.b16 %v4628
      %v4920 = vunpack.c.l.b16 %v4642
      %v4921 = vunpack.c.l.b16 %v4652
      %v4922 = vunpack.c.l.b16 %v4666
      %v4923 = vunpack.c.l.b16 %v4676
      %v4924 = vunpack.c.l.b16 %v4690
      %v4925 = vunpack.c.l.b16 %v4700
      %v4926 = vunpack.c.l.b16 %v4714
      %v4927 = vunpack.c.l.b16 %v4724
      %v4928 = vunpack.c.l.b16 %v4738
      %v4929 = vunpack.c.l.b16 %v4748
      %v4930 = vunpack.c.l.b16 %v4762
      %v4931 = vunpack.c.l.b16 %v4772
      %v4932 = vunpack.c.l.b16 %v4786
      %v4933 = vunpack.c.l.b16 %v4796
      %v4934 = vunpack.c.l.b16 %v4810
      %v4935 = vunpack.c.l.b16 %v4820
      %v4936 = vunpack.c.l.b16 %v4834
      %v4937 = vunpack.c.l.b16 %v4844
      %v4938 = vunpack.c.l.b16 %v4858
      %v4939 = vunpack.c.l.b16 %v4868
      %v4940 = vunpack.c.l.b16 %v4882
      %v4941 = vunpack.c.l.b16 %v4892
      %v4942 = vpack.c.b16 %v4911, %v4910
      %v4943 = vpack.c.b16 %v4913, %v4912
      %v4944 = vpack.c.b16 %v4915, %v4914
      %v4945 = vpack.c.b16 %v4917, %v4916
      %v4946 = vpack.c.b16 %v4919, %v4918
      %v4947 = vpack.c.b16 %v4921, %v4920
      %v4948 = vpack.c.b16 %v4923, %v4922
      %v4949 = vpack.c.b16 %v4925, %v4924
      %v4950 = vpack.c.b16 %v4927, %v4926
      %v4951 = vpack.c.b16 %v4929, %v4928
      %v4952 = vpack.c.b16 %v4931, %v4930
      %v4953 = vpack.c.b16 %v4933, %v4932
      %v4954 = vpack.c.b16 %v4935, %v4934
      %v4955 = vpack.c.b16 %v4937, %v4936
      %v4956 = vpack.c.b16 %v4939, %v4938
      %v4957 = vpack.c.b16 %v4941, %v4940
      %v4990 = vunpack.c.l.b16 %v4894
      %v4991 = vunpack.c.l.b16 %v4895
      %v4992 = vunpack.c.l.b16 %v4896
      %v4993 = vunpack.c.l.b16 %v4897
      %v4994 = vunpack.c.l.b16 %v4898
      %v4995 = vunpack.c.l.b16 %v4899
      %v4996 = vunpack.c.l.b16 %v4900
      %v4997 = vunpack.c.l.b16 %v4901
      %v4998 = vunpack.c.l.b16 %v4902
      %v4999 = vunpack.c.l.b16 %v4903
      %v5000 = vunpack.c.l.b16 %v4904
      %v5001 = vunpack.c.l.b16 %v4905
      %v5002 = vunpack.c.l.b16 %v4906
      %v5003 = vunpack.c.l.b16 %v4907
      %v5004 = vunpack.c.l.b16 %v4908
      %v5005 = vunpack.c.l.b16 %v4909
      %v5006 = vpack.c.b16 %v4991, %v4990
      %v5007 = vpack.c.b16 %v4993, %v4992
      %v5008 = vpack.c.b16 %v4995, %v4994
      %v5009 = vpack.c.b16 %v4997, %v4996
      %v5010 = vpack.c.b16 %v4999, %v4998
      %v5011 = vpack.c.b16 %v5001, %v5000
      %v5012 = vpack.c.b16 %v5003, %v5002
      %v5013 = vpack.c.b16 %v5005, %v5004
      %5022 = vmatprep.subr.bf16.mxu0 0
      %5023 = vmatpush1.bf16.msra.mxu0 %v5006
      %5024 = vmatprep.subr.bf16.mxu0 0
      %5025 = vmatpush1.bf16.msra.mxu0 %v5007
      %5026 = vmatprep.subr.bf16.mxu0 0
      %5027 = vmatpush1.bf16.msra.mxu0 %v5008
      %5028 = vmatprep.subr.bf16.mxu0 0
      %5029 = vmatpush1.bf16.msra.mxu0 %v5009
      %5030 = vmatprep.subr.bf16.mxu0 0
      %5031 = vmatpush1.bf16.msra.mxu0 %v5010
      %5032 = vmatprep.subr.bf16.mxu0 0
      %5033 = vmatpush1.bf16.msra.mxu0 %v5011
      %5034 = vmatprep.subr.bf16.mxu0 0
      %5035 = vmatpush1.bf16.msra.mxu0 %v5012
      %5036 = vmatprep.subr.bf16.mxu0 0
      %5037 = vmatpush1.bf16.msra.mxu0 %v5013
      %5038 = vmatprep.subr.bf16.mxu0 0
      %5039 = vmatpush1.bf16.msra.mxu0 0
      %5040 = vmatprep.subr.bf16.mxu0 0
      %5041 = vmatpush1.bf16.msra.mxu0 0
      %5042 = vmatprep.subr.bf16.mxu0 0
      %5043 = vmatpush1.bf16.msra.mxu0 0
      %5044 = vmatprep.subr.bf16.mxu0 0
      %5045 = vmatpush1.bf16.msra.mxu0 0
      %5046 = vmatprep.subr.bf16.mxu0 0
      %5047 = vmatpush1.bf16.msra.mxu0 0
      %5048 = vmatprep.subr.bf16.mxu0 0
      %5049 = vmatpush1.bf16.msra.mxu0 0
      %5050 = vmatprep.subr.bf16.mxu0 0
      %5051 = vmatpush1.bf16.msra.mxu0 0
      %5052 = vmatprep.subr.bf16.mxu0 0
      %5053 = vmatpush1.bf16.msra.mxu0 0
      %5054 = vmatprep.mubr.bf16.mxu0 0
      %5055 = vmatmul.mubr.bf16.gmra.mrb[0].mxu0 %v4942
      %v5056 = vpop.f32.mrb[0].mxu0
      %v5057 = vadd.f32 0.0, %v5056
      %v5058 = vpop.f32.mrb[0].mxu0
      %v5059 = vpop.f32.mrb[0].mxu0
      %v5060 = vadd.f32 0.0, %v5059
      %v5061 = vpop.f32.mrb[0].mxu0
      %5062 = vmatprep.mubr.bf16.mxu0 0
      %5063 = vmatmul.mubr.bf16.gmra.mrb[0].mxu0 %v4943
      %v5064 = vpop.f32.mrb[0].mxu0
      %v5065 = vadd.f32 0.0, %v5064
      %v5066 = vpop.f32.mrb[0].mxu0
      %v5067 = vpop.f32.mrb[0].mxu0
      %v5068 = vadd.f32 0.0, %v5067
      %v5069 = vpop.f32.mrb[0].mxu0
      %5070 = vmatprep.mubr.bf16.mxu0 0
      %5071 = vmatmul.mubr.bf16.gmra.mrb[0].mxu0 %v4944
      %v5072 = vpop.f32.mrb[0].mxu0
      %v5073 = vadd.f32 0.0, %v5072
      %v5074 = vpop.f32.mrb[0].mxu0
      %v5075 = vpop.f32.mrb[0].mxu0
      %v5076 = vadd.f32 0.0, %v5075
      %v5077 = vpop.f32.mrb[0].mxu0
      %5078 = vmatprep.mubr.bf16.mxu0 0
      %5079 = vmatmul.mubr.bf16.gmra.mrb[0].mxu0 %v4945
      %v5080 = vpop.f32.mrb[0].mxu0
      %v5081 = vadd.f32 0.0, %v5080
      %v5082 = vpop.f32.mrb[0].mxu0
      %v5083 = vpop.f32.mrb[0].mxu0
      %v5084 = vadd.f32 0.0, %v5083
      %v5085 = vpop.f32.mrb[0].mxu0
      %5086 = vmatprep.mubr.bf16.mxu0 0
      %5087 = vmatmul.mubr.bf16.gmra.mrb[0].mxu0 %v4946
      %v5088 = vpop.f32.mrb[0].mxu0
      %v5089 = vadd.f32 0.0, %v5088
      %v5090 = vpop.f32.mrb[0].mxu0
      %v5091 = vpop.f32.mrb[0].mxu0
      %v5092 = vadd.f32 0.0, %v5091
      %v5093 = vpop.f32.mrb[0].mxu0
      %5094 = vmatprep.mubr.bf16.mxu0 0
      %5095 = vmatmul.mubr.bf16.gmra.mrb[0].mxu0 %v4947
      %v5096 = vpop.f32.mrb[0].mxu0
      %v5097 = vadd.f32 0.0, %v5096
      %v5098 = vpop.f32.mrb[0].mxu0
      %v5099 = vpop.f32.mrb[0].mxu0
      %v5100 = vadd.f32 0.0, %v5099
      %v5101 = vpop.f32.mrb[0].mxu0
      %5102 = vmatprep.mubr.bf16.mxu0 0
      %5103 = vmatmul.mubr.bf16.gmra.mrb[0].mxu0 %v4948
      %v5104 = vpop.f32.mrb[0].mxu0
      %v5105 = vadd.f32 0.0, %v5104
      %v5106 = vpop.f32.mrb[0].mxu0
      %v5107 = vpop.f32.mrb[0].mxu0
      %v5108 = vadd.f32 0.0, %v5107
      %v5109 = vpop.f32.mrb[0].mxu0
      %5110 = vmatprep.mubr.bf16.mxu0 0
      %5111 = vmatmul.mubr.bf16.gmra.mrb[0].mxu0 %v4949
      %v5112 = vpop.f32.mrb[0].mxu0
      %v5113 = vadd.f32 0.0, %v5112
      %v5114 = vpop.f32.mrb[0].mxu0
      %v5115 = vpop.f32.mrb[0].mxu0
      %v5116 = vadd.f32 0.0, %v5115
      %v5117 = vpop.f32.mrb[0].mxu0
      %5118 = vmatprep.mubr.bf16.mxu0 0
      %5119 = vmatmul.mubr.bf16.gmra.mrb[0].mxu0 %v4950
      %v5120 = vpop.f32.mrb[0].mxu0
      %v5121 = vadd.f32 0.0, %v5120
      %v5122 = vpop.f32.mrb[0].mxu0
      %v5123 = vpop.f32.mrb[0].mxu0
      %v5124 = vadd.f32 0.0, %v5123
      %v5125 = vpop.f32.mrb[0].mxu0
      %5126 = vmatprep.mubr.bf16.mxu0 0
      %5127 = vmatmul.mubr.bf16.gmra.mrb[0].mxu0 %v4951
      %v5128 = vpop.f32.mrb[0].mxu0
      %v5129 = vadd.f32 0.0, %v5128
      %v5130 = vpop.f32.mrb[0].mxu0
      %v5131 = vpop.f32.mrb[0].mxu0
      %v5132 = vadd.f32 0.0, %v5131
      %v5133 = vpop.f32.mrb[0].mxu0
      %5134 = vmatprep.mubr.bf16.mxu0 0
      %5135 = vmatmul.mubr.bf16.gmra.mrb[0].mxu0 %v4952
      %v5136 = vpop.f32.mrb[0].mxu0
      %v5137 = vadd.f32 0.0, %v5136
      %v5138 = vpop.f32.mrb[0].mxu0
      %v5139 = vpop.f32.mrb[0].mxu0
      %v5140 = vadd.f32 0.0, %v5139
      %v5141 = vpop.f32.mrb[0].mxu0
      %5142 = vmatprep.mubr.bf16.mxu0 0
      %5143 = vmatmul.mubr.bf16.gmra.mrb[0].mxu0 %v4953
      %v5144 = vpop.f32.mrb[0].mxu0
      %v5145 = vadd.f32 0.0, %v5144
      %v5146 = vpop.f32.mrb[0].mxu0
      %v5147 = vpop.f32.mrb[0].mxu0
      %v5148 = vadd.f32 0.0, %v5147
      %v5149 = vpop.f32.mrb[0].mxu0
      %5150 = vmatprep.mubr.bf16.mxu0 0
      %5151 = vmatmul.mubr.bf16.gmra.mrb[0].mxu0 %v4954
      %v5152 = vpop.f32.mrb[0].mxu0
      %v5153 = vadd.f32 0.0, %v5152
      %v5154 = vpop.f32.mrb[0].mxu0
      %v5155 = vpop.f32.mrb[0].mxu0
      %v5156 = vadd.f32 0.0, %v5155
      %v5157 = vpop.f32.mrb[0].mxu0
      %5158 = vmatprep.mubr.bf16.mxu0 0
      %5159 = vmatmul.mubr.bf16.gmra.mrb[0].mxu0 %v4955
      %v5160 = vpop.f32.mrb[0].mxu0
      %v5161 = vadd.f32 0.0, %v5160
      %v5162 = vpop.f32.mrb[0].mxu0
      %v5163 = vpop.f32.mrb[0].mxu0
      %v5164 = vadd.f32 0.0, %v5163
      %v5165 = vpop.f32.mrb[0].mxu0
      %5166 = vmatprep.mubr.bf16.mxu0 0
      %5167 = vmatmul.mubr.bf16.gmra.mrb[0].mxu0 %v4956
      %v5168 = vpop.f32.mrb[0].mxu0
      %v5169 = vadd.f32 0.0, %v5168
      %v5170 = vpop.f32.mrb[0].mxu0
      %v5171 = vpop.f32.mrb[0].mxu0
      %v5172 = vadd.f32 0.0, %v5171
      %v5173 = vpop.f32.mrb[0].mxu0
      %5174 = vmatprep.mubr.bf16.mxu0 0
      %5175 = vmatmul.mubr.bf16.gmra.mrb[0].mxu0 %v4957
      %v5176 = vpop.f32.mrb[0].mxu0
      %v5177 = vadd.f32 0.0, %v5176
      %v5178 = vpop.f32.mrb[0].mxu0
      %v5179 = vpop.f32.mrb[0].mxu0
      %v5180 = vadd.f32 0.0, %v5179
      %v5181 = vpop.f32.mrb[0].mxu0
      %5182 = vdwg.mxu0
      %v5183 = vadd.f32 %v4477, %v5057
      %v5184 = vadd.f32 %v4478, %v5060
      %v5185 = vadd.f32 %v4479, %v5065
      %v5186 = vadd.f32 %v4480, %v5068
      %v5187 = vadd.f32 %v4481, %v5073
      %v5188 = vadd.f32 %v4482, %v5076
      %v5189 = vadd.f32 %v4483, %v5081
      %v5190 = vadd.f32 %v4484, %v5084
      %v5191 = vadd.f32 %v4485, %v5089
      %v5192 = vadd.f32 %v4486, %v5092
      %v5193 = vadd.f32 %v4487, %v5097
      %v5194 = vadd.f32 %v4488, %v5100
      %v5195 = vadd.f32 %v4489, %v5105
      %v5196 = vadd.f32 %v4490, %v5108
      %v5197 = vadd.f32 %v4491, %v5113
      %v5198 = vadd.f32 %v4492, %v5116
      %v5199 = vadd.f32 %v4493, %v5121
      %v5200 = vadd.f32 %v4494, %v5124
      %v5201 = vadd.f32 %v4495, %v5129
      %v5202 = vadd.f32 %v4496, %v5132
      %v5203 = vadd.f32 %v4497, %v5137
      %v5204 = vadd.f32 %v4498, %v5140
      %v5205 = vadd.f32 %v4499, %v5145
      %v5206 = vadd.f32 %v4500, %v5148
      %v5207 = vadd.f32 %v4501, %v5153
      %v5208 = vadd.f32 %v4502, %v5156
      %v5209 = vadd.f32 %v4503, %v5161
      %v5210 = vadd.f32 %v4504, %v5164
      %v5211 = vadd.f32 %v4505, %v5169
      %v5212 = vadd.f32 %v4506, %v5172
      %v5213 = vadd.f32 %v4507, %v5177
      %v5214 = vadd.f32 %v4508, %v5180
      %5215 = vst [vmem:[#allocation2] sm:$0xff] %v5183
      %5216 = vst [vmem:[#allocation2 + $0x8] sm:$0xff] %v5184
      %5217 = vst [vmem:[#allocation2 + $0x10] sm:$0xff] %v5185
      %5218 = vst [vmem:[#allocation2 + $0x18] sm:$0xff] %v5186
      %5219 = vst [vmem:[#allocation2 + $0x20] sm:$0xff] %v5187
      %5220 = vst [vmem:[#allocation2 + $0x28] sm:$0xff] %v5188
      %5221 = vst [vmem:[#allocation2 + $0x30] sm:$0xff] %v5189
      %5222 = vst [vmem:[#allocation2 + $0x38] sm:$0xff] %v5190
      %5223 = vst [vmem:[#allocation2 + $0x40] sm:$0xff] %v5191
      %5224 = vst [vmem:[#allocation2 + $0x48] sm:$0xff] %v5192
      %5225 = vst [vmem:[#allocation2 + $0x50] sm:$0xff] %v5193
      %5226 = vst [vmem:[#allocation2 + $0x58] sm:$0xff] %v5194
      %5227 = vst [vmem:[#allocation2 + $0x60] sm:$0xff] %v5195
      %5228 = vst [vmem:[#allocation2 + $0x68] sm:$0xff] %v5196
      %5229 = vst [vmem:[#allocation2 + $0x70] sm:$0xff] %v5197
      %5230 = vst [vmem:[#allocation2 + $0x78] sm:$0xff] %v5198
      %5231 = vst [vmem:[#allocation2 + $0x80] sm:$0xff] %v5199
      %5232 = vst [vmem:[#allocation2 + $0x88] sm:$0xff] %v5200
      %5233 = vst [vmem:[#allocation2 + $0x90] sm:$0xff] %v5201
      %5234 = vst [vmem:[#allocation2 + $0x98] sm:$0xff] %v5202
      %5235 = vst [vmem:[#allocation2 + $0xa0] sm:$0xff] %v5203
      %5236 = vst [vmem:[#allocation2 + $0xa8] sm:$0xff] %v5204
      %5237 = vst [vmem:[#allocation2 + $0xb0] sm:$0xff] %v5205
      %5238 = vst [vmem:[#allocation2 + $0xb8] sm:$0xff] %v5206
      %5239 = vst [vmem:[#allocation2 + $0xc0] sm:$0xff] %v5207
      %5240 = vst [vmem:[#allocation2 + $0xc8] sm:$0xff] %v5208
      %5241 = vst [vmem:[#allocation2 + $0xd0] sm:$0xff] %v5209
      %5242 = vst [vmem:[#allocation2 + $0xd8] sm:$0xff] %v5210
      %5243 = vst [vmem:[#allocation2 + $0xe0] sm:$0xff] %v5211
      %5244 = vst [vmem:[#allocation2 + $0xe8] sm:$0xff] %v5212
      %5245 = vst [vmem:[#allocation2 + $0xf0] sm:$0xff] %v5213
      %5246 = vst [vmem:[#allocation2 + $0xf8] sm:$0xff] %v5214
      %v5247 = vld [vmem:[%s3978] sm:$0xe]
      %v5248 = vld [vmem:[%s3978 + $0x4] sm:$0xf]
      %v5249 = vld [vmem:[%s3978 + $0x8] sm:$0x1]
      %v5250 = vld [vmem:[%s3978 + $0xc] sm:$0xe]
      %v5251 = vld [vmem:[%s3978 + $0x10] sm:$0xf]
      %v5252 = vld [vmem:[%s3978 + $0x14] sm:$0x1]
      %v5253 = vld [vmem:[%s3978 + $0x18] sm:$0xe]
      %v5254 = vld [vmem:[%s3978 + $0x1c] sm:$0xf]
      %v5255 = vld [vmem:[%s3978 + $0x20] sm:$0x1]
      %v5256 = vld [vmem:[%s3978 + $0x24] sm:$0xe]
      %v5257 = vld [vmem:[%s3978 + $0x28] sm:$0xf]
      %v5258 = vld [vmem:[%s3978 + $0x2c] sm:$0x1]
      %v5259 = vld [vmem:[%s3978 + $0x30] sm:$0xe]
      %v5260 = vld [vmem:[%s3978 + $0x34] sm:$0xf]
      %v5261 = vld [vmem:[%s3978 + $0x38] sm:$0x1]
      %v5262 = vld [vmem:[%s3978 + $0x3c] sm:$0xe]
      %v5263 = vld [vmem:[%s3978 + $0x40] sm:$0xf]
      %v5264 = vld [vmem:[%s3978 + $0x44] sm:$0x1]
      %v5265 = vld [vmem:[%s3978 + $0x48] sm:$0xe]
      %v5266 = vld [vmem:[%s3978 + $0x4c] sm:$0xf]
      %v5267 = vld [vmem:[%s3978 + $0x50] sm:$0x1]
      %v5268 = vld [vmem:[%s3978 + $0x54] sm:$0xe]
      %v5269 = vld [vmem:[%s3978 + $0x58] sm:$0xf]
      %v5270 = vld [vmem:[%s3978 + $0x5c] sm:$0x1]
      %v5271 = vld [vmem:[%s3978 + $0x60] sm:$0xe]
      %v5272 = vld [vmem:[%s3978 + $0x64] sm:$0xf]
      %v5273 = vld [vmem:[%s3978 + $0x68] sm:$0x1]
      %v5274 = vld [vmem:[%s3978 + $0x6c] sm:$0xe]
      %v5275 = vld [vmem:[%s3978 + $0x70] sm:$0xf]
      %v5276 = vld [vmem:[%s3978 + $0x74] sm:$0x1]
      %v5277 = vld [vmem:[%s3978 + $0x78] sm:$0xe]
      %v5278 = vld [vmem:[%s3978 + $0x7c] sm:$0xf]
      %v5279 = vld [vmem:[%s3978 + $0x80] sm:$0x1]
      %v5280 = vld [vmem:[%s3978 + $0x84] sm:$0xe]
      %v5281 = vld [vmem:[%s3978 + $0x88] sm:$0xf]
      %v5282 = vld [vmem:[%s3978 + $0x8c] sm:$0x1]
      %v5283 = vld [vmem:[%s3978 + $0x90] sm:$0xe]
      %v5284 = vld [vmem:[%s3978 + $0x94] sm:$0xf]
      %v5285 = vld [vmem:[%s3978 + $0x98] sm:$0x1]
      %v5286 = vld [vmem:[%s3978 + $0x9c] sm:$0xe]
      %v5287 = vld [vmem:[%s3978 + $0xa0] sm:$0xf]
      %v5288 = vld [vmem:[%s3978 + $0xa4] sm:$0x1]
      %v5289 = vld [vmem:[%s3978 + $0xa8] sm:$0xe]
      %v5290 = vld [vmem:[%s3978 + $0xac] sm:$0xf]
      %v5291 = vld [vmem:[%s3978 + $0xb0] sm:$0x1]
      %v5292 = vld [vmem:[%s3978 + $0xb4] sm:$0xe]
      %v5293 = vld [vmem:[%s3978 + $0xb8] sm:$0xf]
      %v5294 = vld [vmem:[%s3978 + $0xbc] sm:$0x1]
      %v5295 = vld [vmem:[#allocation2] sm:$0xff]
      %v5296 = vld [vmem:[#allocation2 + $0x8] sm:$0xff]
      %v5297 = vld [vmem:[#allocation2 + $0x10] sm:$0xff]
      %v5298 = vld [vmem:[#allocation2 + $0x18] sm:$0xff]
      %v5299 = vld [vmem:[#allocation2 + $0x20] sm:$0xff]
      %v5300 = vld [vmem:[#allocation2 + $0x28] sm:$0xff]
      %v5301 = vld [vmem:[#allocation2 + $0x30] sm:$0xff]
      %v5302 = vld [vmem:[#allocation2 + $0x38] sm:$0xff]
      %v5303 = vld [vmem:[#allocation2 + $0x40] sm:$0xff]
      %v5304 = vld [vmem:[#allocation2 + $0x48] sm:$0xff]
      %v5305 = vld [vmem:[#allocation2 + $0x50] sm:$0xff]
      %v5306 = vld [vmem:[#allocation2 + $0x58] sm:$0xff]
      %v5307 = vld [vmem:[#allocation2 + $0x60] sm:$0xff]
      %v5308 = vld [vmem:[#allocation2 + $0x68] sm:$0xff]
      %v5309 = vld [vmem:[#allocation2 + $0x70] sm:$0xff]
      %v5310 = vld [vmem:[#allocation2 + $0x78] sm:$0xff]
      %v5311 = vld [vmem:[#allocation2 + $0x80] sm:$0xff]
      %v5312 = vld [vmem:[#allocation2 + $0x88] sm:$0xff]
      %v5313 = vld [vmem:[#allocation2 + $0x90] sm:$0xff]
      %v5314 = vld [vmem:[#allocation2 + $0x98] sm:$0xff]
      %v5315 = vld [vmem:[#allocation2 + $0xa0] sm:$0xff]
      %v5316 = vld [vmem:[#allocation2 + $0xa8] sm:$0xff]
      %v5317 = vld [vmem:[#allocation2 + $0xb0] sm:$0xff]
      %v5318 = vld [vmem:[#allocation2 + $0xb8] sm:$0xff]
      %v5319 = vld [vmem:[#allocation2 + $0xc0] sm:$0xff]
      %v5320 = vld [vmem:[#allocation2 + $0xc8] sm:$0xff]
      %v5321 = vld [vmem:[#allocation2 + $0xd0] sm:$0xff]
      %v5322 = vld [vmem:[#allocation2 + $0xd8] sm:$0xff]
      %v5323 = vld [vmem:[#allocation2 + $0xe0] sm:$0xff]
      %v5324 = vld [vmem:[#allocation2 + $0xe8] sm:$0xff]
      %v5325 = vld [vmem:[#allocation2 + $0xf0] sm:$0xff]
      %v5326 = vld [vmem:[#allocation2 + $0xf8] sm:$0xff]
      %v5375 = vrot.slane %v5247, 5
      %v5376 = vrot.slane %v5375, 4
      %v5377 = vrot.slane %v5248, 5
      %v5378 = vsel %vm1648, %v5376, %v5377
      %v5379 = vrot.slane %v5377, 4
      %v5380 = vrot.slane %v5249, 5
      %v5381 = vsel %vm1648, %v5379, %v5380
      %v5382 = vrot.slane %v5250, 5
      %v5383 = vrot.slane %v5382, 4
      %v5384 = vrot.slane %v5251, 5
      %v5385 = vsel %vm1648, %v5383, %v5384
      %v5386 = vrot.slane %v5384, 4
      %v5387 = vrot.slane %v5252, 5
      %v5388 = vsel %vm1648, %v5386, %v5387
      %v5389 = vrot.slane %v5253, 5
      %v5390 = vrot.slane %v5389, 4
      %v5391 = vrot.slane %v5254, 5
      %v5392 = vsel %vm1648, %v5390, %v5391
      %v5393 = vrot.slane %v5391, 4
      %v5394 = vrot.slane %v5255, 5
      %v5395 = vsel %vm1648, %v5393, %v5394
      %v5396 = vrot.slane %v5256, 5
      %v5397 = vrot.slane %v5396, 4
      %v5398 = vrot.slane %v5257, 5
      %v5399 = vsel %vm1648, %v5397, %v5398
      %v5400 = vrot.slane %v5398, 4
      %v5401 = vrot.slane %v5258, 5
      %v5402 = vsel %vm1648, %v5400, %v5401
      %v5403 = vrot.slane %v5259, 5
      %v5404 = vrot.slane %v5403, 4
      %v5405 = vrot.slane %v5260, 5
      %v5406 = vsel %vm1648, %v5404, %v5405
      %v5407 = vrot.slane %v5405, 4
      %v5408 = vrot.slane %v5261, 5
      %v5409 = vsel %vm1648, %v5407, %v5408
      %v5410 = vrot.slane %v5262, 5
      %v5411 = vrot.slane %v5410, 4
      %v5412 = vrot.slane %v5263, 5
      %v5413 = vsel %vm1648, %v5411, %v5412
      %v5414 = vrot.slane %v5412, 4
      %v5415 = vrot.slane %v5264, 5
      %v5416 = vsel %vm1648, %v5414, %v5415
      %v5417 = vrot.slane %v5265, 5
      %v5418 = vrot.slane %v5417, 4
      %v5419 = vrot.slane %v5266, 5
      %v5420 = vsel %vm1648, %v5418, %v5419
      %v5421 = vrot.slane %v5419, 4
      %v5422 = vrot.slane %v5267, 5
      %v5423 = vsel %vm1648, %v5421, %v5422
      %v5424 = vrot.slane %v5268, 5
      %v5425 = vrot.slane %v5424, 4
      %v5426 = vrot.slane %v5269, 5
      %v5427 = vsel %vm1648, %v5425, %v5426
      %v5428 = vrot.slane %v5426, 4
      %v5429 = vrot.slane %v5270, 5
      %v5430 = vsel %vm1648, %v5428, %v5429
      %v5431 = vrot.slane %v5271, 5
      %v5432 = vrot.slane %v5431, 4
      %v5433 = vrot.slane %v5272, 5
      %v5434 = vsel %vm1648, %v5432, %v5433
      %v5435 = vrot.slane %v5433, 4
      %v5436 = vrot.slane %v5273, 5
      %v5437 = vsel %vm1648, %v5435, %v5436
      %v5438 = vrot.slane %v5274, 5
      %v5439 = vrot.slane %v5438, 4
      %v5440 = vrot.slane %v5275, 5
      %v5441 = vsel %vm1648, %v5439, %v5440
      %v5442 = vrot.slane %v5440, 4
      %v5443 = vrot.slane %v5276, 5
      %v5444 = vsel %vm1648, %v5442, %v5443
      %v5445 = vrot.slane %v5277, 5
      %v5446 = vrot.slane %v5445, 4
      %v5447 = vrot.slane %v5278, 5
      %v5448 = vsel %vm1648, %v5446, %v5447
      %v5449 = vrot.slane %v5447, 4
      %v5450 = vrot.slane %v5279, 5
      %v5451 = vsel %vm1648, %v5449, %v5450
      %v5452 = vrot.slane %v5280, 5
      %v5453 = vrot.slane %v5452, 4
      %v5454 = vrot.slane %v5281, 5
      %v5455 = vsel %vm1648, %v5453, %v5454
      %v5456 = vrot.slane %v5454, 4
      %v5457 = vrot.slane %v5282, 5
      %v5458 = vsel %vm1648, %v5456, %v5457
      %v5459 = vrot.slane %v5283, 5
      %v5460 = vrot.slane %v5459, 4
      %v5461 = vrot.slane %v5284, 5
      %v5462 = vsel %vm1648, %v5460, %v5461
      %v5463 = vrot.slane %v5461, 4
      %v5464 = vrot.slane %v5285, 5
      %v5465 = vsel %vm1648, %v5463, %v5464
      %v5466 = vrot.slane %v5286, 5
      %v5467 = vrot.slane %v5466, 4
      %v5468 = vrot.slane %v5287, 5
      %v5469 = vsel %vm1648, %v5467, %v5468
      %v5470 = vrot.slane %v5468, 4
      %v5471 = vrot.slane %v5288, 5
      %v5472 = vsel %vm1648, %v5470, %v5471
      %v5473 = vrot.slane %v5289, 5
      %v5474 = vrot.slane %v5473, 4
      %v5475 = vrot.slane %v5290, 5
      %v5476 = vsel %vm1648, %v5474, %v5475
      %v5477 = vrot.slane %v5475, 4
      %v5478 = vrot.slane %v5291, 5
      %v5479 = vsel %vm1648, %v5477, %v5478
      %v5480 = vrot.slane %v5292, 5
      %v5481 = vrot.slane %v5480, 4
      %v5482 = vrot.slane %v5293, 5
      %v5483 = vsel %vm1648, %v5481, %v5482
      %v5484 = vrot.slane %v5482, 4
      %v5485 = vrot.slane %v5294, 5
      %v5486 = vsel %vm1648, %v5484, %v5485
      %s5487 = scalar_lea.vmem %s1, 512
      %v5488 = vld [vmem:[%s5487] sm:$0xf]
      %v5489 = vld [vmem:[%s5487 + $0x4] sm:$0xf]
      %v5490 = vld [vmem:[%s5487 + $0x8] sm:$0xf]
      %v5491 = vld [vmem:[%s5487 + $0xc] sm:$0xf]
      %v5492 = vld [vmem:[%s5487 + $0x10] sm:$0xf]
      %v5493 = vld [vmem:[%s5487 + $0x14] sm:$0xf]
      %v5494 = vld [vmem:[%s5487 + $0x18] sm:$0xf]
      %v5495 = vld [vmem:[%s5487 + $0x1c] sm:$0xf]
      %v5496 = vld [vmem:[%s5487 + $0x20] sm:$0xf]
      %v5497 = vld [vmem:[%s5487 + $0x24] sm:$0xf]
      %v5498 = vld [vmem:[%s5487 + $0x28] sm:$0xf]
      %v5499 = vld [vmem:[%s5487 + $0x2c] sm:$0xf]
      %v5500 = vld [vmem:[%s5487 + $0x30] sm:$0xf]
      %v5501 = vld [vmem:[%s5487 + $0x34] sm:$0xf]
      %v5502 = vld [vmem:[%s5487 + $0x38] sm:$0xf]
      %v5503 = vld [vmem:[%s5487 + $0x3c] sm:$0xf]
      %v5504 = vunpack.c.l.b16 %v5378
      %v5505 = vunpack.c.l.b16 %v5381
      %v5506 = vunpack.c.l.b16 %v5385
      %v5507 = vunpack.c.l.b16 %v5388
      %v5508 = vunpack.c.l.b16 %v5392
      %v5509 = vunpack.c.l.b16 %v5395
      %v5510 = vunpack.c.l.b16 %v5399
      %v5511 = vunpack.c.l.b16 %v5402
      %v5512 = vunpack.c.l.b16 %v5406
      %v5513 = vunpack.c.l.b16 %v5409
      %v5514 = vunpack.c.l.b16 %v5413
      %v5515 = vunpack.c.l.b16 %v5416
      %v5516 = vunpack.c.l.b16 %v5420
      %v5517 = vunpack.c.l.b16 %v5423
      %v5518 = vunpack.c.l.b16 %v5427
      %v5519 = vunpack.c.l.b16 %v5430
      %v5520 = vunpack.c.l.b16 %v5434
      %v5521 = vunpack.c.l.b16 %v5437
      %v5522 = vunpack.c.l.b16 %v5441
      %v5523 = vunpack.c.l.b16 %v5444
      %v5524 = vunpack.c.l.b16 %v5448
      %v5525 = vunpack.c.l.b16 %v5451
      %v5526 = vunpack.c.l.b16 %v5455
      %v5527 = vunpack.c.l.b16 %v5458
      %v5528 = vunpack.c.l.b16 %v5462
      %v5529 = vunpack.c.l.b16 %v5465
      %v5530 = vunpack.c.l.b16 %v5469
      %v5531 = vunpack.c.l.b16 %v5472
      %v5532 = vunpack.c.l.b16 %v5476
      %v5533 = vunpack.c.l.b16 %v5479
      %v5534 = vunpack.c.l.b16 %v5483
      %v5535 = vunpack.c.l.b16 %v5486
      %v5536 = vpack.c.b16 %v5505, %v5504
      %v5537 = vpack.c.b16 %v5507, %v5506
      %v5538 = vpack.c.b16 %v5509, %v5508
      %v5539 = vpack.c.b16 %v5511, %v5510
      %v5540 = vpack.c.b16 %v5513, %v5512
      %v5541 = vpack.c.b16 %v5515, %v5514
      %v5542 = vpack.c.b16 %v5517, %v5516
      %v5543 = vpack.c.b16 %v5519, %v5518
      %v5544 = vpack.c.b16 %v5521, %v5520
      %v5545 = vpack.c.b16 %v5523, %v5522
      %v5546 = vpack.c.b16 %v5525, %v5524
      %v5547 = vpack.c.b16 %v5527, %v5526
      %v5548 = vpack.c.b16 %v5529, %v5528
      %v5549 = vpack.c.b16 %v5531, %v5530
      %v5550 = vpack.c.b16 %v5533, %v5532
      %v5551 = vpack.c.b16 %v5535, %v5534
      %v5584 = vunpack.c.l.b16 %v5488
      %v5585 = vunpack.c.l.b16 %v5489
      %v5586 = vunpack.c.l.b16 %v5490
      %v5587 = vunpack.c.l.b16 %v5491
      %v5588 = vunpack.c.l.b16 %v5492
      %v5589 = vunpack.c.l.b16 %v5493
      %v5590 = vunpack.c.l.b16 %v5494
      %v5591 = vunpack.c.l.b16 %v5495
      %v5592 = vunpack.c.l.b16 %v5496
      %v5593 = vunpack.c.l.b16 %v5497
      %v5594 = vunpack.c.l.b16 %v5498
      %v5595 = vunpack.c.l.b16 %v5499
      %v5596 = vunpack.c.l.b16 %v5500
      %v5597 = vunpack.c.l.b16 %v5501
      %v5598 = vunpack.c.l.b16 %v5502
      %v5599 = vunpack.c.l.b16 %v5503
      %v5600 = vpack.c.b16 %v5585, %v5584
      %v5601 = vpack.c.b16 %v5587, %v5586
      %v5602 = vpack.c.b16 %v5589, %v5588
      %v5603 = vpack.c.b16 %v5591, %v5590
      %v5604 = vpack.c.b16 %v5593, %v5592
      %v5605 = vpack.c.b16 %v5595, %v5594
      %v5606 = vpack.c.b16 %v5597, %v5596
      %v5607 = vpack.c.b16 %v5599, %v5598
      %5616 = vmatprep.subr.bf16.mxu0 0
      %5617 = vmatpush1.bf16.msra.mxu0 %v5600
      %5618 = vmatprep.subr.bf16.mxu0 0
      %5619 = vmatpush1.bf16.msra.mxu0 %v5601
      %5620 = vmatprep.subr.bf16.mxu0 0
      %5621 = vmatpush1.bf16.msra.mxu0 %v5602
      %5622 = vmatprep.subr.bf16.mxu0 0
      %5623 = vmatpush1.bf16.msra.mxu0 %v5603
      %5624 = vmatprep.subr.bf16.mxu0 0
      %5625 = vmatpush1.bf16.msra.mxu0 %v5604
      %5626 = vmatprep.subr.bf16.mxu0 0
      %5627 = vmatpush1.bf16.msra.mxu0 %v5605
      %5628 = vmatprep.subr.bf16.mxu0 0
      %5629 = vmatpush1.bf16.msra.mxu0 %v5606
      %5630 = vmatprep.subr.bf16.mxu0 0
      %5631 = vmatpush1.bf16.msra.mxu0 %v5607
      %5632 = vmatprep.subr.bf16.mxu0 0
      %5633 = vmatpush1.bf16.msra.mxu0 0
      %5634 = vmatprep.subr.bf16.mxu0 0
      %5635 = vmatpush1.bf16.msra.mxu0 0
      %5636 = vmatprep.subr.bf16.mxu0 0
      %5637 = vmatpush1.bf16.msra.mxu0 0
      %5638 = vmatprep.subr.bf16.mxu0 0
      %5639 = vmatpush1.bf16.msra.mxu0 0
      %5640 = vmatprep.subr.bf16.mxu0 0
      %5641 = vmatpush1.bf16.msra.mxu0 0
      %5642 = vmatprep.subr.bf16.mxu0 0
      %5643 = vmatpush1.bf16.msra.mxu0 0
      %5644 = vmatprep.subr.bf16.mxu0 0
      %5645 = vmatpush1.bf16.msra.mxu0 0
      %5646 = vmatprep.subr.bf16.mxu0 0
      %5647 = vmatpush1.bf16.msra.mxu0 0
      %5648 = vmatprep.mubr.bf16.mxu0 0
      %5649 = vmatmul.mubr.bf16.gmra.mrb[0].mxu0 %v5536
      %v5650 = vpop.f32.mrb[0].mxu0
      %v5651 = vadd.f32 0.0, %v5650
      %v5652 = vpop.f32.mrb[0].mxu0
      %v5653 = vpop.f32.mrb[0].mxu0
      %v5654 = vadd.f32 0.0, %v5653
      %v5655 = vpop.f32.mrb[0].mxu0
      %5656 = vmatprep.mubr.bf16.mxu0 0
      %5657 = vmatmul.mubr.bf16.gmra.mrb[0].mxu0 %v5537
      %v5658 = vpop.f32.mrb[0].mxu0
      %v5659 = vadd.f32 0.0, %v5658
      %v5660 = vpop.f32.mrb[0].mxu0
      %v5661 = vpop.f32.mrb[0].mxu0
      %v5662 = vadd.f32 0.0, %v5661
      %v5663 = vpop.f32.mrb[0].mxu0
      %5664 = vmatprep.mubr.bf16.mxu0 0
      %5665 = vmatmul.mubr.bf16.gmra.mrb[0].mxu0 %v5538
      %v5666 = vpop.f32.mrb[0].mxu0
      %v5667 = vadd.f32 0.0, %v5666
      %v5668 = vpop.f32.mrb[0].mxu0
      %v5669 = vpop.f32.mrb[0].mxu0
      %v5670 = vadd.f32 0.0, %v5669
      %v5671 = vpop.f32.mrb[0].mxu0
      %5672 = vmatprep.mubr.bf16.mxu0 0
      %5673 = vmatmul.mubr.bf16.gmra.mrb[0].mxu0 %v5539
      %v5674 = vpop.f32.mrb[0].mxu0
      %v5675 = vadd.f32 0.0, %v5674
      %v5676 = vpop.f32.mrb[0].mxu0
      %v5677 = vpop.f32.mrb[0].mxu0
      %v5678 = vadd.f32 0.0, %v5677
      %v5679 = vpop.f32.mrb[0].mxu0
      %5680 = vmatprep.mubr.bf16.mxu0 0
      %5681 = vmatmul.mubr.bf16.gmra.mrb[0].mxu0 %v5540
      %v5682 = vpop.f32.mrb[0].mxu0
      %v5683 = vadd.f32 0.0, %v5682
      %v5684 = vpop.f32.mrb[0].mxu0
      %v5685 = vpop.f32.mrb[0].mxu0
      %v5686 = vadd.f32 0.0, %v5685
      %v5687 = vpop.f32.mrb[0].mxu0
      %5688 = vmatprep.mubr.bf16.mxu0 0
      %5689 = vmatmul.mubr.bf16.gmra.mrb[0].mxu0 %v5541
      %v5690 = vpop.f32.mrb[0].mxu0
      %v5691 = vadd.f32 0.0, %v5690
      %v5692 = vpop.f32.mrb[0].mxu0
      %v5693 = vpop.f32.mrb[0].mxu0
      %v5694 = vadd.f32 0.0, %v5693
      %v5695 = vpop.f32.mrb[0].mxu0
      %5696 = vmatprep.mubr.bf16.mxu0 0
      %5697 = vmatmul.mubr.bf16.gmra.mrb[0].mxu0 %v5542
      %v5698 = vpop.f32.mrb[0].mxu0
      %v5699 = vadd.f32 0.0, %v5698
      %v5700 = vpop.f32.mrb[0].mxu0
      %v5701 = vpop.f32.mrb[0].mxu0
      %v5702 = vadd.f32 0.0, %v5701
      %v5703 = vpop.f32.mrb[0].mxu0
      %5704 = vmatprep.mubr.bf16.mxu0 0
      %5705 = vmatmul.mubr.bf16.gmra.mrb[0].mxu0 %v5543
      %v5706 = vpop.f32.mrb[0].mxu0
      %v5707 = vadd.f32 0.0, %v5706
      %v5708 = vpop.f32.mrb[0].mxu0
      %v5709 = vpop.f32.mrb[0].mxu0
      %v5710 = vadd.f32 0.0, %v5709
      %v5711 = vpop.f32.mrb[0].mxu0
      %5712 = vmatprep.mubr.bf16.mxu0 0
      %5713 = vmatmul.mubr.bf16.gmra.mrb[0].mxu0 %v5544
      %v5714 = vpop.f32.mrb[0].mxu0
      %v5715 = vadd.f32 0.0, %v5714
      %v5716 = vpop.f32.mrb[0].mxu0
      %v5717 = vpop.f32.mrb[0].mxu0
      %v5718 = vadd.f32 0.0, %v5717
      %v5719 = vpop.f32.mrb[0].mxu0
      %5720 = vmatprep.mubr.bf16.mxu0 0
      %5721 = vmatmul.mubr.bf16.gmra.mrb[0].mxu0 %v5545
      %v5722 = vpop.f32.mrb[0].mxu0
      %v5723 = vadd.f32 0.0, %v5722
      %v5724 = vpop.f32.mrb[0].mxu0
      %v5725 = vpop.f32.mrb[0].mxu0
      %v5726 = vadd.f32 0.0, %v5725
      %v5727 = vpop.f32.mrb[0].mxu0
      %5728 = vmatprep.mubr.bf16.mxu0 0
      %5729 = vmatmul.mubr.bf16.gmra.mrb[0].mxu0 %v5546
      %v5730 = vpop.f32.mrb[0].mxu0
      %v5731 = vadd.f32 0.0, %v5730
      %v5732 = vpop.f32.mrb[0].mxu0
      %v5733 = vpop.f32.mrb[0].mxu0
      %v5734 = vadd.f32 0.0, %v5733
      %v5735 = vpop.f32.mrb[0].mxu0
      %5736 = vmatprep.mubr.bf16.mxu0 0
      %5737 = vmatmul.mubr.bf16.gmra.mrb[0].mxu0 %v5547
      %v5738 = vpop.f32.mrb[0].mxu0
      %v5739 = vadd.f32 0.0, %v5738
      %v5740 = vpop.f32.mrb[0].mxu0
      %v5741 = vpop.f32.mrb[0].mxu0
      %v5742 = vadd.f32 0.0, %v5741
      %v5743 = vpop.f32.mrb[0].mxu0
      %5744 = vmatprep.mubr.bf16.mxu0 0
      %5745 = vmatmul.mubr.bf16.gmra.mrb[0].mxu0 %v5548
      %v5746 = vpop.f32.mrb[0].mxu0
      %v5747 = vadd.f32 0.0, %v5746
      %v5748 = vpop.f32.mrb[0].mxu0
      %v5749 = vpop.f32.mrb[0].mxu0
      %v5750 = vadd.f32 0.0, %v5749
      %v5751 = vpop.f32.mrb[0].mxu0
      %5752 = vmatprep.mubr.bf16.mxu0 0
      %5753 = vmatmul.mubr.bf16.gmra.mrb[0].mxu0 %v5549
      %v5754 = vpop.f32.mrb[0].mxu0
      %v5755 = vadd.f32 0.0, %v5754
      %v5756 = vpop.f32.mrb[0].mxu0
      %v5757 = vpop.f32.mrb[0].mxu0
      %v5758 = vadd.f32 0.0, %v5757
      %v5759 = vpop.f32.mrb[0].mxu0
      %5760 = vmatprep.mubr.bf16.mxu0 0
      %5761 = vmatmul.mubr.bf16.gmra.mrb[0].mxu0 %v5550
      %v5762 = vpop.f32.mrb[0].mxu0
      %v5763 = vadd.f32 0.0, %v5762
      %v5764 = vpop.f32.mrb[0].mxu0
      %v5765 = vpop.f32.mrb[0].mxu0
      %v5766 = vadd.f32 0.0, %v5765
      %v5767 = vpop.f32.mrb[0].mxu0
      %5768 = vmatprep.mubr.bf16.mxu0 0
      %5769 = vmatmul.mubr.bf16.gmra.mrb[0].mxu0 %v5551
      %v5770 = vpop.f32.mrb[0].mxu0
      %v5771 = vadd.f32 0.0, %v5770
      %v5772 = vpop.f32.mrb[0].mxu0
      %v5773 = vpop.f32.mrb[0].mxu0
      %v5774 = vadd.f32 0.0, %v5773
      %v5775 = vpop.f32.mrb[0].mxu0
      %5776 = vdwg.mxu0
      %v5777 = vadd.f32 %v5295, %v5651
      %v5778 = vadd.f32 %v5296, %v5654
      %v5779 = vadd.f32 %v5297, %v5659
      %v5780 = vadd.f32 %v5298, %v5662
      %v5781 = vadd.f32 %v5299, %v5667
      %v5782 = vadd.f32 %v5300, %v5670
      %v5783 = vadd.f32 %v5301, %v5675
      %v5784 = vadd.f32 %v5302, %v5678
      %v5785 = vadd.f32 %v5303, %v5683
      %v5786 = vadd.f32 %v5304, %v5686
      %v5787 = vadd.f32 %v5305, %v5691
      %v5788 = vadd.f32 %v5306, %v5694
      %v5789 = vadd.f32 %v5307, %v5699
      %v5790 = vadd.f32 %v5308, %v5702
      %v5791 = vadd.f32 %v5309, %v5707
      %v5792 = vadd.f32 %v5310, %v5710
      %v5793 = vadd.f32 %v5311, %v5715
      %v5794 = vadd.f32 %v5312, %v5718
      %v5795 = vadd.f32 %v5313, %v5723
      %v5796 = vadd.f32 %v5314, %v5726
      %v5797 = vadd.f32 %v5315, %v5731
      %v5798 = vadd.f32 %v5316, %v5734
      %v5799 = vadd.f32 %v5317, %v5739
      %v5800 = vadd.f32 %v5318, %v5742
      %v5801 = vadd.f32 %v5319, %v5747
      %v5802 = vadd.f32 %v5320, %v5750
      %v5803 = vadd.f32 %v5321, %v5755
      %v5804 = vadd.f32 %v5322, %v5758
      %v5805 = vadd.f32 %v5323, %v5763
      %v5806 = vadd.f32 %v5324, %v5766
      %v5807 = vadd.f32 %v5325, %v5771
      %v5808 = vadd.f32 %v5326, %v5774
      %5809 = vst [vmem:[#allocation2] sm:$0xff] %v5777
      %5810 = vst [vmem:[#allocation2 + $0x8] sm:$0xff] %v5778
      %5811 = vst [vmem:[#allocation2 + $0x10] sm:$0xff] %v5779
      %5812 = vst [vmem:[#allocation2 + $0x18] sm:$0xff] %v5780
      %5813 = vst [vmem:[#allocation2 + $0x20] sm:$0xff] %v5781
      %5814 = vst [vmem:[#allocation2 + $0x28] sm:$0xff] %v5782
      %5815 = vst [vmem:[#allocation2 + $0x30] sm:$0xff] %v5783
      %5816 = vst [vmem:[#allocation2 + $0x38] sm:$0xff] %v5784
      %5817 = vst [vmem:[#allocation2 + $0x40] sm:$0xff] %v5785
      %5818 = vst [vmem:[#allocation2 + $0x48] sm:$0xff] %v5786
      %5819 = vst [vmem:[#allocation2 + $0x50] sm:$0xff] %v5787
      %5820 = vst [vmem:[#allocation2 + $0x58] sm:$0xff] %v5788
      %5821 = vst [vmem:[#allocation2 + $0x60] sm:$0xff] %v5789
      %5822 = vst [vmem:[#allocation2 + $0x68] sm:$0xff] %v5790
      %5823 = vst [vmem:[#allocation2 + $0x70] sm:$0xff] %v5791
      %5824 = vst [vmem:[#allocation2 + $0x78] sm:$0xff] %v5792
      %5825 = vst [vmem:[#allocation2 + $0x80] sm:$0xff] %v5793
      %5826 = vst [vmem:[#allocation2 + $0x88] sm:$0xff] %v5794
      %5827 = vst [vmem:[#allocation2 + $0x90] sm:$0xff] %v5795
      %5828 = vst [vmem:[#allocation2 + $0x98] sm:$0xff] %v5796
      %5829 = vst [vmem:[#allocation2 + $0xa0] sm:$0xff] %v5797
      %5830 = vst [vmem:[#allocation2 + $0xa8] sm:$0xff] %v5798
      %5831 = vst [vmem:[#allocation2 + $0xb0] sm:$0xff] %v5799
      %5832 = vst [vmem:[#allocation2 + $0xb8] sm:$0xff] %v5800
      %5833 = vst [vmem:[#allocation2 + $0xc0] sm:$0xff] %v5801
      %5834 = vst [vmem:[#allocation2 + $0xc8] sm:$0xff] %v5802
      %5835 = vst [vmem:[#allocation2 + $0xd0] sm:$0xff] %v5803
      %5836 = vst [vmem:[#allocation2 + $0xd8] sm:$0xff] %v5804
      %5837 = vst [vmem:[#allocation2 + $0xe0] sm:$0xff] %v5805
      %5838 = vst [vmem:[#allocation2 + $0xe8] sm:$0xff] %v5806
      %5839 = vst [vmem:[#allocation2 + $0xf0] sm:$0xff] %v5807
      %5840 = vst [vmem:[#allocation2 + $0xf8] sm:$0xff] %v5808
      %v5841 = vld [vmem:[#allocation2] sm:$0xff]
      %v5842 = vld [vmem:[#allocation2 + $0x8] sm:$0xff]
      %v5843 = vld [vmem:[#allocation2 + $0x10] sm:$0xff]
      %v5844 = vld [vmem:[#allocation2 + $0x18] sm:$0xff]
      %v5845 = vld [vmem:[#allocation2 + $0x20] sm:$0xff]
      %v5846 = vld [vmem:[#allocation2 + $0x28] sm:$0xff]
      %v5847 = vld [vmem:[#allocation2 + $0x30] sm:$0xff]
      %v5848 = vld [vmem:[#allocation2 + $0x38] sm:$0xff]
      %v5849 = vld [vmem:[#allocation2 + $0x40] sm:$0xff]
      %v5850 = vld [vmem:[#allocation2 + $0x48] sm:$0xff]
      %v5851 = vld [vmem:[#allocation2 + $0x50] sm:$0xff]
      %v5852 = vld [vmem:[#allocation2 + $0x58] sm:$0xff]
      %v5853 = vld [vmem:[#allocation2 + $0x60] sm:$0xff]
      %v5854 = vld [vmem:[#allocation2 + $0x68] sm:$0xff]
      %v5855 = vld [vmem:[#allocation2 + $0x70] sm:$0xff]
      %v5856 = vld [vmem:[#allocation2 + $0x78] sm:$0xff]
      %v5857 = vld [vmem:[#allocation2 + $0x80] sm:$0xff]
      %v5858 = vld [vmem:[#allocation2 + $0x88] sm:$0xff]
      %v5859 = vld [vmem:[#allocation2 + $0x90] sm:$0xff]
      %v5860 = vld [vmem:[#allocation2 + $0x98] sm:$0xff]
      %v5861 = vld [vmem:[#allocation2 + $0xa0] sm:$0xff]
      %v5862 = vld [vmem:[#allocation2 + $0xa8] sm:$0xff]
      %v5863 = vld [vmem:[#allocation2 + $0xb0] sm:$0xff]
      %v5864 = vld [vmem:[#allocation2 + $0xb8] sm:$0xff]
      %v5865 = vld [vmem:[#allocation2 + $0xc0] sm:$0xff]
      %v5866 = vld [vmem:[#allocation2 + $0xc8] sm:$0xff]
      %v5867 = vld [vmem:[#allocation2 + $0xd0] sm:$0xff]
      %v5868 = vld [vmem:[#allocation2 + $0xd8] sm:$0xff]
      %v5869 = vld [vmem:[#allocation2 + $0xe0] sm:$0xff]
      %v5870 = vld [vmem:[#allocation2 + $0xe8] sm:$0xff]
      %v5871 = vld [vmem:[#allocation2 + $0xf0] sm:$0xff]
      %v5872 = vld [vmem:[#allocation2 + $0xf8] sm:$0xff]
      %5873 = vst [vmem:[%s208] sm:$0xff] %v5841
      %5874 = vst [vmem:[%s208 + $0x8] sm:$0xff] %v5842
      %5875 = vst [vmem:[%s208 + $0x10] sm:$0xff] %v5843
      %5876 = vst [vmem:[%s208 + $0x18] sm:$0xff] %v5844
      %5877 = vst [vmem:[%s208 + $0x20] sm:$0xff] %v5845
      %5878 = vst [vmem:[%s208 + $0x28] sm:$0xff] %v5846
      %5879 = vst [vmem:[%s208 + $0x30] sm:$0xff] %v5847
      %5880 = vst [vmem:[%s208 + $0x38] sm:$0xff] %v5848
      %5881 = vst [vmem:[%s208 + $0x40] sm:$0xff] %v5849
      %5882 = vst [vmem:[%s208 + $0x48] sm:$0xff] %v5850
      %5883 = vst [vmem:[%s208 + $0x50] sm:$0xff] %v5851
      %5884 = vst [vmem:[%s208 + $0x58] sm:$0xff] %v5852
      %5885 = vst [vmem:[%s208 + $0x60] sm:$0xff] %v5853
      %5886 = vst [vmem:[%s208 + $0x68] sm:$0xff] %v5854
      %5887 = vst [vmem:[%s208 + $0x70] sm:$0xff] %v5855
      %5888 = vst [vmem:[%s208 + $0x78] sm:$0xff] %v5856
      %5889 = vst [vmem:[%s208 + $0x80] sm:$0xff] %v5857
      %5890 = vst [vmem:[%s208 + $0x88] sm:$0xff] %v5858
      %5891 = vst [vmem:[%s208 + $0x90] sm:$0xff] %v5859
      %5892 = vst [vmem:[%s208 + $0x98] sm:$0xff] %v5860
      %5893 = vst [vmem:[%s208 + $0xa0] sm:$0xff] %v5861
      %5894 = vst [vmem:[%s208 + $0xa8] sm:$0xff] %v5862
      %5895 = vst [vmem:[%s208 + $0xb0] sm:$0xff] %v5863
      %5896 = vst [vmem:[%s208 + $0xb8] sm:$0xff] %v5864
      %5897 = vst [vmem:[%s208 + $0xc0] sm:$0xff] %v5865
      %5898 = vst [vmem:[%s208 + $0xc8] sm:$0xff] %v5866
      %5899 = vst [vmem:[%s208 + $0xd0] sm:$0xff] %v5867
      %5900 = vst [vmem:[%s208 + $0xd8] sm:$0xff] %v5868
      %5901 = vst [vmem:[%s208 + $0xe0] sm:$0xff] %v5869
      %5902 = vst [vmem:[%s208 + $0xe8] sm:$0xff] %v5870
      %5903 = vst [vmem:[%s208 + $0xf0] sm:$0xff] %v5871
      %5904 = vst [vmem:[%s208 + $0xf8] sm:$0xff] %v5872
      %v5905 = vadd.f32 %v5841, %v5842
      %v5906 = vadd.f32 %v5905, %v5843
      %v5907 = vadd.f32 %v5906, %v5844
      %v5908 = vadd.f32 %v5907, %v5845
      %v5909 = vadd.f32 %v5908, %v5846
      %v5910 = vadd.f32 %v5909, %v5847
      %v5911 = vadd.f32 %v5910, %v5848
      %v5912 = vadd.f32 %v5911, %v5849
      %v5913 = vadd.f32 %v5912, %v5850
      %v5914 = vadd.f32 %v5913, %v5851
      %v5915 = vadd.f32 %v5914, %v5852
      %v5916 = vadd.f32 %v5915, %v5853
      %v5917 = vadd.f32 %v5916, %v5854
      %v5918 = vadd.f32 %v5917, %v5855
      %v5919 = vadd.f32 %v5918, %v5856
      %v5920 = vadd.f32 %v5919, %v5857
      %v5921 = vadd.f32 %v5920, %v5858
      %v5922 = vadd.f32 %v5921, %v5859
      %v5923 = vadd.f32 %v5922, %v5860
      %v5924 = vadd.f32 %v5923, %v5861
      %v5925 = vadd.f32 %v5924, %v5862
      %v5926 = vadd.f32 %v5925, %v5863
      %v5927 = vadd.f32 %v5926, %v5864
      %v5928 = vadd.f32 %v5927, %v5865
      %v5929 = vadd.f32 %v5928, %v5866
      %v5930 = vadd.f32 %v5929, %v5867
      %v5931 = vadd.f32 %v5930, %v5868
      %v5932 = vadd.f32 %v5931, %v5869
      %v5933 = vadd.f32 %v5932, %v5870
      %v5934 = vadd.f32 %v5933, %v5871
      %v5935 = vadd.f32 %v5934, %v5872
      %v5936 = vrot.slane %v5935, 4
      %v5937 = vadd.f32 %v5935, %v5936
      %v5938 = vrot.slane %v5937, 2
      %v5939 = vadd.f32 %v5937, %v5938
      %v5940 = vrot.slane %v5939, 1
      %v5941 = vadd.f32 %v5939, %v5940
      %5942 = vst [vmem:[%s211] sm:$0x1] %v5941
      %v5943 = vmul.f32 %v5841, %v5841
      %v5944 = vmul.f32 %v5842, %v5842
      %v5945 = vmul.f32 %v5843, %v5843
      %v5946 = vmul.f32 %v5844, %v5844
      %v5947 = vmul.f32 %v5845, %v5845
      %v5948 = vmul.f32 %v5846, %v5846
      %v5949 = vmul.f32 %v5847, %v5847
      %v5950 = vmul.f32 %v5848, %v5848
      %v5951 = vmul.f32 %v5849, %v5849
      %v5952 = vmul.f32 %v5850, %v5850
      %v5953 = vmul.f32 %v5851, %v5851
      %v5954 = vmul.f32 %v5852, %v5852
      %v5955 = vmul.f32 %v5853, %v5853
      %v5956 = vmul.f32 %v5854, %v5854
      %v5957 = vmul.f32 %v5855, %v5855
      %v5958 = vmul.f32 %v5856, %v5856
      %v5959 = vmul.f32 %v5857, %v5857
      %v5960 = vmul.f32 %v5858, %v5858
      %v5961 = vmul.f32 %v5859, %v5859
      %v5962 = vmul.f32 %v5860, %v5860
      %v5963 = vmul.f32 %v5861, %v5861
      %v5964 = vmul.f32 %v5862, %v5862
      %v5965 = vmul.f32 %v5863, %v5863
      %v5966 = vmul.f32 %v5864, %v5864
      %v5967 = vmul.f32 %v5865, %v5865
      %v5968 = vmul.f32 %v5866, %v5866
      %v5969 = vmul.f32 %v5867, %v5867
      %v5970 = vmul.f32 %v5868, %v5868
      %v5971 = vmul.f32 %v5869, %v5869
      %v5972 = vmul.f32 %v5870, %v5870
      %v5973 = vmul.f32 %v5871, %v5871
      %v5974 = vmul.f32 %v5872, %v5872
      %v5975 = vadd.f32 %v5943, %v5944
      %v5976 = vadd.f32 %v5975, %v5945
      %v5977 = vadd.f32 %v5976, %v5946
      %v5978 = vadd.f32 %v5977, %v5947
      %v5979 = vadd.f32 %v5978, %v5948
      %v5980 = vadd.f32 %v5979, %v5949
      %v5981 = vadd.f32 %v5980, %v5950
      %v5982 = vadd.f32 %v5981, %v5951
      %v5983 = vadd.f32 %v5982, %v5952
      %v5984 = vadd.f32 %v5983, %v5953
      %v5985 = vadd.f32 %v5984, %v5954
      %v5986 = vadd.f32 %v5985, %v5955
      %v5987 = vadd.f32 %v5986, %v5956
      %v5988 = vadd.f32 %v5987, %v5957
      %v5989 = vadd.f32 %v5988, %v5958
      %v5990 = vadd.f32 %v5989, %v5959
      %v5991 = vadd.f32 %v5990, %v5960
      %v5992 = vadd.f32 %v5991, %v5961
      %v5993 = vadd.f32 %v5992, %v5962
      %v5994 = vadd.f32 %v5993, %v5963
      %v5995 = vadd.f32 %v5994, %v5964
      %v5996 = vadd.f32 %v5995, %v5965
      %v5997 = vadd.f32 %v5996, %v5966
      %v5998 = vadd.f32 %v5997, %v5967
      %v5999 = vadd.f32 %v5998, %v5968
      %v6000 = vadd.f32 %v5999, %v5969
      %v6001 = vadd.f32 %v6000, %v5970
      %v6002 = vadd.f32 %v6001, %v5971
      %v6003 = vadd.f32 %v6002, %v5972
      %v6004 = vadd.f32 %v6003, %v5973
      %v6005 = vadd.f32 %v6004, %v5974
      %v6006 = vrot.slane %v6005, 4
      %v6007 = vadd.f32 %v6005, %v6006
      %v6008 = vrot.slane %v6007, 2
      %v6009 = vadd.f32 %v6007, %v6008
      %v6010 = vrot.slane %v6009, 1
      %v6011 = vadd.f32 %v6009, %v6010
      %6012 = vst [vmem:[%s214] sm:$0x1] %v6011
      %p6013 = scmp.lt.s32.totalorder %s16, 1
      %s6014 = scalar_select %p6013, %s16, 1
      %s6015 = smul.addr %s6014, 32
      %s6016 = smul.addr %s6015, 8
      %s6017 = scalar_lea.vmem %s2, %s6016
      %p6018 = scmp.lt.s32.totalorder %s16, 1
      %s6019 = scalar_select %p6018, %s16, 1
      %s6020 = scalar_lea.vmem %s3, %s6019
      %p6021 = scmp.lt.s32.totalorder %s16, 1
      %s6022 = scalar_select %p6021, %s16, 1
      %s6023 = scalar_lea.vmem %s4, %s6022
      // Predicated region
      $region29: #{basic_block.4} parent=27 // pred_check
        %p6024 = pneg %p81
      $region30: #{basic_block.4} parent=27 // pred_check_branch
        %6026 = sbr.rel (%p6024) target = $region32
      $region31: #{basic_block.4} parent=27 // pred_region
        _
      $region32: #{basic_block.4} parent=27 // pred_fallthru
        _
      // Predicated region
      $region33: #{basic_block.4} parent=27 // pred_check
        %p6027 = pneg %p107
      $region34: #{basic_block.4} parent=27 // pred_check_branch
        %6029 = sbr.rel (%p6027) target = $region36
      $region35: #{basic_block.4} parent=27 // pred_region
        _
      $region36: #{basic_block.4} parent=27 // pred_fallthru
        _
      // Predicated region
      $region37: #{basic_block.4} parent=27 // pred_check
        %p6030 = pneg %p133
      $region38: #{basic_block.4} parent=27 // pred_check_branch
        %6032 = sbr.rel (%p6030) target = $region40
      $region39: #{basic_block.4} parent=27 // pred_region
        _
      $region40: #{basic_block.4} parent=27 // pred_fallthru
        _
    $region28: #{basic_block.4} parent=5 // pred_fallthru
      _
    %p6033 = scmp.le.s32.totalorder 2, %s11
    // Predicated region
    $region41: #{basic_block.4} parent=5 // pred_check
      %p6034 = pneg %p6033
    $region42: #{basic_block.4} parent=5 // pred_check_branch
      %6036 = sbr.rel (%p6034) target = $region44
    $region43: #{basic_block.4} parent=5 // pred_region
      %s6037 = ssub.s32 %s11, 2
      // Predicated region
      $region45: #{basic_block.4} parent=43 // pred_check
        %p6038 = pneg %p87
      $region46: #{basic_block.4} parent=43 // pred_check_branch
        %6040 = sbr.rel (%p6038) target = $region48
      $region47: #{basic_block.4} parent=43 // pred_region
        %p6041 = scmp.lt.s32.totalorder %s17, 1
        %s6042 = scalar_select %p6041, %s17, 1
        %s6043 = smul.addr %s6042, 32
        %s6044 = smul.addr %s6043, 8
        %s6045 = scalar_lea.vmem %s2, %s6044
      $region48: #{basic_block.4} parent=43 // pred_fallthru
        _
      // Predicated region
      $region49: #{basic_block.4} parent=43 // pred_check
        %p6046 = pneg %p113
      $region50: #{basic_block.4} parent=43 // pred_check_branch
        %6048 = sbr.rel (%p6046) target = $region52
      $region51: #{basic_block.4} parent=43 // pred_region
        %p6049 = scmp.lt.s32.totalorder %s17, 1
        %s6050 = scalar_select %p6049, %s17, 1
        %s6051 = scalar_lea.vmem %s3, %s6050
      $region52: #{basic_block.4} parent=43 // pred_fallthru
        _
      // Predicated region
      $region53: #{basic_block.4} parent=43 // pred_check
        %p6052 = pneg %p139
      $region54: #{basic_block.4} parent=43 // pred_check_branch
        %6054 = sbr.rel (%p6052) target = $region56
      $region55: #{basic_block.4} parent=43 // pred_region
        %p6055 = scmp.lt.s32.totalorder %s17, 1
        %s6056 = scalar_select %p6055, %s17, 1
        %s6057 = scalar_lea.vmem %s4, %s6056
      $region56: #{basic_block.4} parent=43 // pred_fallthru
        _
    $region44: #{basic_block.4} parent=5 // pred_fallthru
      _
  $region6: #{basic_block.4} parent=0 // loop_footer
    %s15 = sadd.s32 1, %s11
  $region7: #{basic_block.4} parent=0 // loop_footer_branch
    %10 = sbr.rel target = $region3
  $region8: #{basic_block.4} parent=0 // loop_exit
    _

</llo_original>
